<compile_context>
chip_gen: v5e
topology: v5e:2x2
jax: 0.10.0
libtpu: 0.0.40
codegen_flags: <defaults>
</compile_context>

<pallas_src>
import functools

import jax
import jax.numpy as jnp
from jax import lax
from jax.experimental import pallas as pl
from jax.experimental.pallas import tpu as pltpu


def _round_up(x, m):
    return ((x + m - 1) // m) * m


# ----------------------------------------------------------------------------
# Pallas kernel: batched PointNet MLP (conv1x1 + folded BN + ReLU) + group max
# ----------------------------------------------------------------------------
def _pointnet_groups_kernel(x_ref, w1, s1, w2, s2, w3, s3, w4, s4, o_ref, *, R):
    # x_ref : (G*R, Cin_pad)  bf16  -- G groups of R points each, channels-last
    # wK    : (CinK, CoutK)   bf16  conv1x1 weight with BN scale folded in
    # sK    : (1, CoutK)      f32   conv bias + BN shift folded in
    # o_ref : (G, 1024)       f32   per-group max-pooled global feature
    x = x_ref[...]                                            # bf16 rows

    def layer(h, w_ref, s_ref):
        y = jnp.dot(h, w_ref[...], preferred_element_type=jnp.float32) + s_ref[...]
        return jnp.maximum(y, 0.0)

    h = layer(x, w1, s1)                                      # [G*R, 64]  f32
    h = layer(h.astype(jnp.bfloat16), w2, s2)                 # [G*R, 64]
    h = layer(h.astype(jnp.bfloat16), w3, s3)                 # [G*R, 128]
    h = layer(h.astype(jnp.bfloat16), w4, s4)                 # [G*R, 1024]

    G, Cout = o_ref.shape
    o_ref[...] = jnp.max(h.reshape(G, R, Cout), axis=1)       # group max-pool


def pointnet_pallas(groups, folded_params, *, rows_per_tile=512):
    """groups: [B, M, R, Cin] f32 (channels-last).  Returns [B, M, 1024, 1]."""
    B, M, R, Cin = groups.shape
    (w1, s1), (w2, s2), (w3, s3), (w4, s4) = folded_params
    Cout = int(w4.shape[1])
    Cin_pad = int(w1.shape[0])            # first-layer weight rows already padded

    BM = B * M
    # Groups per grid step: target ~rows_per_tile rows, multiple of 16 so both
    # the bf16 input tile (G_tile*R rows) and the f32 output tile (G_tile rows)
    # satisfy TPU sublane tiling when the grid has more than one step.
    G_tile = _round_up(min(BM, max(1, rows_per_tile // R)), 16)
    n_tiles = pl.cdiv(BM, G_tile)
    BM_pad = n_tiles * G_tile

    # Flatten all group points to rows; pad channels to a multiple of 8 and pad
    # groups to a whole number of tiles; bf16 inputs (f32 accumulation in-kernel).
    x = groups.reshape(BM * R, Cin)
    x = jnp.pad(x, ((0, (BM_pad - BM) * R), (0, Cin_pad - Cin)))
    x = x.astype(jnp.bfloat16)

    def const_spec(arr):
        shp = arr.shape
        return pl.BlockSpec(shp, lambda t: (0,) * len(shp))

    flops = 2 * BM * R * sum(int(w.shape[0]) * int(w.shape[1]) for w, _ in folded_params)
    bytes_accessed = (
        int(x.size) * 2
        + sum(int(w.size) * w.dtype.itemsize + int(s.size) * s.dtype.itemsize
              for w, s in folded_params)
        + BM_pad * Cout * 4)

    out = pl.pallas_call(
        functools.partial(_pointnet_groups_kernel, R=R),
        out_shape=jax.ShapeDtypeStruct((BM_pad, Cout), jnp.float32),
        grid_spec=pltpu.PrefetchScalarGridSpec(
            num_scalar_prefetch=0,
            grid=(n_tiles,),
            in_specs=[
                pl.BlockSpec((G_tile * R, Cin_pad), lambda t: (t, 0)),
                const_spec(w1), const_spec(s1),
                const_spec(w2), const_spec(s2),
                const_spec(w3), const_spec(s3),
                const_spec(w4), const_spec(s4),
            ],
            out_specs=pl.BlockSpec((G_tile, Cout), lambda t: (t, 0)),
        ),
        compiler_params=pltpu.CompilerParams(
            dimension_semantics=("parallel",),
            vmem_limit_bytes=32 * 1024 * 1024),
        cost_estimate=pl.CostEstimate(
            flops=int(flops), transcendentals=0, bytes_accessed=int(bytes_accessed)),
    )(x, w1, s1, w2, s2, w3, s3, w4, s4)

    # torch returns [B, M, 1024, 1] (amax keepdims over the point dim).
    return out[:BM].reshape(B, M, Cout, 1)


# ----------------------------------------------------------------------------
# Pallas kernel: classification head (Linear + folded BN + ReLU, eval mode)
# ----------------------------------------------------------------------------
def _cls_head_kernel(x_ref, w1, s1, w2, s2, w3, b3, o_ref):
    # TODO(synk): Dropout layers are identity in eval mode and are omitted.
    x = x_ref[...]
    h = jnp.maximum(jnp.dot(x, w1[...], preferred_element_type=jnp.float32) + s1[...], 0.0)
    h = jnp.maximum(jnp.dot(h, w2[...], preferred_element_type=jnp.float32) + s2[...], 0.0)
    o_ref[...] = jnp.dot(h, w3[...], preferred_element_type=jnp.float32) + b3[...]


def cls_head_pallas(x, head_params):
    (w1, s1), (w2, s2), (w3, b3) = head_params
    B = x.shape[0]
    nc = int(w3.shape[1])
    return pl.pallas_call(
        _cls_head_kernel,
        out_shape=jax.ShapeDtypeStruct((B, nc), jnp.float32),
    )(x, w1, s1, w2, s2, w3, b3)


# ----------------------------------------------------------------------------
# JAX glue: sampling / grouping (argmax loop, top-k, gather)
# ----------------------------------------------------------------------------
def _sampling(points, M, start_idx=0):
    # TODO(synk): torch.randint start index replaced by deterministic index 0.
    # Note: like the reference code, each new centroid is the point farthest
    # from only the *previously added* centroid (not true FPS).
    B, N, C = points.shape
    xyz = points[..., :3]
    first = points[:, start_idx]                                   # [B, C]
    cents0 = jnp.zeros((B, M, C), points.dtype).at[:, 0].set(first)

    def body(i, carry):
        cents, prev_xyz = carry
        # squared distance: sqrt is monotone, not needed for argmax
        d2 = jnp.sum(jnp.square(xyz - prev_xyz[:, None, :]), axis=-1)   # [B, N]
        inds = jnp.argmax(d2, axis=-1)                                  # [B]
        nxt = points[jnp.arange(B), inds]                               # [B, C]
        cents = cents.at[:, i].set(nxt)
        return cents, nxt[..., :3]

    cents, _ = lax.fori_loop(1, M, body, (cents0, first[..., :3]))
    return cents                                                    # [B, M, C]


def _grouping(points, centroids, R):
    # TODO(synk): torch argsort tie-break order may differ from lax.top_k on
    # exactly-equal distances.
    xyz = points[..., :3]
    d2 = jnp.sum(jnp.square(xyz[:, None, :, :] - centroids[:, :, None, :3]),
                 axis=-1)                                           # [B, M, N]
    _, inds = lax.top_k(-d2, R)                                     # R nearest
    groups = jax.vmap(lambda p, idx: p[idx])(points, inds)          # [B, M, R, C]
    return groups


def abstraction_layer_forward(points, folded_params, M, R):
    centroids = _sampling(points, M)
    groups = _grouping(points, centroids, R)
    feats = pointnet_pallas(groups, folded_params)                  # [B, M, 1024, 1]
    return centroids, feats


def pointnet2_cls_forward(points, params, *, M1, R1, M2, R2):
    sa1_params, sa2_params, head_params = params
    cents1, feats1 = abstraction_layer_forward(points, sa1_params, M1, R1)
    sa2_in = jnp.concatenate([cents1[..., :3], feats1[..., 0]], axis=-1)   # [B, M1, 1027]
    _, feats2 = abstraction_layer_forward(sa2_in, sa2_params, M2, R2)      # [B, M2, 1024, 1]
    per_centroid = jnp.transpose(feats2[..., 0], (0, 2, 1))                # [B, 1024, M2]
    global_feat = jnp.max(per_centroid, axis=-1)                           # [B, 1024]
    return cls_head_pallas(global_feat, head_params)                       # [B, num_classes]


# ----------------------------------------------------------------------------
# Deterministic parameter init (synthetic stand-in for the checkpoint).
# Abstraction layer: Conv1d(in->64)+BN, Conv1d(64->64)+BN, Conv1d(64->128)+BN,
# Conv1d(128->1024)+BN (each followed by ReLU).  BN folded in eval mode.
# ----------------------------------------------------------------------------
def init_folded_conv_params(key, in_feats, eps=1e-5):
    dims = [(in_feats, 64), (64, 64), (64, 128), (128, 1024)]
    params = []
    for li, (cin, cout) in enumerate(dims):
        key, kw, kb, kg, kbt, km, kv = jax.random.split(key, 7)
        W = jax.random.normal(kw, (cout, cin), jnp.float32) / jnp.sqrt(jnp.float32(cin))
        b = 0.01 * jax.random.normal(kb, (cout,), jnp.float32)
        gamma = 1.0 + 0.01 * jax.random.normal(kg, (cout,), jnp.float32)
        beta = 0.01 * jax.random.normal(kbt, (cout,), jnp.float32)
        mean = 0.01 * jax.random.normal(km, (cout,), jnp.float32)
        var = 1.0 + 0.1 * jnp.abs(jax.random.normal(kv, (cout,), jnp.float32))
        # TODO(synk): BatchNorm reproduced in eval mode (running-stats affine
        # folded into the conv); train-mode batch statistics are not reproduced.
        scale = gamma / jnp.sqrt(var + eps)
        Wf = (W * scale[:, None]).T                                  # [cin, cout]
        if li == 0:
            cin_pad = _round_up(cin, 8)
            Wf = jnp.pad(Wf, ((0, cin_pad - cin), (0, 0)))           # zero rows
        sf = ((b - mean) * scale + beta)[None, :]                    # [1, cout]
        params.append((Wf.astype(jnp.bfloat16), sf.astype(jnp.float32)))
    return params


def init_head_params(key, num_classes=3, eps=1e-5):
    dims = [(1024, 512), (512, 256), (256, num_classes)]
    params = []
    for li, (cin, cout) in enumerate(dims):
        key, kw, kb, kg, kbt, km, kv = jax.random.split(key, 7)
        W = jax.random.normal(kw, (cout, cin), jnp.float32) / jnp.sqrt(jnp.float32(cin))
        b = 0.01 * jax.random.normal(kb, (cout,), jnp.float32)
        if li < 2:   # Linear + BN (eval) + ReLU
            gamma = 1.0 + 0.01 * jax.random.normal(kg, (cout,), jnp.float32)
            beta = 0.01 * jax.random.normal(kbt, (cout,), jnp.float32)
            mean = 0.01 * jax.random.normal(km, (cout,), jnp.float32)
            var = 1.0 + 0.1 * jnp.abs(jax.random.normal(kv, (cout,), jnp.float32))
            scale = gamma / jnp.sqrt(var + eps)
            Wf = (W * scale[:, None]).T
            sf = ((b - mean) * scale + beta)[None, :]
        else:        # final Linear
            Wf = W.T
            sf = b[None, :]
        params.append((Wf.astype(jnp.float32), sf.astype(jnp.float32)))
    return params


if __name__ == "__main__":
    # Small shapes consistent with PointNet2_Cls structure
    # (real model: N=10000, M1=R1=100, M2=R2=10).
    B, N = 2, 64
    M1, R1 = 16, 16
    M2, R2 = 8, 8
    num_classes = 3

    key = jax.random.PRNGKey(0)
    points = jax.random.normal(key, (B, N, 3), dtype=jnp.float32)

    params = (
        init_folded_conv_params(jax.random.PRNGKey(1), in_feats=3),
        init_folded_conv_params(jax.random.PRNGKey(2), in_feats=3 + 1024),
        init_head_params(jax.random.PRNGKey(3), num_classes=num_classes),
    )

    fwd = jax.jit(functools.partial(pointnet2_cls_forward, M1=M1, R1=R1, M2=M2, R2=R2))
    logits = jax.block_until_ready(fwd(points, params))

    assert logits.shape == (B, num_classes), logits.shape
    assert bool(jnp.all(jnp.isfinite(logits)))
    print("KERNEL_OK")
</pallas_src>

<mosaic_0001>
module attributes {stable_mosaic.version = 11 : i64} {
  func.func @_pointnet_groups_kernel(%arg0: i32, %arg1: memref<512x8xbf16, #tpu.memory_space<vmem>>, %arg2: memref<8x64xbf16, #tpu.memory_space<vmem>>, %arg3: memref<1x64xf32, #tpu.memory_space<vmem>>, %arg4: memref<64x64xbf16, #tpu.memory_space<vmem>>, %arg5: memref<1x64xf32, #tpu.memory_space<vmem>>, %arg6: memref<64x128xbf16, #tpu.memory_space<vmem>>, %arg7: memref<1x128xf32, #tpu.memory_space<vmem>>, %arg8: memref<128x1024xbf16, #tpu.memory_space<vmem>>, %arg9: memref<1x1024xf32, #tpu.memory_space<vmem>>, %arg10: memref<32x1024xf32, #tpu.memory_space<vmem>>) attributes {dimension_semantics = [#tpu.dimension_semantics<parallel>], iteration_bounds = array<i64: 1>, scalar_prefetch = 0 : i64, scratch_operands = 0 : i64, tpu.core_type = #tpu.core_type<tc>, window_params = [{transform_indices = @transform_0, window_bounds = array<i64: 512, 8>}, {pipeline_mode = #tpu.pipeline_mode<synchronous>, transform_indices = @transform_1, window_bounds = array<i64: 8, 64>}, {pipeline_mode = #tpu.pipeline_mode<synchronous>, transform_indices = @transform_2, window_bounds = array<i64: 1, 64>}, {pipeline_mode = #tpu.pipeline_mode<synchronous>, transform_indices = @transform_3, window_bounds = array<i64: 64, 64>}, {pipeline_mode = #tpu.pipeline_mode<synchronous>, transform_indices = @transform_4, window_bounds = array<i64: 1, 64>}, {pipeline_mode = #tpu.pipeline_mode<synchronous>, transform_indices = @transform_5, window_bounds = array<i64: 64, 128>}, {pipeline_mode = #tpu.pipeline_mode<synchronous>, transform_indices = @transform_6, window_bounds = array<i64: 1, 128>}, {pipeline_mode = #tpu.pipeline_mode<synchronous>, transform_indices = @transform_7, window_bounds = array<i64: 128, 1024>}, {pipeline_mode = #tpu.pipeline_mode<synchronous>, transform_indices = @transform_8, window_bounds = array<i64: 1, 1024>}, {transform_indices = @transform_9, window_bounds = array<i64: 32, 1024>}]} {
    %c0 = arith.constant 0 : index
    %c0_0 = arith.constant 0 : index
    %0 = vector.load %arg1[%c0, %c0_0] : memref<512x8xbf16, #tpu.memory_space<vmem>>, vector<512x8xbf16>
    %c0_1 = arith.constant 0 : index
    %c0_2 = arith.constant 0 : index
    %1 = vector.load %arg2[%c0_1, %c0_2] : memref<8x64xbf16, #tpu.memory_space<vmem>>, vector<8x64xbf16>
    %cst = arith.constant dense<0.000000e+00> : vector<512x64xf32>
    %2 = tpu.matmul %0, %1, %cst {dimension_numbers = #tpu.dot_dimension_numbers<[1], [0], [0], [1], [0, 0, 1, 1], [], []>} : vector<512x8xbf16>, vector<8x64xbf16>, vector<512x64xf32> -> vector<512x64xf32>
    %c0_3 = arith.constant 0 : index
    %c0_4 = arith.constant 0 : index
    %3 = vector.load %arg3[%c0_3, %c0_4] : memref<1x64xf32, #tpu.memory_space<vmem>>, vector<1x64xf32>
    %4 = vector.broadcast %3 : vector<1x64xf32> to vector<512x64xf32>
    %5 = arith.addf %2, %4 : vector<512x64xf32>
    %cst_5 = arith.constant 0.000000e+00 : f32
    %6 = vector.broadcast %cst_5 : f32 to vector<512x64xf32>
    %7 = arith.maximumf %5, %6 : vector<512x64xf32>
    %8 = arith.truncf %7 : vector<512x64xf32> to vector<512x64xbf16>
    %c0_6 = arith.constant 0 : index
    %c0_7 = arith.constant 0 : index
    %9 = vector.load %arg4[%c0_6, %c0_7] : memref<64x64xbf16, #tpu.memory_space<vmem>>, vector<64x64xbf16>
    %cst_8 = arith.constant dense<0.000000e+00> : vector<512x64xf32>
    %10 = tpu.matmul %8, %9, %cst_8 {dimension_numbers = #tpu.dot_dimension_numbers<[1], [0], [0], [1], [0, 0, 1, 1], [], []>} : vector<512x64xbf16>, vector<64x64xbf16>, vector<512x64xf32> -> vector<512x64xf32>
    %c0_9 = arith.constant 0 : index
    %c0_10 = arith.constant 0 : index
    %11 = vector.load %arg5[%c0_9, %c0_10] : memref<1x64xf32, #tpu.memory_space<vmem>>, vector<1x64xf32>
    %12 = vector.broadcast %11 : vector<1x64xf32> to vector<512x64xf32>
    %13 = arith.addf %10, %12 : vector<512x64xf32>
    %cst_11 = arith.constant 0.000000e+00 : f32
    %14 = vector.broadcast %cst_11 : f32 to vector<512x64xf32>
    %15 = arith.maximumf %13, %14 : vector<512x64xf32>
    %16 = arith.truncf %15 : vector<512x64xf32> to vector<512x64xbf16>
    %c0_12 = arith.constant 0 : index
    %c0_13 = arith.constant 0 : index
    %17 = vector.load %arg6[%c0_12, %c0_13] : memref<64x128xbf16, #tpu.memory_space<vmem>>, vector<64x128xbf16>
    %cst_14 = arith.constant dense<0.000000e+00> : vector<512x128xf32>
    %18 = tpu.matmul %16, %17, %cst_14 {dimension_numbers = #tpu.dot_dimension_numbers<[1], [0], [0], [1], [0, 0, 1, 1], [], []>} : vector<512x64xbf16>, vector<64x128xbf16>, vector<512x128xf32> -> vector<512x128xf32>
    %c0_15 = arith.constant 0 : index
    %c0_16 = arith.constant 0 : index
    %19 = vector.load %arg7[%c0_15, %c0_16] : memref<1x128xf32, #tpu.memory_space<vmem>>, vector<1x128xf32>
    %20 = vector.broadcast %19 : vector<1x128xf32> to vector<512x128xf32>
    %21 = arith.addf %18, %20 : vector<512x128xf32>
    %cst_17 = arith.constant 0.000000e+00 : f32
    %22 = vector.broadcast %cst_17 : f32 to vector<512x128xf32>
    %23 = arith.maximumf %21, %22 : vector<512x128xf32>
    %24 = arith.truncf %23 : vector<512x128xf32> to vector<512x128xbf16>
    %c0_18 = arith.constant 0 : index
    %c0_19 = arith.constant 0 : index
    %25 = vector.load %arg8[%c0_18, %c0_19] : memref<128x1024xbf16, #tpu.memory_space<vmem>>, vector<128x1024xbf16>
    %cst_20 = arith.constant dense<0.000000e+00> : vector<512x1024xf32>
    %26 = tpu.matmul %24, %25, %cst_20 {dimension_numbers = #tpu.dot_dimension_numbers<[1], [0], [0], [1], [0, 0, 1, 1], [], []>} : vector<512x128xbf16>, vector<128x1024xbf16>, vector<512x1024xf32> -> vector<512x1024xf32>
    %c0_21 = arith.constant 0 : index
    %c0_22 = arith.constant 0 : index
    %27 = vector.load %arg9[%c0_21, %c0_22] : memref<1x1024xf32, #tpu.memory_space<vmem>>, vector<1x1024xf32>
    %28 = vector.broadcast %27 : vector<1x1024xf32> to vector<512x1024xf32>
    %29 = arith.addf %26, %28 : vector<512x1024xf32>
    %cst_23 = arith.constant 0.000000e+00 : f32
    %30 = vector.broadcast %cst_23 : f32 to vector<512x1024xf32>
    %31 = arith.maximumf %29, %30 : vector<512x1024xf32>
    %32 = vector.shape_cast %31 : vector<512x1024xf32> to vector<32x16x1024xf32>
    %cst_24 = arith.constant dense<0xFF800000> : vector<32x1024xf32>
    %33 = vector.multi_reduction <maximumf>, %32, %cst_24 [1] : vector<32x16x1024xf32> to vector<32x1024xf32>
    %c0_25 = arith.constant 0 : index
    %c0_26 = arith.constant 0 : index
    %34 = vector.load %arg10[%c0_25, %c0_26] : memref<32x1024xf32, #tpu.memory_space<vmem>>, vector<32x1024xf32>
    tpu.vector_store %arg10[%c0_25, %c0_26], %33 {strides = array<i32>} : memref<32x1024xf32, #tpu.memory_space<vmem>>, vector<32x1024xf32>,
    return
  }
  func.func @transform_0(%arg0: i32) -> (i32, i32) {
    %c0_i32 = arith.constant 0 : i32
    %c0_i32_0 = arith.constant 0 : i32
    return %arg0, %c0_i32 : i32, i32
  }
  func.func @transform_1(%arg0: i32) -> (i32, i32) {
    %c0_i32 = arith.constant 0 : i32
    %c0_i32_0 = arith.constant 0 : i32
    %c0_i32_1 = arith.constant 0 : i32
    return %c0_i32, %c0_i32_0 : i32, i32
  }
  func.func @transform_2(%arg0: i32) -> (i32, i32) {
    %c0_i32 = arith.constant 0 : i32
    %c0_i32_0 = arith.constant 0 : i32
    %c0_i32_1 = arith.constant 0 : i32
    return %c0_i32, %c0_i32_0 : i32, i32
  }
  func.func @transform_3(%arg0: i32) -> (i32, i32) {
    %c0_i32 = arith.constant 0 : i32
    %c0_i32_0 = arith.constant 0 : i32
    %c0_i32_1 = arith.constant 0 : i32
    return %c0_i32, %c0_i32_0 : i32, i32
  }
  func.func @transform_4(%arg0: i32) -> (i32, i32) {
    %c0_i32 = arith.constant 0 : i32
    %c0_i32_0 = arith.constant 0 : i32
    %c0_i32_1 = arith.constant 0 : i32
    return %c0_i32, %c0_i32_0 : i32, i32
  }
  func.func @transform_5(%arg0: i32) -> (i32, i32) {
    %c0_i32 = arith.constant 0 : i32
    %c0_i32_0 = arith.constant 0 : i32
    %c0_i32_1 = arith.constant 0 : i32
    return %c0_i32, %c0_i32_0 : i32, i32
  }
  func.func @transform_6(%arg0: i32) -> (i32, i32) {
    %c0_i32 = arith.constant 0 : i32
    %c0_i32_0 = arith.constant 0 : i32
    %c0_i32_1 = arith.constant 0 : i32
    return %c0_i32, %c0_i32_0 : i32, i32
  }
  func.func @transform_7(%arg0: i32) -> (i32, i32) {
    %c0_i32 = arith.constant 0 : i32
    %c0_i32_0 = arith.constant 0 : i32
    %c0_i32_1 = arith.constant 0 : i32
    return %c0_i32, %c0_i32_0 : i32, i32
  }
  func.func @transform_8(%arg0: i32) -> (i32, i32) {
    %c0_i32 = arith.constant 0 : i32
    %c0_i32_0 = arith.constant 0 : i32
    %c0_i32_1 = arith.constant 0 : i32
    return %c0_i32, %c0_i32_0 : i32, i32
  }
  func.func @transform_9(%arg0: i32) -> (i32, i32) {
    %c0_i32 = arith.constant 0 : i32
    %c0_i32_0 = arith.constant 0 : i32
    return %arg0, %c0_i32 : i32, i32
  }
}

module attributes {stable_mosaic.version = 11 : i64} {
  func.func @_pointnet_groups_kernel(%arg0: i32, %arg1: memref<128x1032xbf16, #tpu.memory_space<vmem>>, %arg2: memref<1032x64xbf16, #tpu.memory_space<vmem>>, %arg3: memref<1x64xf32, #tpu.memory_space<vmem>>, %arg4: memref<64x64xbf16, #tpu.memory_space<vmem>>, %arg5: memref<1x64xf32, #tpu.memory_space<vmem>>, %arg6: memref<64x128xbf16, #tpu.memory_space<vmem>>, %arg7: memref<1x128xf32, #tpu.memory_space<vmem>>, %arg8: memref<128x1024xbf16, #tpu.memory_space<vmem>>, %arg9: memref<1x1024xf32, #tpu.memory_space<vmem>>, %arg10: memref<16x1024xf32, #tpu.memory_space<vmem>>) attributes {dimension_semantics = [#tpu.dimension_semantics<parallel>], iteration_bounds = array<i64: 1>, scalar_prefetch = 0 : i64, scratch_operands = 0 : i64, tpu.core_type = #tpu.core_type<tc>, window_params = [{transform_indices = @transform_0, window_bounds = array<i64: 128, 1032>}, {pipeline_mode = #tpu.pipeline_mode<synchronous>, transform_indices = @transform_1, window_bounds = array<i64: 1032, 64>}, {pipeline_mode = #tpu.pipeline_mode<synchronous>, transform_indices = @transform_2, window_bounds = array<i64: 1, 64>}, {pipeline_mode = #tpu.pipeline_mode<synchronous>, transform_indices = @transform_3, window_bounds = array<i64: 64, 64>}, {pipeline_mode = #tpu.pipeline_mode<synchronous>, transform_indices = @transform_4, window_bounds = array<i64: 1, 64>}, {pipeline_mode = #tpu.pipeline_mode<synchronous>, transform_indices = @transform_5, window_bounds = array<i64: 64, 128>}, {pipeline_mode = #tpu.pipeline_mode<synchronous>, transform_indices = @transform_6, window_bounds = array<i64: 1, 128>}, {pipeline_mode = #tpu.pipeline_mode<synchronous>, transform_indices = @transform_7, window_bounds = array<i64: 128, 1024>}, {pipeline_mode = #tpu.pipeline_mode<synchronous>, transform_indices = @transform_8, window_bounds = array<i64: 1, 1024>}, {transform_indices = @transform_9, window_bounds = array<i64: 16, 1024>}]} {
    %c0 = arith.constant 0 : index
    %c0_0 = arith.constant 0 : index
    %0 = vector.load %arg1[%c0, %c0_0] : memref<128x1032xbf16, #tpu.memory_space<vmem>>, vector<128x1032xbf16>
    %c0_1 = arith.constant 0 : index
    %c0_2 = arith.constant 0 : index
    %1 = vector.load %arg2[%c0_1, %c0_2] : memref<1032x64xbf16, #tpu.memory_space<vmem>>, vector<1032x64xbf16>
    %cst = arith.constant dense<0.000000e+00> : vector<128x64xf32>
    %2 = tpu.matmul %0, %1, %cst {dimension_numbers = #tpu.dot_dimension_numbers<[1], [0], [0], [1], [0, 0, 1, 1], [], []>} : vector<128x1032xbf16>, vector<1032x64xbf16>, vector<128x64xf32> -> vector<128x64xf32>
    %c0_3 = arith.constant 0 : index
    %c0_4 = arith.constant 0 : index
    %3 = vector.load %arg3[%c0_3, %c0_4] : memref<1x64xf32, #tpu.memory_space<vmem>>, vector<1x64xf32>
    %4 = vector.broadcast %3 : vector<1x64xf32> to vector<128x64xf32>
    %5 = arith.addf %2, %4 : vector<128x64xf32>
    %cst_5 = arith.constant 0.000000e+00 : f32
    %6 = vector.broadcast %cst_5 : f32 to vector<128x64xf32>
    %7 = arith.maximumf %5, %6 : vector<128x64xf32>
    %8 = arith.truncf %7 : vector<128x64xf32> to vector<128x64xbf16>
    %c0_6 = arith.constant 0 : index
    %c0_7 = arith.constant 0 : index
    %9 = vector.load %arg4[%c0_6, %c0_7] : memref<64x64xbf16, #tpu.memory_space<vmem>>, vector<64x64xbf16>
    %cst_8 = arith.constant dense<0.000000e+00> : vector<128x64xf32>
    %10 = tpu.matmul %8, %9, %cst_8 {dimension_numbers = #tpu.dot_dimension_numbers<[1], [0], [0], [1], [0, 0, 1, 1], [], []>} : vector<128x64xbf16>, vector<64x64xbf16>, vector<128x64xf32> -> vector<128x64xf32>
    %c0_9 = arith.constant 0 : index
    %c0_10 = arith.constant 0 : index
    %11 = vector.load %arg5[%c0_9, %c0_10] : memref<1x64xf32, #tpu.memory_space<vmem>>, vector<1x64xf32>
    %12 = vector.broadcast %11 : vector<1x64xf32> to vector<128x64xf32>
    %13 = arith.addf %10, %12 : vector<128x64xf32>
    %cst_11 = arith.constant 0.000000e+00 : f32
    %14 = vector.broadcast %cst_11 : f32 to vector<128x64xf32>
    %15 = arith.maximumf %13, %14 : vector<128x64xf32>
    %16 = arith.truncf %15 : vector<128x64xf32> to vector<128x64xbf16>
    %c0_12 = arith.constant 0 : index
    %c0_13 = arith.constant 0 : index
    %17 = vector.load %arg6[%c0_12, %c0_13] : memref<64x128xbf16, #tpu.memory_space<vmem>>, vector<64x128xbf16>
    %cst_14 = arith.constant dense<0.000000e+00> : vector<128x128xf32>
    %18 = tpu.matmul %16, %17, %cst_14 {dimension_numbers = #tpu.dot_dimension_numbers<[1], [0], [0], [1], [0, 0, 1, 1], [], []>} : vector<128x64xbf16>, vector<64x128xbf16>, vector<128x128xf32> -> vector<128x128xf32>
    %c0_15 = arith.constant 0 : index
    %c0_16 = arith.constant 0 : index
    %19 = vector.load %arg7[%c0_15, %c0_16] : memref<1x128xf32, #tpu.memory_space<vmem>>, vector<1x128xf32>
    %20 = vector.broadcast %19 : vector<1x128xf32> to vector<128x128xf32>
    %21 = arith.addf %18, %20 : vector<128x128xf32>
    %cst_17 = arith.constant 0.000000e+00 : f32
    %22 = vector.broadcast %cst_17 : f32 to vector<128x128xf32>
    %23 = arith.maximumf %21, %22 : vector<128x128xf32>
    %24 = arith.truncf %23 : vector<128x128xf32> to vector<128x128xbf16>
    %c0_18 = arith.constant 0 : index
    %c0_19 = arith.constant 0 : index
    %25 = vector.load %arg8[%c0_18, %c0_19] : memref<128x1024xbf16, #tpu.memory_space<vmem>>, vector<128x1024xbf16>
    %cst_20 = arith.constant dense<0.000000e+00> : vector<128x1024xf32>
    %26 = tpu.matmul %24, %25, %cst_20 {dimension_numbers = #tpu.dot_dimension_numbers<[1], [0], [0], [1], [0, 0, 1, 1], [], []>} : vector<128x128xbf16>, vector<128x1024xbf16>, vector<128x1024xf32> -> vector<128x1024xf32>
    %c0_21 = arith.constant 0 : index
    %c0_22 = arith.constant 0 : index
    %27 = vector.load %arg9[%c0_21, %c0_22] : memref<1x1024xf32, #tpu.memory_space<vmem>>, vector<1x1024xf32>
    %28 = vector.broadcast %27 : vector<1x1024xf32> to vector<128x1024xf32>
    %29 = arith.addf %26, %28 : vector<128x1024xf32>
    %cst_23 = arith.constant 0.000000e+00 : f32
    %30 = vector.broadcast %cst_23 : f32 to vector<128x1024xf32>
    %31 = arith.maximumf %29, %30 : vector<128x1024xf32>
    %32 = vector.shape_cast %31 : vector<128x1024xf32> to vector<16x8x1024xf32>
    %cst_24 = arith.constant dense<0xFF800000> : vector<16x1024xf32>
    %33 = vector.multi_reduction <maximumf>, %32, %cst_24 [1] : vector<16x8x1024xf32> to vector<16x1024xf32>
    %c0_25 = arith.constant 0 : index
    %c0_26 = arith.constant 0 : index
    %34 = vector.load %arg10[%c0_25, %c0_26] : memref<16x1024xf32, #tpu.memory_space<vmem>>, vector<16x1024xf32>
    tpu.vector_store %arg10[%c0_25, %c0_26], %33 {strides = array<i32>} : memref<16x1024xf32, #tpu.memory_space<vmem>>, vector<16x1024xf32>,
    return
  }
  func.func @transform_0(%arg0: i32) -> (i32, i32) {
    %c0_i32 = arith.constant 0 : i32
    %c0_i32_0 = arith.constant 0 : i32
    return %arg0, %c0_i32 : i32, i32
  }
  func.func @transform_1(%arg0: i32) -> (i32, i32) {
    %c0_i32 = arith.constant 0 : i32
    %c0_i32_0 = arith.constant 0 : i32
    %c0_i32_1 = arith.constant 0 : i32
    return %c0_i32, %c0_i32_0 : i32, i32
  }
  func.func @transform_2(%arg0: i32) -> (i32, i32) {
    %c0_i32 = arith.constant 0 : i32
    %c0_i32_0 = arith.constant 0 : i32
    %c0_i32_1 = arith.constant 0 : i32
    return %c0_i32, %c0_i32_0 : i32, i32
  }
  func.func @transform_3(%arg0: i32) -> (i32, i32) {
    %c0_i32 = arith.constant 0 : i32
    %c0_i32_0 = arith.constant 0 : i32
    %c0_i32_1 = arith.constant 0 : i32
    return %c0_i32, %c0_i32_0 : i32, i32
  }
  func.func @transform_4(%arg0: i32) -> (i32, i32) {
    %c0_i32 = arith.constant 0 : i32
    %c0_i32_0 = arith.constant 0 : i32
    %c0_i32_1 = arith.constant 0 : i32
    return %c0_i32, %c0_i32_0 : i32, i32
  }
  func.func @transform_5(%arg0: i32) -> (i32, i32) {
    %c0_i32 = arith.constant 0 : i32
    %c0_i32_0 = arith.constant 0 : i32
    %c0_i32_1 = arith.constant 0 : i32
    return %c0_i32, %c0_i32_0 : i32, i32
  }
  func.func @transform_6(%arg0: i32) -> (i32, i32) {
    %c0_i32 = arith.constant 0 : i32
    %c0_i32_0 = arith.constant 0 : i32
    %c0_i32_1 = arith.constant 0 : i32
    return %c0_i32, %c0_i32_0 : i32, i32
  }
  func.func @transform_7(%arg0: i32) -> (i32, i32) {
    %c0_i32 = arith.constant 0 : i32
    %c0_i32_0 = arith.constant 0 : i32
    %c0_i32_1 = arith.constant 0 : i32
    return %c0_i32, %c0_i32_0 : i32, i32
  }
  func.func @transform_8(%arg0: i32) -> (i32, i32) {
    %c0_i32 = arith.constant 0 : i32
    %c0_i32_0 = arith.constant 0 : i32
    %c0_i32_1 = arith.constant 0 : i32
    return %c0_i32, %c0_i32_0 : i32, i32
  }
  func.func @transform_9(%arg0: i32) -> (i32, i32) {
    %c0_i32 = arith.constant 0 : i32
    %c0_i32_0 = arith.constant 0 : i32
    return %arg0, %c0_i32 : i32, i32
  }
}

module attributes {stable_mosaic.version = 11 : i64} {
  func.func @_cls_head_kernel(%arg0: memref<2x1024xf32, #tpu.memory_space<vmem>>, %arg1: memref<1024x512xf32, #tpu.memory_space<vmem>>, %arg2: memref<1x512xf32, #tpu.memory_space<vmem>>, %arg3: memref<512x256xf32, #tpu.memory_space<vmem>>, %arg4: memref<1x256xf32, #tpu.memory_space<vmem>>, %arg5: memref<256x3xf32, #tpu.memory_space<vmem>>, %arg6: memref<1x3xf32, #tpu.memory_space<vmem>>, %arg7: memref<2x3xf32, #tpu.memory_space<vmem>>) attributes {dimension_semantics = [], scalar_prefetch = 0 : i64, scratch_operands = 0 : i64, tpu.core_type = #tpu.core_type<tc>} {
    %c0 = arith.constant 0 : index
    %c0_0 = arith.constant 0 : index
    %0 = vector.load %arg0[%c0, %c0_0] : memref<2x1024xf32, #tpu.memory_space<vmem>>, vector<2x1024xf32>
    %c0_1 = arith.constant 0 : index
    %c0_2 = arith.constant 0 : index
    %1 = vector.load %arg1[%c0_1, %c0_2] : memref<1024x512xf32, #tpu.memory_space<vmem>>, vector<1024x512xf32>
    %cst = arith.constant dense<0.000000e+00> : vector<2x512xf32>
    %2 = tpu.matmul %0, %1, %cst {dimension_numbers = #tpu.dot_dimension_numbers<[1], [0], [0], [1], [0, 0, 1, 1], [], []>} : vector<2x1024xf32>, vector<1024x512xf32>, vector<2x512xf32> -> vector<2x512xf32>
    %c0_3 = arith.constant 0 : index
    %c0_4 = arith.constant 0 : index
    %3 = vector.load %arg2[%c0_3, %c0_4] : memref<1x512xf32, #tpu.memory_space<vmem>>, vector<1x512xf32>
    %4 = vector.broadcast %3 : vector<1x512xf32> to vector<2x512xf32>
    %5 = arith.addf %2, %4 : vector<2x512xf32>
    %cst_5 = arith.constant 0.000000e+00 : f32
    %6 = vector.broadcast %cst_5 : f32 to vector<2x512xf32>
    %7 = arith.maximumf %5, %6 : vector<2x512xf32>
    %c0_6 = arith.constant 0 : index
    %c0_7 = arith.constant 0 : index
    %8 = vector.load %arg3[%c0_6, %c0_7] : memref<512x256xf32, #tpu.memory_space<vmem>>, vector<512x256xf32>
    %cst_8 = arith.constant dense<0.000000e+00> : vector<2x256xf32>
    %9 = tpu.matmul %7, %8, %cst_8 {dimension_numbers = #tpu.dot_dimension_numbers<[1], [0], [0], [1], [0, 0, 1, 1], [], []>} : vector<2x512xf32>, vector<512x256xf32>, vector<2x256xf32> -> vector<2x256xf32>
    %c0_9 = arith.constant 0 : index
    %c0_10 = arith.constant 0 : index
    %10 = vector.load %arg4[%c0_9, %c0_10] : memref<1x256xf32, #tpu.memory_space<vmem>>, vector<1x256xf32>
    %11 = vector.broadcast %10 : vector<1x256xf32> to vector<2x256xf32>
    %12 = arith.addf %9, %11 : vector<2x256xf32>
    %cst_11 = arith.constant 0.000000e+00 : f32
    %13 = vector.broadcast %cst_11 : f32 to vector<2x256xf32>
    %14 = arith.maximumf %12, %13 : vector<2x256xf32>
    %c0_12 = arith.constant 0 : index
    %c0_13 = arith.constant 0 : index
    %15 = vector.load %arg5[%c0_12, %c0_13] : memref<256x3xf32, #tpu.memory_space<vmem>>, vector<256x3xf32>
    %cst_14 = arith.constant dense<0.000000e+00> : vector<2x3xf32>
    %16 = tpu.matmul %14, %15, %cst_14 {dimension_numbers = #tpu.dot_dimension_numbers<[1], [0], [0], [1], [0, 0, 1, 1], [], []>} : vector<2x256xf32>, vector<256x3xf32>, vector<2x3xf32> -> vector<2x3xf32>
    %c0_15 = arith.constant 0 : index
    %c0_16 = arith.constant 0 : index
    %17 = vector.load %arg6[%c0_15, %c0_16] : memref<1x3xf32, #tpu.memory_space<vmem>>, vector<1x3xf32>
    %18 = vector.broadcast %17 : vector<1x3xf32> to vector<2x3xf32>
    %19 = arith.addf %16, %18 : vector<2x3xf32>
    %c0_17 = arith.constant 0 : index
    %c0_18 = arith.constant 0 : index
    %20 = vector.load %arg7[%c0_17, %c0_18] : memref<2x3xf32, #tpu.memory_space<vmem>>, vector<2x3xf32>
    tpu.vector_store %arg7[%c0_17, %c0_18], %19 {strides = array<i32>} : memref<2x3xf32, #tpu.memory_space<vmem>>, vector<2x3xf32>,
    return
  }
}

</mosaic_0001>

<llo_original>
// kernel: neg.2
$region0: #{neg.2}
  #allocation0 [shape = 's32[1]{0}', space=sflag, size = 0x4, scoped, tag = 'scoped memory for neg.2']
  %s0 = inlined_call_operand.vmem [shape: f32[2,16,64], index: 0, kind: input, shape index: {}]
  %s1 = inlined_call_operand.vmem [shape: f32[2,16,64], index: 1, kind: output, shape index: {}]
  %v2 = vld [vmem:[%s0] sm:$0xff]
  %3 = xla_tuple %v2
  %4 = xla_tuple %3
  %v5 = vxor.u32 %v2, 2147483648
  %6 = xla_tuple %v5
  %7 = vst [vmem:[%s1] sm:$0xff] %v5
  %s8 = scalar_lea.vmem %s0, 16
  %v9 = vld [vmem:[%s8] sm:$0xff]
  %10 = xla_tuple %v9
  %11 = xla_tuple %10
  %v12 = vxor.u32 %v9, 2147483648
  %13 = xla_tuple %v12
  %s14 = scalar_lea.vmem %s1, 16
  %15 = vst [vmem:[%s14] sm:$0xff] %v12
  %s16 = scalar_lea.vmem %s0, 8
  %v17 = vld [vmem:[%s16] sm:$0xff]
  %18 = xla_tuple %v17
  %19 = xla_tuple %18
  %v20 = vxor.u32 %v17, 2147483648
  %21 = xla_tuple %v20
  %s22 = scalar_lea.vmem %s1, 8
  %23 = vst [vmem:[%s22] sm:$0xff] %v20
  %s24 = scalar_lea.vmem %s0, 24
  %v25 = vld [vmem:[%s24] sm:$0xff]
  %26 = xla_tuple %v25
  %27 = xla_tuple %26
  %v28 = vxor.u32 %v25, 2147483648
  %29 = xla_tuple %v28
  %s30 = scalar_lea.vmem %s1, 24
  %31 = vst [vmem:[%s30] sm:$0xff] %v28

// kernel: neg.3
$region0: #{neg.3}
  #allocation0 [shape = 's32[1]{0}', space=sflag, size = 0x4, scoped, tag = 'scoped memory for neg.3']
  %s0 = inlined_call_operand.vmem [shape: f32[2,8,16], index: 0, kind: input, shape index: {}]
  %s1 = inlined_call_operand.vmem [shape: f32[2,8,16], index: 1, kind: output, shape index: {}]
  %v2 = vld [vmem:[%s0] sm:$0xff]
  %3 = xla_tuple %v2
  %4 = xla_tuple %3
  %v5 = vxor.u32 %v2, 2147483648
  %6 = xla_tuple %v5
  %7 = vst [vmem:[%s1] sm:$0xff] %v5
  %s8 = scalar_lea.vmem %s0, 8
  %v9 = vld [vmem:[%s8] sm:$0xff]
  %10 = xla_tuple %v9
  %11 = xla_tuple %10
  %v12 = vxor.u32 %v9, 2147483648
  %13 = xla_tuple %v12
  %s14 = scalar_lea.vmem %s1, 8
  %15 = vst [vmem:[%s14] sm:$0xff] %v12

// kernel: pointnet2_cls_forward.3
$region0: #{pointnet2_cls_forward.3}
  #allocation0 [shape = 'u32[]', space=smem, size = 0x4, offset = 0x4, fixed_abs, tag = 'smem constant byte address 0x4 - core index']
  #allocation1 [shape = 'u32[72,128]{1,0:T(1,128)}', space=vmem, size = 0x9000, scoped, tag = 'internal scratch']
  %s0 = inlined_call_operand.vmem [shape: bf16[512,8], index: 0, kind: input, shape index: {}]
  %s1 = inlined_call_operand.vmem [shape: bf16[8,64], index: 1, kind: input, shape index: {}]
  %s2 = inlined_call_operand.vmem [shape: f32[1,64], index: 2, kind: input, shape index: {}]
  %s3 = inlined_call_operand.vmem [shape: bf16[64,64], index: 3, kind: input, shape index: {}]
  %s4 = inlined_call_operand.vmem [shape: f32[1,64], index: 4, kind: input, shape index: {}]
  %s5 = inlined_call_operand.vmem [shape: bf16[64,128], index: 5, kind: input, shape index: {}]
  %s6 = inlined_call_operand.vmem [shape: f32[1,128], index: 6, kind: input, shape index: {}]
  %s7 = inlined_call_operand.vmem [shape: bf16[128,1024], index: 7, kind: input, shape index: {}]
  %s8 = inlined_call_operand.vmem [shape: f32[1,1024], index: 8, kind: input, shape index: {}]
  %s9 = inlined_call_operand.vmem [shape: f32[32,1024], index: 9, kind: output, shape index: {}]
  %s10 = sld [smem:[#allocation0]]
  $region46: #{pointnet2_cls_forward.3} parent=0
    _
  %s12 = ssub.s32 1, %s10
  %s13 = scalar_select 0, %s12, %s10
  // Predicated region
  $region2: #{pointnet2_cls_forward.3} parent=0 // pred_check
    _
  $region3: #{pointnet2_cls_forward.3} parent=0 // pred_check_branch
    %15 = sbr.rel (0) target = $region5
  $region4: #{pointnet2_cls_forward.3} parent=0 // pred_region
    _
  $region5: #{pointnet2_cls_forward.3} parent=0 // pred_fallthru
    _
  // Predicated region
  $region6: #{pointnet2_cls_forward.3} parent=0 // pred_check
    _
  $region7: #{pointnet2_cls_forward.3} parent=0 // pred_check_branch
    %17 = sbr.rel (0) target = $region9
  $region8: #{pointnet2_cls_forward.3} parent=0 // pred_region
    _
  $region9: #{pointnet2_cls_forward.3} parent=0 // pred_fallthru
    _
  // Predicated region
  $region10: #{pointnet2_cls_forward.3} parent=0 // pred_check
    _
  $region11: #{pointnet2_cls_forward.3} parent=0 // pred_check_branch
    %19 = sbr.rel (0) target = $region13
  $region12: #{pointnet2_cls_forward.3} parent=0 // pred_region
    _
  $region13: #{pointnet2_cls_forward.3} parent=0 // pred_fallthru
    _
  // Predicated region
  $region14: #{pointnet2_cls_forward.3} parent=0 // pred_check
    _
  $region15: #{pointnet2_cls_forward.3} parent=0 // pred_check_branch
    %21 = sbr.rel (0) target = $region17
  $region16: #{pointnet2_cls_forward.3} parent=0 // pred_region
    _
  $region17: #{pointnet2_cls_forward.3} parent=0 // pred_fallthru
    _
  // Predicated region
  $region18: #{pointnet2_cls_forward.3} parent=0 // pred_check
    _
  $region19: #{pointnet2_cls_forward.3} parent=0 // pred_check_branch
    %23 = sbr.rel (0) target = $region21
  $region20: #{pointnet2_cls_forward.3} parent=0 // pred_region
    _
  $region21: #{pointnet2_cls_forward.3} parent=0 // pred_fallthru
    _
  // Predicated region
  $region22: #{pointnet2_cls_forward.3} parent=0 // pred_check
    _
  $region23: #{pointnet2_cls_forward.3} parent=0 // pred_check_branch
    %25 = sbr.rel (0) target = $region25
  $region24: #{pointnet2_cls_forward.3} parent=0 // pred_region
    _
  $region25: #{pointnet2_cls_forward.3} parent=0 // pred_fallthru
    _
  // Predicated region
  $region26: #{pointnet2_cls_forward.3} parent=0 // pred_check
    _
  $region27: #{pointnet2_cls_forward.3} parent=0 // pred_check_branch
    %27 = sbr.rel (0) target = $region29
  $region28: #{pointnet2_cls_forward.3} parent=0 // pred_region
    _
  $region29: #{pointnet2_cls_forward.3} parent=0 // pred_fallthru
    _
  // Predicated region
  $region30: #{pointnet2_cls_forward.3} parent=0 // pred_check
    _
  $region31: #{pointnet2_cls_forward.3} parent=0 // pred_check_branch
    %29 = sbr.rel (0) target = $region33
  $region32: #{pointnet2_cls_forward.3} parent=0 // pred_region
    _
  $region33: #{pointnet2_cls_forward.3} parent=0 // pred_fallthru
    _
  // Predicated region
  $region34: #{pointnet2_cls_forward.3} parent=0 // pred_check
    _
  $region35: #{pointnet2_cls_forward.3} parent=0 // pred_check_branch
    %31 = sbr.rel (0) target = $region37
  $region36: #{pointnet2_cls_forward.3} parent=0 // pred_region
    _
  $region37: #{pointnet2_cls_forward.3} parent=0 // pred_fallthru
    _
  %v33 = vld [vmem:[%s0] sm:$0xf]
  %v34 = vld [vmem:[%s0 + $0x4] sm:$0xf]
  %v35 = vld [vmem:[%s0 + $0x8] sm:$0xf]
  %v36 = vld [vmem:[%s0 + $0xc] sm:$0xf]
  %v37 = vld [vmem:[%s0 + $0x10] sm:$0xf]
  %v38 = vld [vmem:[%s0 + $0x14] sm:$0xf]
  %v39 = vld [vmem:[%s0 + $0x18] sm:$0xf]
  %v40 = vld [vmem:[%s0 + $0x1c] sm:$0xf]
  %v41 = vld [vmem:[%s0 + $0x20] sm:$0xf]
  %v42 = vld [vmem:[%s0 + $0x24] sm:$0xf]
  %v43 = vld [vmem:[%s0 + $0x28] sm:$0xf]
  %v44 = vld [vmem:[%s0 + $0x2c] sm:$0xf]
  %v45 = vld [vmem:[%s0 + $0x30] sm:$0xf]
  %v46 = vld [vmem:[%s0 + $0x34] sm:$0xf]
  %v47 = vld [vmem:[%s0 + $0x38] sm:$0xf]
  %v48 = vld [vmem:[%s0 + $0x3c] sm:$0xf]
  %v49 = vld [vmem:[%s0 + $0x40] sm:$0xf]
  %v50 = vld [vmem:[%s0 + $0x44] sm:$0xf]
  %v51 = vld [vmem:[%s0 + $0x48] sm:$0xf]
  %v52 = vld [vmem:[%s0 + $0x4c] sm:$0xf]
  %v53 = vld [vmem:[%s0 + $0x50] sm:$0xf]
  %v54 = vld [vmem:[%s0 + $0x54] sm:$0xf]
  %v55 = vld [vmem:[%s0 + $0x58] sm:$0xf]
  %v56 = vld [vmem:[%s0 + $0x5c] sm:$0xf]
  %v57 = vld [vmem:[%s0 + $0x60] sm:$0xf]
  %v58 = vld [vmem:[%s0 + $0x64] sm:$0xf]
  %v59 = vld [vmem:[%s0 + $0x68] sm:$0xf]
  %v60 = vld [vmem:[%s0 + $0x6c] sm:$0xf]
  %v61 = vld [vmem:[%s0 + $0x70] sm:$0xf]
  %v62 = vld [vmem:[%s0 + $0x74] sm:$0xf]
  %v63 = vld [vmem:[%s0 + $0x78] sm:$0xf]
  %v64 = vld [vmem:[%s0 + $0x7c] sm:$0xf]
  %v65 = vld [vmem:[%s0 + $0x80] sm:$0xf]
  %v66 = vld [vmem:[%s0 + $0x84] sm:$0xf]
  %v67 = vld [vmem:[%s0 + $0x88] sm:$0xf]
  %v68 = vld [vmem:[%s0 + $0x8c] sm:$0xf]
  %v69 = vld [vmem:[%s0 + $0x90] sm:$0xf]
  %v70 = vld [vmem:[%s0 + $0x94] sm:$0xf]
  %v71 = vld [vmem:[%s0 + $0x98] sm:$0xf]
  %v72 = vld [vmem:[%s0 + $0x9c] sm:$0xf]
  %v73 = vld [vmem:[%s0 + $0xa0] sm:$0xf]
  %v74 = vld [vmem:[%s0 + $0xa4] sm:$0xf]
  %v75 = vld [vmem:[%s0 + $0xa8] sm:$0xf]
  %v76 = vld [vmem:[%s0 + $0xac] sm:$0xf]
  %v77 = vld [vmem:[%s0 + $0xb0] sm:$0xf]
  %v78 = vld [vmem:[%s0 + $0xb4] sm:$0xf]
  %v79 = vld [vmem:[%s0 + $0xb8] sm:$0xf]
  %v80 = vld [vmem:[%s0 + $0xbc] sm:$0xf]
  %v81 = vld [vmem:[%s0 + $0xc0] sm:$0xf]
  %v82 = vld [vmem:[%s0 + $0xc4] sm:$0xf]
  %v83 = vld [vmem:[%s0 + $0xc8] sm:$0xf]
  %v84 = vld [vmem:[%s0 + $0xcc] sm:$0xf]
  %v85 = vld [vmem:[%s0 + $0xd0] sm:$0xf]
  %v86 = vld [vmem:[%s0 + $0xd4] sm:$0xf]
  %v87 = vld [vmem:[%s0 + $0xd8] sm:$0xf]
  %v88 = vld [vmem:[%s0 + $0xdc] sm:$0xf]
  %v89 = vld [vmem:[%s0 + $0xe0] sm:$0xf]
  %v90 = vld [vmem:[%s0 + $0xe4] sm:$0xf]
  %v91 = vld [vmem:[%s0 + $0xe8] sm:$0xf]
  %v92 = vld [vmem:[%s0 + $0xec] sm:$0xf]
  %v93 = vld [vmem:[%s0 + $0xf0] sm:$0xf]
  %v94 = vld [vmem:[%s0 + $0xf4] sm:$0xf]
  %v95 = vld [vmem:[%s0 + $0xf8] sm:$0xf]
  %v96 = vld [vmem:[%s0 + $0xfc] sm:$0xf]
  %v97 = vld [vmem:[%s1] sm:$0xf]
  %v98 = vld [vmem:[%s2] sm:$0x1]
  %v100 = vperm.slane %v98, 0
  %v166 = vunpack.c.l.b16 %v33
  %v167 = vunpack.c.l.b16 %v34
  %v168 = vunpack.c.l.b16 %v35
  %v169 = vunpack.c.l.b16 %v36
  %v170 = vunpack.c.l.b16 %v37
  %v171 = vunpack.c.l.b16 %v38
  %v172 = vunpack.c.l.b16 %v39
  %v173 = vunpack.c.l.b16 %v40
  %v174 = vunpack.c.l.b16 %v41
  %v175 = vunpack.c.l.b16 %v42
  %v176 = vunpack.c.l.b16 %v43
  %v177 = vunpack.c.l.b16 %v44
  %v178 = vunpack.c.l.b16 %v45
  %v179 = vunpack.c.l.b16 %v46
  %v180 = vunpack.c.l.b16 %v47
  %v181 = vunpack.c.l.b16 %v48
  %v182 = vunpack.c.l.b16 %v49
  %v183 = vunpack.c.l.b16 %v50
  %v184 = vunpack.c.l.b16 %v51
  %v185 = vunpack.c.l.b16 %v52
  %v186 = vunpack.c.l.b16 %v53
  %v187 = vunpack.c.l.b16 %v54
  %v188 = vunpack.c.l.b16 %v55
  %v189 = vunpack.c.l.b16 %v56
  %v190 = vunpack.c.l.b16 %v57
  %v191 = vunpack.c.l.b16 %v58
  %v192 = vunpack.c.l.b16 %v59
  %v193 = vunpack.c.l.b16 %v60
  %v194 = vunpack.c.l.b16 %v61
  %v195 = vunpack.c.l.b16 %v62
  %v196 = vunpack.c.l.b16 %v63
  %v197 = vunpack.c.l.b16 %v64
  %v198 = vunpack.c.l.b16 %v65
  %v199 = vunpack.c.l.b16 %v66
  %v200 = vunpack.c.l.b16 %v67
  %v201 = vunpack.c.l.b16 %v68
  %v202 = vunpack.c.l.b16 %v69
  %v203 = vunpack.c.l.b16 %v70
  %v204 = vunpack.c.l.b16 %v71
  %v205 = vunpack.c.l.b16 %v72
  %v206 = vunpack.c.l.b16 %v73
  %v207 = vunpack.c.l.b16 %v74
  %v208 = vunpack.c.l.b16 %v75
  %v209 = vunpack.c.l.b16 %v76
  %v210 = vunpack.c.l.b16 %v77
  %v211 = vunpack.c.l.b16 %v78
  %v212 = vunpack.c.l.b16 %v79
  %v213 = vunpack.c.l.b16 %v80
  %v214 = vunpack.c.l.b16 %v81
  %v215 = vunpack.c.l.b16 %v82
  %v216 = vunpack.c.l.b16 %v83
  %v217 = vunpack.c.l.b16 %v84
  %v218 = vunpack.c.l.b16 %v85
  %v219 = vunpack.c.l.b16 %v86
  %v220 = vunpack.c.l.b16 %v87
  %v221 = vunpack.c.l.b16 %v88
  %v222 = vunpack.c.l.b16 %v89
  %v223 = vunpack.c.l.b16 %v90
  %v224 = vunpack.c.l.b16 %v91
  %v225 = vunpack.c.l.b16 %v92
  %v226 = vunpack.c.l.b16 %v93
  %v227 = vunpack.c.l.b16 %v94
  %v228 = vunpack.c.l.b16 %v95
  %v229 = vunpack.c.l.b16 %v96
  %v230 = vpack.c.b16 %v167, %v166
  %v231 = vpack.c.b16 %v169, %v168
  %v232 = vpack.c.b16 %v171, %v170
  %v233 = vpack.c.b16 %v173, %v172
  %v234 = vpack.c.b16 %v175, %v174
  %v235 = vpack.c.b16 %v177, %v176
  %v236 = vpack.c.b16 %v179, %v178
  %v237 = vpack.c.b16 %v181, %v180
  %v238 = vpack.c.b16 %v183, %v182
  %v239 = vpack.c.b16 %v185, %v184
  %v240 = vpack.c.b16 %v187, %v186
  %v241 = vpack.c.b16 %v189, %v188
  %v242 = vpack.c.b16 %v191, %v190
  %v243 = vpack.c.b16 %v193, %v192
  %v244 = vpack.c.b16 %v195, %v194
  %v245 = vpack.c.b16 %v197, %v196
  %v246 = vpack.c.b16 %v199, %v198
  %v247 = vpack.c.b16 %v201, %v200
  %v248 = vpack.c.b16 %v203, %v202
  %v249 = vpack.c.b16 %v205, %v204
  %v250 = vpack.c.b16 %v207, %v206
  %v251 = vpack.c.b16 %v209, %v208
  %v252 = vpack.c.b16 %v211, %v210
  %v253 = vpack.c.b16 %v213, %v212
  %v254 = vpack.c.b16 %v215, %v214
  %v255 = vpack.c.b16 %v217, %v216
  %v256 = vpack.c.b16 %v219, %v218
  %v257 = vpack.c.b16 %v221, %v220
  %v258 = vpack.c.b16 %v223, %v222
  %v259 = vpack.c.b16 %v225, %v224
  %v260 = vpack.c.b16 %v227, %v226
  %v261 = vpack.c.b16 %v229, %v228
  %vm262 = vcmask 64512
  %v264 = vsel %vm262, %v230, 0
  %v267 = vsel %vm262, %v231, 0
  %v270 = vsel %vm262, %v232, 0
  %v273 = vsel %vm262, %v233, 0
  %v276 = vsel %vm262, %v234, 0
  %v279 = vsel %vm262, %v235, 0
  %v282 = vsel %vm262, %v236, 0
  %v285 = vsel %vm262, %v237, 0
  %v288 = vsel %vm262, %v238, 0
  %v291 = vsel %vm262, %v239, 0
  %v294 = vsel %vm262, %v240, 0
  %v297 = vsel %vm262, %v241, 0
  %v300 = vsel %vm262, %v242, 0
  %v303 = vsel %vm262, %v243, 0
  %v306 = vsel %vm262, %v244, 0
  %v309 = vsel %vm262, %v245, 0
  %v312 = vsel %vm262, %v246, 0
  %v315 = vsel %vm262, %v247, 0
  %v318 = vsel %vm262, %v248, 0
  %v321 = vsel %vm262, %v249, 0
  %v324 = vsel %vm262, %v250, 0
  %v327 = vsel %vm262, %v251, 0
  %v330 = vsel %vm262, %v252, 0
  %v333 = vsel %vm262, %v253, 0
  %v336 = vsel %vm262, %v254, 0
  %v339 = vsel %vm262, %v255, 0
  %v342 = vsel %vm262, %v256, 0
  %v345 = vsel %vm262, %v257, 0
  %v348 = vsel %vm262, %v258, 0
  %v351 = vsel %vm262, %v259, 0
  %v354 = vsel %vm262, %v260, 0
  %v357 = vsel %vm262, %v261, 0
  %vm359 = vcmask 1043456
  %v361 = vsel %vm359, %v97, 0
  %363 = vmatpush.bf16.msra.mxu0 0
  %364 = vmatpush.bf16.msra.mxu0 0
  %365 = vmatpush.bf16.msra.mxu0 0
  %366 = vmatpush.bf16.msra.mxu0 0
  %367 = vmatpush.bf16.msra.mxu0 0
  %368 = vmatpush.bf16.msra.mxu0 0
  %369 = vmatpush.bf16.msra.mxu0 0
  %370 = vmatpush.bf16.msra.mxu0 %v361
  %371 = vmatmul.bf16.gmra.mxu0 %v264
  %v372 = vpop.f32.mrf.mxu0
  %v373 = vadd.f32 %v100, %v372
  %v374 = vpop.f32.mrf.mxu0
  %v375 = vadd.f32 %v100, %v374
  %376 = vmatmul.bf16.gmra.mxu0 %v267
  %v377 = vpop.f32.mrf.mxu0
  %v378 = vadd.f32 %v100, %v377
  %v379 = vpop.f32.mrf.mxu0
  %v380 = vadd.f32 %v100, %v379
  %381 = vmatmul.bf16.gmra.mxu0 %v270
  %v382 = vpop.f32.mrf.mxu0
  %v383 = vadd.f32 %v100, %v382
  %v384 = vpop.f32.mrf.mxu0
  %v385 = vadd.f32 %v100, %v384
  %386 = vmatmul.bf16.gmra.mxu0 %v273
  %v387 = vpop.f32.mrf.mxu0
  %v388 = vadd.f32 %v100, %v387
  %v389 = vpop.f32.mrf.mxu0
  %v390 = vadd.f32 %v100, %v389
  %391 = vmatmul.bf16.gmra.mxu0 %v276
  %v392 = vpop.f32.mrf.mxu0
  %v393 = vadd.f32 %v100, %v392
  %v394 = vpop.f32.mrf.mxu0
  %v395 = vadd.f32 %v100, %v394
  %396 = vmatmul.bf16.gmra.mxu0 %v279
  %v397 = vpop.f32.mrf.mxu0
  %v398 = vadd.f32 %v100, %v397
  %v399 = vpop.f32.mrf.mxu0
  %v400 = vadd.f32 %v100, %v399
  %401 = vmatmul.bf16.gmra.mxu0 %v282
  %v402 = vpop.f32.mrf.mxu0
  %v403 = vadd.f32 %v100, %v402
  %v404 = vpop.f32.mrf.mxu0
  %v405 = vadd.f32 %v100, %v404
  %406 = vmatmul.bf16.gmra.mxu0 %v285
  %v407 = vpop.f32.mrf.mxu0
  %v408 = vadd.f32 %v100, %v407
  %v409 = vpop.f32.mrf.mxu0
  %v410 = vadd.f32 %v100, %v409
  %411 = vmatmul.bf16.gmra.mxu0 %v288
  %v412 = vpop.f32.mrf.mxu0
  %v413 = vadd.f32 %v100, %v412
  %v414 = vpop.f32.mrf.mxu0
  %v415 = vadd.f32 %v100, %v414
  %416 = vmatmul.bf16.gmra.mxu0 %v291
  %v417 = vpop.f32.mrf.mxu0
  %v418 = vadd.f32 %v100, %v417
  %v419 = vpop.f32.mrf.mxu0
  %v420 = vadd.f32 %v100, %v419
  %421 = vmatmul.bf16.gmra.mxu0 %v294
  %v422 = vpop.f32.mrf.mxu0
  %v423 = vadd.f32 %v100, %v422
  %v424 = vpop.f32.mrf.mxu0
  %v425 = vadd.f32 %v100, %v424
  %426 = vmatmul.bf16.gmra.mxu0 %v297
  %v427 = vpop.f32.mrf.mxu0
  %v428 = vadd.f32 %v100, %v427
  %v429 = vpop.f32.mrf.mxu0
  %v430 = vadd.f32 %v100, %v429
  %431 = vmatmul.bf16.gmra.mxu0 %v300
  %v432 = vpop.f32.mrf.mxu0
  %v433 = vadd.f32 %v100, %v432
  %v434 = vpop.f32.mrf.mxu0
  %v435 = vadd.f32 %v100, %v434
  %436 = vmatmul.bf16.gmra.mxu0 %v303
  %v437 = vpop.f32.mrf.mxu0
  %v438 = vadd.f32 %v100, %v437
  %v439 = vpop.f32.mrf.mxu0
  %v440 = vadd.f32 %v100, %v439
  %441 = vmatmul.bf16.gmra.mxu0 %v306
  %v442 = vpop.f32.mrf.mxu0
  %v443 = vadd.f32 %v100, %v442
  %v444 = vpop.f32.mrf.mxu0
  %v445 = vadd.f32 %v100, %v444
  %446 = vmatmul.bf16.gmra.mxu0 %v309
  %v447 = vpop.f32.mrf.mxu0
  %v448 = vadd.f32 %v100, %v447
  %v449 = vpop.f32.mrf.mxu0
  %v450 = vadd.f32 %v100, %v449
  %451 = vmatmul.bf16.gmra.mxu0 %v312
  %v452 = vpop.f32.mrf.mxu0
  %v453 = vadd.f32 %v100, %v452
  %v454 = vpop.f32.mrf.mxu0
  %v455 = vadd.f32 %v100, %v454
  %456 = vmatmul.bf16.gmra.mxu0 %v315
  %v457 = vpop.f32.mrf.mxu0
  %v458 = vadd.f32 %v100, %v457
  %v459 = vpop.f32.mrf.mxu0
  %v460 = vadd.f32 %v100, %v459
  %461 = vmatmul.bf16.gmra.mxu0 %v318
  %v462 = vpop.f32.mrf.mxu0
  %v463 = vadd.f32 %v100, %v462
  %v464 = vpop.f32.mrf.mxu0
  %v465 = vadd.f32 %v100, %v464
  %466 = vmatmul.bf16.gmra.mxu0 %v321
  %v467 = vpop.f32.mrf.mxu0
  %v468 = vadd.f32 %v100, %v467
  %v469 = vpop.f32.mrf.mxu0
  %v470 = vadd.f32 %v100, %v469
  %471 = vmatmul.bf16.gmra.mxu0 %v324
  %v472 = vpop.f32.mrf.mxu0
  %v473 = vadd.f32 %v100, %v472
  %v474 = vpop.f32.mrf.mxu0
  %v475 = vadd.f32 %v100, %v474
  %476 = vmatmul.bf16.gmra.mxu0 %v327
  %v477 = vpop.f32.mrf.mxu0
  %v478 = vadd.f32 %v100, %v477
  %v479 = vpop.f32.mrf.mxu0
  %v480 = vadd.f32 %v100, %v479
  %481 = vmatmul.bf16.gmra.mxu0 %v330
  %v482 = vpop.f32.mrf.mxu0
  %v483 = vadd.f32 %v100, %v482
  %v484 = vpop.f32.mrf.mxu0
  %v485 = vadd.f32 %v100, %v484
  %486 = vmatmul.bf16.gmra.mxu0 %v333
  %v487 = vpop.f32.mrf.mxu0
  %v488 = vadd.f32 %v100, %v487
  %v489 = vpop.f32.mrf.mxu0
  %v490 = vadd.f32 %v100, %v489
  %491 = vmatmul.bf16.gmra.mxu0 %v336
  %v492 = vpop.f32.mrf.mxu0
  %v493 = vadd.f32 %v100, %v492
  %v494 = vpop.f32.mrf.mxu0
  %v495 = vadd.f32 %v100, %v494
  %496 = vmatmul.bf16.gmra.mxu0 %v339
  %v497 = vpop.f32.mrf.mxu0
  %v498 = vadd.f32 %v100, %v497
  %v499 = vpop.f32.mrf.mxu0
  %v500 = vadd.f32 %v100, %v499
  %501 = vmatmul.bf16.gmra.mxu0 %v342
  %v502 = vpop.f32.mrf.mxu0
  %v503 = vadd.f32 %v100, %v502
  %v504 = vpop.f32.mrf.mxu0
  %v505 = vadd.f32 %v100, %v504
  %506 = vmatmul.bf16.gmra.mxu0 %v345
  %v507 = vpop.f32.mrf.mxu0
  %v508 = vadd.f32 %v100, %v507
  %v509 = vpop.f32.mrf.mxu0
  %v510 = vadd.f32 %v100, %v509
  %511 = vmatmul.bf16.gmra.mxu0 %v348
  %v512 = vpop.f32.mrf.mxu0
  %v513 = vadd.f32 %v100, %v512
  %v514 = vpop.f32.mrf.mxu0
  %v515 = vadd.f32 %v100, %v514
  %516 = vmatmul.bf16.gmra.mxu0 %v351
  %v517 = vpop.f32.mrf.mxu0
  %v518 = vadd.f32 %v100, %v517
  %v519 = vpop.f32.mrf.mxu0
  %v520 = vadd.f32 %v100, %v519
  %521 = vmatmul.bf16.gmra.mxu0 %v354
  %v522 = vpop.f32.mrf.mxu0
  %v523 = vadd.f32 %v100, %v522
  %v524 = vpop.f32.mrf.mxu0
  %v525 = vadd.f32 %v100, %v524
  %526 = vmatmul.bf16.gmra.mxu0 %v357
  %v527 = vpop.f32.mrf.mxu0
  %v528 = vadd.f32 %v100, %v527
  %v529 = vpop.f32.mrf.mxu0
  %v530 = vadd.f32 %v100, %v529
  %531 = vdwg.mxu0
  %v532 = vmax.f32 %v373, 0.0
  %v533 = vmax.f32 %v375, 0.0
  %v534 = vmax.f32 %v378, 0.0
  %v535 = vmax.f32 %v380, 0.0
  %v536 = vmax.f32 %v383, 0.0
  %v537 = vmax.f32 %v385, 0.0
  %v538 = vmax.f32 %v388, 0.0
  %v539 = vmax.f32 %v390, 0.0
  %v540 = vmax.f32 %v393, 0.0
  %v541 = vmax.f32 %v395, 0.0
  %v542 = vmax.f32 %v398, 0.0
  %v543 = vmax.f32 %v400, 0.0
  %v544 = vmax.f32 %v403, 0.0
  %v545 = vmax.f32 %v405, 0.0
  %v546 = vmax.f32 %v408, 0.0
  %v547 = vmax.f32 %v410, 0.0
  %v548 = vmax.f32 %v413, 0.0
  %v549 = vmax.f32 %v415, 0.0
  %v550 = vmax.f32 %v418, 0.0
  %v551 = vmax.f32 %v420, 0.0
  %v552 = vmax.f32 %v423, 0.0
  %v553 = vmax.f32 %v425, 0.0
  %v554 = vmax.f32 %v428, 0.0
  %v555 = vmax.f32 %v430, 0.0
  %v556 = vmax.f32 %v433, 0.0
  %v557 = vmax.f32 %v435, 0.0
  %v558 = vmax.f32 %v438, 0.0
  %v559 = vmax.f32 %v440, 0.0
  %v560 = vmax.f32 %v443, 0.0
  %v561 = vmax.f32 %v445, 0.0
  %v562 = vmax.f32 %v448, 0.0
  %v563 = vmax.f32 %v450, 0.0
  %v564 = vmax.f32 %v453, 0.0
  %v565 = vmax.f32 %v455, 0.0
  %v566 = vmax.f32 %v458, 0.0
  %v567 = vmax.f32 %v460, 0.0
  %v568 = vmax.f32 %v463, 0.0
  %v569 = vmax.f32 %v465, 0.0
  %v570 = vmax.f32 %v468, 0.0
  %v571 = vmax.f32 %v470, 0.0
  %v572 = vmax.f32 %v473, 0.0
  %v573 = vmax.f32 %v475, 0.0
  %v574 = vmax.f32 %v478, 0.0
  %v575 = vmax.f32 %v480, 0.0
  %v576 = vmax.f32 %v483, 0.0
  %v577 = vmax.f32 %v485, 0.0
  %v578 = vmax.f32 %v488, 0.0
  %v579 = vmax.f32 %v490, 0.0
  %v580 = vmax.f32 %v493, 0.0
  %v581 = vmax.f32 %v495, 0.0
  %v582 = vmax.f32 %v498, 0.0
  %v583 = vmax.f32 %v500, 0.0
  %v584 = vmax.f32 %v503, 0.0
  %v585 = vmax.f32 %v505, 0.0
  %v586 = vmax.f32 %v508, 0.0
  %v587 = vmax.f32 %v510, 0.0
  %v588 = vmax.f32 %v513, 0.0
  %v589 = vmax.f32 %v515, 0.0
  %v590 = vmax.f32 %v518, 0.0
  %v591 = vmax.f32 %v520, 0.0
  %v592 = vmax.f32 %v523, 0.0
  %v593 = vmax.f32 %v525, 0.0
  %v594 = vmax.f32 %v528, 0.0
  %v595 = vmax.f32 %v530, 0.0
  %v596 = vpack.c.bf16 %v533, %v532
  %v597 = vpack.c.bf16 %v535, %v534
  %v598 = vpack.c.bf16 %v537, %v536
  %v599 = vpack.c.bf16 %v539, %v538
  %v600 = vpack.c.bf16 %v541, %v540
  %v601 = vpack.c.bf16 %v543, %v542
  %v602 = vpack.c.bf16 %v545, %v544
  %v603 = vpack.c.bf16 %v547, %v546
  %v604 = vpack.c.bf16 %v549, %v548
  %v605 = vpack.c.bf16 %v551, %v550
  %v606 = vpack.c.bf16 %v553, %v552
  %v607 = vpack.c.bf16 %v555, %v554
  %v608 = vpack.c.bf16 %v557, %v556
  %v609 = vpack.c.bf16 %v559, %v558
  %v610 = vpack.c.bf16 %v561, %v560
  %v611 = vpack.c.bf16 %v563, %v562
  %v612 = vpack.c.bf16 %v565, %v564
  %v613 = vpack.c.bf16 %v567, %v566
  %v614 = vpack.c.bf16 %v569, %v568
  %v615 = vpack.c.bf16 %v571, %v570
  %v616 = vpack.c.bf16 %v573, %v572
  %v617 = vpack.c.bf16 %v575, %v574
  %v618 = vpack.c.bf16 %v577, %v576
  %v619 = vpack.c.bf16 %v579, %v578
  %v620 = vpack.c.bf16 %v581, %v580
  %v621 = vpack.c.bf16 %v583, %v582
  %v622 = vpack.c.bf16 %v585, %v584
  %v623 = vpack.c.bf16 %v587, %v586
  %v624 = vpack.c.bf16 %v589, %v588
  %v625 = vpack.c.bf16 %v591, %v590
  %v626 = vpack.c.bf16 %v593, %v592
  %v627 = vpack.c.bf16 %v595, %v594
  %v628 = vld [vmem:[%s3] sm:$0xf]
  %v629 = vld [vmem:[%s3 + $0x4] sm:$0xf]
  %v630 = vld [vmem:[%s3 + $0x8] sm:$0xf]
  %v631 = vld [vmem:[%s3 + $0xc] sm:$0xf]
  %v632 = vld [vmem:[%s3 + $0x10] sm:$0xf]
  %v633 = vld [vmem:[%s3 + $0x14] sm:$0xf]
  %v634 = vld [vmem:[%s3 + $0x18] sm:$0xf]
  %v635 = vld [vmem:[%s3 + $0x1c] sm:$0xf]
  %v636 = vld [vmem:[%s4] sm:$0x1]
  %v638 = vperm.slane %v636, 0
  %v648 = vunpack.c.l.b16 %v628
  %v649 = vunpack.c.l.b16 %v629
  %v650 = vunpack.c.l.b16 %v630
  %v651 = vunpack.c.l.b16 %v631
  %v652 = vunpack.c.l.b16 %v632
  %v653 = vunpack.c.l.b16 %v633
  %v654 = vunpack.c.l.b16 %v634
  %v655 = vunpack.c.l.b16 %v635
  %v656 = vpack.c.b16 %v649, %v648
  %v657 = vpack.c.b16 %v651, %v650
  %v658 = vpack.c.b16 %v653, %v652
  %v659 = vpack.c.b16 %v655, %v654
  %vm664 = vcmask 523264
  %v666 = vsel %vm664, %v596, 0
  %v669 = vsel %vm664, %v597, 0
  %v672 = vsel %vm664, %v598, 0
  %v675 = vsel %vm664, %v599, 0
  %v678 = vsel %vm664, %v600, 0
  %v681 = vsel %vm664, %v601, 0
  %v684 = vsel %vm664, %v602, 0
  %v687 = vsel %vm664, %v603, 0
  %v690 = vsel %vm664, %v604, 0
  %v693 = vsel %vm664, %v605, 0
  %v696 = vsel %vm664, %v606, 0
  %v699 = vsel %vm664, %v607, 0
  %v702 = vsel %vm664, %v608, 0
  %v705 = vsel %vm664, %v609, 0
  %v708 = vsel %vm664, %v610, 0
  %v711 = vsel %vm664, %v611, 0
  %v714 = vsel %vm664, %v612, 0
  %v717 = vsel %vm664, %v613, 0
  %v720 = vsel %vm664, %v614, 0
  %v723 = vsel %vm664, %v615, 0
  %v726 = vsel %vm664, %v616, 0
  %v729 = vsel %vm664, %v617, 0
  %v732 = vsel %vm664, %v618, 0
  %v735 = vsel %vm664, %v619, 0
  %v738 = vsel %vm664, %v620, 0
  %v741 = vsel %vm664, %v621, 0
  %v744 = vsel %vm664, %v622, 0
  %v747 = vsel %vm664, %v623, 0
  %v750 = vsel %vm664, %v624, 0
  %v753 = vsel %vm664, %v625, 0
  %v756 = vsel %vm664, %v626, 0
  %v759 = vsel %vm664, %v627, 0
  %761 = vmatpush.bf16.msra.mxu0 0
  %762 = vmatpush.bf16.msra.mxu0 0
  %763 = vmatpush.bf16.msra.mxu0 0
  %764 = vmatpush.bf16.msra.mxu0 0
  %765 = vmatpush.bf16.msra.mxu0 %v659
  %766 = vmatpush.bf16.msra.mxu0 %v658
  %767 = vmatpush.bf16.msra.mxu0 %v657
  %768 = vmatpush.bf16.msra.mxu0 %v656
  %769 = vmatmul.bf16.gmra.mxu0 %v666
  %v770 = vpop.f32.mrf.mxu0
  %v771 = vadd.f32 %v638, %v770
  %v772 = vpop.f32.mrf.mxu0
  %v773 = vadd.f32 %v638, %v772
  %774 = vmatmul.bf16.gmra.mxu0 %v669
  %v775 = vpop.f32.mrf.mxu0
  %v776 = vadd.f32 %v638, %v775
  %v777 = vpop.f32.mrf.mxu0
  %v778 = vadd.f32 %v638, %v777
  %779 = vmatmul.bf16.gmra.mxu0 %v672
  %v780 = vpop.f32.mrf.mxu0
  %v781 = vadd.f32 %v638, %v780
  %v782 = vpop.f32.mrf.mxu0
  %v783 = vadd.f32 %v638, %v782
  %784 = vmatmul.bf16.gmra.mxu0 %v675
  %v785 = vpop.f32.mrf.mxu0
  %v786 = vadd.f32 %v638, %v785
  %v787 = vpop.f32.mrf.mxu0
  %v788 = vadd.f32 %v638, %v787
  %789 = vmatmul.bf16.gmra.mxu0 %v678
  %v790 = vpop.f32.mrf.mxu0
  %v791 = vadd.f32 %v638, %v790
  %v792 = vpop.f32.mrf.mxu0
  %v793 = vadd.f32 %v638, %v792
  %794 = vmatmul.bf16.gmra.mxu0 %v681
  %v795 = vpop.f32.mrf.mxu0
  %v796 = vadd.f32 %v638, %v795
  %v797 = vpop.f32.mrf.mxu0
  %v798 = vadd.f32 %v638, %v797
  %799 = vmatmul.bf16.gmra.mxu0 %v684
  %v800 = vpop.f32.mrf.mxu0
  %v801 = vadd.f32 %v638, %v800
  %v802 = vpop.f32.mrf.mxu0
  %v803 = vadd.f32 %v638, %v802
  %804 = vmatmul.bf16.gmra.mxu0 %v687
  %v805 = vpop.f32.mrf.mxu0
  %v806 = vadd.f32 %v638, %v805
  %v807 = vpop.f32.mrf.mxu0
  %v808 = vadd.f32 %v638, %v807
  %809 = vmatmul.bf16.gmra.mxu0 %v690
  %v810 = vpop.f32.mrf.mxu0
  %v811 = vadd.f32 %v638, %v810
  %v812 = vpop.f32.mrf.mxu0
  %v813 = vadd.f32 %v638, %v812
  %814 = vmatmul.bf16.gmra.mxu0 %v693
  %v815 = vpop.f32.mrf.mxu0
  %v816 = vadd.f32 %v638, %v815
  %v817 = vpop.f32.mrf.mxu0
  %v818 = vadd.f32 %v638, %v817
  %819 = vmatmul.bf16.gmra.mxu0 %v696
  %v820 = vpop.f32.mrf.mxu0
  %v821 = vadd.f32 %v638, %v820
  %v822 = vpop.f32.mrf.mxu0
  %v823 = vadd.f32 %v638, %v822
  %824 = vmatmul.bf16.gmra.mxu0 %v699
  %v825 = vpop.f32.mrf.mxu0
  %v826 = vadd.f32 %v638, %v825
  %v827 = vpop.f32.mrf.mxu0
  %v828 = vadd.f32 %v638, %v827
  %829 = vmatmul.bf16.gmra.mxu0 %v702
  %v830 = vpop.f32.mrf.mxu0
  %v831 = vadd.f32 %v638, %v830
  %v832 = vpop.f32.mrf.mxu0
  %v833 = vadd.f32 %v638, %v832
  %834 = vmatmul.bf16.gmra.mxu0 %v705
  %v835 = vpop.f32.mrf.mxu0
  %v836 = vadd.f32 %v638, %v835
  %v837 = vpop.f32.mrf.mxu0
  %v838 = vadd.f32 %v638, %v837
  %839 = vmatmul.bf16.gmra.mxu0 %v708
  %v840 = vpop.f32.mrf.mxu0
  %v841 = vadd.f32 %v638, %v840
  %v842 = vpop.f32.mrf.mxu0
  %v843 = vadd.f32 %v638, %v842
  %844 = vmatmul.bf16.gmra.mxu0 %v711
  %v845 = vpop.f32.mrf.mxu0
  %v846 = vadd.f32 %v638, %v845
  %v847 = vpop.f32.mrf.mxu0
  %v848 = vadd.f32 %v638, %v847
  %849 = vmatmul.bf16.gmra.mxu0 %v714
  %v850 = vpop.f32.mrf.mxu0
  %v851 = vadd.f32 %v638, %v850
  %v852 = vpop.f32.mrf.mxu0
  %v853 = vadd.f32 %v638, %v852
  %854 = vmatmul.bf16.gmra.mxu0 %v717
  %v855 = vpop.f32.mrf.mxu0
  %v856 = vadd.f32 %v638, %v855
  %v857 = vpop.f32.mrf.mxu0
  %v858 = vadd.f32 %v638, %v857
  %859 = vmatmul.bf16.gmra.mxu0 %v720
  %v860 = vpop.f32.mrf.mxu0
  %v861 = vadd.f32 %v638, %v860
  %v862 = vpop.f32.mrf.mxu0
  %v863 = vadd.f32 %v638, %v862
  %864 = vmatmul.bf16.gmra.mxu0 %v723
  %v865 = vpop.f32.mrf.mxu0
  %v866 = vadd.f32 %v638, %v865
  %v867 = vpop.f32.mrf.mxu0
  %v868 = vadd.f32 %v638, %v867
  %869 = vmatmul.bf16.gmra.mxu0 %v726
  %v870 = vpop.f32.mrf.mxu0
  %v871 = vadd.f32 %v638, %v870
  %v872 = vpop.f32.mrf.mxu0
  %v873 = vadd.f32 %v638, %v872
  %874 = vmatmul.bf16.gmra.mxu0 %v729
  %v875 = vpop.f32.mrf.mxu0
  %v876 = vadd.f32 %v638, %v875
  %v877 = vpop.f32.mrf.mxu0
  %v878 = vadd.f32 %v638, %v877
  %879 = vmatmul.bf16.gmra.mxu0 %v732
  %v880 = vpop.f32.mrf.mxu0
  %v881 = vadd.f32 %v638, %v880
  %v882 = vpop.f32.mrf.mxu0
  %v883 = vadd.f32 %v638, %v882
  %884 = vmatmul.bf16.gmra.mxu0 %v735
  %v885 = vpop.f32.mrf.mxu0
  %v886 = vadd.f32 %v638, %v885
  %v887 = vpop.f32.mrf.mxu0
  %v888 = vadd.f32 %v638, %v887
  %889 = vmatmul.bf16.gmra.mxu0 %v738
  %v890 = vpop.f32.mrf.mxu0
  %v891 = vadd.f32 %v638, %v890
  %v892 = vpop.f32.mrf.mxu0
  %v893 = vadd.f32 %v638, %v892
  %894 = vmatmul.bf16.gmra.mxu0 %v741
  %v895 = vpop.f32.mrf.mxu0
  %v896 = vadd.f32 %v638, %v895
  %v897 = vpop.f32.mrf.mxu0
  %v898 = vadd.f32 %v638, %v897
  %899 = vmatmul.bf16.gmra.mxu0 %v744
  %v900 = vpop.f32.mrf.mxu0
  %v901 = vadd.f32 %v638, %v900
  %v902 = vpop.f32.mrf.mxu0
  %v903 = vadd.f32 %v638, %v902
  %904 = vmatmul.bf16.gmra.mxu0 %v747
  %v905 = vpop.f32.mrf.mxu0
  %v906 = vadd.f32 %v638, %v905
  %v907 = vpop.f32.mrf.mxu0
  %v908 = vadd.f32 %v638, %v907
  %909 = vmatmul.bf16.gmra.mxu0 %v750
  %v910 = vpop.f32.mrf.mxu0
  %v911 = vadd.f32 %v638, %v910
  %v912 = vpop.f32.mrf.mxu0
  %v913 = vadd.f32 %v638, %v912
  %914 = vmatmul.bf16.gmra.mxu0 %v753
  %v915 = vpop.f32.mrf.mxu0
  %v916 = vadd.f32 %v638, %v915
  %v917 = vpop.f32.mrf.mxu0
  %v918 = vadd.f32 %v638, %v917
  %919 = vmatmul.bf16.gmra.mxu0 %v756
  %v920 = vpop.f32.mrf.mxu0
  %v921 = vadd.f32 %v638, %v920
  %v922 = vpop.f32.mrf.mxu0
  %v923 = vadd.f32 %v638, %v922
  %924 = vmatmul.bf16.gmra.mxu0 %v759
  %v925 = vpop.f32.mrf.mxu0
  %v926 = vadd.f32 %v638, %v925
  %v927 = vpop.f32.mrf.mxu0
  %v928 = vadd.f32 %v638, %v927
  %929 = vdwg.mxu0
  %v930 = vmax.f32 %v771, 0.0
  %v931 = vmax.f32 %v773, 0.0
  %v932 = vmax.f32 %v776, 0.0
  %v933 = vmax.f32 %v778, 0.0
  %v934 = vmax.f32 %v781, 0.0
  %v935 = vmax.f32 %v783, 0.0
  %v936 = vmax.f32 %v786, 0.0
  %v937 = vmax.f32 %v788, 0.0
  %v938 = vmax.f32 %v791, 0.0
  %v939 = vmax.f32 %v793, 0.0
  %v940 = vmax.f32 %v796, 0.0
  %v941 = vmax.f32 %v798, 0.0
  %v942 = vmax.f32 %v801, 0.0
  %v943 = vmax.f32 %v803, 0.0
  %v944 = vmax.f32 %v806, 0.0
  %v945 = vmax.f32 %v808, 0.0
  %v946 = vmax.f32 %v811, 0.0
  %v947 = vmax.f32 %v813, 0.0
  %v948 = vmax.f32 %v816, 0.0
  %v949 = vmax.f32 %v818, 0.0
  %v950 = vmax.f32 %v821, 0.0
  %v951 = vmax.f32 %v823, 0.0
  %v952 = vmax.f32 %v826, 0.0
  %v953 = vmax.f32 %v828, 0.0
  %v954 = vmax.f32 %v831, 0.0
  %v955 = vmax.f32 %v833, 0.0
  %v956 = vmax.f32 %v836, 0.0
  %v957 = vmax.f32 %v838, 0.0
  %v958 = vmax.f32 %v841, 0.0
  %v959 = vmax.f32 %v843, 0.0
  %v960 = vmax.f32 %v846, 0.0
  %v961 = vmax.f32 %v848, 0.0
  %v962 = vmax.f32 %v851, 0.0
  %v963 = vmax.f32 %v853, 0.0
  %v964 = vmax.f32 %v856, 0.0
  %v965 = vmax.f32 %v858, 0.0
  %v966 = vmax.f32 %v861, 0.0
  %v967 = vmax.f32 %v863, 0.0
  %v968 = vmax.f32 %v866, 0.0
  %v969 = vmax.f32 %v868, 0.0
  %v970 = vmax.f32 %v871, 0.0
  %v971 = vmax.f32 %v873, 0.0
  %v972 = vmax.f32 %v876, 0.0
  %v973 = vmax.f32 %v878, 0.0
  %v974 = vmax.f32 %v881, 0.0
  %v975 = vmax.f32 %v883, 0.0
  %v976 = vmax.f32 %v886, 0.0
  %v977 = vmax.f32 %v888, 0.0
  %v978 = vmax.f32 %v891, 0.0
  %v979 = vmax.f32 %v893, 0.0
  %v980 = vmax.f32 %v896, 0.0
  %v981 = vmax.f32 %v898, 0.0
  %v982 = vmax.f32 %v901, 0.0
  %v983 = vmax.f32 %v903, 0.0
  %v984 = vmax.f32 %v906, 0.0
  %v985 = vmax.f32 %v908, 0.0
  %v986 = vmax.f32 %v911, 0.0
  %v987 = vmax.f32 %v913, 0.0
  %v988 = vmax.f32 %v916, 0.0
  %v989 = vmax.f32 %v918, 0.0
  %v990 = vmax.f32 %v921, 0.0
  %v991 = vmax.f32 %v923, 0.0
  %v992 = vmax.f32 %v926, 0.0
  %v993 = vmax.f32 %v928, 0.0
  %v994 = vpack.c.bf16 %v931, %v930
  %v995 = vpack.c.bf16 %v933, %v932
  %v996 = vpack.c.bf16 %v935, %v934
  %v997 = vpack.c.bf16 %v937, %v936
  %v998 = vpack.c.bf16 %v939, %v938
  %v999 = vpack.c.bf16 %v941, %v940
  %v1000 = vpack.c.bf16 %v943, %v942
  %v1001 = vpack.c.bf16 %v945, %v944
  %v1002 = vpack.c.bf16 %v947, %v946
  %v1003 = vpack.c.bf16 %v949, %v948
  %v1004 = vpack.c.bf16 %v951, %v950
  %v1005 = vpack.c.bf16 %v953, %v952
  %v1006 = vpack.c.bf16 %v955, %v954
  %v1007 = vpack.c.bf16 %v957, %v956
  %v1008 = vpack.c.bf16 %v959, %v958
  %v1009 = vpack.c.bf16 %v961, %v960
  %v1010 = vpack.c.bf16 %v963, %v962
  %v1011 = vpack.c.bf16 %v965, %v964
  %v1012 = vpack.c.bf16 %v967, %v966
  %v1013 = vpack.c.bf16 %v969, %v968
  %v1014 = vpack.c.bf16 %v971, %v970
  %v1015 = vpack.c.bf16 %v973, %v972
  %v1016 = vpack.c.bf16 %v975, %v974
  %v1017 = vpack.c.bf16 %v977, %v976
  %v1018 = vpack.c.bf16 %v979, %v978
  %v1019 = vpack.c.bf16 %v981, %v980
  %v1020 = vpack.c.bf16 %v983, %v982
  %v1021 = vpack.c.bf16 %v985, %v984
  %v1022 = vpack.c.bf16 %v987, %v986
  %v1023 = vpack.c.bf16 %v989, %v988
  %v1024 = vpack.c.bf16 %v991, %v990
  %v1025 = vpack.c.bf16 %v993, %v992
  %v1026 = vld [vmem:[%s5] sm:$0xf]
  %v1027 = vld [vmem:[%s5 + $0x4] sm:$0xf]
  %v1028 = vld [vmem:[%s5 + $0x8] sm:$0xf]
  %v1029 = vld [vmem:[%s5 + $0xc] sm:$0xf]
  %v1030 = vld [vmem:[%s5 + $0x10] sm:$0xf]
  %v1031 = vld [vmem:[%s5 + $0x14] sm:$0xf]
  %v1032 = vld [vmem:[%s5 + $0x18] sm:$0xf]
  %v1033 = vld [vmem:[%s5 + $0x1c] sm:$0xf]
  %v1034 = vld [vmem:[%s6] sm:$0x1]
  %v1036 = vperm.slane %v1034, 0
  %v1046 = vunpack.c.l.b16 %v1026
  %v1047 = vunpack.c.l.b16 %v1027
  %v1048 = vunpack.c.l.b16 %v1028
  %v1049 = vunpack.c.l.b16 %v1029
  %v1050 = vunpack.c.l.b16 %v1030
  %v1051 = vunpack.c.l.b16 %v1031
  %v1052 = vunpack.c.l.b16 %v1032
  %v1053 = vunpack.c.l.b16 %v1033
  %v1054 = vpack.c.b16 %v1047, %v1046
  %v1055 = vpack.c.b16 %v1049, %v1048
  %v1056 = vpack.c.b16 %v1051, %v1050
  %v1057 = vpack.c.b16 %v1053, %v1052
  %v1063 = vsel %vm664, %v994, 0
  %v1066 = vsel %vm664, %v995, 0
  %v1069 = vsel %vm664, %v996, 0
  %v1072 = vsel %vm664, %v997, 0
  %v1075 = vsel %vm664, %v998, 0
  %v1078 = vsel %vm664, %v999, 0
  %v1081 = vsel %vm664, %v1000, 0
  %v1084 = vsel %vm664, %v1001, 0
  %v1087 = vsel %vm664, %v1002, 0
  %v1090 = vsel %vm664, %v1003, 0
  %v1093 = vsel %vm664, %v1004, 0
  %v1096 = vsel %vm664, %v1005, 0
  %v1099 = vsel %vm664, %v1006, 0
  %v1102 = vsel %vm664, %v1007, 0
  %v1105 = vsel %vm664, %v1008, 0
  %v1108 = vsel %vm664, %v1009, 0
  %v1111 = vsel %vm664, %v1010, 0
  %v1114 = vsel %vm664, %v1011, 0
  %v1117 = vsel %vm664, %v1012, 0
  %v1120 = vsel %vm664, %v1013, 0
  %v1123 = vsel %vm664, %v1014, 0
  %v1126 = vsel %vm664, %v1015, 0
  %v1129 = vsel %vm664, %v1016, 0
  %v1132 = vsel %vm664, %v1017, 0
  %v1135 = vsel %vm664, %v1018, 0
  %v1138 = vsel %vm664, %v1019, 0
  %v1141 = vsel %vm664, %v1020, 0
  %v1144 = vsel %vm664, %v1021, 0
  %v1147 = vsel %vm664, %v1022, 0
  %v1150 = vsel %vm664, %v1023, 0
  %v1153 = vsel %vm664, %v1024, 0
  %v1156 = vsel %vm664, %v1025, 0
  %1158 = vmatpush.bf16.msra.mxu0 0
  %1159 = vmatpush.bf16.msra.mxu0 0
  %1160 = vmatpush.bf16.msra.mxu0 0
  %1161 = vmatpush.bf16.msra.mxu0 0
  %1162 = vmatpush.bf16.msra.mxu0 %v1057
  %1163 = vmatpush.bf16.msra.mxu0 %v1056
  %1164 = vmatpush.bf16.msra.mxu0 %v1055
  %1165 = vmatpush.bf16.msra.mxu0 %v1054
  %1166 = vmatmul.bf16.gmra.mxu0 %v1063
  %v1167 = vpop.f32.mrf.mxu0
  %v1168 = vadd.f32 %v1036, %v1167
  %v1169 = vpop.f32.mrf.mxu0
  %v1170 = vadd.f32 %v1036, %v1169
  %1171 = vmatmul.bf16.gmra.mxu0 %v1066
  %v1172 = vpop.f32.mrf.mxu0
  %v1173 = vadd.f32 %v1036, %v1172
  %v1174 = vpop.f32.mrf.mxu0
  %v1175 = vadd.f32 %v1036, %v1174
  %1176 = vmatmul.bf16.gmra.mxu0 %v1069
  %v1177 = vpop.f32.mrf.mxu0
  %v1178 = vadd.f32 %v1036, %v1177
  %v1179 = vpop.f32.mrf.mxu0
  %v1180 = vadd.f32 %v1036, %v1179
  %1181 = vmatmul.bf16.gmra.mxu0 %v1072
  %v1182 = vpop.f32.mrf.mxu0
  %v1183 = vadd.f32 %v1036, %v1182
  %v1184 = vpop.f32.mrf.mxu0
  %v1185 = vadd.f32 %v1036, %v1184
  %1186 = vmatmul.bf16.gmra.mxu0 %v1075
  %v1187 = vpop.f32.mrf.mxu0
  %v1188 = vadd.f32 %v1036, %v1187
  %v1189 = vpop.f32.mrf.mxu0
  %v1190 = vadd.f32 %v1036, %v1189
  %1191 = vmatmul.bf16.gmra.mxu0 %v1078
  %v1192 = vpop.f32.mrf.mxu0
  %v1193 = vadd.f32 %v1036, %v1192
  %v1194 = vpop.f32.mrf.mxu0
  %v1195 = vadd.f32 %v1036, %v1194
  %1196 = vmatmul.bf16.gmra.mxu0 %v1081
  %v1197 = vpop.f32.mrf.mxu0
  %v1198 = vadd.f32 %v1036, %v1197
  %v1199 = vpop.f32.mrf.mxu0
  %v1200 = vadd.f32 %v1036, %v1199
  %1201 = vmatmul.bf16.gmra.mxu0 %v1084
  %v1202 = vpop.f32.mrf.mxu0
  %v1203 = vadd.f32 %v1036, %v1202
  %v1204 = vpop.f32.mrf.mxu0
  %v1205 = vadd.f32 %v1036, %v1204
  %1206 = vmatmul.bf16.gmra.mxu0 %v1087
  %v1207 = vpop.f32.mrf.mxu0
  %v1208 = vadd.f32 %v1036, %v1207
  %v1209 = vpop.f32.mrf.mxu0
  %v1210 = vadd.f32 %v1036, %v1209
  %1211 = vmatmul.bf16.gmra.mxu0 %v1090
  %v1212 = vpop.f32.mrf.mxu0
  %v1213 = vadd.f32 %v1036, %v1212
  %v1214 = vpop.f32.mrf.mxu0
  %v1215 = vadd.f32 %v1036, %v1214
  %1216 = vmatmul.bf16.gmra.mxu0 %v1093
  %v1217 = vpop.f32.mrf.mxu0
  %v1218 = vadd.f32 %v1036, %v1217
  %v1219 = vpop.f32.mrf.mxu0
  %v1220 = vadd.f32 %v1036, %v1219
  %1221 = vmatmul.bf16.gmra.mxu0 %v1096
  %v1222 = vpop.f32.mrf.mxu0
  %v1223 = vadd.f32 %v1036, %v1222
  %v1224 = vpop.f32.mrf.mxu0
  %v1225 = vadd.f32 %v1036, %v1224
  %1226 = vmatmul.bf16.gmra.mxu0 %v1099
  %v1227 = vpop.f32.mrf.mxu0
  %v1228 = vadd.f32 %v1036, %v1227
  %v1229 = vpop.f32.mrf.mxu0
  %v1230 = vadd.f32 %v1036, %v1229
  %1231 = vmatmul.bf16.gmra.mxu0 %v1102
  %v1232 = vpop.f32.mrf.mxu0
  %v1233 = vadd.f32 %v1036, %v1232
  %v1234 = vpop.f32.mrf.mxu0
  %v1235 = vadd.f32 %v1036, %v1234
  %1236 = vmatmul.bf16.gmra.mxu0 %v1105
  %v1237 = vpop.f32.mrf.mxu0
  %v1238 = vadd.f32 %v1036, %v1237
  %v1239 = vpop.f32.mrf.mxu0
  %v1240 = vadd.f32 %v1036, %v1239
  %1241 = vmatmul.bf16.gmra.mxu0 %v1108
  %v1242 = vpop.f32.mrf.mxu0
  %v1243 = vadd.f32 %v1036, %v1242
  %v1244 = vpop.f32.mrf.mxu0
  %v1245 = vadd.f32 %v1036, %v1244
  %1246 = vmatmul.bf16.gmra.mxu0 %v1111
  %v1247 = vpop.f32.mrf.mxu0
  %v1248 = vadd.f32 %v1036, %v1247
  %v1249 = vpop.f32.mrf.mxu0
  %v1250 = vadd.f32 %v1036, %v1249
  %1251 = vmatmul.bf16.gmra.mxu0 %v1114
  %v1252 = vpop.f32.mrf.mxu0
  %v1253 = vadd.f32 %v1036, %v1252
  %v1254 = vpop.f32.mrf.mxu0
  %v1255 = vadd.f32 %v1036, %v1254
  %1256 = vmatmul.bf16.gmra.mxu0 %v1117
  %v1257 = vpop.f32.mrf.mxu0
  %v1258 = vadd.f32 %v1036, %v1257
  %v1259 = vpop.f32.mrf.mxu0
  %v1260 = vadd.f32 %v1036, %v1259
  %1261 = vmatmul.bf16.gmra.mxu0 %v1120
  %v1262 = vpop.f32.mrf.mxu0
  %v1263 = vadd.f32 %v1036, %v1262
  %v1264 = vpop.f32.mrf.mxu0
  %v1265 = vadd.f32 %v1036, %v1264
  %1266 = vmatmul.bf16.gmra.mxu0 %v1123
  %v1267 = vpop.f32.mrf.mxu0
  %v1268 = vadd.f32 %v1036, %v1267
  %v1269 = vpop.f32.mrf.mxu0
  %v1270 = vadd.f32 %v1036, %v1269
  %1271 = vmatmul.bf16.gmra.mxu0 %v1126
  %v1272 = vpop.f32.mrf.mxu0
  %v1273 = vadd.f32 %v1036, %v1272
  %v1274 = vpop.f32.mrf.mxu0
  %v1275 = vadd.f32 %v1036, %v1274
  %1276 = vmatmul.bf16.gmra.mxu0 %v1129
  %v1277 = vpop.f32.mrf.mxu0
  %v1278 = vadd.f32 %v1036, %v1277
  %v1279 = vpop.f32.mrf.mxu0
  %v1280 = vadd.f32 %v1036, %v1279
  %1281 = vmatmul.bf16.gmra.mxu0 %v1132
  %v1282 = vpop.f32.mrf.mxu0
  %v1283 = vadd.f32 %v1036, %v1282
  %v1284 = vpop.f32.mrf.mxu0
  %v1285 = vadd.f32 %v1036, %v1284
  %1286 = vmatmul.bf16.gmra.mxu0 %v1135
  %v1287 = vpop.f32.mrf.mxu0
  %v1288 = vadd.f32 %v1036, %v1287
  %v1289 = vpop.f32.mrf.mxu0
  %v1290 = vadd.f32 %v1036, %v1289
  %1291 = vmatmul.bf16.gmra.mxu0 %v1138
  %v1292 = vpop.f32.mrf.mxu0
  %v1293 = vadd.f32 %v1036, %v1292
  %v1294 = vpop.f32.mrf.mxu0
  %v1295 = vadd.f32 %v1036, %v1294
  %1296 = vmatmul.bf16.gmra.mxu0 %v1141
  %v1297 = vpop.f32.mrf.mxu0
  %v1298 = vadd.f32 %v1036, %v1297
  %v1299 = vpop.f32.mrf.mxu0
  %v1300 = vadd.f32 %v1036, %v1299
  %1301 = vmatmul.bf16.gmra.mxu0 %v1144
  %v1302 = vpop.f32.mrf.mxu0
  %v1303 = vadd.f32 %v1036, %v1302
  %v1304 = vpop.f32.mrf.mxu0
  %v1305 = vadd.f32 %v1036, %v1304
  %1306 = vmatmul.bf16.gmra.mxu0 %v1147
  %v1307 = vpop.f32.mrf.mxu0
  %v1308 = vadd.f32 %v1036, %v1307
  %v1309 = vpop.f32.mrf.mxu0
  %v1310 = vadd.f32 %v1036, %v1309
  %1311 = vmatmul.bf16.gmra.mxu0 %v1150
  %v1312 = vpop.f32.mrf.mxu0
  %v1313 = vadd.f32 %v1036, %v1312
  %v1314 = vpop.f32.mrf.mxu0
  %v1315 = vadd.f32 %v1036, %v1314
  %1316 = vmatmul.bf16.gmra.mxu0 %v1153
  %v1317 = vpop.f32.mrf.mxu0
  %v1318 = vadd.f32 %v1036, %v1317
  %v1319 = vpop.f32.mrf.mxu0
  %v1320 = vadd.f32 %v1036, %v1319
  %1321 = vmatmul.bf16.gmra.mxu0 %v1156
  %v1322 = vpop.f32.mrf.mxu0
  %v1323 = vadd.f32 %v1036, %v1322
  %v1324 = vpop.f32.mrf.mxu0
  %v1325 = vadd.f32 %v1036, %v1324
  %1326 = vdwg.mxu0
  %v1327 = vmax.f32 %v1168, 0.0
  %v1328 = vmax.f32 %v1170, 0.0
  %v1329 = vmax.f32 %v1173, 0.0
  %v1330 = vmax.f32 %v1175, 0.0
  %v1331 = vmax.f32 %v1178, 0.0
  %v1332 = vmax.f32 %v1180, 0.0
  %v1333 = vmax.f32 %v1183, 0.0
  %v1334 = vmax.f32 %v1185, 0.0
  %v1335 = vmax.f32 %v1188, 0.0
  %v1336 = vmax.f32 %v1190, 0.0
  %v1337 = vmax.f32 %v1193, 0.0
  %v1338 = vmax.f32 %v1195, 0.0
  %v1339 = vmax.f32 %v1198, 0.0
  %v1340 = vmax.f32 %v1200, 0.0
  %v1341 = vmax.f32 %v1203, 0.0
  %v1342 = vmax.f32 %v1205, 0.0
  %v1343 = vmax.f32 %v1208, 0.0
  %v1344 = vmax.f32 %v1210, 0.0
  %v1345 = vmax.f32 %v1213, 0.0
  %v1346 = vmax.f32 %v1215, 0.0
  %v1347 = vmax.f32 %v1218, 0.0
  %v1348 = vmax.f32 %v1220, 0.0
  %v1349 = vmax.f32 %v1223, 0.0
  %v1350 = vmax.f32 %v1225, 0.0
  %v1351 = vmax.f32 %v1228, 0.0
  %v1352 = vmax.f32 %v1230, 0.0
  %v1353 = vmax.f32 %v1233, 0.0
  %v1354 = vmax.f32 %v1235, 0.0
  %v1355 = vmax.f32 %v1238, 0.0
  %v1356 = vmax.f32 %v1240, 0.0
  %v1357 = vmax.f32 %v1243, 0.0
  %v1358 = vmax.f32 %v1245, 0.0
  %v1359 = vmax.f32 %v1248, 0.0
  %v1360 = vmax.f32 %v1250, 0.0
  %v1361 = vmax.f32 %v1253, 0.0
  %v1362 = vmax.f32 %v1255, 0.0
  %v1363 = vmax.f32 %v1258, 0.0
  %v1364 = vmax.f32 %v1260, 0.0
  %v1365 = vmax.f32 %v1263, 0.0
  %v1366 = vmax.f32 %v1265, 0.0
  %v1367 = vmax.f32 %v1268, 0.0
  %v1368 = vmax.f32 %v1270, 0.0
  %v1369 = vmax.f32 %v1273, 0.0
  %v1370 = vmax.f32 %v1275, 0.0
  %v1371 = vmax.f32 %v1278, 0.0
  %v1372 = vmax.f32 %v1280, 0.0
  %v1373 = vmax.f32 %v1283, 0.0
  %v1374 = vmax.f32 %v1285, 0.0
  %v1375 = vmax.f32 %v1288, 0.0
  %v1376 = vmax.f32 %v1290, 0.0
  %v1377 = vmax.f32 %v1293, 0.0
  %v1378 = vmax.f32 %v1295, 0.0
  %v1379 = vmax.f32 %v1298, 0.0
  %v1380 = vmax.f32 %v1300, 0.0
  %v1381 = vmax.f32 %v1303, 0.0
  %v1382 = vmax.f32 %v1305, 0.0
  %v1383 = vmax.f32 %v1308, 0.0
  %v1384 = vmax.f32 %v1310, 0.0
  %v1385 = vmax.f32 %v1313, 0.0
  %v1386 = vmax.f32 %v1315, 0.0
  %v1387 = vmax.f32 %v1318, 0.0
  %v1388 = vmax.f32 %v1320, 0.0
  %v1389 = vmax.f32 %v1323, 0.0
  %v1390 = vmax.f32 %v1325, 0.0
  %v1391 = vpack.c.bf16 %v1328, %v1327
  %v1392 = vpack.c.bf16 %v1330, %v1329
  %v1393 = vpack.c.bf16 %v1332, %v1331
  %v1394 = vpack.c.bf16 %v1334, %v1333
  %v1395 = vpack.c.bf16 %v1336, %v1335
  %v1396 = vpack.c.bf16 %v1338, %v1337
  %v1397 = vpack.c.bf16 %v1340, %v1339
  %v1398 = vpack.c.bf16 %v1342, %v1341
  %v1399 = vpack.c.bf16 %v1344, %v1343
  %v1400 = vpack.c.bf16 %v1346, %v1345
  %v1401 = vpack.c.bf16 %v1348, %v1347
  %v1402 = vpack.c.bf16 %v1350, %v1349
  %v1403 = vpack.c.bf16 %v1352, %v1351
  %v1404 = vpack.c.bf16 %v1354, %v1353
  %v1405 = vpack.c.bf16 %v1356, %v1355
  %v1406 = vpack.c.bf16 %v1358, %v1357
  %v1407 = vpack.c.bf16 %v1360, %v1359
  %v1408 = vpack.c.bf16 %v1362, %v1361
  %v1409 = vpack.c.bf16 %v1364, %v1363
  %v1410 = vpack.c.bf16 %v1366, %v1365
  %v1411 = vpack.c.bf16 %v1368, %v1367
  %v1412 = vpack.c.bf16 %v1370, %v1369
  %v1413 = vpack.c.bf16 %v1372, %v1371
  %v1414 = vpack.c.bf16 %v1374, %v1373
  %v1415 = vpack.c.bf16 %v1376, %v1375
  %v1416 = vpack.c.bf16 %v1378, %v1377
  %v1417 = vpack.c.bf16 %v1380, %v1379
  %v1418 = vpack.c.bf16 %v1382, %v1381
  %v1419 = vpack.c.bf16 %v1384, %v1383
  %v1420 = vpack.c.bf16 %v1386, %v1385
  %v1421 = vpack.c.bf16 %v1388, %v1387
  %v1422 = vpack.c.bf16 %v1390, %v1389
  %v1423 = vld [vmem:[%s7] sm:$0xff]
  %v1424 = vld [vmem:[%s7 + $0x8] sm:$0xff]
  %v1425 = vld [vmem:[%s7 + $0x10] sm:$0xff]
  %v1426 = vld [vmem:[%s7 + $0x18] sm:$0xff]
  %v1427 = vld [vmem:[%s7 + $0x20] sm:$0xff]
  %v1428 = vld [vmem:[%s7 + $0x28] sm:$0xff]
  %v1429 = vld [vmem:[%s7 + $0x30] sm:$0xff]
  %v1430 = vld [vmem:[%s7 + $0x38] sm:$0xff]
  %v1431 = vld [vmem:[%s7 + $0x40] sm:$0xff]
  %v1432 = vld [vmem:[%s7 + $0x48] sm:$0xff]
  %v1433 = vld [vmem:[%s7 + $0x50] sm:$0xff]
  %v1434 = vld [vmem:[%s7 + $0x58] sm:$0xff]
  %v1435 = vld [vmem:[%s7 + $0x60] sm:$0xff]
  %v1436 = vld [vmem:[%s7 + $0x68] sm:$0xff]
  %v1437 = vld [vmem:[%s7 + $0x70] sm:$0xff]
  %v1438 = vld [vmem:[%s7 + $0x78] sm:$0xff]
  %v1439 = vld [vmem:[%s7 + $0x80] sm:$0xff]
  %v1440 = vld [vmem:[%s7 + $0x88] sm:$0xff]
  %v1441 = vld [vmem:[%s7 + $0x90] sm:$0xff]
  %v1442 = vld [vmem:[%s7 + $0x98] sm:$0xff]
  %v1443 = vld [vmem:[%s7 + $0xa0] sm:$0xff]
  %v1444 = vld [vmem:[%s7 + $0xa8] sm:$0xff]
  %v1445 = vld [vmem:[%s7 + $0xb0] sm:$0xff]
  %v1446 = vld [vmem:[%s7 + $0xb8] sm:$0xff]
  %v1447 = vld [vmem:[%s7 + $0xc0] sm:$0xff]
  %v1448 = vld [vmem:[%s7 + $0xc8] sm:$0xff]
  %v1449 = vld [vmem:[%s7 + $0xd0] sm:$0xff]
  %v1450 = vld [vmem:[%s7 + $0xd8] sm:$0xff]
  %v1451 = vld [vmem:[%s7 + $0xe0] sm:$0xff]
  %v1452 = vld [vmem:[%s7 + $0xe8] sm:$0xff]
  %v1453 = vld [vmem:[%s7 + $0xf0] sm:$0xff]
  %v1454 = vld [vmem:[%s7 + $0xf8] sm:$0xff]
  %v1455 = vld [vmem:[%s7 + $0x100] sm:$0xff]
  %v1456 = vld [vmem:[%s7 + $0x108] sm:$0xff]
  %v1457 = vld [vmem:[%s7 + $0x110] sm:$0xff]
  %v1458 = vld [vmem:[%s7 + $0x118] sm:$0xff]
  %v1459 = vld [vmem:[%s7 + $0x120] sm:$0xff]
  %v1460 = vld [vmem:[%s7 + $0x128] sm:$0xff]
  %v1461 = vld [vmem:[%s7 + $0x130] sm:$0xff]
  %v1462 = vld [vmem:[%s7 + $0x138] sm:$0xff]
  %v1463 = vld [vmem:[%s7 + $0x140] sm:$0xff]
  %v1464 = vld [vmem:[%s7 + $0x148] sm:$0xff]
  %v1465 = vld [vmem:[%s7 + $0x150] sm:$0xff]
  %v1466 = vld [vmem:[%s7 + $0x158] sm:$0xff]
  %v1467 = vld [vmem:[%s7 + $0x160] sm:$0xff]
  %v1468 = vld [vmem:[%s7 + $0x168] sm:$0xff]
  %v1469 = vld [vmem:[%s7 + $0x170] sm:$0xff]
  %v1470 = vld [vmem:[%s7 + $0x178] sm:$0xff]
  %v1471 = vld [vmem:[%s7 + $0x180] sm:$0xff]
  %v1472 = vld [vmem:[%s7 + $0x188] sm:$0xff]
  %v1473 = vld [vmem:[%s7 + $0x190] sm:$0xff]
  %v1474 = vld [vmem:[%s7 + $0x198] sm:$0xff]
  %v1475 = vld [vmem:[%s7 + $0x1a0] sm:$0xff]
  %v1476 = vld [vmem:[%s7 + $0x1a8] sm:$0xff]
  %v1477 = vld [vmem:[%s7 + $0x1b0] sm:$0xff]
  %v1478 = vld [vmem:[%s7 + $0x1b8] sm:$0xff]
  %v1479 = vld [vmem:[%s7 + $0x1c0] sm:$0xff]
  %v1480 = vld [vmem:[%s7 + $0x1c8] sm:$0xff]
  %v1481 = vld [vmem:[%s7 + $0x1d0] sm:$0xff]
  %v1482 = vld [vmem:[%s7 + $0x1d8] sm:$0xff]
  %v1483 = vld [vmem:[%s7 + $0x1e0] sm:$0xff]
  %v1484 = vld [vmem:[%s7 + $0x1e8] sm:$0xff]
  %v1485 = vld [vmem:[%s7 + $0x1f0] sm:$0xff]
  %v1486 = vld [vmem:[%s7 + $0x1f8] sm:$0xff]
  %v1487 = vld [vmem:[%s8] sm:$0xff]
  %v1489 = vperm.slane %v1487, 0
  %v1490 = vperm.slane %v1487, 1
  %v1491 = vperm.slane %v1487, 2
  %v1492 = vperm.slane %v1487, 3
  %v1493 = vperm.slane %v1487, 4
  %v1494 = vperm.slane %v1487, 5
  %v1495 = vperm.slane %v1487, 6
  %v1496 = vperm.slane %v1487, 7
  %v1569 = vunpack.c.l.b16 %v1423
  %v1570 = vunpack.c.h.b16 %v1423
  %v1571 = vunpack.c.l.b16 %v1424
  %v1572 = vunpack.c.h.b16 %v1424
  %v1573 = vunpack.c.l.b16 %v1425
  %v1574 = vunpack.c.h.b16 %v1425
  %v1575 = vunpack.c.l.b16 %v1426
  %v1576 = vunpack.c.h.b16 %v1426
  %v1577 = vunpack.c.l.b16 %v1427
  %v1578 = vunpack.c.h.b16 %v1427
  %v1579 = vunpack.c.l.b16 %v1428
  %v1580 = vunpack.c.h.b16 %v1428
  %v1581 = vunpack.c.l.b16 %v1429
  %v1582 = vunpack.c.h.b16 %v1429
  %v1583 = vunpack.c.l.b16 %v1430
  %v1584 = vunpack.c.h.b16 %v1430
  %v1585 = vunpack.c.l.b16 %v1431
  %v1586 = vunpack.c.h.b16 %v1431
  %v1587 = vunpack.c.l.b16 %v1432
  %v1588 = vunpack.c.h.b16 %v1432
  %v1589 = vunpack.c.l.b16 %v1433
  %v1590 = vunpack.c.h.b16 %v1433
  %v1591 = vunpack.c.l.b16 %v1434
  %v1592 = vunpack.c.h.b16 %v1434
  %v1593 = vunpack.c.l.b16 %v1435
  %v1594 = vunpack.c.h.b16 %v1435
  %v1595 = vunpack.c.l.b16 %v1436
  %v1596 = vunpack.c.h.b16 %v1436
  %v1597 = vunpack.c.l.b16 %v1437
  %v1598 = vunpack.c.h.b16 %v1437
  %v1599 = vunpack.c.l.b16 %v1438
  %v1600 = vunpack.c.h.b16 %v1438
  %v1601 = vunpack.c.l.b16 %v1439
  %v1602 = vunpack.c.h.b16 %v1439
  %v1603 = vunpack.c.l.b16 %v1440
  %v1604 = vunpack.c.h.b16 %v1440
  %v1605 = vunpack.c.l.b16 %v1441
  %v1606 = vunpack.c.h.b16 %v1441
  %v1607 = vunpack.c.l.b16 %v1442
  %v1608 = vunpack.c.h.b16 %v1442
  %v1609 = vunpack.c.l.b16 %v1443
  %v1610 = vunpack.c.h.b16 %v1443
  %v1611 = vunpack.c.l.b16 %v1444
  %v1612 = vunpack.c.h.b16 %v1444
  %v1613 = vunpack.c.l.b16 %v1445
  %v1614 = vunpack.c.h.b16 %v1445
  %v1615 = vunpack.c.l.b16 %v1446
  %v1616 = vunpack.c.h.b16 %v1446
  %v1617 = vunpack.c.l.b16 %v1447
  %v1618 = vunpack.c.h.b16 %v1447
  %v1619 = vunpack.c.l.b16 %v1448
  %v1620 = vunpack.c.h.b16 %v1448
  %v1621 = vunpack.c.l.b16 %v1449
  %v1622 = vunpack.c.h.b16 %v1449
  %v1623 = vunpack.c.l.b16 %v1450
  %v1624 = vunpack.c.h.b16 %v1450
  %v1625 = vunpack.c.l.b16 %v1451
  %v1626 = vunpack.c.h.b16 %v1451
  %v1627 = vunpack.c.l.b16 %v1452
  %v1628 = vunpack.c.h.b16 %v1452
  %v1629 = vunpack.c.l.b16 %v1453
  %v1630 = vunpack.c.h.b16 %v1453
  %v1631 = vunpack.c.l.b16 %v1454
  %v1632 = vunpack.c.h.b16 %v1454
  %v1633 = vunpack.c.l.b16 %v1455
  %v1634 = vunpack.c.h.b16 %v1455
  %v1635 = vunpack.c.l.b16 %v1456
  %v1636 = vunpack.c.h.b16 %v1456
  %v1637 = vunpack.c.l.b16 %v1457
  %v1638 = vunpack.c.h.b16 %v1457
  %v1639 = vunpack.c.l.b16 %v1458
  %v1640 = vunpack.c.h.b16 %v1458
  %v1641 = vunpack.c.l.b16 %v1459
  %v1642 = vunpack.c.h.b16 %v1459
  %v1643 = vunpack.c.l.b16 %v1460
  %v1644 = vunpack.c.h.b16 %v1460
  %v1645 = vunpack.c.l.b16 %v1461
  %v1646 = vunpack.c.h.b16 %v1461
  %v1647 = vunpack.c.l.b16 %v1462
  %v1648 = vunpack.c.h.b16 %v1462
  %v1649 = vunpack.c.l.b16 %v1463
  %v1650 = vunpack.c.h.b16 %v1463
  %v1651 = vunpack.c.l.b16 %v1464
  %v1652 = vunpack.c.h.b16 %v1464
  %v1653 = vunpack.c.l.b16 %v1465
  %v1654 = vunpack.c.h.b16 %v1465
  %v1655 = vunpack.c.l.b16 %v1466
  %v1656 = vunpack.c.h.b16 %v1466
  %v1657 = vunpack.c.l.b16 %v1467
  %v1658 = vunpack.c.h.b16 %v1467
  %v1659 = vunpack.c.l.b16 %v1468
  %v1660 = vunpack.c.h.b16 %v1468
  %v1661 = vunpack.c.l.b16 %v1469
  %v1662 = vunpack.c.h.b16 %v1469
  %v1663 = vunpack.c.l.b16 %v1470
  %v1664 = vunpack.c.h.b16 %v1470
  %v1665 = vunpack.c.l.b16 %v1471
  %v1666 = vunpack.c.h.b16 %v1471
  %v1667 = vunpack.c.l.b16 %v1472
  %v1668 = vunpack.c.h.b16 %v1472
  %v1669 = vunpack.c.l.b16 %v1473
  %v1670 = vunpack.c.h.b16 %v1473
  %v1671 = vunpack.c.l.b16 %v1474
  %v1672 = vunpack.c.h.b16 %v1474
  %v1673 = vunpack.c.l.b16 %v1475
  %v1674 = vunpack.c.h.b16 %v1475
  %v1675 = vunpack.c.l.b16 %v1476
  %v1676 = vunpack.c.h.b16 %v1476
  %v1677 = vunpack.c.l.b16 %v1477
  %v1678 = vunpack.c.h.b16 %v1477
  %v1679 = vunpack.c.l.b16 %v1478
  %v1680 = vunpack.c.h.b16 %v1478
  %v1681 = vunpack.c.l.b16 %v1479
  %v1682 = vunpack.c.h.b16 %v1479
  %v1683 = vunpack.c.l.b16 %v1480
  %v1684 = vunpack.c.h.b16 %v1480
  %v1685 = vunpack.c.l.b16 %v1481
  %v1686 = vunpack.c.h.b16 %v1481
  %v1687 = vunpack.c.l.b16 %v1482
  %v1688 = vunpack.c.h.b16 %v1482
  %v1689 = vunpack.c.l.b16 %v1483
  %v1690 = vunpack.c.h.b16 %v1483
  %v1691 = vunpack.c.l.b16 %v1484
  %v1692 = vunpack.c.h.b16 %v1484
  %v1693 = vunpack.c.l.b16 %v1485
  %v1694 = vunpack.c.h.b16 %v1485
  %v1695 = vunpack.c.l.b16 %v1486
  %v1696 = vunpack.c.h.b16 %v1486
  %v1697 = vpack.c.b16 %v1577, %v1569
  %v1698 = vpack.c.b16 %v1578, %v1570
  %v1699 = vpack.c.b16 %v1579, %v1571
  %v1700 = vpack.c.b16 %v1580, %v1572
  %v1701 = vpack.c.b16 %v1581, %v1573
  %v1702 = vpack.c.b16 %v1582, %v1574
  %v1703 = vpack.c.b16 %v1583, %v1575
  %v1704 = vpack.c.b16 %v1584, %v1576
  %v1705 = vpack.c.b16 %v1593, %v1585
  %v1706 = vpack.c.b16 %v1594, %v1586
  %v1707 = vpack.c.b16 %v1595, %v1587
  %v1708 = vpack.c.b16 %v1596, %v1588
  %v1709 = vpack.c.b16 %v1597, %v1589
  %v1710 = vpack.c.b16 %v1598, %v1590
  %v1711 = vpack.c.b16 %v1599, %v1591
  %v1712 = vpack.c.b16 %v1600, %v1592
  %v1713 = vpack.c.b16 %v1609, %v1601
  %v1714 = vpack.c.b16 %v1610, %v1602
  %v1715 = vpack.c.b16 %v1611, %v1603
  %v1716 = vpack.c.b16 %v1612, %v1604
  %v1717 = vpack.c.b16 %v1613, %v1605
  %v1718 = vpack.c.b16 %v1614, %v1606
  %v1719 = vpack.c.b16 %v1615, %v1607
  %v1720 = vpack.c.b16 %v1616, %v1608
  %v1721 = vpack.c.b16 %v1625, %v1617
  %v1722 = vpack.c.b16 %v1626, %v1618
  %v1723 = vpack.c.b16 %v1627, %v1619
  %v1724 = vpack.c.b16 %v1628, %v1620
  %v1725 = vpack.c.b16 %v1629, %v1621
  %v1726 = vpack.c.b16 %v1630, %v1622
  %v1727 = vpack.c.b16 %v1631, %v1623
  %v1728 = vpack.c.b16 %v1632, %v1624
  %v1729 = vpack.c.b16 %v1641, %v1633
  %v1730 = vpack.c.b16 %v1642, %v1634
  %v1731 = vpack.c.b16 %v1643, %v1635
  %v1732 = vpack.c.b16 %v1644, %v1636
  %v1733 = vpack.c.b16 %v1645, %v1637
  %v1734 = vpack.c.b16 %v1646, %v1638
  %v1735 = vpack.c.b16 %v1647, %v1639
  %v1736 = vpack.c.b16 %v1648, %v1640
  %v1737 = vpack.c.b16 %v1657, %v1649
  %v1738 = vpack.c.b16 %v1658, %v1650
  %v1739 = vpack.c.b16 %v1659, %v1651
  %v1740 = vpack.c.b16 %v1660, %v1652
  %v1741 = vpack.c.b16 %v1661, %v1653
  %v1742 = vpack.c.b16 %v1662, %v1654
  %v1743 = vpack.c.b16 %v1663, %v1655
  %v1744 = vpack.c.b16 %v1664, %v1656
  %v1745 = vpack.c.b16 %v1673, %v1665
  %v1746 = vpack.c.b16 %v1674, %v1666
  %v1747 = vpack.c.b16 %v1675, %v1667
  %v1748 = vpack.c.b16 %v1676, %v1668
  %v1749 = vpack.c.b16 %v1677, %v1669
  %v1750 = vpack.c.b16 %v1678, %v1670
  %v1751 = vpack.c.b16 %v1679, %v1671
  %v1752 = vpack.c.b16 %v1680, %v1672
  %v1753 = vpack.c.b16 %v1689, %v1681
  %v1754 = vpack.c.b16 %v1690, %v1682
  %v1755 = vpack.c.b16 %v1691, %v1683
  %v1756 = vpack.c.b16 %v1692, %v1684
  %v1757 = vpack.c.b16 %v1693, %v1685
  %v1758 = vpack.c.b16 %v1694, %v1686
  %v1759 = vpack.c.b16 %v1695, %v1687
  %v1760 = vpack.c.b16 %v1696, %v1688
  %1825 = vmatpush.bf16.msra.mxu0 %v1753
  %1826 = vmatpush.bf16.msra.mxu0 %v1745
  %1827 = vmatpush.bf16.msra.mxu0 %v1737
  %1828 = vmatpush.bf16.msra.mxu0 %v1729
  %1829 = vmatpush.bf16.msra.mxu0 %v1721
  %1830 = vmatpush.bf16.msra.mxu0 %v1713
  %1831 = vmatpush.bf16.msra.mxu0 %v1705
  %1832 = vmatpush.bf16.msra.mxu0 %v1697
  %1833 = vmatmul.bf16.gmra.mxu0 %v1391
  %v1834 = vpop.f32.mrf.mxu0
  %v1835 = vadd.f32 %v1489, %v1834
  %v1836 = vpop.f32.mrf.mxu0
  %v1837 = vadd.f32 %v1489, %v1836
  %1838 = vmatmul.bf16.gmra.mxu0 %v1392
  %v1839 = vpop.f32.mrf.mxu0
  %v1840 = vadd.f32 %v1489, %v1839
  %v1841 = vpop.f32.mrf.mxu0
  %v1842 = vadd.f32 %v1489, %v1841
  %1843 = vmatmul.bf16.gmra.mxu0 %v1393
  %v1844 = vpop.f32.mrf.mxu0
  %v1845 = vadd.f32 %v1489, %v1844
  %v1846 = vpop.f32.mrf.mxu0
  %v1847 = vadd.f32 %v1489, %v1846
  %1848 = vmatmul.bf16.gmra.mxu0 %v1394
  %v1849 = vpop.f32.mrf.mxu0
  %v1850 = vadd.f32 %v1489, %v1849
  %v1851 = vpop.f32.mrf.mxu0
  %v1852 = vadd.f32 %v1489, %v1851
  %1853 = vmatmul.bf16.gmra.mxu0 %v1395
  %v1854 = vpop.f32.mrf.mxu0
  %v1855 = vadd.f32 %v1489, %v1854
  %v1856 = vpop.f32.mrf.mxu0
  %v1857 = vadd.f32 %v1489, %v1856
  %1858 = vmatmul.bf16.gmra.mxu0 %v1396
  %v1859 = vpop.f32.mrf.mxu0
  %v1860 = vadd.f32 %v1489, %v1859
  %v1861 = vpop.f32.mrf.mxu0
  %v1862 = vadd.f32 %v1489, %v1861
  %1863 = vmatmul.bf16.gmra.mxu0 %v1397
  %v1864 = vpop.f32.mrf.mxu0
  %v1865 = vadd.f32 %v1489, %v1864
  %v1866 = vpop.f32.mrf.mxu0
  %v1867 = vadd.f32 %v1489, %v1866
  %1868 = vmatmul.bf16.gmra.mxu0 %v1398
  %v1869 = vpop.f32.mrf.mxu0
  %v1870 = vadd.f32 %v1489, %v1869
  %v1871 = vpop.f32.mrf.mxu0
  %v1872 = vadd.f32 %v1489, %v1871
  %1873 = vmatmul.bf16.gmra.mxu0 %v1399
  %v1874 = vpop.f32.mrf.mxu0
  %v1875 = vadd.f32 %v1489, %v1874
  %v1876 = vpop.f32.mrf.mxu0
  %v1877 = vadd.f32 %v1489, %v1876
  %1878 = vmatmul.bf16.gmra.mxu0 %v1400
  %v1879 = vpop.f32.mrf.mxu0
  %v1880 = vadd.f32 %v1489, %v1879
  %v1881 = vpop.f32.mrf.mxu0
  %v1882 = vadd.f32 %v1489, %v1881
  %1883 = vmatmul.bf16.gmra.mxu0 %v1401
  %v1884 = vpop.f32.mrf.mxu0
  %v1885 = vadd.f32 %v1489, %v1884
  %v1886 = vpop.f32.mrf.mxu0
  %v1887 = vadd.f32 %v1489, %v1886
  %1888 = vmatmul.bf16.gmra.mxu0 %v1402
  %v1889 = vpop.f32.mrf.mxu0
  %v1890 = vadd.f32 %v1489, %v1889
  %v1891 = vpop.f32.mrf.mxu0
  %v1892 = vadd.f32 %v1489, %v1891
  %1893 = vmatmul.bf16.gmra.mxu0 %v1403
  %v1894 = vpop.f32.mrf.mxu0
  %v1895 = vadd.f32 %v1489, %v1894
  %v1896 = vpop.f32.mrf.mxu0
  %v1897 = vadd.f32 %v1489, %v1896
  %1898 = vmatmul.bf16.gmra.mxu0 %v1404
  %v1899 = vpop.f32.mrf.mxu0
  %v1900 = vadd.f32 %v1489, %v1899
  %v1901 = vpop.f32.mrf.mxu0
  %v1902 = vadd.f32 %v1489, %v1901
  %1903 = vmatmul.bf16.gmra.mxu0 %v1405
  %v1904 = vpop.f32.mrf.mxu0
  %v1905 = vadd.f32 %v1489, %v1904
  %v1906 = vpop.f32.mrf.mxu0
  %v1907 = vadd.f32 %v1489, %v1906
  %1908 = vmatmul.bf16.gmra.mxu0 %v1406
  %v1909 = vpop.f32.mrf.mxu0
  %v1910 = vadd.f32 %v1489, %v1909
  %v1911 = vpop.f32.mrf.mxu0
  %v1912 = vadd.f32 %v1489, %v1911
  %1913 = vmatmul.bf16.gmra.mxu0 %v1407
  %v1914 = vpop.f32.mrf.mxu0
  %v1915 = vadd.f32 %v1489, %v1914
  %v1916 = vpop.f32.mrf.mxu0
  %v1917 = vadd.f32 %v1489, %v1916
  %1918 = vmatmul.bf16.gmra.mxu0 %v1408
  %v1919 = vpop.f32.mrf.mxu0
  %v1920 = vadd.f32 %v1489, %v1919
  %v1921 = vpop.f32.mrf.mxu0
  %v1922 = vadd.f32 %v1489, %v1921
  %1923 = vmatmul.bf16.gmra.mxu0 %v1409
  %v1924 = vpop.f32.mrf.mxu0
  %v1925 = vadd.f32 %v1489, %v1924
  %v1926 = vpop.f32.mrf.mxu0
  %v1927 = vadd.f32 %v1489, %v1926
  %1928 = vmatmul.bf16.gmra.mxu0 %v1410
  %v1929 = vpop.f32.mrf.mxu0
  %v1930 = vadd.f32 %v1489, %v1929
  %v1931 = vpop.f32.mrf.mxu0
  %v1932 = vadd.f32 %v1489, %v1931
  %1933 = vmatmul.bf16.gmra.mxu0 %v1411
  %v1934 = vpop.f32.mrf.mxu0
  %v1935 = vadd.f32 %v1489, %v1934
  %v1936 = vpop.f32.mrf.mxu0
  %v1937 = vadd.f32 %v1489, %v1936
  %1938 = vmatmul.bf16.gmra.mxu0 %v1412
  %v1939 = vpop.f32.mrf.mxu0
  %v1940 = vadd.f32 %v1489, %v1939
  %v1941 = vpop.f32.mrf.mxu0
  %v1942 = vadd.f32 %v1489, %v1941
  %1943 = vmatmul.bf16.gmra.mxu0 %v1413
  %v1944 = vpop.f32.mrf.mxu0
  %v1945 = vadd.f32 %v1489, %v1944
  %v1946 = vpop.f32.mrf.mxu0
  %v1947 = vadd.f32 %v1489, %v1946
  %1948 = vmatmul.bf16.gmra.mxu0 %v1414
  %v1949 = vpop.f32.mrf.mxu0
  %v1950 = vadd.f32 %v1489, %v1949
  %v1951 = vpop.f32.mrf.mxu0
  %v1952 = vadd.f32 %v1489, %v1951
  %1953 = vmatmul.bf16.gmra.mxu0 %v1415
  %v1954 = vpop.f32.mrf.mxu0
  %v1955 = vadd.f32 %v1489, %v1954
  %v1956 = vpop.f32.mrf.mxu0
  %v1957 = vadd.f32 %v1489, %v1956
  %1958 = vmatmul.bf16.gmra.mxu0 %v1416
  %v1959 = vpop.f32.mrf.mxu0
  %v1960 = vadd.f32 %v1489, %v1959
  %v1961 = vpop.f32.mrf.mxu0
  %v1962 = vadd.f32 %v1489, %v1961
  %1963 = vmatmul.bf16.gmra.mxu0 %v1417
  %v1964 = vpop.f32.mrf.mxu0
  %v1965 = vadd.f32 %v1489, %v1964
  %v1966 = vpop.f32.mrf.mxu0
  %v1967 = vadd.f32 %v1489, %v1966
  %1968 = vmatmul.bf16.gmra.mxu0 %v1418
  %v1969 = vpop.f32.mrf.mxu0
  %v1970 = vadd.f32 %v1489, %v1969
  %v1971 = vpop.f32.mrf.mxu0
  %v1972 = vadd.f32 %v1489, %v1971
  %1973 = vmatmul.bf16.gmra.mxu0 %v1419
  %v1974 = vpop.f32.mrf.mxu0
  %v1975 = vadd.f32 %v1489, %v1974
  %v1976 = vpop.f32.mrf.mxu0
  %v1977 = vadd.f32 %v1489, %v1976
  %1978 = vmatmul.bf16.gmra.mxu0 %v1420
  %v1979 = vpop.f32.mrf.mxu0
  %v1980 = vadd.f32 %v1489, %v1979
  %v1981 = vpop.f32.mrf.mxu0
  %v1982 = vadd.f32 %v1489, %v1981
  %1983 = vmatmul.bf16.gmra.mxu0 %v1421
  %v1984 = vpop.f32.mrf.mxu0
  %v1985 = vadd.f32 %v1489, %v1984
  %v1986 = vpop.f32.mrf.mxu0
  %v1987 = vadd.f32 %v1489, %v1986
  %1988 = vmatmul.bf16.gmra.mxu0 %v1422
  %v1989 = vpop.f32.mrf.mxu0
  %v1990 = vadd.f32 %v1489, %v1989
  %v1991 = vpop.f32.mrf.mxu0
  %v1992 = vadd.f32 %v1489, %v1991
  %1993 = vdwg.mxu0
  %1994 = vmatpush.bf16.msra.mxu0 %v1754
  %1995 = vmatpush.bf16.msra.mxu0 %v1746
  %1996 = vmatpush.bf16.msra.mxu0 %v1738
  %1997 = vmatpush.bf16.msra.mxu0 %v1730
  %1998 = vmatpush.bf16.msra.mxu0 %v1722
  %1999 = vmatpush.bf16.msra.mxu0 %v1714
  %2000 = vmatpush.bf16.msra.mxu0 %v1706
  %2001 = vmatpush.bf16.msra.mxu0 %v1698
  %2002 = vmatmul.bf16.gmra.mxu0 %v1391
  %v2003 = vpop.f32.mrf.mxu0
  %v2004 = vadd.f32 %v1490, %v2003
  %v2005 = vpop.f32.mrf.mxu0
  %v2006 = vadd.f32 %v1490, %v2005
  %2007 = vmatmul.bf16.gmra.mxu0 %v1392
  %v2008 = vpop.f32.mrf.mxu0
  %v2009 = vadd.f32 %v1490, %v2008
  %v2010 = vpop.f32.mrf.mxu0
  %v2011 = vadd.f32 %v1490, %v2010
  %2012 = vmatmul.bf16.gmra.mxu0 %v1393
  %v2013 = vpop.f32.mrf.mxu0
  %v2014 = vadd.f32 %v1490, %v2013
  %v2015 = vpop.f32.mrf.mxu0
  %v2016 = vadd.f32 %v1490, %v2015
  %2017 = vmatmul.bf16.gmra.mxu0 %v1394
  %v2018 = vpop.f32.mrf.mxu0
  %v2019 = vadd.f32 %v1490, %v2018
  %v2020 = vpop.f32.mrf.mxu0
  %v2021 = vadd.f32 %v1490, %v2020
  %2022 = vmatmul.bf16.gmra.mxu0 %v1395
  %v2023 = vpop.f32.mrf.mxu0
  %v2024 = vadd.f32 %v1490, %v2023
  %v2025 = vpop.f32.mrf.mxu0
  %v2026 = vadd.f32 %v1490, %v2025
  %2027 = vmatmul.bf16.gmra.mxu0 %v1396
  %v2028 = vpop.f32.mrf.mxu0
  %v2029 = vadd.f32 %v1490, %v2028
  %v2030 = vpop.f32.mrf.mxu0
  %v2031 = vadd.f32 %v1490, %v2030
  %2032 = vmatmul.bf16.gmra.mxu0 %v1397
  %v2033 = vpop.f32.mrf.mxu0
  %v2034 = vadd.f32 %v1490, %v2033
  %v2035 = vpop.f32.mrf.mxu0
  %v2036 = vadd.f32 %v1490, %v2035
  %2037 = vmatmul.bf16.gmra.mxu0 %v1398
  %v2038 = vpop.f32.mrf.mxu0
  %v2039 = vadd.f32 %v1490, %v2038
  %v2040 = vpop.f32.mrf.mxu0
  %v2041 = vadd.f32 %v1490, %v2040
  %2042 = vmatmul.bf16.gmra.mxu0 %v1399
  %v2043 = vpop.f32.mrf.mxu0
  %v2044 = vadd.f32 %v1490, %v2043
  %v2045 = vpop.f32.mrf.mxu0
  %v2046 = vadd.f32 %v1490, %v2045
  %2047 = vmatmul.bf16.gmra.mxu0 %v1400
  %v2048 = vpop.f32.mrf.mxu0
  %v2049 = vadd.f32 %v1490, %v2048
  %v2050 = vpop.f32.mrf.mxu0
  %v2051 = vadd.f32 %v1490, %v2050
  %2052 = vmatmul.bf16.gmra.mxu0 %v1401
  %v2053 = vpop.f32.mrf.mxu0
  %v2054 = vadd.f32 %v1490, %v2053
  %v2055 = vpop.f32.mrf.mxu0
  %v2056 = vadd.f32 %v1490, %v2055
  %2057 = vmatmul.bf16.gmra.mxu0 %v1402
  %v2058 = vpop.f32.mrf.mxu0
  %v2059 = vadd.f32 %v1490, %v2058
  %v2060 = vpop.f32.mrf.mxu0
  %v2061 = vadd.f32 %v1490, %v2060
  %2062 = vmatmul.bf16.gmra.mxu0 %v1403
  %v2063 = vpop.f32.mrf.mxu0
  %v2064 = vadd.f32 %v1490, %v2063
  %v2065 = vpop.f32.mrf.mxu0
  %v2066 = vadd.f32 %v1490, %v2065
  %2067 = vmatmul.bf16.gmra.mxu0 %v1404
  %v2068 = vpop.f32.mrf.mxu0
  %v2069 = vadd.f32 %v1490, %v2068
  %v2070 = vpop.f32.mrf.mxu0
  %v2071 = vadd.f32 %v1490, %v2070
  %2072 = vmatmul.bf16.gmra.mxu0 %v1405
  %v2073 = vpop.f32.mrf.mxu0
  %v2074 = vadd.f32 %v1490, %v2073
  %v2075 = vpop.f32.mrf.mxu0
  %v2076 = vadd.f32 %v1490, %v2075
  %2077 = vmatmul.bf16.gmra.mxu0 %v1406
  %v2078 = vpop.f32.mrf.mxu0
  %v2079 = vadd.f32 %v1490, %v2078
  %v2080 = vpop.f32.mrf.mxu0
  %v2081 = vadd.f32 %v1490, %v2080
  %2082 = vmatmul.bf16.gmra.mxu0 %v1407
  %v2083 = vpop.f32.mrf.mxu0
  %v2084 = vadd.f32 %v1490, %v2083
  %v2085 = vpop.f32.mrf.mxu0
  %v2086 = vadd.f32 %v1490, %v2085
  %2087 = vmatmul.bf16.gmra.mxu0 %v1408
  %v2088 = vpop.f32.mrf.mxu0
  %v2089 = vadd.f32 %v1490, %v2088
  %v2090 = vpop.f32.mrf.mxu0
  %v2091 = vadd.f32 %v1490, %v2090
  %2092 = vmatmul.bf16.gmra.mxu0 %v1409
  %v2093 = vpop.f32.mrf.mxu0
  %v2094 = vadd.f32 %v1490, %v2093
  %v2095 = vpop.f32.mrf.mxu0
  %v2096 = vadd.f32 %v1490, %v2095
  %2097 = vmatmul.bf16.gmra.mxu0 %v1410
  %v2098 = vpop.f32.mrf.mxu0
  %v2099 = vadd.f32 %v1490, %v2098
  %v2100 = vpop.f32.mrf.mxu0
  %v2101 = vadd.f32 %v1490, %v2100
  %2102 = vmatmul.bf16.gmra.mxu0 %v1411
  %v2103 = vpop.f32.mrf.mxu0
  %v2104 = vadd.f32 %v1490, %v2103
  %v2105 = vpop.f32.mrf.mxu0
  %v2106 = vadd.f32 %v1490, %v2105
  %2107 = vmatmul.bf16.gmra.mxu0 %v1412
  %v2108 = vpop.f32.mrf.mxu0
  %v2109 = vadd.f32 %v1490, %v2108
  %v2110 = vpop.f32.mrf.mxu0
  %v2111 = vadd.f32 %v1490, %v2110
  %2112 = vmatmul.bf16.gmra.mxu0 %v1413
  %v2113 = vpop.f32.mrf.mxu0
  %v2114 = vadd.f32 %v1490, %v2113
  %v2115 = vpop.f32.mrf.mxu0
  %v2116 = vadd.f32 %v1490, %v2115
  %2117 = vmatmul.bf16.gmra.mxu0 %v1414
  %v2118 = vpop.f32.mrf.mxu0
  %v2119 = vadd.f32 %v1490, %v2118
  %v2120 = vpop.f32.mrf.mxu0
  %v2121 = vadd.f32 %v1490, %v2120
  %2122 = vmatmul.bf16.gmra.mxu0 %v1415
  %v2123 = vpop.f32.mrf.mxu0
  %v2124 = vadd.f32 %v1490, %v2123
  %v2125 = vpop.f32.mrf.mxu0
  %v2126 = vadd.f32 %v1490, %v2125
  %2127 = vmatmul.bf16.gmra.mxu0 %v1416
  %v2128 = vpop.f32.mrf.mxu0
  %v2129 = vadd.f32 %v1490, %v2128
  %v2130 = vpop.f32.mrf.mxu0
  %v2131 = vadd.f32 %v1490, %v2130
  %2132 = vmatmul.bf16.gmra.mxu0 %v1417
  %v2133 = vpop.f32.mrf.mxu0
  %v2134 = vadd.f32 %v1490, %v2133
  %v2135 = vpop.f32.mrf.mxu0
  %v2136 = vadd.f32 %v1490, %v2135
  %2137 = vmatmul.bf16.gmra.mxu0 %v1418
  %v2138 = vpop.f32.mrf.mxu0
  %v2139 = vadd.f32 %v1490, %v2138
  %v2140 = vpop.f32.mrf.mxu0
  %v2141 = vadd.f32 %v1490, %v2140
  %2142 = vmatmul.bf16.gmra.mxu0 %v1419
  %v2143 = vpop.f32.mrf.mxu0
  %v2144 = vadd.f32 %v1490, %v2143
  %v2145 = vpop.f32.mrf.mxu0
  %v2146 = vadd.f32 %v1490, %v2145
  %2147 = vmatmul.bf16.gmra.mxu0 %v1420
  %v2148 = vpop.f32.mrf.mxu0
  %v2149 = vadd.f32 %v1490, %v2148
  %v2150 = vpop.f32.mrf.mxu0
  %v2151 = vadd.f32 %v1490, %v2150
  %2152 = vmatmul.bf16.gmra.mxu0 %v1421
  %v2153 = vpop.f32.mrf.mxu0
  %v2154 = vadd.f32 %v1490, %v2153
  %v2155 = vpop.f32.mrf.mxu0
  %v2156 = vadd.f32 %v1490, %v2155
  %2157 = vmatmul.bf16.gmra.mxu0 %v1422
  %v2158 = vpop.f32.mrf.mxu0
  %v2159 = vadd.f32 %v1490, %v2158
  %v2160 = vpop.f32.mrf.mxu0
  %v2161 = vadd.f32 %v1490, %v2160
  %2162 = vdwg.mxu0
  %2163 = vmatpush.bf16.msra.mxu0 %v1755
  %2164 = vmatpush.bf16.msra.mxu0 %v1747
  %2165 = vmatpush.bf16.msra.mxu0 %v1739
  %2166 = vmatpush.bf16.msra.mxu0 %v1731
  %2167 = vmatpush.bf16.msra.mxu0 %v1723
  %2168 = vmatpush.bf16.msra.mxu0 %v1715
  %2169 = vmatpush.bf16.msra.mxu0 %v1707
  %2170 = vmatpush.bf16.msra.mxu0 %v1699
  %2171 = vmatmul.bf16.gmra.mxu0 %v1391
  %v2172 = vpop.f32.mrf.mxu0
  %v2173 = vadd.f32 %v1491, %v2172
  %v2174 = vpop.f32.mrf.mxu0
  %v2175 = vadd.f32 %v1491, %v2174
  %2176 = vmatmul.bf16.gmra.mxu0 %v1392
  %v2177 = vpop.f32.mrf.mxu0
  %v2178 = vadd.f32 %v1491, %v2177
  %v2179 = vpop.f32.mrf.mxu0
  %v2180 = vadd.f32 %v1491, %v2179
  %2181 = vmatmul.bf16.gmra.mxu0 %v1393
  %v2182 = vpop.f32.mrf.mxu0
  %v2183 = vadd.f32 %v1491, %v2182
  %v2184 = vpop.f32.mrf.mxu0
  %v2185 = vadd.f32 %v1491, %v2184
  %2186 = vmatmul.bf16.gmra.mxu0 %v1394
  %v2187 = vpop.f32.mrf.mxu0
  %v2188 = vadd.f32 %v1491, %v2187
  %v2189 = vpop.f32.mrf.mxu0
  %v2190 = vadd.f32 %v1491, %v2189
  %2191 = vmatmul.bf16.gmra.mxu0 %v1395
  %v2192 = vpop.f32.mrf.mxu0
  %v2193 = vadd.f32 %v1491, %v2192
  %v2194 = vpop.f32.mrf.mxu0
  %v2195 = vadd.f32 %v1491, %v2194
  %2196 = vmatmul.bf16.gmra.mxu0 %v1396
  %v2197 = vpop.f32.mrf.mxu0
  %v2198 = vadd.f32 %v1491, %v2197
  %v2199 = vpop.f32.mrf.mxu0
  %v2200 = vadd.f32 %v1491, %v2199
  %2201 = vmatmul.bf16.gmra.mxu0 %v1397
  %v2202 = vpop.f32.mrf.mxu0
  %v2203 = vadd.f32 %v1491, %v2202
  %v2204 = vpop.f32.mrf.mxu0
  %v2205 = vadd.f32 %v1491, %v2204
  %2206 = vmatmul.bf16.gmra.mxu0 %v1398
  %v2207 = vpop.f32.mrf.mxu0
  %v2208 = vadd.f32 %v1491, %v2207
  %v2209 = vpop.f32.mrf.mxu0
  %v2210 = vadd.f32 %v1491, %v2209
  %2211 = vmatmul.bf16.gmra.mxu0 %v1399
  %v2212 = vpop.f32.mrf.mxu0
  %v2213 = vadd.f32 %v1491, %v2212
  %v2214 = vpop.f32.mrf.mxu0
  %v2215 = vadd.f32 %v1491, %v2214
  %2216 = vmatmul.bf16.gmra.mxu0 %v1400
  %v2217 = vpop.f32.mrf.mxu0
  %v2218 = vadd.f32 %v1491, %v2217
  %v2219 = vpop.f32.mrf.mxu0
  %v2220 = vadd.f32 %v1491, %v2219
  %2221 = vmatmul.bf16.gmra.mxu0 %v1401
  %v2222 = vpop.f32.mrf.mxu0
  %v2223 = vadd.f32 %v1491, %v2222
  %v2224 = vpop.f32.mrf.mxu0
  %v2225 = vadd.f32 %v1491, %v2224
  %2226 = vmatmul.bf16.gmra.mxu0 %v1402
  %v2227 = vpop.f32.mrf.mxu0
  %v2228 = vadd.f32 %v1491, %v2227
  %v2229 = vpop.f32.mrf.mxu0
  %v2230 = vadd.f32 %v1491, %v2229
  %2231 = vmatmul.bf16.gmra.mxu0 %v1403
  %v2232 = vpop.f32.mrf.mxu0
  %v2233 = vadd.f32 %v1491, %v2232
  %v2234 = vpop.f32.mrf.mxu0
  %v2235 = vadd.f32 %v1491, %v2234
  %2236 = vmatmul.bf16.gmra.mxu0 %v1404
  %v2237 = vpop.f32.mrf.mxu0
  %v2238 = vadd.f32 %v1491, %v2237
  %v2239 = vpop.f32.mrf.mxu0
  %v2240 = vadd.f32 %v1491, %v2239
  %2241 = vmatmul.bf16.gmra.mxu0 %v1405
  %v2242 = vpop.f32.mrf.mxu0
  %v2243 = vadd.f32 %v1491, %v2242
  %v2244 = vpop.f32.mrf.mxu0
  %v2245 = vadd.f32 %v1491, %v2244
  %2246 = vmatmul.bf16.gmra.mxu0 %v1406
  %v2247 = vpop.f32.mrf.mxu0
  %v2248 = vadd.f32 %v1491, %v2247
  %v2249 = vpop.f32.mrf.mxu0
  %v2250 = vadd.f32 %v1491, %v2249
  %2251 = vmatmul.bf16.gmra.mxu0 %v1407
  %v2252 = vpop.f32.mrf.mxu0
  %v2253 = vadd.f32 %v1491, %v2252
  %v2254 = vpop.f32.mrf.mxu0
  %v2255 = vadd.f32 %v1491, %v2254
  %2256 = vmatmul.bf16.gmra.mxu0 %v1408
  %v2257 = vpop.f32.mrf.mxu0
  %v2258 = vadd.f32 %v1491, %v2257
  %v2259 = vpop.f32.mrf.mxu0
  %v2260 = vadd.f32 %v1491, %v2259
  %2261 = vmatmul.bf16.gmra.mxu0 %v1409
  %v2262 = vpop.f32.mrf.mxu0
  %v2263 = vadd.f32 %v1491, %v2262
  %v2264 = vpop.f32.mrf.mxu0
  %v2265 = vadd.f32 %v1491, %v2264
  %2266 = vmatmul.bf16.gmra.mxu0 %v1410
  %v2267 = vpop.f32.mrf.mxu0
  %v2268 = vadd.f32 %v1491, %v2267
  %v2269 = vpop.f32.mrf.mxu0
  %v2270 = vadd.f32 %v1491, %v2269
  %2271 = vmatmul.bf16.gmra.mxu0 %v1411
  %v2272 = vpop.f32.mrf.mxu0
  %v2273 = vadd.f32 %v1491, %v2272
  %v2274 = vpop.f32.mrf.mxu0
  %v2275 = vadd.f32 %v1491, %v2274
  %2276 = vmatmul.bf16.gmra.mxu0 %v1412
  %v2277 = vpop.f32.mrf.mxu0
  %v2278 = vadd.f32 %v1491, %v2277
  %v2279 = vpop.f32.mrf.mxu0
  %v2280 = vadd.f32 %v1491, %v2279
  %2281 = vmatmul.bf16.gmra.mxu0 %v1413
  %v2282 = vpop.f32.mrf.mxu0
  %v2283 = vadd.f32 %v1491, %v2282
  %v2284 = vpop.f32.mrf.mxu0
  %v2285 = vadd.f32 %v1491, %v2284
  %2286 = vmatmul.bf16.gmra.mxu0 %v1414
  %v2287 = vpop.f32.mrf.mxu0
  %v2288 = vadd.f32 %v1491, %v2287
  %v2289 = vpop.f32.mrf.mxu0
  %v2290 = vadd.f32 %v1491, %v2289
  %2291 = vmatmul.bf16.gmra.mxu0 %v1415
  %v2292 = vpop.f32.mrf.mxu0
  %v2293 = vadd.f32 %v1491, %v2292
  %v2294 = vpop.f32.mrf.mxu0
  %v2295 = vadd.f32 %v1491, %v2294
  %2296 = vmatmul.bf16.gmra.mxu0 %v1416
  %v2297 = vpop.f32.mrf.mxu0
  %v2298 = vadd.f32 %v1491, %v2297
  %v2299 = vpop.f32.mrf.mxu0
  %v2300 = vadd.f32 %v1491, %v2299
  %2301 = vmatmul.bf16.gmra.mxu0 %v1417
  %v2302 = vpop.f32.mrf.mxu0
  %v2303 = vadd.f32 %v1491, %v2302
  %v2304 = vpop.f32.mrf.mxu0
  %v2305 = vadd.f32 %v1491, %v2304
  %2306 = vmatmul.bf16.gmra.mxu0 %v1418
  %v2307 = vpop.f32.mrf.mxu0
  %v2308 = vadd.f32 %v1491, %v2307
  %v2309 = vpop.f32.mrf.mxu0
  %v2310 = vadd.f32 %v1491, %v2309
  %2311 = vmatmul.bf16.gmra.mxu0 %v1419
  %v2312 = vpop.f32.mrf.mxu0
  %v2313 = vadd.f32 %v1491, %v2312
  %v2314 = vpop.f32.mrf.mxu0
  %v2315 = vadd.f32 %v1491, %v2314
  %2316 = vmatmul.bf16.gmra.mxu0 %v1420
  %v2317 = vpop.f32.mrf.mxu0
  %v2318 = vadd.f32 %v1491, %v2317
  %v2319 = vpop.f32.mrf.mxu0
  %v2320 = vadd.f32 %v1491, %v2319
  %2321 = vmatmul.bf16.gmra.mxu0 %v1421
  %v2322 = vpop.f32.mrf.mxu0
  %v2323 = vadd.f32 %v1491, %v2322
  %v2324 = vpop.f32.mrf.mxu0
  %v2325 = vadd.f32 %v1491, %v2324
  %2326 = vmatmul.bf16.gmra.mxu0 %v1422
  %v2327 = vpop.f32.mrf.mxu0
  %v2328 = vadd.f32 %v1491, %v2327
  %v2329 = vpop.f32.mrf.mxu0
  %v2330 = vadd.f32 %v1491, %v2329
  %2331 = vdwg.mxu0
  %2332 = vmatpush.bf16.msra.mxu0 %v1756
  %2333 = vmatpush.bf16.msra.mxu0 %v1748
  %2334 = vmatpush.bf16.msra.mxu0 %v1740
  %2335 = vmatpush.bf16.msra.mxu0 %v1732
  %2336 = vmatpush.bf16.msra.mxu0 %v1724
  %2337 = vmatpush.bf16.msra.mxu0 %v1716
  %2338 = vmatpush.bf16.msra.mxu0 %v1708
  %2339 = vmatpush.bf16.msra.mxu0 %v1700
  %2340 = vmatmul.bf16.gmra.mxu0 %v1391
  %v2341 = vpop.f32.mrf.mxu0
  %v2342 = vadd.f32 %v1492, %v2341
  %v2343 = vpop.f32.mrf.mxu0
  %v2344 = vadd.f32 %v1492, %v2343
  %2345 = vmatmul.bf16.gmra.mxu0 %v1392
  %v2346 = vpop.f32.mrf.mxu0
  %v2347 = vadd.f32 %v1492, %v2346
  %v2348 = vpop.f32.mrf.mxu0
  %v2349 = vadd.f32 %v1492, %v2348
  %2350 = vmatmul.bf16.gmra.mxu0 %v1393
  %v2351 = vpop.f32.mrf.mxu0
  %v2352 = vadd.f32 %v1492, %v2351
  %v2353 = vpop.f32.mrf.mxu0
  %v2354 = vadd.f32 %v1492, %v2353
  %2355 = vmatmul.bf16.gmra.mxu0 %v1394
  %v2356 = vpop.f32.mrf.mxu0
  %v2357 = vadd.f32 %v1492, %v2356
  %v2358 = vpop.f32.mrf.mxu0
  %v2359 = vadd.f32 %v1492, %v2358
  %2360 = vmatmul.bf16.gmra.mxu0 %v1395
  %v2361 = vpop.f32.mrf.mxu0
  %v2362 = vadd.f32 %v1492, %v2361
  %v2363 = vpop.f32.mrf.mxu0
  %v2364 = vadd.f32 %v1492, %v2363
  %2365 = vmatmul.bf16.gmra.mxu0 %v1396
  %v2366 = vpop.f32.mrf.mxu0
  %v2367 = vadd.f32 %v1492, %v2366
  %v2368 = vpop.f32.mrf.mxu0
  %v2369 = vadd.f32 %v1492, %v2368
  %2370 = vmatmul.bf16.gmra.mxu0 %v1397
  %v2371 = vpop.f32.mrf.mxu0
  %v2372 = vadd.f32 %v1492, %v2371
  %v2373 = vpop.f32.mrf.mxu0
  %v2374 = vadd.f32 %v1492, %v2373
  %2375 = vmatmul.bf16.gmra.mxu0 %v1398
  %v2376 = vpop.f32.mrf.mxu0
  %v2377 = vadd.f32 %v1492, %v2376
  %v2378 = vpop.f32.mrf.mxu0
  %v2379 = vadd.f32 %v1492, %v2378
  %2380 = vmatmul.bf16.gmra.mxu0 %v1399
  %v2381 = vpop.f32.mrf.mxu0
  %v2382 = vadd.f32 %v1492, %v2381
  %v2383 = vpop.f32.mrf.mxu0
  %v2384 = vadd.f32 %v1492, %v2383
  %2385 = vmatmul.bf16.gmra.mxu0 %v1400
  %v2386 = vpop.f32.mrf.mxu0
  %v2387 = vadd.f32 %v1492, %v2386
  %v2388 = vpop.f32.mrf.mxu0
  %v2389 = vadd.f32 %v1492, %v2388
  %2390 = vmatmul.bf16.gmra.mxu0 %v1401
  %v2391 = vpop.f32.mrf.mxu0
  %v2392 = vadd.f32 %v1492, %v2391
  %v2393 = vpop.f32.mrf.mxu0
  %v2394 = vadd.f32 %v1492, %v2393
  %2395 = vmatmul.bf16.gmra.mxu0 %v1402
  %v2396 = vpop.f32.mrf.mxu0
  %v2397 = vadd.f32 %v1492, %v2396
  %v2398 = vpop.f32.mrf.mxu0
  %v2399 = vadd.f32 %v1492, %v2398
  %2400 = vmatmul.bf16.gmra.mxu0 %v1403
  %v2401 = vpop.f32.mrf.mxu0
  %v2402 = vadd.f32 %v1492, %v2401
  %v2403 = vpop.f32.mrf.mxu0
  %v2404 = vadd.f32 %v1492, %v2403
  %2405 = vmatmul.bf16.gmra.mxu0 %v1404
  %v2406 = vpop.f32.mrf.mxu0
  %v2407 = vadd.f32 %v1492, %v2406
  %v2408 = vpop.f32.mrf.mxu0
  %v2409 = vadd.f32 %v1492, %v2408
  %2410 = vmatmul.bf16.gmra.mxu0 %v1405
  %v2411 = vpop.f32.mrf.mxu0
  %v2412 = vadd.f32 %v1492, %v2411
  %v2413 = vpop.f32.mrf.mxu0
  %v2414 = vadd.f32 %v1492, %v2413
  %2415 = vmatmul.bf16.gmra.mxu0 %v1406
  %v2416 = vpop.f32.mrf.mxu0
  %v2417 = vadd.f32 %v1492, %v2416
  %v2418 = vpop.f32.mrf.mxu0
  %v2419 = vadd.f32 %v1492, %v2418
  %2420 = vmatmul.bf16.gmra.mxu0 %v1407
  %v2421 = vpop.f32.mrf.mxu0
  %v2422 = vadd.f32 %v1492, %v2421
  %v2423 = vpop.f32.mrf.mxu0
  %v2424 = vadd.f32 %v1492, %v2423
  %2425 = vmatmul.bf16.gmra.mxu0 %v1408
  %v2426 = vpop.f32.mrf.mxu0
  %v2427 = vadd.f32 %v1492, %v2426
  %v2428 = vpop.f32.mrf.mxu0
  %v2429 = vadd.f32 %v1492, %v2428
  %2430 = vmatmul.bf16.gmra.mxu0 %v1409
  %v2431 = vpop.f32.mrf.mxu0
  %v2432 = vadd.f32 %v1492, %v2431
  %v2433 = vpop.f32.mrf.mxu0
  %v2434 = vadd.f32 %v1492, %v2433
  %2435 = vmatmul.bf16.gmra.mxu0 %v1410
  %v2436 = vpop.f32.mrf.mxu0
  %v2437 = vadd.f32 %v1492, %v2436
  %v2438 = vpop.f32.mrf.mxu0
  %v2439 = vadd.f32 %v1492, %v2438
  %2440 = vmatmul.bf16.gmra.mxu0 %v1411
  %v2441 = vpop.f32.mrf.mxu0
  %v2442 = vadd.f32 %v1492, %v2441
  %v2443 = vpop.f32.mrf.mxu0
  %v2444 = vadd.f32 %v1492, %v2443
  %2445 = vmatmul.bf16.gmra.mxu0 %v1412
  %v2446 = vpop.f32.mrf.mxu0
  %v2447 = vadd.f32 %v1492, %v2446
  %v2448 = vpop.f32.mrf.mxu0
  %v2449 = vadd.f32 %v1492, %v2448
  %2450 = vmatmul.bf16.gmra.mxu0 %v1413
  %v2451 = vpop.f32.mrf.mxu0
  %v2452 = vadd.f32 %v1492, %v2451
  %v2453 = vpop.f32.mrf.mxu0
  %v2454 = vadd.f32 %v1492, %v2453
  %2455 = vmatmul.bf16.gmra.mxu0 %v1414
  %v2456 = vpop.f32.mrf.mxu0
  %v2457 = vadd.f32 %v1492, %v2456
  %v2458 = vpop.f32.mrf.mxu0
  %v2459 = vadd.f32 %v1492, %v2458
  %2460 = vmatmul.bf16.gmra.mxu0 %v1415
  %v2461 = vpop.f32.mrf.mxu0
  %v2462 = vadd.f32 %v1492, %v2461
  %v2463 = vpop.f32.mrf.mxu0
  %v2464 = vadd.f32 %v1492, %v2463
  %2465 = vmatmul.bf16.gmra.mxu0 %v1416
  %v2466 = vpop.f32.mrf.mxu0
  %v2467 = vadd.f32 %v1492, %v2466
  %v2468 = vpop.f32.mrf.mxu0
  %v2469 = vadd.f32 %v1492, %v2468
  %2470 = vmatmul.bf16.gmra.mxu0 %v1417
  %v2471 = vpop.f32.mrf.mxu0
  %v2472 = vadd.f32 %v1492, %v2471
  %v2473 = vpop.f32.mrf.mxu0
  %v2474 = vadd.f32 %v1492, %v2473
  %2475 = vmatmul.bf16.gmra.mxu0 %v1418
  %v2476 = vpop.f32.mrf.mxu0
  %v2477 = vadd.f32 %v1492, %v2476
  %v2478 = vpop.f32.mrf.mxu0
  %v2479 = vadd.f32 %v1492, %v2478
  %2480 = vmatmul.bf16.gmra.mxu0 %v1419
  %v2481 = vpop.f32.mrf.mxu0
  %v2482 = vadd.f32 %v1492, %v2481
  %v2483 = vpop.f32.mrf.mxu0
  %v2484 = vadd.f32 %v1492, %v2483
  %2485 = vmatmul.bf16.gmra.mxu0 %v1420
  %v2486 = vpop.f32.mrf.mxu0
  %v2487 = vadd.f32 %v1492, %v2486
  %v2488 = vpop.f32.mrf.mxu0
  %v2489 = vadd.f32 %v1492, %v2488
  %2490 = vmatmul.bf16.gmra.mxu0 %v1421
  %v2491 = vpop.f32.mrf.mxu0
  %v2492 = vadd.f32 %v1492, %v2491
  %v2493 = vpop.f32.mrf.mxu0
  %v2494 = vadd.f32 %v1492, %v2493
  %2495 = vmatmul.bf16.gmra.mxu0 %v1422
  %v2496 = vpop.f32.mrf.mxu0
  %v2497 = vadd.f32 %v1492, %v2496
  %v2498 = vpop.f32.mrf.mxu0
  %v2499 = vadd.f32 %v1492, %v2498
  %2500 = vdwg.mxu0
  %2501 = vmatpush.bf16.msra.mxu0 %v1757
  %2502 = vmatpush.bf16.msra.mxu0 %v1749
  %2503 = vmatpush.bf16.msra.mxu0 %v1741
  %2504 = vmatpush.bf16.msra.mxu0 %v1733
  %2505 = vmatpush.bf16.msra.mxu0 %v1725
  %2506 = vmatpush.bf16.msra.mxu0 %v1717
  %2507 = vmatpush.bf16.msra.mxu0 %v1709
  %2508 = vmatpush.bf16.msra.mxu0 %v1701
  %2509 = vmatmul.bf16.gmra.mxu0 %v1391
  %v2510 = vpop.f32.mrf.mxu0
  %v2511 = vadd.f32 %v1493, %v2510
  %v2512 = vpop.f32.mrf.mxu0
  %v2513 = vadd.f32 %v1493, %v2512
  %2514 = vmatmul.bf16.gmra.mxu0 %v1392
  %v2515 = vpop.f32.mrf.mxu0
  %v2516 = vadd.f32 %v1493, %v2515
  %v2517 = vpop.f32.mrf.mxu0
  %v2518 = vadd.f32 %v1493, %v2517
  %2519 = vmatmul.bf16.gmra.mxu0 %v1393
  %v2520 = vpop.f32.mrf.mxu0
  %v2521 = vadd.f32 %v1493, %v2520
  %v2522 = vpop.f32.mrf.mxu0
  %v2523 = vadd.f32 %v1493, %v2522
  %2524 = vmatmul.bf16.gmra.mxu0 %v1394
  %v2525 = vpop.f32.mrf.mxu0
  %v2526 = vadd.f32 %v1493, %v2525
  %v2527 = vpop.f32.mrf.mxu0
  %v2528 = vadd.f32 %v1493, %v2527
  %2529 = vmatmul.bf16.gmra.mxu0 %v1395
  %v2530 = vpop.f32.mrf.mxu0
  %v2531 = vadd.f32 %v1493, %v2530
  %v2532 = vpop.f32.mrf.mxu0
  %v2533 = vadd.f32 %v1493, %v2532
  %2534 = vmatmul.bf16.gmra.mxu0 %v1396
  %v2535 = vpop.f32.mrf.mxu0
  %v2536 = vadd.f32 %v1493, %v2535
  %v2537 = vpop.f32.mrf.mxu0
  %v2538 = vadd.f32 %v1493, %v2537
  %2539 = vmatmul.bf16.gmra.mxu0 %v1397
  %v2540 = vpop.f32.mrf.mxu0
  %v2541 = vadd.f32 %v1493, %v2540
  %v2542 = vpop.f32.mrf.mxu0
  %v2543 = vadd.f32 %v1493, %v2542
  %2544 = vmatmul.bf16.gmra.mxu0 %v1398
  %v2545 = vpop.f32.mrf.mxu0
  %v2546 = vadd.f32 %v1493, %v2545
  %v2547 = vpop.f32.mrf.mxu0
  %v2548 = vadd.f32 %v1493, %v2547
  %2549 = vmatmul.bf16.gmra.mxu0 %v1399
  %v2550 = vpop.f32.mrf.mxu0
  %v2551 = vadd.f32 %v1493, %v2550
  %v2552 = vpop.f32.mrf.mxu0
  %v2553 = vadd.f32 %v1493, %v2552
  %2554 = vmatmul.bf16.gmra.mxu0 %v1400
  %v2555 = vpop.f32.mrf.mxu0
  %v2556 = vadd.f32 %v1493, %v2555
  %v2557 = vpop.f32.mrf.mxu0
  %v2558 = vadd.f32 %v1493, %v2557
  %2559 = vmatmul.bf16.gmra.mxu0 %v1401
  %v2560 = vpop.f32.mrf.mxu0
  %v2561 = vadd.f32 %v1493, %v2560
  %v2562 = vpop.f32.mrf.mxu0
  %v2563 = vadd.f32 %v1493, %v2562
  %2564 = vmatmul.bf16.gmra.mxu0 %v1402
  %v2565 = vpop.f32.mrf.mxu0
  %v2566 = vadd.f32 %v1493, %v2565
  %v2567 = vpop.f32.mrf.mxu0
  %v2568 = vadd.f32 %v1493, %v2567
  %2569 = vmatmul.bf16.gmra.mxu0 %v1403
  %v2570 = vpop.f32.mrf.mxu0
  %v2571 = vadd.f32 %v1493, %v2570
  %v2572 = vpop.f32.mrf.mxu0
  %v2573 = vadd.f32 %v1493, %v2572
  %2574 = vmatmul.bf16.gmra.mxu0 %v1404
  %v2575 = vpop.f32.mrf.mxu0
  %v2576 = vadd.f32 %v1493, %v2575
  %v2577 = vpop.f32.mrf.mxu0
  %v2578 = vadd.f32 %v1493, %v2577
  %2579 = vmatmul.bf16.gmra.mxu0 %v1405
  %v2580 = vpop.f32.mrf.mxu0
  %v2581 = vadd.f32 %v1493, %v2580
  %v2582 = vpop.f32.mrf.mxu0
  %v2583 = vadd.f32 %v1493, %v2582
  %2584 = vmatmul.bf16.gmra.mxu0 %v1406
  %v2585 = vpop.f32.mrf.mxu0
  %v2586 = vadd.f32 %v1493, %v2585
  %v2587 = vpop.f32.mrf.mxu0
  %v2588 = vadd.f32 %v1493, %v2587
  %2589 = vmatmul.bf16.gmra.mxu0 %v1407
  %v2590 = vpop.f32.mrf.mxu0
  %v2591 = vadd.f32 %v1493, %v2590
  %v2592 = vpop.f32.mrf.mxu0
  %v2593 = vadd.f32 %v1493, %v2592
  %2594 = vmatmul.bf16.gmra.mxu0 %v1408
  %v2595 = vpop.f32.mrf.mxu0
  %v2596 = vadd.f32 %v1493, %v2595
  %v2597 = vpop.f32.mrf.mxu0
  %v2598 = vadd.f32 %v1493, %v2597
  %2599 = vmatmul.bf16.gmra.mxu0 %v1409
  %v2600 = vpop.f32.mrf.mxu0
  %v2601 = vadd.f32 %v1493, %v2600
  %v2602 = vpop.f32.mrf.mxu0
  %v2603 = vadd.f32 %v1493, %v2602
  %2604 = vmatmul.bf16.gmra.mxu0 %v1410
  %v2605 = vpop.f32.mrf.mxu0
  %v2606 = vadd.f32 %v1493, %v2605
  %v2607 = vpop.f32.mrf.mxu0
  %v2608 = vadd.f32 %v1493, %v2607
  %2609 = vmatmul.bf16.gmra.mxu0 %v1411
  %v2610 = vpop.f32.mrf.mxu0
  %v2611 = vadd.f32 %v1493, %v2610
  %v2612 = vpop.f32.mrf.mxu0
  %v2613 = vadd.f32 %v1493, %v2612
  %2614 = vmatmul.bf16.gmra.mxu0 %v1412
  %v2615 = vpop.f32.mrf.mxu0
  %v2616 = vadd.f32 %v1493, %v2615
  %v2617 = vpop.f32.mrf.mxu0
  %v2618 = vadd.f32 %v1493, %v2617
  %2619 = vmatmul.bf16.gmra.mxu0 %v1413
  %v2620 = vpop.f32.mrf.mxu0
  %v2621 = vadd.f32 %v1493, %v2620
  %v2622 = vpop.f32.mrf.mxu0
  %v2623 = vadd.f32 %v1493, %v2622
  %2624 = vmatmul.bf16.gmra.mxu0 %v1414
  %v2625 = vpop.f32.mrf.mxu0
  %v2626 = vadd.f32 %v1493, %v2625
  %v2627 = vpop.f32.mrf.mxu0
  %v2628 = vadd.f32 %v1493, %v2627
  %2629 = vmatmul.bf16.gmra.mxu0 %v1415
  %v2630 = vpop.f32.mrf.mxu0
  %v2631 = vadd.f32 %v1493, %v2630
  %v2632 = vpop.f32.mrf.mxu0
  %v2633 = vadd.f32 %v1493, %v2632
  %2634 = vmatmul.bf16.gmra.mxu0 %v1416
  %v2635 = vpop.f32.mrf.mxu0
  %v2636 = vadd.f32 %v1493, %v2635
  %v2637 = vpop.f32.mrf.mxu0
  %v2638 = vadd.f32 %v1493, %v2637
  %2639 = vmatmul.bf16.gmra.mxu0 %v1417
  %v2640 = vpop.f32.mrf.mxu0
  %v2641 = vadd.f32 %v1493, %v2640
  %v2642 = vpop.f32.mrf.mxu0
  %v2643 = vadd.f32 %v1493, %v2642
  %2644 = vmatmul.bf16.gmra.mxu0 %v1418
  %v2645 = vpop.f32.mrf.mxu0
  %v2646 = vadd.f32 %v1493, %v2645
  %v2647 = vpop.f32.mrf.mxu0
  %v2648 = vadd.f32 %v1493, %v2647
  %2649 = vmatmul.bf16.gmra.mxu0 %v1419
  %v2650 = vpop.f32.mrf.mxu0
  %v2651 = vadd.f32 %v1493, %v2650
  %v2652 = vpop.f32.mrf.mxu0
  %v2653 = vadd.f32 %v1493, %v2652
  %2654 = vmatmul.bf16.gmra.mxu0 %v1420
  %v2655 = vpop.f32.mrf.mxu0
  %v2656 = vadd.f32 %v1493, %v2655
  %v2657 = vpop.f32.mrf.mxu0
  %v2658 = vadd.f32 %v1493, %v2657
  %2659 = vmatmul.bf16.gmra.mxu0 %v1421
  %v2660 = vpop.f32.mrf.mxu0
  %v2661 = vadd.f32 %v1493, %v2660
  %v2662 = vpop.f32.mrf.mxu0
  %v2663 = vadd.f32 %v1493, %v2662
  %2664 = vmatmul.bf16.gmra.mxu0 %v1422
  %v2665 = vpop.f32.mrf.mxu0
  %v2666 = vadd.f32 %v1493, %v2665
  %v2667 = vpop.f32.mrf.mxu0
  %v2668 = vadd.f32 %v1493, %v2667
  %2669 = vdwg.mxu0
  %2670 = vmatpush.bf16.msra.mxu0 %v1758
  %2671 = vmatpush.bf16.msra.mxu0 %v1750
  %2672 = vmatpush.bf16.msra.mxu0 %v1742
  %2673 = vmatpush.bf16.msra.mxu0 %v1734
  %2674 = vmatpush.bf16.msra.mxu0 %v1726
  %2675 = vmatpush.bf16.msra.mxu0 %v1718
  %2676 = vmatpush.bf16.msra.mxu0 %v1710
  %2677 = vmatpush.bf16.msra.mxu0 %v1702
  %2678 = vmatmul.bf16.gmra.mxu0 %v1391
  %v2679 = vpop.f32.mrf.mxu0
  %v2680 = vadd.f32 %v1494, %v2679
  %v2681 = vpop.f32.mrf.mxu0
  %v2682 = vadd.f32 %v1494, %v2681
  %2683 = vmatmul.bf16.gmra.mxu0 %v1392
  %v2684 = vpop.f32.mrf.mxu0
  %v2685 = vadd.f32 %v1494, %v2684
  %v2686 = vpop.f32.mrf.mxu0
  %v2687 = vadd.f32 %v1494, %v2686
  %2688 = vmatmul.bf16.gmra.mxu0 %v1393
  %v2689 = vpop.f32.mrf.mxu0
  %v2690 = vadd.f32 %v1494, %v2689
  %v2691 = vpop.f32.mrf.mxu0
  %v2692 = vadd.f32 %v1494, %v2691
  %2693 = vmatmul.bf16.gmra.mxu0 %v1394
  %v2694 = vpop.f32.mrf.mxu0
  %v2695 = vadd.f32 %v1494, %v2694
  %v2696 = vpop.f32.mrf.mxu0
  %v2697 = vadd.f32 %v1494, %v2696
  %2698 = vmatmul.bf16.gmra.mxu0 %v1395
  %v2699 = vpop.f32.mrf.mxu0
  %v2700 = vadd.f32 %v1494, %v2699
  %v2701 = vpop.f32.mrf.mxu0
  %v2702 = vadd.f32 %v1494, %v2701
  %2703 = vmatmul.bf16.gmra.mxu0 %v1396
  %v2704 = vpop.f32.mrf.mxu0
  %v2705 = vadd.f32 %v1494, %v2704
  %v2706 = vpop.f32.mrf.mxu0
  %v2707 = vadd.f32 %v1494, %v2706
  %2708 = vmatmul.bf16.gmra.mxu0 %v1397
  %v2709 = vpop.f32.mrf.mxu0
  %v2710 = vadd.f32 %v1494, %v2709
  %v2711 = vpop.f32.mrf.mxu0
  %v2712 = vadd.f32 %v1494, %v2711
  %2713 = vmatmul.bf16.gmra.mxu0 %v1398
  %v2714 = vpop.f32.mrf.mxu0
  %v2715 = vadd.f32 %v1494, %v2714
  %v2716 = vpop.f32.mrf.mxu0
  %v2717 = vadd.f32 %v1494, %v2716
  %2718 = vmatmul.bf16.gmra.mxu0 %v1399
  %v2719 = vpop.f32.mrf.mxu0
  %v2720 = vadd.f32 %v1494, %v2719
  %v2721 = vpop.f32.mrf.mxu0
  %v2722 = vadd.f32 %v1494, %v2721
  %2723 = vmatmul.bf16.gmra.mxu0 %v1400
  %v2724 = vpop.f32.mrf.mxu0
  %v2725 = vadd.f32 %v1494, %v2724
  %v2726 = vpop.f32.mrf.mxu0
  %v2727 = vadd.f32 %v1494, %v2726
  %2728 = vmatmul.bf16.gmra.mxu0 %v1401
  %v2729 = vpop.f32.mrf.mxu0
  %v2730 = vadd.f32 %v1494, %v2729
  %v2731 = vpop.f32.mrf.mxu0
  %v2732 = vadd.f32 %v1494, %v2731
  %2733 = vmatmul.bf16.gmra.mxu0 %v1402
  %v2734 = vpop.f32.mrf.mxu0
  %v2735 = vadd.f32 %v1494, %v2734
  %v2736 = vpop.f32.mrf.mxu0
  %v2737 = vadd.f32 %v1494, %v2736
  %2738 = vmatmul.bf16.gmra.mxu0 %v1403
  %v2739 = vpop.f32.mrf.mxu0
  %v2740 = vadd.f32 %v1494, %v2739
  %v2741 = vpop.f32.mrf.mxu0
  %v2742 = vadd.f32 %v1494, %v2741
  %2743 = vmatmul.bf16.gmra.mxu0 %v1404
  %v2744 = vpop.f32.mrf.mxu0
  %v2745 = vadd.f32 %v1494, %v2744
  %v2746 = vpop.f32.mrf.mxu0
  %v2747 = vadd.f32 %v1494, %v2746
  %2748 = vmatmul.bf16.gmra.mxu0 %v1405
  %v2749 = vpop.f32.mrf.mxu0
  %v2750 = vadd.f32 %v1494, %v2749
  %v2751 = vpop.f32.mrf.mxu0
  %v2752 = vadd.f32 %v1494, %v2751
  %2753 = vmatmul.bf16.gmra.mxu0 %v1406
  %v2754 = vpop.f32.mrf.mxu0
  %v2755 = vadd.f32 %v1494, %v2754
  %v2756 = vpop.f32.mrf.mxu0
  %v2757 = vadd.f32 %v1494, %v2756
  %2758 = vmatmul.bf16.gmra.mxu0 %v1407
  %v2759 = vpop.f32.mrf.mxu0
  %v2760 = vadd.f32 %v1494, %v2759
  %v2761 = vpop.f32.mrf.mxu0
  %v2762 = vadd.f32 %v1494, %v2761
  %2763 = vmatmul.bf16.gmra.mxu0 %v1408
  %v2764 = vpop.f32.mrf.mxu0
  %v2765 = vadd.f32 %v1494, %v2764
  %v2766 = vpop.f32.mrf.mxu0
  %v2767 = vadd.f32 %v1494, %v2766
  %2768 = vmatmul.bf16.gmra.mxu0 %v1409
  %v2769 = vpop.f32.mrf.mxu0
  %v2770 = vadd.f32 %v1494, %v2769
  %v2771 = vpop.f32.mrf.mxu0
  %v2772 = vadd.f32 %v1494, %v2771
  %2773 = vmatmul.bf16.gmra.mxu0 %v1410
  %v2774 = vpop.f32.mrf.mxu0
  %v2775 = vadd.f32 %v1494, %v2774
  %v2776 = vpop.f32.mrf.mxu0
  %v2777 = vadd.f32 %v1494, %v2776
  %2778 = vmatmul.bf16.gmra.mxu0 %v1411
  %v2779 = vpop.f32.mrf.mxu0
  %v2780 = vadd.f32 %v1494, %v2779
  %v2781 = vpop.f32.mrf.mxu0
  %v2782 = vadd.f32 %v1494, %v2781
  %2783 = vmatmul.bf16.gmra.mxu0 %v1412
  %v2784 = vpop.f32.mrf.mxu0
  %v2785 = vadd.f32 %v1494, %v2784
  %v2786 = vpop.f32.mrf.mxu0
  %v2787 = vadd.f32 %v1494, %v2786
  %2788 = vmatmul.bf16.gmra.mxu0 %v1413
  %v2789 = vpop.f32.mrf.mxu0
  %v2790 = vadd.f32 %v1494, %v2789
  %v2791 = vpop.f32.mrf.mxu0
  %v2792 = vadd.f32 %v1494, %v2791
  %2793 = vmatmul.bf16.gmra.mxu0 %v1414
  %v2794 = vpop.f32.mrf.mxu0
  %v2795 = vadd.f32 %v1494, %v2794
  %v2796 = vpop.f32.mrf.mxu0
  %v2797 = vadd.f32 %v1494, %v2796
  %2798 = vmatmul.bf16.gmra.mxu0 %v1415
  %v2799 = vpop.f32.mrf.mxu0
  %v2800 = vadd.f32 %v1494, %v2799
  %v2801 = vpop.f32.mrf.mxu0
  %v2802 = vadd.f32 %v1494, %v2801
  %2803 = vmatmul.bf16.gmra.mxu0 %v1416
  %v2804 = vpop.f32.mrf.mxu0
  %v2805 = vadd.f32 %v1494, %v2804
  %v2806 = vpop.f32.mrf.mxu0
  %v2807 = vadd.f32 %v1494, %v2806
  %2808 = vmatmul.bf16.gmra.mxu0 %v1417
  %v2809 = vpop.f32.mrf.mxu0
  %v2810 = vadd.f32 %v1494, %v2809
  %v2811 = vpop.f32.mrf.mxu0
  %v2812 = vadd.f32 %v1494, %v2811
  %2813 = vmatmul.bf16.gmra.mxu0 %v1418
  %v2814 = vpop.f32.mrf.mxu0
  %v2815 = vadd.f32 %v1494, %v2814
  %v2816 = vpop.f32.mrf.mxu0
  %v2817 = vadd.f32 %v1494, %v2816
  %2818 = vmatmul.bf16.gmra.mxu0 %v1419
  %v2819 = vpop.f32.mrf.mxu0
  %v2820 = vadd.f32 %v1494, %v2819
  %v2821 = vpop.f32.mrf.mxu0
  %v2822 = vadd.f32 %v1494, %v2821
  %2823 = vmatmul.bf16.gmra.mxu0 %v1420
  %v2824 = vpop.f32.mrf.mxu0
  %v2825 = vadd.f32 %v1494, %v2824
  %v2826 = vpop.f32.mrf.mxu0
  %v2827 = vadd.f32 %v1494, %v2826
  %2828 = vmatmul.bf16.gmra.mxu0 %v1421
  %v2829 = vpop.f32.mrf.mxu0
  %v2830 = vadd.f32 %v1494, %v2829
  %v2831 = vpop.f32.mrf.mxu0
  %v2832 = vadd.f32 %v1494, %v2831
  %2833 = vmatmul.bf16.gmra.mxu0 %v1422
  %v2834 = vpop.f32.mrf.mxu0
  %v2835 = vadd.f32 %v1494, %v2834
  %v2836 = vpop.f32.mrf.mxu0
  %v2837 = vadd.f32 %v1494, %v2836
  %2838 = vdwg.mxu0
  %2839 = vmatpush.bf16.msra.mxu0 %v1759
  %2840 = vmatpush.bf16.msra.mxu0 %v1751
  %2841 = vmatpush.bf16.msra.mxu0 %v1743
  %2842 = vmatpush.bf16.msra.mxu0 %v1735
  %2843 = vmatpush.bf16.msra.mxu0 %v1727
  %2844 = vmatpush.bf16.msra.mxu0 %v1719
  %2845 = vmatpush.bf16.msra.mxu0 %v1711
  %2846 = vmatpush.bf16.msra.mxu0 %v1703
  %2847 = vmatmul.bf16.gmra.mxu0 %v1391
  %v2848 = vpop.f32.mrf.mxu0
  %v2849 = vadd.f32 %v1495, %v2848
  %v2850 = vpop.f32.mrf.mxu0
  %v2851 = vadd.f32 %v1495, %v2850
  %2852 = vmatmul.bf16.gmra.mxu0 %v1392
  %v2853 = vpop.f32.mrf.mxu0
  %v2854 = vadd.f32 %v1495, %v2853
  %v2855 = vpop.f32.mrf.mxu0
  %v2856 = vadd.f32 %v1495, %v2855
  %2857 = vmatmul.bf16.gmra.mxu0 %v1393
  %v2858 = vpop.f32.mrf.mxu0
  %v2859 = vadd.f32 %v1495, %v2858
  %v2860 = vpop.f32.mrf.mxu0
  %v2861 = vadd.f32 %v1495, %v2860
  %2862 = vmatmul.bf16.gmra.mxu0 %v1394
  %v2863 = vpop.f32.mrf.mxu0
  %v2864 = vadd.f32 %v1495, %v2863
  %v2865 = vpop.f32.mrf.mxu0
  %v2866 = vadd.f32 %v1495, %v2865
  %2867 = vmatmul.bf16.gmra.mxu0 %v1395
  %v2868 = vpop.f32.mrf.mxu0
  %v2869 = vadd.f32 %v1495, %v2868
  %v2870 = vpop.f32.mrf.mxu0
  %v2871 = vadd.f32 %v1495, %v2870
  %2872 = vmatmul.bf16.gmra.mxu0 %v1396
  %v2873 = vpop.f32.mrf.mxu0
  %v2874 = vadd.f32 %v1495, %v2873
  %v2875 = vpop.f32.mrf.mxu0
  %v2876 = vadd.f32 %v1495, %v2875
  %2877 = vmatmul.bf16.gmra.mxu0 %v1397
  %v2878 = vpop.f32.mrf.mxu0
  %v2879 = vadd.f32 %v1495, %v2878
  %v2880 = vpop.f32.mrf.mxu0
  %v2881 = vadd.f32 %v1495, %v2880
  %2882 = vmatmul.bf16.gmra.mxu0 %v1398
  %v2883 = vpop.f32.mrf.mxu0
  %v2884 = vadd.f32 %v1495, %v2883
  %v2885 = vpop.f32.mrf.mxu0
  %v2886 = vadd.f32 %v1495, %v2885
  %2887 = vmatmul.bf16.gmra.mxu0 %v1399
  %v2888 = vpop.f32.mrf.mxu0
  %v2889 = vadd.f32 %v1495, %v2888
  %v2890 = vpop.f32.mrf.mxu0
  %v2891 = vadd.f32 %v1495, %v2890
  %2892 = vmatmul.bf16.gmra.mxu0 %v1400
  %v2893 = vpop.f32.mrf.mxu0
  %v2894 = vadd.f32 %v1495, %v2893
  %v2895 = vpop.f32.mrf.mxu0
  %v2896 = vadd.f32 %v1495, %v2895
  %2897 = vmatmul.bf16.gmra.mxu0 %v1401
  %v2898 = vpop.f32.mrf.mxu0
  %v2899 = vadd.f32 %v1495, %v2898
  %v2900 = vpop.f32.mrf.mxu0
  %v2901 = vadd.f32 %v1495, %v2900
  %2902 = vmatmul.bf16.gmra.mxu0 %v1402
  %v2903 = vpop.f32.mrf.mxu0
  %v2904 = vadd.f32 %v1495, %v2903
  %v2905 = vpop.f32.mrf.mxu0
  %v2906 = vadd.f32 %v1495, %v2905
  %2907 = vmatmul.bf16.gmra.mxu0 %v1403
  %v2908 = vpop.f32.mrf.mxu0
  %v2909 = vadd.f32 %v1495, %v2908
  %v2910 = vpop.f32.mrf.mxu0
  %v2911 = vadd.f32 %v1495, %v2910
  %2912 = vmatmul.bf16.gmra.mxu0 %v1404
  %v2913 = vpop.f32.mrf.mxu0
  %v2914 = vadd.f32 %v1495, %v2913
  %v2915 = vpop.f32.mrf.mxu0
  %v2916 = vadd.f32 %v1495, %v2915
  %2917 = vmatmul.bf16.gmra.mxu0 %v1405
  %v2918 = vpop.f32.mrf.mxu0
  %v2919 = vadd.f32 %v1495, %v2918
  %v2920 = vpop.f32.mrf.mxu0
  %v2921 = vadd.f32 %v1495, %v2920
  %2922 = vmatmul.bf16.gmra.mxu0 %v1406
  %v2923 = vpop.f32.mrf.mxu0
  %v2924 = vadd.f32 %v1495, %v2923
  %v2925 = vpop.f32.mrf.mxu0
  %v2926 = vadd.f32 %v1495, %v2925
  %2927 = vmatmul.bf16.gmra.mxu0 %v1407
  %v2928 = vpop.f32.mrf.mxu0
  %v2929 = vadd.f32 %v1495, %v2928
  %v2930 = vpop.f32.mrf.mxu0
  %v2931 = vadd.f32 %v1495, %v2930
  %2932 = vmatmul.bf16.gmra.mxu0 %v1408
  %v2933 = vpop.f32.mrf.mxu0
  %v2934 = vadd.f32 %v1495, %v2933
  %v2935 = vpop.f32.mrf.mxu0
  %v2936 = vadd.f32 %v1495, %v2935
  %2937 = vmatmul.bf16.gmra.mxu0 %v1409
  %v2938 = vpop.f32.mrf.mxu0
  %v2939 = vadd.f32 %v1495, %v2938
  %v2940 = vpop.f32.mrf.mxu0
  %v2941 = vadd.f32 %v1495, %v2940
  %2942 = vmatmul.bf16.gmra.mxu0 %v1410
  %v2943 = vpop.f32.mrf.mxu0
  %v2944 = vadd.f32 %v1495, %v2943
  %v2945 = vpop.f32.mrf.mxu0
  %v2946 = vadd.f32 %v1495, %v2945
  %2947 = vmatmul.bf16.gmra.mxu0 %v1411
  %v2948 = vpop.f32.mrf.mxu0
  %v2949 = vadd.f32 %v1495, %v2948
  %v2950 = vpop.f32.mrf.mxu0
  %v2951 = vadd.f32 %v1495, %v2950
  %2952 = vmatmul.bf16.gmra.mxu0 %v1412
  %v2953 = vpop.f32.mrf.mxu0
  %v2954 = vadd.f32 %v1495, %v2953
  %v2955 = vpop.f32.mrf.mxu0
  %v2956 = vadd.f32 %v1495, %v2955
  %2957 = vmatmul.bf16.gmra.mxu0 %v1413
  %v2958 = vpop.f32.mrf.mxu0
  %v2959 = vadd.f32 %v1495, %v2958
  %v2960 = vpop.f32.mrf.mxu0
  %v2961 = vadd.f32 %v1495, %v2960
  %2962 = vmatmul.bf16.gmra.mxu0 %v1414
  %v2963 = vpop.f32.mrf.mxu0
  %v2964 = vadd.f32 %v1495, %v2963
  %v2965 = vpop.f32.mrf.mxu0
  %v2966 = vadd.f32 %v1495, %v2965
  %2967 = vmatmul.bf16.gmra.mxu0 %v1415
  %v2968 = vpop.f32.mrf.mxu0
  %v2969 = vadd.f32 %v1495, %v2968
  %v2970 = vpop.f32.mrf.mxu0
  %v2971 = vadd.f32 %v1495, %v2970
  %2972 = vmatmul.bf16.gmra.mxu0 %v1416
  %v2973 = vpop.f32.mrf.mxu0
  %v2974 = vadd.f32 %v1495, %v2973
  %v2975 = vpop.f32.mrf.mxu0
  %v2976 = vadd.f32 %v1495, %v2975
  %2977 = vmatmul.bf16.gmra.mxu0 %v1417
  %v2978 = vpop.f32.mrf.mxu0
  %v2979 = vadd.f32 %v1495, %v2978
  %v2980 = vpop.f32.mrf.mxu0
  %v2981 = vadd.f32 %v1495, %v2980
  %2982 = vmatmul.bf16.gmra.mxu0 %v1418
  %v2983 = vpop.f32.mrf.mxu0
  %v2984 = vadd.f32 %v1495, %v2983
  %v2985 = vpop.f32.mrf.mxu0
  %v2986 = vadd.f32 %v1495, %v2985
  %2987 = vmatmul.bf16.gmra.mxu0 %v1419
  %v2988 = vpop.f32.mrf.mxu0
  %v2989 = vadd.f32 %v1495, %v2988
  %v2990 = vpop.f32.mrf.mxu0
  %v2991 = vadd.f32 %v1495, %v2990
  %2992 = vmatmul.bf16.gmra.mxu0 %v1420
  %v2993 = vpop.f32.mrf.mxu0
  %v2994 = vadd.f32 %v1495, %v2993
  %v2995 = vpop.f32.mrf.mxu0
  %v2996 = vadd.f32 %v1495, %v2995
  %2997 = vmatmul.bf16.gmra.mxu0 %v1421
  %v2998 = vpop.f32.mrf.mxu0
  %v2999 = vadd.f32 %v1495, %v2998
  %v3000 = vpop.f32.mrf.mxu0
  %v3001 = vadd.f32 %v1495, %v3000
  %3002 = vmatmul.bf16.gmra.mxu0 %v1422
  %v3003 = vpop.f32.mrf.mxu0
  %v3004 = vadd.f32 %v1495, %v3003
  %v3005 = vpop.f32.mrf.mxu0
  %v3006 = vadd.f32 %v1495, %v3005
  %3007 = vdwg.mxu0
  %3008 = vmatpush.bf16.msra.mxu0 %v1760
  %3009 = vmatpush.bf16.msra.mxu0 %v1752
  %3010 = vmatpush.bf16.msra.mxu0 %v1744
  %3011 = vmatpush.bf16.msra.mxu0 %v1736
  %3012 = vmatpush.bf16.msra.mxu0 %v1728
  %3013 = vmatpush.bf16.msra.mxu0 %v1720
  %3014 = vmatpush.bf16.msra.mxu0 %v1712
  %3015 = vmatpush.bf16.msra.mxu0 %v1704
  %3016 = vmatmul.bf16.gmra.mxu0 %v1391
  %v3017 = vpop.f32.mrf.mxu0
  %v3018 = vadd.f32 %v1496, %v3017
  %v3019 = vpop.f32.mrf.mxu0
  %v3020 = vadd.f32 %v1496, %v3019
  %3021 = vmatmul.bf16.gmra.mxu0 %v1392
  %v3022 = vpop.f32.mrf.mxu0
  %v3023 = vadd.f32 %v1496, %v3022
  %v3024 = vpop.f32.mrf.mxu0
  %v3025 = vadd.f32 %v1496, %v3024
  %3026 = vmatmul.bf16.gmra.mxu0 %v1393
  %v3027 = vpop.f32.mrf.mxu0
  %v3028 = vadd.f32 %v1496, %v3027
  %v3029 = vpop.f32.mrf.mxu0
  %v3030 = vadd.f32 %v1496, %v3029
  %3031 = vmatmul.bf16.gmra.mxu0 %v1394
  %v3032 = vpop.f32.mrf.mxu0
  %v3033 = vadd.f32 %v1496, %v3032
  %v3034 = vpop.f32.mrf.mxu0
  %v3035 = vadd.f32 %v1496, %v3034
  %3036 = vmatmul.bf16.gmra.mxu0 %v1395
  %v3037 = vpop.f32.mrf.mxu0
  %v3038 = vadd.f32 %v1496, %v3037
  %v3039 = vpop.f32.mrf.mxu0
  %v3040 = vadd.f32 %v1496, %v3039
  %3041 = vmatmul.bf16.gmra.mxu0 %v1396
  %v3042 = vpop.f32.mrf.mxu0
  %v3043 = vadd.f32 %v1496, %v3042
  %v3044 = vpop.f32.mrf.mxu0
  %v3045 = vadd.f32 %v1496, %v3044
  %3046 = vmatmul.bf16.gmra.mxu0 %v1397
  %v3047 = vpop.f32.mrf.mxu0
  %v3048 = vadd.f32 %v1496, %v3047
  %v3049 = vpop.f32.mrf.mxu0
  %v3050 = vadd.f32 %v1496, %v3049
  %3051 = vmatmul.bf16.gmra.mxu0 %v1398
  %v3052 = vpop.f32.mrf.mxu0
  %v3053 = vadd.f32 %v1496, %v3052
  %v3054 = vpop.f32.mrf.mxu0
  %v3055 = vadd.f32 %v1496, %v3054
  %3056 = vmatmul.bf16.gmra.mxu0 %v1399
  %v3057 = vpop.f32.mrf.mxu0
  %v3058 = vadd.f32 %v1496, %v3057
  %v3059 = vpop.f32.mrf.mxu0
  %v3060 = vadd.f32 %v1496, %v3059
  %3061 = vmatmul.bf16.gmra.mxu0 %v1400
  %v3062 = vpop.f32.mrf.mxu0
  %v3063 = vadd.f32 %v1496, %v3062
  %v3064 = vpop.f32.mrf.mxu0
  %v3065 = vadd.f32 %v1496, %v3064
  %3066 = vmatmul.bf16.gmra.mxu0 %v1401
  %v3067 = vpop.f32.mrf.mxu0
  %v3068 = vadd.f32 %v1496, %v3067
  %v3069 = vpop.f32.mrf.mxu0
  %v3070 = vadd.f32 %v1496, %v3069
  %3071 = vmatmul.bf16.gmra.mxu0 %v1402
  %v3072 = vpop.f32.mrf.mxu0
  %v3073 = vadd.f32 %v1496, %v3072
  %v3074 = vpop.f32.mrf.mxu0
  %v3075 = vadd.f32 %v1496, %v3074
  %3076 = vmatmul.bf16.gmra.mxu0 %v1403
  %v3077 = vpop.f32.mrf.mxu0
  %v3078 = vadd.f32 %v1496, %v3077
  %v3079 = vpop.f32.mrf.mxu0
  %v3080 = vadd.f32 %v1496, %v3079
  %3081 = vmatmul.bf16.gmra.mxu0 %v1404
  %v3082 = vpop.f32.mrf.mxu0
  %v3083 = vadd.f32 %v1496, %v3082
  %v3084 = vpop.f32.mrf.mxu0
  %v3085 = vadd.f32 %v1496, %v3084
  %3086 = vmatmul.bf16.gmra.mxu0 %v1405
  %v3087 = vpop.f32.mrf.mxu0
  %v3088 = vadd.f32 %v1496, %v3087
  %v3089 = vpop.f32.mrf.mxu0
  %v3090 = vadd.f32 %v1496, %v3089
  %3091 = vmatmul.bf16.gmra.mxu0 %v1406
  %v3092 = vpop.f32.mrf.mxu0
  %v3093 = vadd.f32 %v1496, %v3092
  %v3094 = vpop.f32.mrf.mxu0
  %v3095 = vadd.f32 %v1496, %v3094
  %3096 = vmatmul.bf16.gmra.mxu0 %v1407
  %v3097 = vpop.f32.mrf.mxu0
  %v3098 = vadd.f32 %v1496, %v3097
  %v3099 = vpop.f32.mrf.mxu0
  %v3100 = vadd.f32 %v1496, %v3099
  %3101 = vmatmul.bf16.gmra.mxu0 %v1408
  %v3102 = vpop.f32.mrf.mxu0
  %v3103 = vadd.f32 %v1496, %v3102
  %v3104 = vpop.f32.mrf.mxu0
  %v3105 = vadd.f32 %v1496, %v3104
  %3106 = vmatmul.bf16.gmra.mxu0 %v1409
  %v3107 = vpop.f32.mrf.mxu0
  %v3108 = vadd.f32 %v1496, %v3107
  %v3109 = vpop.f32.mrf.mxu0
  %v3110 = vadd.f32 %v1496, %v3109
  %3111 = vmatmul.bf16.gmra.mxu0 %v1410
  %v3112 = vpop.f32.mrf.mxu0
  %v3113 = vadd.f32 %v1496, %v3112
  %v3114 = vpop.f32.mrf.mxu0
  %v3115 = vadd.f32 %v1496, %v3114
  %3116 = vmatmul.bf16.gmra.mxu0 %v1411
  %v3117 = vpop.f32.mrf.mxu0
  %v3118 = vadd.f32 %v1496, %v3117
  %v3119 = vpop.f32.mrf.mxu0
  %v3120 = vadd.f32 %v1496, %v3119
  %3121 = vmatmul.bf16.gmra.mxu0 %v1412
  %v3122 = vpop.f32.mrf.mxu0
  %v3123 = vadd.f32 %v1496, %v3122
  %v3124 = vpop.f32.mrf.mxu0
  %v3125 = vadd.f32 %v1496, %v3124
  %3126 = vmatmul.bf16.gmra.mxu0 %v1413
  %v3127 = vpop.f32.mrf.mxu0
  %v3128 = vadd.f32 %v1496, %v3127
  %v3129 = vpop.f32.mrf.mxu0
  %v3130 = vadd.f32 %v1496, %v3129
  %3131 = vmatmul.bf16.gmra.mxu0 %v1414
  %v3132 = vpop.f32.mrf.mxu0
  %v3133 = vadd.f32 %v1496, %v3132
  %v3134 = vpop.f32.mrf.mxu0
  %v3135 = vadd.f32 %v1496, %v3134
  %3136 = vmatmul.bf16.gmra.mxu0 %v1415
  %v3137 = vpop.f32.mrf.mxu0
  %v3138 = vadd.f32 %v1496, %v3137
  %v3139 = vpop.f32.mrf.mxu0
  %v3140 = vadd.f32 %v1496, %v3139
  %3141 = vmatmul.bf16.gmra.mxu0 %v1416
  %v3142 = vpop.f32.mrf.mxu0
  %v3143 = vadd.f32 %v1496, %v3142
  %v3144 = vpop.f32.mrf.mxu0
  %v3145 = vadd.f32 %v1496, %v3144
  %3146 = vmatmul.bf16.gmra.mxu0 %v1417
  %v3147 = vpop.f32.mrf.mxu0
  %v3148 = vadd.f32 %v1496, %v3147
  %v3149 = vpop.f32.mrf.mxu0
  %v3150 = vadd.f32 %v1496, %v3149
  %3151 = vmatmul.bf16.gmra.mxu0 %v1418
  %v3152 = vpop.f32.mrf.mxu0
  %v3153 = vadd.f32 %v1496, %v3152
  %v3154 = vpop.f32.mrf.mxu0
  %v3155 = vadd.f32 %v1496, %v3154
  %3156 = vmatmul.bf16.gmra.mxu0 %v1419
  %v3157 = vpop.f32.mrf.mxu0
  %v3158 = vadd.f32 %v1496, %v3157
  %v3159 = vpop.f32.mrf.mxu0
  %v3160 = vadd.f32 %v1496, %v3159
  %3161 = vmatmul.bf16.gmra.mxu0 %v1420
  %v3162 = vpop.f32.mrf.mxu0
  %v3163 = vadd.f32 %v1496, %v3162
  %v3164 = vpop.f32.mrf.mxu0
  %v3165 = vadd.f32 %v1496, %v3164
  %3166 = vmatmul.bf16.gmra.mxu0 %v1421
  %v3167 = vpop.f32.mrf.mxu0
  %v3168 = vadd.f32 %v1496, %v3167
  %v3169 = vpop.f32.mrf.mxu0
  %v3170 = vadd.f32 %v1496, %v3169
  %3171 = vmatmul.bf16.gmra.mxu0 %v1422
  %v3172 = vpop.f32.mrf.mxu0
  %v3173 = vadd.f32 %v1496, %v3172
  %v3174 = vpop.f32.mrf.mxu0
  %v3175 = vadd.f32 %v1496, %v3174
  %3176 = vdwg.mxu0
  %v3177 = vmax.f32 %v1835, 0.0
  %v3178 = vmax.f32 %v2004, 0.0
  %v3179 = vmax.f32 %v2173, 0.0
  %v3180 = vmax.f32 %v2342, 0.0
  %v3181 = vmax.f32 %v2511, 0.0
  %v3182 = vmax.f32 %v2680, 0.0
  %v3183 = vmax.f32 %v2849, 0.0
  %v3184 = vmax.f32 %v3018, 0.0
  %v3185 = vmax.f32 %v1837, 0.0
  %v3186 = vmax.f32 %v2006, 0.0
  %v3187 = vmax.f32 %v2175, 0.0
  %v3188 = vmax.f32 %v2344, 0.0
  %v3189 = vmax.f32 %v2513, 0.0
  %v3190 = vmax.f32 %v2682, 0.0
  %v3191 = vmax.f32 %v2851, 0.0
  %v3192 = vmax.f32 %v3020, 0.0
  %v3193 = vmax.f32 %v1840, 0.0
  %v3194 = vmax.f32 %v2009, 0.0
  %v3195 = vmax.f32 %v2178, 0.0
  %v3196 = vmax.f32 %v2347, 0.0
  %v3197 = vmax.f32 %v2516, 0.0
  %v3198 = vmax.f32 %v2685, 0.0
  %v3199 = vmax.f32 %v2854, 0.0
  %v3200 = vmax.f32 %v3023, 0.0
  %v3201 = vmax.f32 %v1842, 0.0
  %v3202 = vmax.f32 %v2011, 0.0
  %v3203 = vmax.f32 %v2180, 0.0
  %v3204 = vmax.f32 %v2349, 0.0
  %v3205 = vmax.f32 %v2518, 0.0
  %v3206 = vmax.f32 %v2687, 0.0
  %v3207 = vmax.f32 %v2856, 0.0
  %v3208 = vmax.f32 %v3025, 0.0
  %v3209 = vmax.f32 %v1845, 0.0
  %v3210 = vmax.f32 %v2014, 0.0
  %v3211 = vmax.f32 %v2183, 0.0
  %v3212 = vmax.f32 %v2352, 0.0
  %v3213 = vmax.f32 %v2521, 0.0
  %v3214 = vmax.f32 %v2690, 0.0
  %v3215 = vmax.f32 %v2859, 0.0
  %v3216 = vmax.f32 %v3028, 0.0
  %v3217 = vmax.f32 %v1847, 0.0
  %v3218 = vmax.f32 %v2016, 0.0
  %v3219 = vmax.f32 %v2185, 0.0
  %v3220 = vmax.f32 %v2354, 0.0
  %v3221 = vmax.f32 %v2523, 0.0
  %v3222 = vmax.f32 %v2692, 0.0
  %v3223 = vmax.f32 %v2861, 0.0
  %v3224 = vmax.f32 %v3030, 0.0
  %v3225 = vmax.f32 %v1850, 0.0
  %v3226 = vmax.f32 %v2019, 0.0
  %v3227 = vmax.f32 %v2188, 0.0
  %v3228 = vmax.f32 %v2357, 0.0
  %v3229 = vmax.f32 %v2526, 0.0
  %v3230 = vmax.f32 %v2695, 0.0
  %v3231 = vmax.f32 %v2864, 0.0
  %v3232 = vmax.f32 %v3033, 0.0
  %v3233 = vmax.f32 %v1852, 0.0
  %v3234 = vmax.f32 %v2021, 0.0
  %v3235 = vmax.f32 %v2190, 0.0
  %v3236 = vmax.f32 %v2359, 0.0
  %v3237 = vmax.f32 %v2528, 0.0
  %v3238 = vmax.f32 %v2697, 0.0
  %v3239 = vmax.f32 %v2866, 0.0
  %v3240 = vmax.f32 %v3035, 0.0
  %v3241 = vmax.f32 %v1855, 0.0
  %v3242 = vmax.f32 %v2024, 0.0
  %v3243 = vmax.f32 %v2193, 0.0
  %v3244 = vmax.f32 %v2362, 0.0
  %v3245 = vmax.f32 %v2531, 0.0
  %v3246 = vmax.f32 %v2700, 0.0
  %v3247 = vmax.f32 %v2869, 0.0
  %v3248 = vmax.f32 %v3038, 0.0
  %v3249 = vmax.f32 %v1857, 0.0
  %v3250 = vmax.f32 %v2026, 0.0
  %v3251 = vmax.f32 %v2195, 0.0
  %v3252 = vmax.f32 %v2364, 0.0
  %v3253 = vmax.f32 %v2533, 0.0
  %v3254 = vmax.f32 %v2702, 0.0
  %v3255 = vmax.f32 %v2871, 0.0
  %v3256 = vmax.f32 %v3040, 0.0
  %v3257 = vmax.f32 %v1860, 0.0
  %v3258 = vmax.f32 %v2029, 0.0
  %v3259 = vmax.f32 %v2198, 0.0
  %v3260 = vmax.f32 %v2367, 0.0
  %v3261 = vmax.f32 %v2536, 0.0
  %v3262 = vmax.f32 %v2705, 0.0
  %v3263 = vmax.f32 %v2874, 0.0
  %v3264 = vmax.f32 %v3043, 0.0
  %v3265 = vmax.f32 %v1862, 0.0
  %v3266 = vmax.f32 %v2031, 0.0
  %v3267 = vmax.f32 %v2200, 0.0
  %v3268 = vmax.f32 %v2369, 0.0
  %v3269 = vmax.f32 %v2538, 0.0
  %v3270 = vmax.f32 %v2707, 0.0
  %v3271 = vmax.f32 %v2876, 0.0
  %v3272 = vmax.f32 %v3045, 0.0
  %v3273 = vmax.f32 %v1865, 0.0
  %v3274 = vmax.f32 %v2034, 0.0
  %v3275 = vmax.f32 %v2203, 0.0
  %v3276 = vmax.f32 %v2372, 0.0
  %v3277 = vmax.f32 %v2541, 0.0
  %v3278 = vmax.f32 %v2710, 0.0
  %v3279 = vmax.f32 %v2879, 0.0
  %v3280 = vmax.f32 %v3048, 0.0
  %v3281 = vmax.f32 %v1867, 0.0
  %v3282 = vmax.f32 %v2036, 0.0
  %v3283 = vmax.f32 %v2205, 0.0
  %v3284 = vmax.f32 %v2374, 0.0
  %v3285 = vmax.f32 %v2543, 0.0
  %v3286 = vmax.f32 %v2712, 0.0
  %v3287 = vmax.f32 %v2881, 0.0
  %v3288 = vmax.f32 %v3050, 0.0
  %v3289 = vmax.f32 %v1870, 0.0
  %v3290 = vmax.f32 %v2039, 0.0
  %v3291 = vmax.f32 %v2208, 0.0
  %v3292 = vmax.f32 %v2377, 0.0
  %v3293 = vmax.f32 %v2546, 0.0
  %v3294 = vmax.f32 %v2715, 0.0
  %v3295 = vmax.f32 %v2884, 0.0
  %v3296 = vmax.f32 %v3053, 0.0
  %v3297 = vmax.f32 %v1872, 0.0
  %v3298 = vmax.f32 %v2041, 0.0
  %v3299 = vmax.f32 %v2210, 0.0
  %v3300 = vmax.f32 %v2379, 0.0
  %v3301 = vmax.f32 %v2548, 0.0
  %v3302 = vmax.f32 %v2717, 0.0
  %v3303 = vmax.f32 %v2886, 0.0
  %v3304 = vmax.f32 %v3055, 0.0
  %v3305 = vmax.f32 %v1875, 0.0
  %v3306 = vmax.f32 %v2044, 0.0
  %v3307 = vmax.f32 %v2213, 0.0
  %v3308 = vmax.f32 %v2382, 0.0
  %v3309 = vmax.f32 %v2551, 0.0
  %v3310 = vmax.f32 %v2720, 0.0
  %v3311 = vmax.f32 %v2889, 0.0
  %v3312 = vmax.f32 %v3058, 0.0
  %v3313 = vmax.f32 %v1877, 0.0
  %v3314 = vmax.f32 %v2046, 0.0
  %v3315 = vmax.f32 %v2215, 0.0
  %v3316 = vmax.f32 %v2384, 0.0
  %v3317 = vmax.f32 %v2553, 0.0
  %v3318 = vmax.f32 %v2722, 0.0
  %v3319 = vmax.f32 %v2891, 0.0
  %v3320 = vmax.f32 %v3060, 0.0
  %v3321 = vmax.f32 %v1880, 0.0
  %v3322 = vmax.f32 %v2049, 0.0
  %v3323 = vmax.f32 %v2218, 0.0
  %v3324 = vmax.f32 %v2387, 0.0
  %v3325 = vmax.f32 %v2556, 0.0
  %v3326 = vmax.f32 %v2725, 0.0
  %v3327 = vmax.f32 %v2894, 0.0
  %v3328 = vmax.f32 %v3063, 0.0
  %v3329 = vmax.f32 %v1882, 0.0
  %v3330 = vmax.f32 %v2051, 0.0
  %v3331 = vmax.f32 %v2220, 0.0
  %v3332 = vmax.f32 %v2389, 0.0
  %v3333 = vmax.f32 %v2558, 0.0
  %v3334 = vmax.f32 %v2727, 0.0
  %v3335 = vmax.f32 %v2896, 0.0
  %v3336 = vmax.f32 %v3065, 0.0
  %v3337 = vmax.f32 %v1885, 0.0
  %v3338 = vmax.f32 %v2054, 0.0
  %v3339 = vmax.f32 %v2223, 0.0
  %v3340 = vmax.f32 %v2392, 0.0
  %v3341 = vmax.f32 %v2561, 0.0
  %v3342 = vmax.f32 %v2730, 0.0
  %v3343 = vmax.f32 %v2899, 0.0
  %v3344 = vmax.f32 %v3068, 0.0
  %v3345 = vmax.f32 %v1887, 0.0
  %v3346 = vmax.f32 %v2056, 0.0
  %v3347 = vmax.f32 %v2225, 0.0
  %v3348 = vmax.f32 %v2394, 0.0
  %v3349 = vmax.f32 %v2563, 0.0
  %v3350 = vmax.f32 %v2732, 0.0
  %v3351 = vmax.f32 %v2901, 0.0
  %v3352 = vmax.f32 %v3070, 0.0
  %v3353 = vmax.f32 %v1890, 0.0
  %v3354 = vmax.f32 %v2059, 0.0
  %v3355 = vmax.f32 %v2228, 0.0
  %v3356 = vmax.f32 %v2397, 0.0
  %v3357 = vmax.f32 %v2566, 0.0
  %v3358 = vmax.f32 %v2735, 0.0
  %v3359 = vmax.f32 %v2904, 0.0
  %v3360 = vmax.f32 %v3073, 0.0
  %v3361 = vmax.f32 %v1892, 0.0
  %v3362 = vmax.f32 %v2061, 0.0
  %v3363 = vmax.f32 %v2230, 0.0
  %v3364 = vmax.f32 %v2399, 0.0
  %v3365 = vmax.f32 %v2568, 0.0
  %v3366 = vmax.f32 %v2737, 0.0
  %v3367 = vmax.f32 %v2906, 0.0
  %v3368 = vmax.f32 %v3075, 0.0
  %v3369 = vmax.f32 %v1895, 0.0
  %v3370 = vmax.f32 %v2064, 0.0
  %v3371 = vmax.f32 %v2233, 0.0
  %v3372 = vmax.f32 %v2402, 0.0
  %v3373 = vmax.f32 %v2571, 0.0
  %v3374 = vmax.f32 %v2740, 0.0
  %v3375 = vmax.f32 %v2909, 0.0
  %v3376 = vmax.f32 %v3078, 0.0
  %v3377 = vmax.f32 %v1897, 0.0
  %v3378 = vmax.f32 %v2066, 0.0
  %v3379 = vmax.f32 %v2235, 0.0
  %v3380 = vmax.f32 %v2404, 0.0
  %v3381 = vmax.f32 %v2573, 0.0
  %v3382 = vmax.f32 %v2742, 0.0
  %v3383 = vmax.f32 %v2911, 0.0
  %v3384 = vmax.f32 %v3080, 0.0
  %v3385 = vmax.f32 %v1900, 0.0
  %v3386 = vmax.f32 %v2069, 0.0
  %v3387 = vmax.f32 %v2238, 0.0
  %v3388 = vmax.f32 %v2407, 0.0
  %v3389 = vmax.f32 %v2576, 0.0
  %v3390 = vmax.f32 %v2745, 0.0
  %v3391 = vmax.f32 %v2914, 0.0
  %v3392 = vmax.f32 %v3083, 0.0
  %v3393 = vmax.f32 %v1902, 0.0
  %v3394 = vmax.f32 %v2071, 0.0
  %v3395 = vmax.f32 %v2240, 0.0
  %v3396 = vmax.f32 %v2409, 0.0
  %v3397 = vmax.f32 %v2578, 0.0
  %v3398 = vmax.f32 %v2747, 0.0
  %v3399 = vmax.f32 %v2916, 0.0
  %v3400 = vmax.f32 %v3085, 0.0
  %v3401 = vmax.f32 %v1905, 0.0
  %v3402 = vmax.f32 %v2074, 0.0
  %v3403 = vmax.f32 %v2243, 0.0
  %v3404 = vmax.f32 %v2412, 0.0
  %v3405 = vmax.f32 %v2581, 0.0
  %v3406 = vmax.f32 %v2750, 0.0
  %v3407 = vmax.f32 %v2919, 0.0
  %v3408 = vmax.f32 %v3088, 0.0
  %v3409 = vmax.f32 %v1907, 0.0
  %v3410 = vmax.f32 %v2076, 0.0
  %v3411 = vmax.f32 %v2245, 0.0
  %v3412 = vmax.f32 %v2414, 0.0
  %v3413 = vmax.f32 %v2583, 0.0
  %v3414 = vmax.f32 %v2752, 0.0
  %v3415 = vmax.f32 %v2921, 0.0
  %v3416 = vmax.f32 %v3090, 0.0
  %v3417 = vmax.f32 %v1910, 0.0
  %v3418 = vmax.f32 %v2079, 0.0
  %v3419 = vmax.f32 %v2248, 0.0
  %v3420 = vmax.f32 %v2417, 0.0
  %v3421 = vmax.f32 %v2586, 0.0
  %v3422 = vmax.f32 %v2755, 0.0
  %v3423 = vmax.f32 %v2924, 0.0
  %v3424 = vmax.f32 %v3093, 0.0
  %v3425 = vmax.f32 %v1912, 0.0
  %v3426 = vmax.f32 %v2081, 0.0
  %v3427 = vmax.f32 %v2250, 0.0
  %v3428 = vmax.f32 %v2419, 0.0
  %v3429 = vmax.f32 %v2588, 0.0
  %v3430 = vmax.f32 %v2757, 0.0
  %v3431 = vmax.f32 %v2926, 0.0
  %v3432 = vmax.f32 %v3095, 0.0
  %v3433 = vmax.f32 %v1915, 0.0
  %v3434 = vmax.f32 %v2084, 0.0
  %v3435 = vmax.f32 %v2253, 0.0
  %v3436 = vmax.f32 %v2422, 0.0
  %v3437 = vmax.f32 %v2591, 0.0
  %v3438 = vmax.f32 %v2760, 0.0
  %v3439 = vmax.f32 %v2929, 0.0
  %v3440 = vmax.f32 %v3098, 0.0
  %v3441 = vmax.f32 %v1917, 0.0
  %v3442 = vmax.f32 %v2086, 0.0
  %v3443 = vmax.f32 %v2255, 0.0
  %v3444 = vmax.f32 %v2424, 0.0
  %v3445 = vmax.f32 %v2593, 0.0
  %v3446 = vmax.f32 %v2762, 0.0
  %v3447 = vmax.f32 %v2931, 0.0
  %v3448 = vmax.f32 %v3100, 0.0
  %v3449 = vmax.f32 %v1920, 0.0
  %v3450 = vmax.f32 %v2089, 0.0
  %v3451 = vmax.f32 %v2258, 0.0
  %v3452 = vmax.f32 %v2427, 0.0
  %v3453 = vmax.f32 %v2596, 0.0
  %v3454 = vmax.f32 %v2765, 0.0
  %v3455 = vmax.f32 %v2934, 0.0
  %v3456 = vmax.f32 %v3103, 0.0
  %v3457 = vmax.f32 %v1922, 0.0
  %v3458 = vmax.f32 %v2091, 0.0
  %v3459 = vmax.f32 %v2260, 0.0
  %v3460 = vmax.f32 %v2429, 0.0
  %v3461 = vmax.f32 %v2598, 0.0
  %v3462 = vmax.f32 %v2767, 0.0
  %v3463 = vmax.f32 %v2936, 0.0
  %v3464 = vmax.f32 %v3105, 0.0
  %v3465 = vmax.f32 %v1925, 0.0
  %v3466 = vmax.f32 %v2094, 0.0
  %v3467 = vmax.f32 %v2263, 0.0
  %v3468 = vmax.f32 %v2432, 0.0
  %v3469 = vmax.f32 %v2601, 0.0
  %v3470 = vmax.f32 %v2770, 0.0
  %v3471 = vmax.f32 %v2939, 0.0
  %v3472 = vmax.f32 %v3108, 0.0
  %v3473 = vmax.f32 %v1927, 0.0
  %v3474 = vmax.f32 %v2096, 0.0
  %v3475 = vmax.f32 %v2265, 0.0
  %v3476 = vmax.f32 %v2434, 0.0
  %v3477 = vmax.f32 %v2603, 0.0
  %v3478 = vmax.f32 %v2772, 0.0
  %v3479 = vmax.f32 %v2941, 0.0
  %v3480 = vmax.f32 %v3110, 0.0
  %v3481 = vmax.f32 %v1930, 0.0
  %v3482 = vmax.f32 %v2099, 0.0
  %v3483 = vmax.f32 %v2268, 0.0
  %v3484 = vmax.f32 %v2437, 0.0
  %v3485 = vmax.f32 %v2606, 0.0
  %v3486 = vmax.f32 %v2775, 0.0
  %v3487 = vmax.f32 %v2944, 0.0
  %v3488 = vmax.f32 %v3113, 0.0
  %v3489 = vmax.f32 %v1932, 0.0
  %v3490 = vmax.f32 %v2101, 0.0
  %v3491 = vmax.f32 %v2270, 0.0
  %v3492 = vmax.f32 %v2439, 0.0
  %v3493 = vmax.f32 %v2608, 0.0
  %v3494 = vmax.f32 %v2777, 0.0
  %v3495 = vmax.f32 %v2946, 0.0
  %v3496 = vmax.f32 %v3115, 0.0
  %v3497 = vmax.f32 %v1935, 0.0
  %v3498 = vmax.f32 %v2104, 0.0
  %v3499 = vmax.f32 %v2273, 0.0
  %v3500 = vmax.f32 %v2442, 0.0
  %v3501 = vmax.f32 %v2611, 0.0
  %v3502 = vmax.f32 %v2780, 0.0
  %v3503 = vmax.f32 %v2949, 0.0
  %v3504 = vmax.f32 %v3118, 0.0
  %v3505 = vmax.f32 %v1937, 0.0
  %v3506 = vmax.f32 %v2106, 0.0
  %v3507 = vmax.f32 %v2275, 0.0
  %v3508 = vmax.f32 %v2444, 0.0
  %v3509 = vmax.f32 %v2613, 0.0
  %v3510 = vmax.f32 %v2782, 0.0
  %v3511 = vmax.f32 %v2951, 0.0
  %v3512 = vmax.f32 %v3120, 0.0
  %v3513 = vmax.f32 %v1940, 0.0
  %v3514 = vmax.f32 %v2109, 0.0
  %v3515 = vmax.f32 %v2278, 0.0
  %v3516 = vmax.f32 %v2447, 0.0
  %v3517 = vmax.f32 %v2616, 0.0
  %v3518 = vmax.f32 %v2785, 0.0
  %v3519 = vmax.f32 %v2954, 0.0
  %v3520 = vmax.f32 %v3123, 0.0
  %v3521 = vmax.f32 %v1942, 0.0
  %v3522 = vmax.f32 %v2111, 0.0
  %v3523 = vmax.f32 %v2280, 0.0
  %v3524 = vmax.f32 %v2449, 0.0
  %v3525 = vmax.f32 %v2618, 0.0
  %v3526 = vmax.f32 %v2787, 0.0
  %v3527 = vmax.f32 %v2956, 0.0
  %v3528 = vmax.f32 %v3125, 0.0
  %v3529 = vmax.f32 %v1945, 0.0
  %v3530 = vmax.f32 %v2114, 0.0
  %v3531 = vmax.f32 %v2283, 0.0
  %v3532 = vmax.f32 %v2452, 0.0
  %v3533 = vmax.f32 %v2621, 0.0
  %v3534 = vmax.f32 %v2790, 0.0
  %v3535 = vmax.f32 %v2959, 0.0
  %v3536 = vmax.f32 %v3128, 0.0
  %v3537 = vmax.f32 %v1947, 0.0
  %v3538 = vmax.f32 %v2116, 0.0
  %v3539 = vmax.f32 %v2285, 0.0
  %v3540 = vmax.f32 %v2454, 0.0
  %v3541 = vmax.f32 %v2623, 0.0
  %v3542 = vmax.f32 %v2792, 0.0
  %v3543 = vmax.f32 %v2961, 0.0
  %v3544 = vmax.f32 %v3130, 0.0
  %v3545 = vmax.f32 %v1950, 0.0
  %v3546 = vmax.f32 %v2119, 0.0
  %v3547 = vmax.f32 %v2288, 0.0
  %v3548 = vmax.f32 %v2457, 0.0
  %v3549 = vmax.f32 %v2626, 0.0
  %v3550 = vmax.f32 %v2795, 0.0
  %v3551 = vmax.f32 %v2964, 0.0
  %v3552 = vmax.f32 %v3133, 0.0
  %v3553 = vmax.f32 %v1952, 0.0
  %v3554 = vmax.f32 %v2121, 0.0
  %v3555 = vmax.f32 %v2290, 0.0
  %v3556 = vmax.f32 %v2459, 0.0
  %v3557 = vmax.f32 %v2628, 0.0
  %v3558 = vmax.f32 %v2797, 0.0
  %v3559 = vmax.f32 %v2966, 0.0
  %v3560 = vmax.f32 %v3135, 0.0
  %v3561 = vmax.f32 %v1955, 0.0
  %v3562 = vmax.f32 %v2124, 0.0
  %v3563 = vmax.f32 %v2293, 0.0
  %v3564 = vmax.f32 %v2462, 0.0
  %v3565 = vmax.f32 %v2631, 0.0
  %v3566 = vmax.f32 %v2800, 0.0
  %v3567 = vmax.f32 %v2969, 0.0
  %v3568 = vmax.f32 %v3138, 0.0
  %v3569 = vmax.f32 %v1957, 0.0
  %v3570 = vmax.f32 %v2126, 0.0
  %v3571 = vmax.f32 %v2295, 0.0
  %v3572 = vmax.f32 %v2464, 0.0
  %v3573 = vmax.f32 %v2633, 0.0
  %v3574 = vmax.f32 %v2802, 0.0
  %v3575 = vmax.f32 %v2971, 0.0
  %v3576 = vmax.f32 %v3140, 0.0
  %v3577 = vmax.f32 %v1960, 0.0
  %v3578 = vmax.f32 %v2129, 0.0
  %v3579 = vmax.f32 %v2298, 0.0
  %v3580 = vmax.f32 %v2467, 0.0
  %v3581 = vmax.f32 %v2636, 0.0
  %v3582 = vmax.f32 %v2805, 0.0
  %v3583 = vmax.f32 %v2974, 0.0
  %v3584 = vmax.f32 %v3143, 0.0
  %v3585 = vmax.f32 %v1962, 0.0
  %v3586 = vmax.f32 %v2131, 0.0
  %v3587 = vmax.f32 %v2300, 0.0
  %v3588 = vmax.f32 %v2469, 0.0
  %v3589 = vmax.f32 %v2638, 0.0
  %v3590 = vmax.f32 %v2807, 0.0
  %v3591 = vmax.f32 %v2976, 0.0
  %v3592 = vmax.f32 %v3145, 0.0
  %v3593 = vmax.f32 %v1965, 0.0
  %v3594 = vmax.f32 %v2134, 0.0
  %v3595 = vmax.f32 %v2303, 0.0
  %v3596 = vmax.f32 %v2472, 0.0
  %v3597 = vmax.f32 %v2641, 0.0
  %v3598 = vmax.f32 %v2810, 0.0
  %v3599 = vmax.f32 %v2979, 0.0
  %v3600 = vmax.f32 %v3148, 0.0
  %v3601 = vmax.f32 %v1967, 0.0
  %v3602 = vmax.f32 %v2136, 0.0
  %v3603 = vmax.f32 %v2305, 0.0
  %v3604 = vmax.f32 %v2474, 0.0
  %v3605 = vmax.f32 %v2643, 0.0
  %v3606 = vmax.f32 %v2812, 0.0
  %v3607 = vmax.f32 %v2981, 0.0
  %v3608 = vmax.f32 %v3150, 0.0
  %v3609 = vmax.f32 %v1970, 0.0
  %v3610 = vmax.f32 %v2139, 0.0
  %v3611 = vmax.f32 %v2308, 0.0
  %v3612 = vmax.f32 %v2477, 0.0
  %v3613 = vmax.f32 %v2646, 0.0
  %v3614 = vmax.f32 %v2815, 0.0
  %v3615 = vmax.f32 %v2984, 0.0
  %v3616 = vmax.f32 %v3153, 0.0
  %v3617 = vmax.f32 %v1972, 0.0
  %v3618 = vmax.f32 %v2141, 0.0
  %v3619 = vmax.f32 %v2310, 0.0
  %v3620 = vmax.f32 %v2479, 0.0
  %v3621 = vmax.f32 %v2648, 0.0
  %v3622 = vmax.f32 %v2817, 0.0
  %v3623 = vmax.f32 %v2986, 0.0
  %v3624 = vmax.f32 %v3155, 0.0
  %v3625 = vmax.f32 %v1975, 0.0
  %v3626 = vmax.f32 %v2144, 0.0
  %v3627 = vmax.f32 %v2313, 0.0
  %v3628 = vmax.f32 %v2482, 0.0
  %v3629 = vmax.f32 %v2651, 0.0
  %v3630 = vmax.f32 %v2820, 0.0
  %v3631 = vmax.f32 %v2989, 0.0
  %v3632 = vmax.f32 %v3158, 0.0
  %v3633 = vmax.f32 %v1977, 0.0
  %v3634 = vmax.f32 %v2146, 0.0
  %v3635 = vmax.f32 %v2315, 0.0
  %v3636 = vmax.f32 %v2484, 0.0
  %v3637 = vmax.f32 %v2653, 0.0
  %v3638 = vmax.f32 %v2822, 0.0
  %v3639 = vmax.f32 %v2991, 0.0
  %v3640 = vmax.f32 %v3160, 0.0
  %v3641 = vmax.f32 %v1980, 0.0
  %v3642 = vmax.f32 %v2149, 0.0
  %v3643 = vmax.f32 %v2318, 0.0
  %v3644 = vmax.f32 %v2487, 0.0
  %v3645 = vmax.f32 %v2656, 0.0
  %v3646 = vmax.f32 %v2825, 0.0
  %v3647 = vmax.f32 %v2994, 0.0
  %v3648 = vmax.f32 %v3163, 0.0
  %v3649 = vmax.f32 %v1982, 0.0
  %v3650 = vmax.f32 %v2151, 0.0
  %v3651 = vmax.f32 %v2320, 0.0
  %v3652 = vmax.f32 %v2489, 0.0
  %v3653 = vmax.f32 %v2658, 0.0
  %v3654 = vmax.f32 %v2827, 0.0
  %v3655 = vmax.f32 %v2996, 0.0
  %v3656 = vmax.f32 %v3165, 0.0
  %v3657 = vmax.f32 %v1985, 0.0
  %v3658 = vmax.f32 %v2154, 0.0
  %v3659 = vmax.f32 %v2323, 0.0
  %v3660 = vmax.f32 %v2492, 0.0
  %v3661 = vmax.f32 %v2661, 0.0
  %v3662 = vmax.f32 %v2830, 0.0
  %v3663 = vmax.f32 %v2999, 0.0
  %v3664 = vmax.f32 %v3168, 0.0
  %v3665 = vmax.f32 %v1987, 0.0
  %v3666 = vmax.f32 %v2156, 0.0
  %v3667 = vmax.f32 %v2325, 0.0
  %v3668 = vmax.f32 %v2494, 0.0
  %v3669 = vmax.f32 %v2663, 0.0
  %v3670 = vmax.f32 %v2832, 0.0
  %v3671 = vmax.f32 %v3001, 0.0
  %v3672 = vmax.f32 %v3170, 0.0
  %v3673 = vmax.f32 %v1990, 0.0
  %v3674 = vmax.f32 %v2159, 0.0
  %v3675 = vmax.f32 %v2328, 0.0
  %v3676 = vmax.f32 %v2497, 0.0
  %v3677 = vmax.f32 %v2666, 0.0
  %v3678 = vmax.f32 %v2835, 0.0
  %v3679 = vmax.f32 %v3004, 0.0
  %v3680 = vmax.f32 %v3173, 0.0
  %v3681 = vmax.f32 %v1992, 0.0
  %v3682 = vmax.f32 %v2161, 0.0
  %v3683 = vmax.f32 %v2330, 0.0
  %v3684 = vmax.f32 %v2499, 0.0
  %v3685 = vmax.f32 %v2668, 0.0
  %v3686 = vmax.f32 %v2837, 0.0
  %v3687 = vmax.f32 %v3006, 0.0
  %v3688 = vmax.f32 %v3175, 0.0
  %v3689 = vmax.f32 %v3177, %v3185
  %v3690 = vrot.slane %v3689, 4
  %v3691 = vmax.f32 %v3689, %v3690
  %v3692 = vrot.slane %v3691, 2
  %v3693 = vmax.f32 %v3691, %v3692
  %v3694 = vrot.slane %v3693, 1
  %v3695 = vmax.f32 %v3693, %v3694
  %v3696 = vmax.f32 %v3178, %v3186
  %v3697 = vrot.slane %v3696, 4
  %v3698 = vmax.f32 %v3696, %v3697
  %v3699 = vrot.slane %v3698, 2
  %v3700 = vmax.f32 %v3698, %v3699
  %v3701 = vrot.slane %v3700, 1
  %v3702 = vmax.f32 %v3700, %v3701
  %v3703 = vmax.f32 %v3179, %v3187
  %v3704 = vrot.slane %v3703, 4
  %v3705 = vmax.f32 %v3703, %v3704
  %v3706 = vrot.slane %v3705, 2
  %v3707 = vmax.f32 %v3705, %v3706
  %v3708 = vrot.slane %v3707, 1
  %v3709 = vmax.f32 %v3707, %v3708
  %v3710 = vmax.f32 %v3180, %v3188
  %v3711 = vrot.slane %v3710, 4
  %v3712 = vmax.f32 %v3710, %v3711
  %v3713 = vrot.slane %v3712, 2
  %v3714 = vmax.f32 %v3712, %v3713
  %v3715 = vrot.slane %v3714, 1
  %v3716 = vmax.f32 %v3714, %v3715
  %v3717 = vmax.f32 %v3181, %v3189
  %v3718 = vrot.slane %v3717, 4
  %v3719 = vmax.f32 %v3717, %v3718
  %v3720 = vrot.slane %v3719, 2
  %v3721 = vmax.f32 %v3719, %v3720
  %v3722 = vrot.slane %v3721, 1
  %v3723 = vmax.f32 %v3721, %v3722
  %v3724 = vmax.f32 %v3182, %v3190
  %v3725 = vrot.slane %v3724, 4
  %v3726 = vmax.f32 %v3724, %v3725
  %v3727 = vrot.slane %v3726, 2
  %v3728 = vmax.f32 %v3726, %v3727
  %v3729 = vrot.slane %v3728, 1
  %v3730 = vmax.f32 %v3728, %v3729
  %v3731 = vmax.f32 %v3183, %v3191
  %v3732 = vrot.slane %v3731, 4
  %v3733 = vmax.f32 %v3731, %v3732
  %v3734 = vrot.slane %v3733, 2
  %v3735 = vmax.f32 %v3733, %v3734
  %v3736 = vrot.slane %v3735, 1
  %v3737 = vmax.f32 %v3735, %v3736
  %v3738 = vmax.f32 %v3184, %v3192
  %v3739 = vrot.slane %v3738, 4
  %v3740 = vmax.f32 %v3738, %v3739
  %v3741 = vrot.slane %v3740, 2
  %v3742 = vmax.f32 %v3740, %v3741
  %v3743 = vrot.slane %v3742, 1
  %v3744 = vmax.f32 %v3742, %v3743
  %v3745 = vmax.f32 %v3193, %v3201
  %v3746 = vrot.slane %v3745, 4
  %v3747 = vmax.f32 %v3745, %v3746
  %v3748 = vrot.slane %v3747, 2
  %v3749 = vmax.f32 %v3747, %v3748
  %v3750 = vrot.slane %v3749, 1
  %v3751 = vmax.f32 %v3749, %v3750
  %v3752 = vmax.f32 %v3194, %v3202
  %v3753 = vrot.slane %v3752, 4
  %v3754 = vmax.f32 %v3752, %v3753
  %v3755 = vrot.slane %v3754, 2
  %v3756 = vmax.f32 %v3754, %v3755
  %v3757 = vrot.slane %v3756, 1
  %v3758 = vmax.f32 %v3756, %v3757
  %v3759 = vmax.f32 %v3195, %v3203
  %v3760 = vrot.slane %v3759, 4
  %v3761 = vmax.f32 %v3759, %v3760
  %v3762 = vrot.slane %v3761, 2
  %v3763 = vmax.f32 %v3761, %v3762
  %v3764 = vrot.slane %v3763, 1
  %v3765 = vmax.f32 %v3763, %v3764
  %v3766 = vmax.f32 %v3196, %v3204
  %v3767 = vrot.slane %v3766, 4
  %v3768 = vmax.f32 %v3766, %v3767
  %v3769 = vrot.slane %v3768, 2
  %v3770 = vmax.f32 %v3768, %v3769
  %v3771 = vrot.slane %v3770, 1
  %v3772 = vmax.f32 %v3770, %v3771
  %v3773 = vmax.f32 %v3197, %v3205
  %v3774 = vrot.slane %v3773, 4
  %v3775 = vmax.f32 %v3773, %v3774
  %v3776 = vrot.slane %v3775, 2
  %v3777 = vmax.f32 %v3775, %v3776
  %v3778 = vrot.slane %v3777, 1
  %v3779 = vmax.f32 %v3777, %v3778
  %v3780 = vmax.f32 %v3198, %v3206
  %v3781 = vrot.slane %v3780, 4
  %v3782 = vmax.f32 %v3780, %v3781
  %v3783 = vrot.slane %v3782, 2
  %v3784 = vmax.f32 %v3782, %v3783
  %v3785 = vrot.slane %v3784, 1
  %v3786 = vmax.f32 %v3784, %v3785
  %v3787 = vmax.f32 %v3199, %v3207
  %v3788 = vrot.slane %v3787, 4
  %v3789 = vmax.f32 %v3787, %v3788
  %v3790 = vrot.slane %v3789, 2
  %v3791 = vmax.f32 %v3789, %v3790
  %v3792 = vrot.slane %v3791, 1
  %v3793 = vmax.f32 %v3791, %v3792
  %v3794 = vmax.f32 %v3200, %v3208
  %v3795 = vrot.slane %v3794, 4
  %v3796 = vmax.f32 %v3794, %v3795
  %v3797 = vrot.slane %v3796, 2
  %v3798 = vmax.f32 %v3796, %v3797
  %v3799 = vrot.slane %v3798, 1
  %v3800 = vmax.f32 %v3798, %v3799
  %v3801 = vmax.f32 %v3209, %v3217
  %v3802 = vrot.slane %v3801, 4
  %v3803 = vmax.f32 %v3801, %v3802
  %v3804 = vrot.slane %v3803, 2
  %v3805 = vmax.f32 %v3803, %v3804
  %v3806 = vrot.slane %v3805, 1
  %v3807 = vmax.f32 %v3805, %v3806
  %v3808 = vmax.f32 %v3210, %v3218
  %v3809 = vrot.slane %v3808, 4
  %v3810 = vmax.f32 %v3808, %v3809
  %v3811 = vrot.slane %v3810, 2
  %v3812 = vmax.f32 %v3810, %v3811
  %v3813 = vrot.slane %v3812, 1
  %v3814 = vmax.f32 %v3812, %v3813
  %v3815 = vmax.f32 %v3211, %v3219
  %v3816 = vrot.slane %v3815, 4
  %v3817 = vmax.f32 %v3815, %v3816
  %v3818 = vrot.slane %v3817, 2
  %v3819 = vmax.f32 %v3817, %v3818
  %v3820 = vrot.slane %v3819, 1
  %v3821 = vmax.f32 %v3819, %v3820
  %v3822 = vmax.f32 %v3212, %v3220
  %v3823 = vrot.slane %v3822, 4
  %v3824 = vmax.f32 %v3822, %v3823
  %v3825 = vrot.slane %v3824, 2
  %v3826 = vmax.f32 %v3824, %v3825
  %v3827 = vrot.slane %v3826, 1
  %v3828 = vmax.f32 %v3826, %v3827
  %v3829 = vmax.f32 %v3213, %v3221
  %v3830 = vrot.slane %v3829, 4
  %v3831 = vmax.f32 %v3829, %v3830
  %v3832 = vrot.slane %v3831, 2
  %v3833 = vmax.f32 %v3831, %v3832
  %v3834 = vrot.slane %v3833, 1
  %v3835 = vmax.f32 %v3833, %v3834
  %v3836 = vmax.f32 %v3214, %v3222
  %v3837 = vrot.slane %v3836, 4
  %v3838 = vmax.f32 %v3836, %v3837
  %v3839 = vrot.slane %v3838, 2
  %v3840 = vmax.f32 %v3838, %v3839
  %v3841 = vrot.slane %v3840, 1
  %v3842 = vmax.f32 %v3840, %v3841
  %v3843 = vmax.f32 %v3215, %v3223
  %v3844 = vrot.slane %v3843, 4
  %v3845 = vmax.f32 %v3843, %v3844
  %v3846 = vrot.slane %v3845, 2
  %v3847 = vmax.f32 %v3845, %v3846
  %v3848 = vrot.slane %v3847, 1
  %v3849 = vmax.f32 %v3847, %v3848
  %v3850 = vmax.f32 %v3216, %v3224
  %v3851 = vrot.slane %v3850, 4
  %v3852 = vmax.f32 %v3850, %v3851
  %v3853 = vrot.slane %v3852, 2
  %v3854 = vmax.f32 %v3852, %v3853
  %v3855 = vrot.slane %v3854, 1
  %v3856 = vmax.f32 %v3854, %v3855
  %v3857 = vmax.f32 %v3225, %v3233
  %v3858 = vrot.slane %v3857, 4
  %v3859 = vmax.f32 %v3857, %v3858
  %v3860 = vrot.slane %v3859, 2
  %v3861 = vmax.f32 %v3859, %v3860
  %v3862 = vrot.slane %v3861, 1
  %v3863 = vmax.f32 %v3861, %v3862
  %v3864 = vmax.f32 %v3226, %v3234
  %v3865 = vrot.slane %v3864, 4
  %v3866 = vmax.f32 %v3864, %v3865
  %v3867 = vrot.slane %v3866, 2
  %v3868 = vmax.f32 %v3866, %v3867
  %v3869 = vrot.slane %v3868, 1
  %v3870 = vmax.f32 %v3868, %v3869
  %v3871 = vmax.f32 %v3227, %v3235
  %v3872 = vrot.slane %v3871, 4
  %v3873 = vmax.f32 %v3871, %v3872
  %v3874 = vrot.slane %v3873, 2
  %v3875 = vmax.f32 %v3873, %v3874
  %v3876 = vrot.slane %v3875, 1
  %v3877 = vmax.f32 %v3875, %v3876
  %v3878 = vmax.f32 %v3228, %v3236
  %v3879 = vrot.slane %v3878, 4
  %v3880 = vmax.f32 %v3878, %v3879
  %v3881 = vrot.slane %v3880, 2
  %v3882 = vmax.f32 %v3880, %v3881
  %v3883 = vrot.slane %v3882, 1
  %v3884 = vmax.f32 %v3882, %v3883
  %v3885 = vmax.f32 %v3229, %v3237
  %v3886 = vrot.slane %v3885, 4
  %v3887 = vmax.f32 %v3885, %v3886
  %v3888 = vrot.slane %v3887, 2
  %v3889 = vmax.f32 %v3887, %v3888
  %v3890 = vrot.slane %v3889, 1
  %v3891 = vmax.f32 %v3889, %v3890
  %v3892 = vmax.f32 %v3230, %v3238
  %v3893 = vrot.slane %v3892, 4
  %v3894 = vmax.f32 %v3892, %v3893
  %v3895 = vrot.slane %v3894, 2
  %v3896 = vmax.f32 %v3894, %v3895
  %v3897 = vrot.slane %v3896, 1
  %v3898 = vmax.f32 %v3896, %v3897
  %v3899 = vmax.f32 %v3231, %v3239
  %v3900 = vrot.slane %v3899, 4
  %v3901 = vmax.f32 %v3899, %v3900
  %v3902 = vrot.slane %v3901, 2
  %v3903 = vmax.f32 %v3901, %v3902
  %v3904 = vrot.slane %v3903, 1
  %v3905 = vmax.f32 %v3903, %v3904
  %v3906 = vmax.f32 %v3232, %v3240
  %v3907 = vrot.slane %v3906, 4
  %v3908 = vmax.f32 %v3906, %v3907
  %v3909 = vrot.slane %v3908, 2
  %v3910 = vmax.f32 %v3908, %v3909
  %v3911 = vrot.slane %v3910, 1
  %v3912 = vmax.f32 %v3910, %v3911
  %v3913 = vmax.f32 %v3241, %v3249
  %v3914 = vrot.slane %v3913, 4
  %v3915 = vmax.f32 %v3913, %v3914
  %v3916 = vrot.slane %v3915, 2
  %v3917 = vmax.f32 %v3915, %v3916
  %v3918 = vrot.slane %v3917, 1
  %v3919 = vmax.f32 %v3917, %v3918
  %v3920 = vmax.f32 %v3242, %v3250
  %v3921 = vrot.slane %v3920, 4
  %v3922 = vmax.f32 %v3920, %v3921
  %v3923 = vrot.slane %v3922, 2
  %v3924 = vmax.f32 %v3922, %v3923
  %v3925 = vrot.slane %v3924, 1
  %v3926 = vmax.f32 %v3924, %v3925
  %v3927 = vmax.f32 %v3243, %v3251
  %v3928 = vrot.slane %v3927, 4
  %v3929 = vmax.f32 %v3927, %v3928
  %v3930 = vrot.slane %v3929, 2
  %v3931 = vmax.f32 %v3929, %v3930
  %v3932 = vrot.slane %v3931, 1
  %v3933 = vmax.f32 %v3931, %v3932
  %v3934 = vmax.f32 %v3244, %v3252
  %v3935 = vrot.slane %v3934, 4
  %v3936 = vmax.f32 %v3934, %v3935
  %v3937 = vrot.slane %v3936, 2
  %v3938 = vmax.f32 %v3936, %v3937
  %v3939 = vrot.slane %v3938, 1
  %v3940 = vmax.f32 %v3938, %v3939
  %v3941 = vmax.f32 %v3245, %v3253
  %v3942 = vrot.slane %v3941, 4
  %v3943 = vmax.f32 %v3941, %v3942
  %v3944 = vrot.slane %v3943, 2
  %v3945 = vmax.f32 %v3943, %v3944
  %v3946 = vrot.slane %v3945, 1
  %v3947 = vmax.f32 %v3945, %v3946
  %v3948 = vmax.f32 %v3246, %v3254
  %v3949 = vrot.slane %v3948, 4
  %v3950 = vmax.f32 %v3948, %v3949
  %v3951 = vrot.slane %v3950, 2
  %v3952 = vmax.f32 %v3950, %v3951
  %v3953 = vrot.slane %v3952, 1
  %v3954 = vmax.f32 %v3952, %v3953
  %v3955 = vmax.f32 %v3247, %v3255
  %v3956 = vrot.slane %v3955, 4
  %v3957 = vmax.f32 %v3955, %v3956
  %v3958 = vrot.slane %v3957, 2
  %v3959 = vmax.f32 %v3957, %v3958
  %v3960 = vrot.slane %v3959, 1
  %v3961 = vmax.f32 %v3959, %v3960
  %v3962 = vmax.f32 %v3248, %v3256
  %v3963 = vrot.slane %v3962, 4
  %v3964 = vmax.f32 %v3962, %v3963
  %v3965 = vrot.slane %v3964, 2
  %v3966 = vmax.f32 %v3964, %v3965
  %v3967 = vrot.slane %v3966, 1
  %v3968 = vmax.f32 %v3966, %v3967
  %v3969 = vmax.f32 %v3257, %v3265
  %v3970 = vrot.slane %v3969, 4
  %v3971 = vmax.f32 %v3969, %v3970
  %v3972 = vrot.slane %v3971, 2
  %v3973 = vmax.f32 %v3971, %v3972
  %v3974 = vrot.slane %v3973, 1
  %v3975 = vmax.f32 %v3973, %v3974
  %v3976 = vmax.f32 %v3258, %v3266
  %v3977 = vrot.slane %v3976, 4
  %v3978 = vmax.f32 %v3976, %v3977
  %v3979 = vrot.slane %v3978, 2
  %v3980 = vmax.f32 %v3978, %v3979
  %v3981 = vrot.slane %v3980, 1
  %v3982 = vmax.f32 %v3980, %v3981
  %v3983 = vmax.f32 %v3259, %v3267
  %v3984 = vrot.slane %v3983, 4
  %v3985 = vmax.f32 %v3983, %v3984
  %v3986 = vrot.slane %v3985, 2
  %v3987 = vmax.f32 %v3985, %v3986
  %v3988 = vrot.slane %v3987, 1
  %v3989 = vmax.f32 %v3987, %v3988
  %v3990 = vmax.f32 %v3260, %v3268
  %v3991 = vrot.slane %v3990, 4
  %v3992 = vmax.f32 %v3990, %v3991
  %v3993 = vrot.slane %v3992, 2
  %v3994 = vmax.f32 %v3992, %v3993
  %v3995 = vrot.slane %v3994, 1
  %v3996 = vmax.f32 %v3994, %v3995
  %v3997 = vmax.f32 %v3261, %v3269
  %v3998 = vrot.slane %v3997, 4
  %v3999 = vmax.f32 %v3997, %v3998
  %v4000 = vrot.slane %v3999, 2
  %v4001 = vmax.f32 %v3999, %v4000
  %v4002 = vrot.slane %v4001, 1
  %v4003 = vmax.f32 %v4001, %v4002
  %v4004 = vmax.f32 %v3262, %v3270
  %v4005 = vrot.slane %v4004, 4
  %v4006 = vmax.f32 %v4004, %v4005
  %v4007 = vrot.slane %v4006, 2
  %v4008 = vmax.f32 %v4006, %v4007
  %v4009 = vrot.slane %v4008, 1
  %v4010 = vmax.f32 %v4008, %v4009
  %v4011 = vmax.f32 %v3263, %v3271
  %v4012 = vrot.slane %v4011, 4
  %v4013 = vmax.f32 %v4011, %v4012
  %v4014 = vrot.slane %v4013, 2
  %v4015 = vmax.f32 %v4013, %v4014
  %v4016 = vrot.slane %v4015, 1
  %v4017 = vmax.f32 %v4015, %v4016
  %v4018 = vmax.f32 %v3264, %v3272
  %v4019 = vrot.slane %v4018, 4
  %v4020 = vmax.f32 %v4018, %v4019
  %v4021 = vrot.slane %v4020, 2
  %v4022 = vmax.f32 %v4020, %v4021
  %v4023 = vrot.slane %v4022, 1
  %v4024 = vmax.f32 %v4022, %v4023
  %v4025 = vmax.f32 %v3273, %v3281
  %v4026 = vrot.slane %v4025, 4
  %v4027 = vmax.f32 %v4025, %v4026
  %v4028 = vrot.slane %v4027, 2
  %v4029 = vmax.f32 %v4027, %v4028
  %v4030 = vrot.slane %v4029, 1
  %v4031 = vmax.f32 %v4029, %v4030
  %v4032 = vmax.f32 %v3274, %v3282
  %v4033 = vrot.slane %v4032, 4
  %v4034 = vmax.f32 %v4032, %v4033
  %v4035 = vrot.slane %v4034, 2
  %v4036 = vmax.f32 %v4034, %v4035
  %v4037 = vrot.slane %v4036, 1
  %v4038 = vmax.f32 %v4036, %v4037
  %v4039 = vmax.f32 %v3275, %v3283
  %v4040 = vrot.slane %v4039, 4
  %v4041 = vmax.f32 %v4039, %v4040
  %v4042 = vrot.slane %v4041, 2
  %v4043 = vmax.f32 %v4041, %v4042
  %v4044 = vrot.slane %v4043, 1
  %v4045 = vmax.f32 %v4043, %v4044
  %v4046 = vmax.f32 %v3276, %v3284
  %v4047 = vrot.slane %v4046, 4
  %v4048 = vmax.f32 %v4046, %v4047
  %v4049 = vrot.slane %v4048, 2
  %v4050 = vmax.f32 %v4048, %v4049
  %v4051 = vrot.slane %v4050, 1
  %v4052 = vmax.f32 %v4050, %v4051
  %v4053 = vmax.f32 %v3277, %v3285
  %v4054 = vrot.slane %v4053, 4
  %v4055 = vmax.f32 %v4053, %v4054
  %v4056 = vrot.slane %v4055, 2
  %v4057 = vmax.f32 %v4055, %v4056
  %v4058 = vrot.slane %v4057, 1
  %v4059 = vmax.f32 %v4057, %v4058
  %v4060 = vmax.f32 %v3278, %v3286
  %v4061 = vrot.slane %v4060, 4
  %v4062 = vmax.f32 %v4060, %v4061
  %v4063 = vrot.slane %v4062, 2
  %v4064 = vmax.f32 %v4062, %v4063
  %v4065 = vrot.slane %v4064, 1
  %v4066 = vmax.f32 %v4064, %v4065
  %v4067 = vmax.f32 %v3279, %v3287
  %v4068 = vrot.slane %v4067, 4
  %v4069 = vmax.f32 %v4067, %v4068
  %v4070 = vrot.slane %v4069, 2
  %v4071 = vmax.f32 %v4069, %v4070
  %v4072 = vrot.slane %v4071, 1
  %v4073 = vmax.f32 %v4071, %v4072
  %v4074 = vmax.f32 %v3280, %v3288
  %v4075 = vrot.slane %v4074, 4
  %v4076 = vmax.f32 %v4074, %v4075
  %v4077 = vrot.slane %v4076, 2
  %v4078 = vmax.f32 %v4076, %v4077
  %v4079 = vrot.slane %v4078, 1
  %v4080 = vmax.f32 %v4078, %v4079
  %v4081 = vmax.f32 %v3289, %v3297
  %v4082 = vrot.slane %v4081, 4
  %v4083 = vmax.f32 %v4081, %v4082
  %v4084 = vrot.slane %v4083, 2
  %v4085 = vmax.f32 %v4083, %v4084
  %v4086 = vrot.slane %v4085, 1
  %v4087 = vmax.f32 %v4085, %v4086
  %v4088 = vmax.f32 %v3290, %v3298
  %v4089 = vrot.slane %v4088, 4
  %v4090 = vmax.f32 %v4088, %v4089
  %v4091 = vrot.slane %v4090, 2
  %v4092 = vmax.f32 %v4090, %v4091
  %v4093 = vrot.slane %v4092, 1
  %v4094 = vmax.f32 %v4092, %v4093
  %v4095 = vmax.f32 %v3291, %v3299
  %v4096 = vrot.slane %v4095, 4
  %v4097 = vmax.f32 %v4095, %v4096
  %v4098 = vrot.slane %v4097, 2
  %v4099 = vmax.f32 %v4097, %v4098
  %v4100 = vrot.slane %v4099, 1
  %v4101 = vmax.f32 %v4099, %v4100
  %v4102 = vmax.f32 %v3292, %v3300
  %v4103 = vrot.slane %v4102, 4
  %v4104 = vmax.f32 %v4102, %v4103
  %v4105 = vrot.slane %v4104, 2
  %v4106 = vmax.f32 %v4104, %v4105
  %v4107 = vrot.slane %v4106, 1
  %v4108 = vmax.f32 %v4106, %v4107
  %v4109 = vmax.f32 %v3293, %v3301
  %v4110 = vrot.slane %v4109, 4
  %v4111 = vmax.f32 %v4109, %v4110
  %v4112 = vrot.slane %v4111, 2
  %v4113 = vmax.f32 %v4111, %v4112
  %v4114 = vrot.slane %v4113, 1
  %v4115 = vmax.f32 %v4113, %v4114
  %v4116 = vmax.f32 %v3294, %v3302
  %v4117 = vrot.slane %v4116, 4
  %v4118 = vmax.f32 %v4116, %v4117
  %v4119 = vrot.slane %v4118, 2
  %v4120 = vmax.f32 %v4118, %v4119
  %v4121 = vrot.slane %v4120, 1
  %v4122 = vmax.f32 %v4120, %v4121
  %v4123 = vmax.f32 %v3295, %v3303
  %v4124 = vrot.slane %v4123, 4
  %v4125 = vmax.f32 %v4123, %v4124
  %v4126 = vrot.slane %v4125, 2
  %v4127 = vmax.f32 %v4125, %v4126
  %v4128 = vrot.slane %v4127, 1
  %v4129 = vmax.f32 %v4127, %v4128
  %v4130 = vmax.f32 %v3296, %v3304
  %v4131 = vrot.slane %v4130, 4
  %v4132 = vmax.f32 %v4130, %v4131
  %v4133 = vrot.slane %v4132, 2
  %v4134 = vmax.f32 %v4132, %v4133
  %v4135 = vrot.slane %v4134, 1
  %v4136 = vmax.f32 %v4134, %v4135
  %v4137 = vmax.f32 %v3305, %v3313
  %v4138 = vrot.slane %v4137, 4
  %v4139 = vmax.f32 %v4137, %v4138
  %v4140 = vrot.slane %v4139, 2
  %v4141 = vmax.f32 %v4139, %v4140
  %v4142 = vrot.slane %v4141, 1
  %v4143 = vmax.f32 %v4141, %v4142
  %v4144 = vmax.f32 %v3306, %v3314
  %v4145 = vrot.slane %v4144, 4
  %v4146 = vmax.f32 %v4144, %v4145
  %v4147 = vrot.slane %v4146, 2
  %v4148 = vmax.f32 %v4146, %v4147
  %v4149 = vrot.slane %v4148, 1
  %v4150 = vmax.f32 %v4148, %v4149
  %v4151 = vmax.f32 %v3307, %v3315
  %v4152 = vrot.slane %v4151, 4
  %v4153 = vmax.f32 %v4151, %v4152
  %v4154 = vrot.slane %v4153, 2
  %v4155 = vmax.f32 %v4153, %v4154
  %v4156 = vrot.slane %v4155, 1
  %v4157 = vmax.f32 %v4155, %v4156
  %v4158 = vmax.f32 %v3308, %v3316
  %v4159 = vrot.slane %v4158, 4
  %v4160 = vmax.f32 %v4158, %v4159
  %v4161 = vrot.slane %v4160, 2
  %v4162 = vmax.f32 %v4160, %v4161
  %v4163 = vrot.slane %v4162, 1
  %v4164 = vmax.f32 %v4162, %v4163
  %v4165 = vmax.f32 %v3309, %v3317
  %v4166 = vrot.slane %v4165, 4
  %v4167 = vmax.f32 %v4165, %v4166
  %v4168 = vrot.slane %v4167, 2
  %v4169 = vmax.f32 %v4167, %v4168
  %v4170 = vrot.slane %v4169, 1
  %v4171 = vmax.f32 %v4169, %v4170
  %v4172 = vmax.f32 %v3310, %v3318
  %v4173 = vrot.slane %v4172, 4
  %v4174 = vmax.f32 %v4172, %v4173
  %v4175 = vrot.slane %v4174, 2
  %v4176 = vmax.f32 %v4174, %v4175
  %v4177 = vrot.slane %v4176, 1
  %v4178 = vmax.f32 %v4176, %v4177
  %v4179 = vmax.f32 %v3311, %v3319
  %v4180 = vrot.slane %v4179, 4
  %v4181 = vmax.f32 %v4179, %v4180
  %v4182 = vrot.slane %v4181, 2
  %v4183 = vmax.f32 %v4181, %v4182
  %v4184 = vrot.slane %v4183, 1
  %v4185 = vmax.f32 %v4183, %v4184
  %v4186 = vmax.f32 %v3312, %v3320
  %v4187 = vrot.slane %v4186, 4
  %v4188 = vmax.f32 %v4186, %v4187
  %v4189 = vrot.slane %v4188, 2
  %v4190 = vmax.f32 %v4188, %v4189
  %v4191 = vrot.slane %v4190, 1
  %v4192 = vmax.f32 %v4190, %v4191
  %v4193 = vmax.f32 %v3321, %v3329
  %v4194 = vrot.slane %v4193, 4
  %v4195 = vmax.f32 %v4193, %v4194
  %v4196 = vrot.slane %v4195, 2
  %v4197 = vmax.f32 %v4195, %v4196
  %v4198 = vrot.slane %v4197, 1
  %v4199 = vmax.f32 %v4197, %v4198
  %v4200 = vmax.f32 %v3322, %v3330
  %v4201 = vrot.slane %v4200, 4
  %v4202 = vmax.f32 %v4200, %v4201
  %v4203 = vrot.slane %v4202, 2
  %v4204 = vmax.f32 %v4202, %v4203
  %v4205 = vrot.slane %v4204, 1
  %v4206 = vmax.f32 %v4204, %v4205
  %v4207 = vmax.f32 %v3323, %v3331
  %v4208 = vrot.slane %v4207, 4
  %v4209 = vmax.f32 %v4207, %v4208
  %v4210 = vrot.slane %v4209, 2
  %v4211 = vmax.f32 %v4209, %v4210
  %v4212 = vrot.slane %v4211, 1
  %v4213 = vmax.f32 %v4211, %v4212
  %v4214 = vmax.f32 %v3324, %v3332
  %v4215 = vrot.slane %v4214, 4
  %v4216 = vmax.f32 %v4214, %v4215
  %v4217 = vrot.slane %v4216, 2
  %v4218 = vmax.f32 %v4216, %v4217
  %v4219 = vrot.slane %v4218, 1
  %v4220 = vmax.f32 %v4218, %v4219
  %v4221 = vmax.f32 %v3325, %v3333
  %v4222 = vrot.slane %v4221, 4
  %v4223 = vmax.f32 %v4221, %v4222
  %v4224 = vrot.slane %v4223, 2
  %v4225 = vmax.f32 %v4223, %v4224
  %v4226 = vrot.slane %v4225, 1
  %v4227 = vmax.f32 %v4225, %v4226
  %v4228 = vmax.f32 %v3326, %v3334
  %v4229 = vrot.slane %v4228, 4
  %v4230 = vmax.f32 %v4228, %v4229
  %v4231 = vrot.slane %v4230, 2
  %v4232 = vmax.f32 %v4230, %v4231
  %v4233 = vrot.slane %v4232, 1
  %v4234 = vmax.f32 %v4232, %v4233
  %v4235 = vmax.f32 %v3327, %v3335
  %v4236 = vrot.slane %v4235, 4
  %v4237 = vmax.f32 %v4235, %v4236
  %v4238 = vrot.slane %v4237, 2
  %v4239 = vmax.f32 %v4237, %v4238
  %v4240 = vrot.slane %v4239, 1
  %v4241 = vmax.f32 %v4239, %v4240
  %v4242 = vmax.f32 %v3328, %v3336
  %v4243 = vrot.slane %v4242, 4
  %v4244 = vmax.f32 %v4242, %v4243
  %v4245 = vrot.slane %v4244, 2
  %v4246 = vmax.f32 %v4244, %v4245
  %v4247 = vrot.slane %v4246, 1
  %v4248 = vmax.f32 %v4246, %v4247
  %v4249 = vmax.f32 %v3337, %v3345
  %v4250 = vrot.slane %v4249, 4
  %v4251 = vmax.f32 %v4249, %v4250
  %v4252 = vrot.slane %v4251, 2
  %v4253 = vmax.f32 %v4251, %v4252
  %v4254 = vrot.slane %v4253, 1
  %v4255 = vmax.f32 %v4253, %v4254
  %v4256 = vmax.f32 %v3338, %v3346
  %v4257 = vrot.slane %v4256, 4
  %v4258 = vmax.f32 %v4256, %v4257
  %v4259 = vrot.slane %v4258, 2
  %v4260 = vmax.f32 %v4258, %v4259
  %v4261 = vrot.slane %v4260, 1
  %v4262 = vmax.f32 %v4260, %v4261
  %v4263 = vmax.f32 %v3339, %v3347
  %v4264 = vrot.slane %v4263, 4
  %v4265 = vmax.f32 %v4263, %v4264
  %v4266 = vrot.slane %v4265, 2
  %v4267 = vmax.f32 %v4265, %v4266
  %v4268 = vrot.slane %v4267, 1
  %v4269 = vmax.f32 %v4267, %v4268
  %v4270 = vmax.f32 %v3340, %v3348
  %v4271 = vrot.slane %v4270, 4
  %v4272 = vmax.f32 %v4270, %v4271
  %v4273 = vrot.slane %v4272, 2
  %v4274 = vmax.f32 %v4272, %v4273
  %v4275 = vrot.slane %v4274, 1
  %v4276 = vmax.f32 %v4274, %v4275
  %v4277 = vmax.f32 %v3341, %v3349
  %v4278 = vrot.slane %v4277, 4
  %v4279 = vmax.f32 %v4277, %v4278
  %v4280 = vrot.slane %v4279, 2
  %v4281 = vmax.f32 %v4279, %v4280
  %v4282 = vrot.slane %v4281, 1
  %v4283 = vmax.f32 %v4281, %v4282
  %v4284 = vmax.f32 %v3342, %v3350
  %v4285 = vrot.slane %v4284, 4
  %v4286 = vmax.f32 %v4284, %v4285
  %v4287 = vrot.slane %v4286, 2
  %v4288 = vmax.f32 %v4286, %v4287
  %v4289 = vrot.slane %v4288, 1
  %v4290 = vmax.f32 %v4288, %v4289
  %v4291 = vmax.f32 %v3343, %v3351
  %v4292 = vrot.slane %v4291, 4
  %v4293 = vmax.f32 %v4291, %v4292
  %v4294 = vrot.slane %v4293, 2
  %v4295 = vmax.f32 %v4293, %v4294
  %v4296 = vrot.slane %v4295, 1
  %v4297 = vmax.f32 %v4295, %v4296
  %v4298 = vmax.f32 %v3344, %v3352
  %v4299 = vrot.slane %v4298, 4
  %v4300 = vmax.f32 %v4298, %v4299
  %v4301 = vrot.slane %v4300, 2
  %v4302 = vmax.f32 %v4300, %v4301
  %v4303 = vrot.slane %v4302, 1
  %v4304 = vmax.f32 %v4302, %v4303
  %v4305 = vmax.f32 %v3353, %v3361
  %v4306 = vrot.slane %v4305, 4
  %v4307 = vmax.f32 %v4305, %v4306
  %v4308 = vrot.slane %v4307, 2
  %v4309 = vmax.f32 %v4307, %v4308
  %v4310 = vrot.slane %v4309, 1
  %v4311 = vmax.f32 %v4309, %v4310
  %v4312 = vmax.f32 %v3354, %v3362
  %v4313 = vrot.slane %v4312, 4
  %v4314 = vmax.f32 %v4312, %v4313
  %v4315 = vrot.slane %v4314, 2
  %v4316 = vmax.f32 %v4314, %v4315
  %v4317 = vrot.slane %v4316, 1
  %v4318 = vmax.f32 %v4316, %v4317
  %v4319 = vmax.f32 %v3355, %v3363
  %v4320 = vrot.slane %v4319, 4
  %v4321 = vmax.f32 %v4319, %v4320
  %v4322 = vrot.slane %v4321, 2
  %v4323 = vmax.f32 %v4321, %v4322
  %v4324 = vrot.slane %v4323, 1
  %v4325 = vmax.f32 %v4323, %v4324
  %v4326 = vmax.f32 %v3356, %v3364
  %v4327 = vrot.slane %v4326, 4
  %v4328 = vmax.f32 %v4326, %v4327
  %v4329 = vrot.slane %v4328, 2
  %v4330 = vmax.f32 %v4328, %v4329
  %v4331 = vrot.slane %v4330, 1
  %v4332 = vmax.f32 %v4330, %v4331
  %v4333 = vmax.f32 %v3357, %v3365
  %v4334 = vrot.slane %v4333, 4
  %v4335 = vmax.f32 %v4333, %v4334
  %v4336 = vrot.slane %v4335, 2
  %v4337 = vmax.f32 %v4335, %v4336
  %v4338 = vrot.slane %v4337, 1
  %v4339 = vmax.f32 %v4337, %v4338
  %v4340 = vmax.f32 %v3358, %v3366
  %v4341 = vrot.slane %v4340, 4
  %v4342 = vmax.f32 %v4340, %v4341
  %v4343 = vrot.slane %v4342, 2
  %v4344 = vmax.f32 %v4342, %v4343
  %v4345 = vrot.slane %v4344, 1
  %v4346 = vmax.f32 %v4344, %v4345
  %v4347 = vmax.f32 %v3359, %v3367
  %v4348 = vrot.slane %v4347, 4
  %v4349 = vmax.f32 %v4347, %v4348
  %v4350 = vrot.slane %v4349, 2
  %v4351 = vmax.f32 %v4349, %v4350
  %v4352 = vrot.slane %v4351, 1
  %v4353 = vmax.f32 %v4351, %v4352
  %v4354 = vmax.f32 %v3360, %v3368
  %v4355 = vrot.slane %v4354, 4
  %v4356 = vmax.f32 %v4354, %v4355
  %v4357 = vrot.slane %v4356, 2
  %v4358 = vmax.f32 %v4356, %v4357
  %v4359 = vrot.slane %v4358, 1
  %v4360 = vmax.f32 %v4358, %v4359
  %v4361 = vmax.f32 %v3369, %v3377
  %v4362 = vrot.slane %v4361, 4
  %v4363 = vmax.f32 %v4361, %v4362
  %v4364 = vrot.slane %v4363, 2
  %v4365 = vmax.f32 %v4363, %v4364
  %v4366 = vrot.slane %v4365, 1
  %v4367 = vmax.f32 %v4365, %v4366
  %v4368 = vmax.f32 %v3370, %v3378
  %v4369 = vrot.slane %v4368, 4
  %v4370 = vmax.f32 %v4368, %v4369
  %v4371 = vrot.slane %v4370, 2
  %v4372 = vmax.f32 %v4370, %v4371
  %v4373 = vrot.slane %v4372, 1
  %v4374 = vmax.f32 %v4372, %v4373
  %v4375 = vmax.f32 %v3371, %v3379
  %v4376 = vrot.slane %v4375, 4
  %v4377 = vmax.f32 %v4375, %v4376
  %v4378 = vrot.slane %v4377, 2
  %v4379 = vmax.f32 %v4377, %v4378
  %v4380 = vrot.slane %v4379, 1
  %v4381 = vmax.f32 %v4379, %v4380
  %v4382 = vmax.f32 %v3372, %v3380
  %v4383 = vrot.slane %v4382, 4
  %v4384 = vmax.f32 %v4382, %v4383
  %v4385 = vrot.slane %v4384, 2
  %v4386 = vmax.f32 %v4384, %v4385
  %v4387 = vrot.slane %v4386, 1
  %v4388 = vmax.f32 %v4386, %v4387
  %v4389 = vmax.f32 %v3373, %v3381
  %v4390 = vrot.slane %v4389, 4
  %v4391 = vmax.f32 %v4389, %v4390
  %v4392 = vrot.slane %v4391, 2
  %v4393 = vmax.f32 %v4391, %v4392
  %v4394 = vrot.slane %v4393, 1
  %v4395 = vmax.f32 %v4393, %v4394
  %v4396 = vmax.f32 %v3374, %v3382
  %v4397 = vrot.slane %v4396, 4
  %v4398 = vmax.f32 %v4396, %v4397
  %v4399 = vrot.slane %v4398, 2
  %v4400 = vmax.f32 %v4398, %v4399
  %v4401 = vrot.slane %v4400, 1
  %v4402 = vmax.f32 %v4400, %v4401
  %v4403 = vmax.f32 %v3375, %v3383
  %v4404 = vrot.slane %v4403, 4
  %v4405 = vmax.f32 %v4403, %v4404
  %v4406 = vrot.slane %v4405, 2
  %v4407 = vmax.f32 %v4405, %v4406
  %v4408 = vrot.slane %v4407, 1
  %v4409 = vmax.f32 %v4407, %v4408
  %v4410 = vmax.f32 %v3376, %v3384
  %v4411 = vrot.slane %v4410, 4
  %v4412 = vmax.f32 %v4410, %v4411
  %v4413 = vrot.slane %v4412, 2
  %v4414 = vmax.f32 %v4412, %v4413
  %v4415 = vrot.slane %v4414, 1
  %v4416 = vmax.f32 %v4414, %v4415
  %v4417 = vmax.f32 %v3385, %v3393
  %v4418 = vrot.slane %v4417, 4
  %v4419 = vmax.f32 %v4417, %v4418
  %v4420 = vrot.slane %v4419, 2
  %v4421 = vmax.f32 %v4419, %v4420
  %v4422 = vrot.slane %v4421, 1
  %v4423 = vmax.f32 %v4421, %v4422
  %v4424 = vmax.f32 %v3386, %v3394
  %v4425 = vrot.slane %v4424, 4
  %v4426 = vmax.f32 %v4424, %v4425
  %v4427 = vrot.slane %v4426, 2
  %v4428 = vmax.f32 %v4426, %v4427
  %v4429 = vrot.slane %v4428, 1
  %v4430 = vmax.f32 %v4428, %v4429
  %v4431 = vmax.f32 %v3387, %v3395
  %v4432 = vrot.slane %v4431, 4
  %v4433 = vmax.f32 %v4431, %v4432
  %v4434 = vrot.slane %v4433, 2
  %v4435 = vmax.f32 %v4433, %v4434
  %v4436 = vrot.slane %v4435, 1
  %v4437 = vmax.f32 %v4435, %v4436
  %v4438 = vmax.f32 %v3388, %v3396
  %v4439 = vrot.slane %v4438, 4
  %v4440 = vmax.f32 %v4438, %v4439
  %v4441 = vrot.slane %v4440, 2
  %v4442 = vmax.f32 %v4440, %v4441
  %v4443 = vrot.slane %v4442, 1
  %v4444 = vmax.f32 %v4442, %v4443
  %v4445 = vmax.f32 %v3389, %v3397
  %v4446 = vrot.slane %v4445, 4
  %v4447 = vmax.f32 %v4445, %v4446
  %v4448 = vrot.slane %v4447, 2
  %v4449 = vmax.f32 %v4447, %v4448
  %v4450 = vrot.slane %v4449, 1
  %v4451 = vmax.f32 %v4449, %v4450
  %v4452 = vmax.f32 %v3390, %v3398
  %v4453 = vrot.slane %v4452, 4
  %v4454 = vmax.f32 %v4452, %v4453
  %v4455 = vrot.slane %v4454, 2
  %v4456 = vmax.f32 %v4454, %v4455
  %v4457 = vrot.slane %v4456, 1
  %v4458 = vmax.f32 %v4456, %v4457
  %v4459 = vmax.f32 %v3391, %v3399
  %v4460 = vrot.slane %v4459, 4
  %v4461 = vmax.f32 %v4459, %v4460
  %v4462 = vrot.slane %v4461, 2
  %v4463 = vmax.f32 %v4461, %v4462
  %v4464 = vrot.slane %v4463, 1
  %v4465 = vmax.f32 %v4463, %v4464
  %v4466 = vmax.f32 %v3392, %v3400
  %v4467 = vrot.slane %v4466, 4
  %v4468 = vmax.f32 %v4466, %v4467
  %v4469 = vrot.slane %v4468, 2
  %v4470 = vmax.f32 %v4468, %v4469
  %v4471 = vrot.slane %v4470, 1
  %v4472 = vmax.f32 %v4470, %v4471
  %v4473 = vmax.f32 %v3401, %v3409
  %v4474 = vrot.slane %v4473, 4
  %v4475 = vmax.f32 %v4473, %v4474
  %v4476 = vrot.slane %v4475, 2
  %v4477 = vmax.f32 %v4475, %v4476
  %v4478 = vrot.slane %v4477, 1
  %v4479 = vmax.f32 %v4477, %v4478
  %v4480 = vmax.f32 %v3402, %v3410
  %v4481 = vrot.slane %v4480, 4
  %v4482 = vmax.f32 %v4480, %v4481
  %v4483 = vrot.slane %v4482, 2
  %v4484 = vmax.f32 %v4482, %v4483
  %v4485 = vrot.slane %v4484, 1
  %v4486 = vmax.f32 %v4484, %v4485
  %v4487 = vmax.f32 %v3403, %v3411
  %v4488 = vrot.slane %v4487, 4
  %v4489 = vmax.f32 %v4487, %v4488
  %v4490 = vrot.slane %v4489, 2
  %v4491 = vmax.f32 %v4489, %v4490
  %v4492 = vrot.slane %v4491, 1
  %v4493 = vmax.f32 %v4491, %v4492
  %v4494 = vmax.f32 %v3404, %v3412
  %v4495 = vrot.slane %v4494, 4
  %v4496 = vmax.f32 %v4494, %v4495
  %v4497 = vrot.slane %v4496, 2
  %v4498 = vmax.f32 %v4496, %v4497
  %v4499 = vrot.slane %v4498, 1
  %v4500 = vmax.f32 %v4498, %v4499
  %v4501 = vmax.f32 %v3405, %v3413
  %v4502 = vrot.slane %v4501, 4
  %v4503 = vmax.f32 %v4501, %v4502
  %v4504 = vrot.slane %v4503, 2
  %v4505 = vmax.f32 %v4503, %v4504
  %v4506 = vrot.slane %v4505, 1
  %v4507 = vmax.f32 %v4505, %v4506
  %v4508 = vmax.f32 %v3406, %v3414
  %v4509 = vrot.slane %v4508, 4
  %v4510 = vmax.f32 %v4508, %v4509
  %v4511 = vrot.slane %v4510, 2
  %v4512 = vmax.f32 %v4510, %v4511
  %v4513 = vrot.slane %v4512, 1
  %v4514 = vmax.f32 %v4512, %v4513
  %v4515 = vmax.f32 %v3407, %v3415
  %v4516 = vrot.slane %v4515, 4
  %v4517 = vmax.f32 %v4515, %v4516
  %v4518 = vrot.slane %v4517, 2
  %v4519 = vmax.f32 %v4517, %v4518
  %v4520 = vrot.slane %v4519, 1
  %v4521 = vmax.f32 %v4519, %v4520
  %v4522 = vmax.f32 %v3408, %v3416
  %v4523 = vrot.slane %v4522, 4
  %v4524 = vmax.f32 %v4522, %v4523
  %v4525 = vrot.slane %v4524, 2
  %v4526 = vmax.f32 %v4524, %v4525
  %v4527 = vrot.slane %v4526, 1
  %v4528 = vmax.f32 %v4526, %v4527
  %v4529 = vmax.f32 %v3417, %v3425
  %v4530 = vrot.slane %v4529, 4
  %v4531 = vmax.f32 %v4529, %v4530
  %v4532 = vrot.slane %v4531, 2
  %v4533 = vmax.f32 %v4531, %v4532
  %v4534 = vrot.slane %v4533, 1
  %v4535 = vmax.f32 %v4533, %v4534
  %v4536 = vmax.f32 %v3418, %v3426
  %v4537 = vrot.slane %v4536, 4
  %v4538 = vmax.f32 %v4536, %v4537
  %v4539 = vrot.slane %v4538, 2
  %v4540 = vmax.f32 %v4538, %v4539
  %v4541 = vrot.slane %v4540, 1
  %v4542 = vmax.f32 %v4540, %v4541
  %v4543 = vmax.f32 %v3419, %v3427
  %v4544 = vrot.slane %v4543, 4
  %v4545 = vmax.f32 %v4543, %v4544
  %v4546 = vrot.slane %v4545, 2
  %v4547 = vmax.f32 %v4545, %v4546
  %v4548 = vrot.slane %v4547, 1
  %v4549 = vmax.f32 %v4547, %v4548
  %v4550 = vmax.f32 %v3420, %v3428
  %v4551 = vrot.slane %v4550, 4
  %v4552 = vmax.f32 %v4550, %v4551
  %v4553 = vrot.slane %v4552, 2
  %v4554 = vmax.f32 %v4552, %v4553
  %v4555 = vrot.slane %v4554, 1
  %v4556 = vmax.f32 %v4554, %v4555
  %v4557 = vmax.f32 %v3421, %v3429
  %v4558 = vrot.slane %v4557, 4
  %v4559 = vmax.f32 %v4557, %v4558
  %v4560 = vrot.slane %v4559, 2
  %v4561 = vmax.f32 %v4559, %v4560
  %v4562 = vrot.slane %v4561, 1
  %v4563 = vmax.f32 %v4561, %v4562
  %v4564 = vmax.f32 %v3422, %v3430
  %v4565 = vrot.slane %v4564, 4
  %v4566 = vmax.f32 %v4564, %v4565
  %v4567 = vrot.slane %v4566, 2
  %v4568 = vmax.f32 %v4566, %v4567
  %v4569 = vrot.slane %v4568, 1
  %v4570 = vmax.f32 %v4568, %v4569
  %v4571 = vmax.f32 %v3423, %v3431
  %v4572 = vrot.slane %v4571, 4
  %v4573 = vmax.f32 %v4571, %v4572
  %v4574 = vrot.slane %v4573, 2
  %v4575 = vmax.f32 %v4573, %v4574
  %v4576 = vrot.slane %v4575, 1
  %v4577 = vmax.f32 %v4575, %v4576
  %v4578 = vmax.f32 %v3424, %v3432
  %v4579 = vrot.slane %v4578, 4
  %v4580 = vmax.f32 %v4578, %v4579
  %v4581 = vrot.slane %v4580, 2
  %v4582 = vmax.f32 %v4580, %v4581
  %v4583 = vrot.slane %v4582, 1
  %v4584 = vmax.f32 %v4582, %v4583
  %v4585 = vmax.f32 %v3433, %v3441
  %v4586 = vrot.slane %v4585, 4
  %v4587 = vmax.f32 %v4585, %v4586
  %v4588 = vrot.slane %v4587, 2
  %v4589 = vmax.f32 %v4587, %v4588
  %v4590 = vrot.slane %v4589, 1
  %v4591 = vmax.f32 %v4589, %v4590
  %v4592 = vmax.f32 %v3434, %v3442
  %v4593 = vrot.slane %v4592, 4
  %v4594 = vmax.f32 %v4592, %v4593
  %v4595 = vrot.slane %v4594, 2
  %v4596 = vmax.f32 %v4594, %v4595
  %v4597 = vrot.slane %v4596, 1
  %v4598 = vmax.f32 %v4596, %v4597
  %v4599 = vmax.f32 %v3435, %v3443
  %v4600 = vrot.slane %v4599, 4
  %v4601 = vmax.f32 %v4599, %v4600
  %v4602 = vrot.slane %v4601, 2
  %v4603 = vmax.f32 %v4601, %v4602
  %v4604 = vrot.slane %v4603, 1
  %v4605 = vmax.f32 %v4603, %v4604
  %v4606 = vmax.f32 %v3436, %v3444
  %v4607 = vrot.slane %v4606, 4
  %v4608 = vmax.f32 %v4606, %v4607
  %v4609 = vrot.slane %v4608, 2
  %v4610 = vmax.f32 %v4608, %v4609
  %v4611 = vrot.slane %v4610, 1
  %v4612 = vmax.f32 %v4610, %v4611
  %v4613 = vmax.f32 %v3437, %v3445
  %v4614 = vrot.slane %v4613, 4
  %v4615 = vmax.f32 %v4613, %v4614
  %v4616 = vrot.slane %v4615, 2
  %v4617 = vmax.f32 %v4615, %v4616
  %v4618 = vrot.slane %v4617, 1
  %v4619 = vmax.f32 %v4617, %v4618
  %v4620 = vmax.f32 %v3438, %v3446
  %v4621 = vrot.slane %v4620, 4
  %v4622 = vmax.f32 %v4620, %v4621
  %v4623 = vrot.slane %v4622, 2
  %v4624 = vmax.f32 %v4622, %v4623
  %v4625 = vrot.slane %v4624, 1
  %v4626 = vmax.f32 %v4624, %v4625
  %v4627 = vmax.f32 %v3439, %v3447
  %v4628 = vrot.slane %v4627, 4
  %v4629 = vmax.f32 %v4627, %v4628
  %v4630 = vrot.slane %v4629, 2
  %v4631 = vmax.f32 %v4629, %v4630
  %v4632 = vrot.slane %v4631, 1
  %v4633 = vmax.f32 %v4631, %v4632
  %v4634 = vmax.f32 %v3440, %v3448
  %v4635 = vrot.slane %v4634, 4
  %v4636 = vmax.f32 %v4634, %v4635
  %v4637 = vrot.slane %v4636, 2
  %v4638 = vmax.f32 %v4636, %v4637
  %v4639 = vrot.slane %v4638, 1
  %v4640 = vmax.f32 %v4638, %v4639
  %v4641 = vmax.f32 %v3449, %v3457
  %v4642 = vrot.slane %v4641, 4
  %v4643 = vmax.f32 %v4641, %v4642
  %v4644 = vrot.slane %v4643, 2
  %v4645 = vmax.f32 %v4643, %v4644
  %v4646 = vrot.slane %v4645, 1
  %v4647 = vmax.f32 %v4645, %v4646
  %v4648 = vmax.f32 %v3450, %v3458
  %v4649 = vrot.slane %v4648, 4
  %v4650 = vmax.f32 %v4648, %v4649
  %v4651 = vrot.slane %v4650, 2
  %v4652 = vmax.f32 %v4650, %v4651
  %v4653 = vrot.slane %v4652, 1
  %v4654 = vmax.f32 %v4652, %v4653
  %v4655 = vmax.f32 %v3451, %v3459
  %v4656 = vrot.slane %v4655, 4
  %v4657 = vmax.f32 %v4655, %v4656
  %v4658 = vrot.slane %v4657, 2
  %v4659 = vmax.f32 %v4657, %v4658
  %v4660 = vrot.slane %v4659, 1
  %v4661 = vmax.f32 %v4659, %v4660
  %v4662 = vmax.f32 %v3452, %v3460
  %v4663 = vrot.slane %v4662, 4
  %v4664 = vmax.f32 %v4662, %v4663
  %v4665 = vrot.slane %v4664, 2
  %v4666 = vmax.f32 %v4664, %v4665
  %v4667 = vrot.slane %v4666, 1
  %v4668 = vmax.f32 %v4666, %v4667
  %v4669 = vmax.f32 %v3453, %v3461
  %v4670 = vrot.slane %v4669, 4
  %v4671 = vmax.f32 %v4669, %v4670
  %v4672 = vrot.slane %v4671, 2
  %v4673 = vmax.f32 %v4671, %v4672
  %v4674 = vrot.slane %v4673, 1
  %v4675 = vmax.f32 %v4673, %v4674
  %v4676 = vmax.f32 %v3454, %v3462
  %v4677 = vrot.slane %v4676, 4
  %v4678 = vmax.f32 %v4676, %v4677
  %v4679 = vrot.slane %v4678, 2
  %v4680 = vmax.f32 %v4678, %v4679
  %v4681 = vrot.slane %v4680, 1
  %v4682 = vmax.f32 %v4680, %v4681
  %v4683 = vmax.f32 %v3455, %v3463
  %v4684 = vrot.slane %v4683, 4
  %v4685 = vmax.f32 %v4683, %v4684
  %v4686 = vrot.slane %v4685, 2
  %v4687 = vmax.f32 %v4685, %v4686
  %v4688 = vrot.slane %v4687, 1
  %v4689 = vmax.f32 %v4687, %v4688
  %v4690 = vmax.f32 %v3456, %v3464
  %v4691 = vrot.slane %v4690, 4
  %v4692 = vmax.f32 %v4690, %v4691
  %v4693 = vrot.slane %v4692, 2
  %v4694 = vmax.f32 %v4692, %v4693
  %v4695 = vrot.slane %v4694, 1
  %v4696 = vmax.f32 %v4694, %v4695
  %v4697 = vmax.f32 %v3465, %v3473
  %v4698 = vrot.slane %v4697, 4
  %v4699 = vmax.f32 %v4697, %v4698
  %v4700 = vrot.slane %v4699, 2
  %v4701 = vmax.f32 %v4699, %v4700
  %v4702 = vrot.slane %v4701, 1
  %v4703 = vmax.f32 %v4701, %v4702
  %v4704 = vmax.f32 %v3466, %v3474
  %v4705 = vrot.slane %v4704, 4
  %v4706 = vmax.f32 %v4704, %v4705
  %v4707 = vrot.slane %v4706, 2
  %v4708 = vmax.f32 %v4706, %v4707
  %v4709 = vrot.slane %v4708, 1
  %v4710 = vmax.f32 %v4708, %v4709
  %v4711 = vmax.f32 %v3467, %v3475
  %v4712 = vrot.slane %v4711, 4
  %v4713 = vmax.f32 %v4711, %v4712
  %v4714 = vrot.slane %v4713, 2
  %v4715 = vmax.f32 %v4713, %v4714
  %v4716 = vrot.slane %v4715, 1
  %v4717 = vmax.f32 %v4715, %v4716
  %v4718 = vmax.f32 %v3468, %v3476
  %v4719 = vrot.slane %v4718, 4
  %v4720 = vmax.f32 %v4718, %v4719
  %v4721 = vrot.slane %v4720, 2
  %v4722 = vmax.f32 %v4720, %v4721
  %v4723 = vrot.slane %v4722, 1
  %v4724 = vmax.f32 %v4722, %v4723
  %v4725 = vmax.f32 %v3469, %v3477
  %v4726 = vrot.slane %v4725, 4
  %v4727 = vmax.f32 %v4725, %v4726
  %v4728 = vrot.slane %v4727, 2
  %v4729 = vmax.f32 %v4727, %v4728
  %v4730 = vrot.slane %v4729, 1
  %v4731 = vmax.f32 %v4729, %v4730
  %v4732 = vmax.f32 %v3470, %v3478
  %v4733 = vrot.slane %v4732, 4
  %v4734 = vmax.f32 %v4732, %v4733
  %v4735 = vrot.slane %v4734, 2
  %v4736 = vmax.f32 %v4734, %v4735
  %v4737 = vrot.slane %v4736, 1
  %v4738 = vmax.f32 %v4736, %v4737
  %v4739 = vmax.f32 %v3471, %v3479
  %v4740 = vrot.slane %v4739, 4
  %v4741 = vmax.f32 %v4739, %v4740
  %v4742 = vrot.slane %v4741, 2
  %v4743 = vmax.f32 %v4741, %v4742
  %v4744 = vrot.slane %v4743, 1
  %v4745 = vmax.f32 %v4743, %v4744
  %v4746 = vmax.f32 %v3472, %v3480
  %v4747 = vrot.slane %v4746, 4
  %v4748 = vmax.f32 %v4746, %v4747
  %v4749 = vrot.slane %v4748, 2
  %v4750 = vmax.f32 %v4748, %v4749
  %v4751 = vrot.slane %v4750, 1
  %v4752 = vmax.f32 %v4750, %v4751
  %v4753 = vmax.f32 %v3481, %v3489
  %v4754 = vrot.slane %v4753, 4
  %v4755 = vmax.f32 %v4753, %v4754
  %v4756 = vrot.slane %v4755, 2
  %v4757 = vmax.f32 %v4755, %v4756
  %v4758 = vrot.slane %v4757, 1
  %v4759 = vmax.f32 %v4757, %v4758
  %v4760 = vmax.f32 %v3482, %v3490
  %v4761 = vrot.slane %v4760, 4
  %v4762 = vmax.f32 %v4760, %v4761
  %v4763 = vrot.slane %v4762, 2
  %v4764 = vmax.f32 %v4762, %v4763
  %v4765 = vrot.slane %v4764, 1
  %v4766 = vmax.f32 %v4764, %v4765
  %v4767 = vmax.f32 %v3483, %v3491
  %v4768 = vrot.slane %v4767, 4
  %v4769 = vmax.f32 %v4767, %v4768
  %v4770 = vrot.slane %v4769, 2
  %v4771 = vmax.f32 %v4769, %v4770
  %v4772 = vrot.slane %v4771, 1
  %v4773 = vmax.f32 %v4771, %v4772
  %v4774 = vmax.f32 %v3484, %v3492
  %v4775 = vrot.slane %v4774, 4
  %v4776 = vmax.f32 %v4774, %v4775
  %v4777 = vrot.slane %v4776, 2
  %v4778 = vmax.f32 %v4776, %v4777
  %v4779 = vrot.slane %v4778, 1
  %v4780 = vmax.f32 %v4778, %v4779
  %v4781 = vmax.f32 %v3485, %v3493
  %v4782 = vrot.slane %v4781, 4
  %v4783 = vmax.f32 %v4781, %v4782
  %v4784 = vrot.slane %v4783, 2
  %v4785 = vmax.f32 %v4783, %v4784
  %v4786 = vrot.slane %v4785, 1
  %v4787 = vmax.f32 %v4785, %v4786
  %v4788 = vmax.f32 %v3486, %v3494
  %v4789 = vrot.slane %v4788, 4
  %v4790 = vmax.f32 %v4788, %v4789
  %v4791 = vrot.slane %v4790, 2
  %v4792 = vmax.f32 %v4790, %v4791
  %v4793 = vrot.slane %v4792, 1
  %v4794 = vmax.f32 %v4792, %v4793
  %v4795 = vmax.f32 %v3487, %v3495
  %v4796 = vrot.slane %v4795, 4
  %v4797 = vmax.f32 %v4795, %v4796
  %v4798 = vrot.slane %v4797, 2
  %v4799 = vmax.f32 %v4797, %v4798
  %v4800 = vrot.slane %v4799, 1
  %v4801 = vmax.f32 %v4799, %v4800
  %v4802 = vmax.f32 %v3488, %v3496
  %v4803 = vrot.slane %v4802, 4
  %v4804 = vmax.f32 %v4802, %v4803
  %v4805 = vrot.slane %v4804, 2
  %v4806 = vmax.f32 %v4804, %v4805
  %v4807 = vrot.slane %v4806, 1
  %v4808 = vmax.f32 %v4806, %v4807
  %v4809 = vmax.f32 %v3497, %v3505
  %v4810 = vrot.slane %v4809, 4
  %v4811 = vmax.f32 %v4809, %v4810
  %v4812 = vrot.slane %v4811, 2
  %v4813 = vmax.f32 %v4811, %v4812
  %v4814 = vrot.slane %v4813, 1
  %v4815 = vmax.f32 %v4813, %v4814
  %v4816 = vmax.f32 %v3498, %v3506
  %v4817 = vrot.slane %v4816, 4
  %v4818 = vmax.f32 %v4816, %v4817
  %v4819 = vrot.slane %v4818, 2
  %v4820 = vmax.f32 %v4818, %v4819
  %v4821 = vrot.slane %v4820, 1
  %v4822 = vmax.f32 %v4820, %v4821
  %v4823 = vmax.f32 %v3499, %v3507
  %v4824 = vrot.slane %v4823, 4
  %v4825 = vmax.f32 %v4823, %v4824
  %v4826 = vrot.slane %v4825, 2
  %v4827 = vmax.f32 %v4825, %v4826
  %v4828 = vrot.slane %v4827, 1
  %v4829 = vmax.f32 %v4827, %v4828
  %v4830 = vmax.f32 %v3500, %v3508
  %v4831 = vrot.slane %v4830, 4
  %v4832 = vmax.f32 %v4830, %v4831
  %v4833 = vrot.slane %v4832, 2
  %v4834 = vmax.f32 %v4832, %v4833
  %v4835 = vrot.slane %v4834, 1
  %v4836 = vmax.f32 %v4834, %v4835
  %v4837 = vmax.f32 %v3501, %v3509
  %v4838 = vrot.slane %v4837, 4
  %v4839 = vmax.f32 %v4837, %v4838
  %v4840 = vrot.slane %v4839, 2
  %v4841 = vmax.f32 %v4839, %v4840
  %v4842 = vrot.slane %v4841, 1
  %v4843 = vmax.f32 %v4841, %v4842
  %v4844 = vmax.f32 %v3502, %v3510
  %v4845 = vrot.slane %v4844, 4
  %v4846 = vmax.f32 %v4844, %v4845
  %v4847 = vrot.slane %v4846, 2
  %v4848 = vmax.f32 %v4846, %v4847
  %v4849 = vrot.slane %v4848, 1
  %v4850 = vmax.f32 %v4848, %v4849
  %v4851 = vmax.f32 %v3503, %v3511
  %v4852 = vrot.slane %v4851, 4
  %v4853 = vmax.f32 %v4851, %v4852
  %v4854 = vrot.slane %v4853, 2
  %v4855 = vmax.f32 %v4853, %v4854
  %v4856 = vrot.slane %v4855, 1
  %v4857 = vmax.f32 %v4855, %v4856
  %v4858 = vmax.f32 %v3504, %v3512
  %v4859 = vrot.slane %v4858, 4
  %v4860 = vmax.f32 %v4858, %v4859
  %v4861 = vrot.slane %v4860, 2
  %v4862 = vmax.f32 %v4860, %v4861
  %v4863 = vrot.slane %v4862, 1
  %v4864 = vmax.f32 %v4862, %v4863
  %v4865 = vmax.f32 %v3513, %v3521
  %v4866 = vrot.slane %v4865, 4
  %v4867 = vmax.f32 %v4865, %v4866
  %v4868 = vrot.slane %v4867, 2
  %v4869 = vmax.f32 %v4867, %v4868
  %v4870 = vrot.slane %v4869, 1
  %v4871 = vmax.f32 %v4869, %v4870
  %v4872 = vmax.f32 %v3514, %v3522
  %v4873 = vrot.slane %v4872, 4
  %v4874 = vmax.f32 %v4872, %v4873
  %v4875 = vrot.slane %v4874, 2
  %v4876 = vmax.f32 %v4874, %v4875
  %v4877 = vrot.slane %v4876, 1
  %v4878 = vmax.f32 %v4876, %v4877
  %v4879 = vmax.f32 %v3515, %v3523
  %v4880 = vrot.slane %v4879, 4
  %v4881 = vmax.f32 %v4879, %v4880
  %v4882 = vrot.slane %v4881, 2
  %v4883 = vmax.f32 %v4881, %v4882
  %v4884 = vrot.slane %v4883, 1
  %v4885 = vmax.f32 %v4883, %v4884
  %v4886 = vmax.f32 %v3516, %v3524
  %v4887 = vrot.slane %v4886, 4
  %v4888 = vmax.f32 %v4886, %v4887
  %v4889 = vrot.slane %v4888, 2
  %v4890 = vmax.f32 %v4888, %v4889
  %v4891 = vrot.slane %v4890, 1
  %v4892 = vmax.f32 %v4890, %v4891
  %v4893 = vmax.f32 %v3517, %v3525
  %v4894 = vrot.slane %v4893, 4
  %v4895 = vmax.f32 %v4893, %v4894
  %v4896 = vrot.slane %v4895, 2
  %v4897 = vmax.f32 %v4895, %v4896
  %v4898 = vrot.slane %v4897, 1
  %v4899 = vmax.f32 %v4897, %v4898
  %v4900 = vmax.f32 %v3518, %v3526
  %v4901 = vrot.slane %v4900, 4
  %v4902 = vmax.f32 %v4900, %v4901
  %v4903 = vrot.slane %v4902, 2
  %v4904 = vmax.f32 %v4902, %v4903
  %v4905 = vrot.slane %v4904, 1
  %v4906 = vmax.f32 %v4904, %v4905
  %v4907 = vmax.f32 %v3519, %v3527
  %v4908 = vrot.slane %v4907, 4
  %v4909 = vmax.f32 %v4907, %v4908
  %v4910 = vrot.slane %v4909, 2
  %v4911 = vmax.f32 %v4909, %v4910
  %v4912 = vrot.slane %v4911, 1
  %v4913 = vmax.f32 %v4911, %v4912
  %v4914 = vmax.f32 %v3520, %v3528
  %v4915 = vrot.slane %v4914, 4
  %v4916 = vmax.f32 %v4914, %v4915
  %v4917 = vrot.slane %v4916, 2
  %v4918 = vmax.f32 %v4916, %v4917
  %v4919 = vrot.slane %v4918, 1
  %v4920 = vmax.f32 %v4918, %v4919
  %v4921 = vmax.f32 %v3529, %v3537
  %v4922 = vrot.slane %v4921, 4
  %v4923 = vmax.f32 %v4921, %v4922
  %v4924 = vrot.slane %v4923, 2
  %v4925 = vmax.f32 %v4923, %v4924
  %v4926 = vrot.slane %v4925, 1
  %v4927 = vmax.f32 %v4925, %v4926
  %v4928 = vmax.f32 %v3530, %v3538
  %v4929 = vrot.slane %v4928, 4
  %v4930 = vmax.f32 %v4928, %v4929
  %v4931 = vrot.slane %v4930, 2
  %v4932 = vmax.f32 %v4930, %v4931
  %v4933 = vrot.slane %v4932, 1
  %v4934 = vmax.f32 %v4932, %v4933
  %v4935 = vmax.f32 %v3531, %v3539
  %v4936 = vrot.slane %v4935, 4
  %v4937 = vmax.f32 %v4935, %v4936
  %v4938 = vrot.slane %v4937, 2
  %v4939 = vmax.f32 %v4937, %v4938
  %v4940 = vrot.slane %v4939, 1
  %v4941 = vmax.f32 %v4939, %v4940
  %v4942 = vmax.f32 %v3532, %v3540
  %v4943 = vrot.slane %v4942, 4
  %v4944 = vmax.f32 %v4942, %v4943
  %v4945 = vrot.slane %v4944, 2
  %v4946 = vmax.f32 %v4944, %v4945
  %v4947 = vrot.slane %v4946, 1
  %v4948 = vmax.f32 %v4946, %v4947
  %v4949 = vmax.f32 %v3533, %v3541
  %v4950 = vrot.slane %v4949, 4
  %v4951 = vmax.f32 %v4949, %v4950
  %v4952 = vrot.slane %v4951, 2
  %v4953 = vmax.f32 %v4951, %v4952
  %v4954 = vrot.slane %v4953, 1
  %v4955 = vmax.f32 %v4953, %v4954
  %v4956 = vmax.f32 %v3534, %v3542
  %v4957 = vrot.slane %v4956, 4
  %v4958 = vmax.f32 %v4956, %v4957
  %v4959 = vrot.slane %v4958, 2
  %v4960 = vmax.f32 %v4958, %v4959
  %v4961 = vrot.slane %v4960, 1
  %v4962 = vmax.f32 %v4960, %v4961
  %v4963 = vmax.f32 %v3535, %v3543
  %v4964 = vrot.slane %v4963, 4
  %v4965 = vmax.f32 %v4963, %v4964
  %v4966 = vrot.slane %v4965, 2
  %v4967 = vmax.f32 %v4965, %v4966
  %v4968 = vrot.slane %v4967, 1
  %v4969 = vmax.f32 %v4967, %v4968
  %v4970 = vmax.f32 %v3536, %v3544
  %v4971 = vrot.slane %v4970, 4
  %v4972 = vmax.f32 %v4970, %v4971
  %v4973 = vrot.slane %v4972, 2
  %v4974 = vmax.f32 %v4972, %v4973
  %v4975 = vrot.slane %v4974, 1
  %v4976 = vmax.f32 %v4974, %v4975
  %v4977 = vmax.f32 %v3545, %v3553
  %v4978 = vrot.slane %v4977, 4
  %v4979 = vmax.f32 %v4977, %v4978
  %v4980 = vrot.slane %v4979, 2
  %v4981 = vmax.f32 %v4979, %v4980
  %v4982 = vrot.slane %v4981, 1
  %v4983 = vmax.f32 %v4981, %v4982
  %v4984 = vmax.f32 %v3546, %v3554
  %v4985 = vrot.slane %v4984, 4
  %v4986 = vmax.f32 %v4984, %v4985
  %v4987 = vrot.slane %v4986, 2
  %v4988 = vmax.f32 %v4986, %v4987
  %v4989 = vrot.slane %v4988, 1
  %v4990 = vmax.f32 %v4988, %v4989
  %v4991 = vmax.f32 %v3547, %v3555
  %v4992 = vrot.slane %v4991, 4
  %v4993 = vmax.f32 %v4991, %v4992
  %v4994 = vrot.slane %v4993, 2
  %v4995 = vmax.f32 %v4993, %v4994
  %v4996 = vrot.slane %v4995, 1
  %v4997 = vmax.f32 %v4995, %v4996
  %v4998 = vmax.f32 %v3548, %v3556
  %v4999 = vrot.slane %v4998, 4
  %v5000 = vmax.f32 %v4998, %v4999
  %v5001 = vrot.slane %v5000, 2
  %v5002 = vmax.f32 %v5000, %v5001
  %v5003 = vrot.slane %v5002, 1
  %v5004 = vmax.f32 %v5002, %v5003
  %v5005 = vmax.f32 %v3549, %v3557
  %v5006 = vrot.slane %v5005, 4
  %v5007 = vmax.f32 %v5005, %v5006
  %v5008 = vrot.slane %v5007, 2
  %v5009 = vmax.f32 %v5007, %v5008
  %v5010 = vrot.slane %v5009, 1
  %v5011 = vmax.f32 %v5009, %v5010
  %v5012 = vmax.f32 %v3550, %v3558
  %v5013 = vrot.slane %v5012, 4
  %v5014 = vmax.f32 %v5012, %v5013
  %v5015 = vrot.slane %v5014, 2
  %v5016 = vmax.f32 %v5014, %v5015
  %v5017 = vrot.slane %v5016, 1
  %v5018 = vmax.f32 %v5016, %v5017
  %v5019 = vmax.f32 %v3551, %v3559
  %v5020 = vrot.slane %v5019, 4
  %v5021 = vmax.f32 %v5019, %v5020
  %v5022 = vrot.slane %v5021, 2
  %v5023 = vmax.f32 %v5021, %v5022
  %v5024 = vrot.slane %v5023, 1
  %v5025 = vmax.f32 %v5023, %v5024
  %v5026 = vmax.f32 %v3552, %v3560
  %v5027 = vrot.slane %v5026, 4
  %v5028 = vmax.f32 %v5026, %v5027
  %v5029 = vrot.slane %v5028, 2
  %v5030 = vmax.f32 %v5028, %v5029
  %v5031 = vrot.slane %v5030, 1
  %v5032 = vmax.f32 %v5030, %v5031
  %v5033 = vmax.f32 %v3561, %v3569
  %v5034 = vrot.slane %v5033, 4
  %v5035 = vmax.f32 %v5033, %v5034
  %v5036 = vrot.slane %v5035, 2
  %v5037 = vmax.f32 %v5035, %v5036
  %v5038 = vrot.slane %v5037, 1
  %v5039 = vmax.f32 %v5037, %v5038
  %v5040 = vmax.f32 %v3562, %v3570
  %v5041 = vrot.slane %v5040, 4
  %v5042 = vmax.f32 %v5040, %v5041
  %v5043 = vrot.slane %v5042, 2
  %v5044 = vmax.f32 %v5042, %v5043
  %v5045 = vrot.slane %v5044, 1
  %v5046 = vmax.f32 %v5044, %v5045
  %v5047 = vmax.f32 %v3563, %v3571
  %v5048 = vrot.slane %v5047, 4
  %v5049 = vmax.f32 %v5047, %v5048
  %v5050 = vrot.slane %v5049, 2
  %v5051 = vmax.f32 %v5049, %v5050
  %v5052 = vrot.slane %v5051, 1
  %v5053 = vmax.f32 %v5051, %v5052
  %v5054 = vmax.f32 %v3564, %v3572
  %v5055 = vrot.slane %v5054, 4
  %v5056 = vmax.f32 %v5054, %v5055
  %v5057 = vrot.slane %v5056, 2
  %v5058 = vmax.f32 %v5056, %v5057
  %v5059 = vrot.slane %v5058, 1
  %v5060 = vmax.f32 %v5058, %v5059
  %v5061 = vmax.f32 %v3565, %v3573
  %v5062 = vrot.slane %v5061, 4
  %v5063 = vmax.f32 %v5061, %v5062
  %v5064 = vrot.slane %v5063, 2
  %v5065 = vmax.f32 %v5063, %v5064
  %v5066 = vrot.slane %v5065, 1
  %v5067 = vmax.f32 %v5065, %v5066
  %v5068 = vmax.f32 %v3566, %v3574
  %v5069 = vrot.slane %v5068, 4
  %v5070 = vmax.f32 %v5068, %v5069
  %v5071 = vrot.slane %v5070, 2
  %v5072 = vmax.f32 %v5070, %v5071
  %v5073 = vrot.slane %v5072, 1
  %v5074 = vmax.f32 %v5072, %v5073
  %v5075 = vmax.f32 %v3567, %v3575
  %v5076 = vrot.slane %v5075, 4
  %v5077 = vmax.f32 %v5075, %v5076
  %v5078 = vrot.slane %v5077, 2
  %v5079 = vmax.f32 %v5077, %v5078
  %v5080 = vrot.slane %v5079, 1
  %v5081 = vmax.f32 %v5079, %v5080
  %v5082 = vmax.f32 %v3568, %v3576
  %v5083 = vrot.slane %v5082, 4
  %v5084 = vmax.f32 %v5082, %v5083
  %v5085 = vrot.slane %v5084, 2
  %v5086 = vmax.f32 %v5084, %v5085
  %v5087 = vrot.slane %v5086, 1
  %v5088 = vmax.f32 %v5086, %v5087
  %v5089 = vmax.f32 %v3577, %v3585
  %v5090 = vrot.slane %v5089, 4
  %v5091 = vmax.f32 %v5089, %v5090
  %v5092 = vrot.slane %v5091, 2
  %v5093 = vmax.f32 %v5091, %v5092
  %v5094 = vrot.slane %v5093, 1
  %v5095 = vmax.f32 %v5093, %v5094
  %v5096 = vmax.f32 %v3578, %v3586
  %v5097 = vrot.slane %v5096, 4
  %v5098 = vmax.f32 %v5096, %v5097
  %v5099 = vrot.slane %v5098, 2
  %v5100 = vmax.f32 %v5098, %v5099
  %v5101 = vrot.slane %v5100, 1
  %v5102 = vmax.f32 %v5100, %v5101
  %v5103 = vmax.f32 %v3579, %v3587
  %v5104 = vrot.slane %v5103, 4
  %v5105 = vmax.f32 %v5103, %v5104
  %v5106 = vrot.slane %v5105, 2
  %v5107 = vmax.f32 %v5105, %v5106
  %v5108 = vrot.slane %v5107, 1
  %v5109 = vmax.f32 %v5107, %v5108
  %v5110 = vmax.f32 %v3580, %v3588
  %v5111 = vrot.slane %v5110, 4
  %v5112 = vmax.f32 %v5110, %v5111
  %v5113 = vrot.slane %v5112, 2
  %v5114 = vmax.f32 %v5112, %v5113
  %v5115 = vrot.slane %v5114, 1
  %v5116 = vmax.f32 %v5114, %v5115
  %v5117 = vmax.f32 %v3581, %v3589
  %v5118 = vrot.slane %v5117, 4
  %v5119 = vmax.f32 %v5117, %v5118
  %v5120 = vrot.slane %v5119, 2
  %v5121 = vmax.f32 %v5119, %v5120
  %v5122 = vrot.slane %v5121, 1
  %v5123 = vmax.f32 %v5121, %v5122
  %v5124 = vmax.f32 %v3582, %v3590
  %v5125 = vrot.slane %v5124, 4
  %v5126 = vmax.f32 %v5124, %v5125
  %v5127 = vrot.slane %v5126, 2
  %v5128 = vmax.f32 %v5126, %v5127
  %v5129 = vrot.slane %v5128, 1
  %v5130 = vmax.f32 %v5128, %v5129
  %v5131 = vmax.f32 %v3583, %v3591
  %v5132 = vrot.slane %v5131, 4
  %v5133 = vmax.f32 %v5131, %v5132
  %v5134 = vrot.slane %v5133, 2
  %v5135 = vmax.f32 %v5133, %v5134
  %v5136 = vrot.slane %v5135, 1
  %v5137 = vmax.f32 %v5135, %v5136
  %v5138 = vmax.f32 %v3584, %v3592
  %v5139 = vrot.slane %v5138, 4
  %v5140 = vmax.f32 %v5138, %v5139
  %v5141 = vrot.slane %v5140, 2
  %v5142 = vmax.f32 %v5140, %v5141
  %v5143 = vrot.slane %v5142, 1
  %v5144 = vmax.f32 %v5142, %v5143
  %v5145 = vmax.f32 %v3593, %v3601
  %v5146 = vrot.slane %v5145, 4
  %v5147 = vmax.f32 %v5145, %v5146
  %v5148 = vrot.slane %v5147, 2
  %v5149 = vmax.f32 %v5147, %v5148
  %v5150 = vrot.slane %v5149, 1
  %v5151 = vmax.f32 %v5149, %v5150
  %v5152 = vmax.f32 %v3594, %v3602
  %v5153 = vrot.slane %v5152, 4
  %v5154 = vmax.f32 %v5152, %v5153
  %v5155 = vrot.slane %v5154, 2
  %v5156 = vmax.f32 %v5154, %v5155
  %v5157 = vrot.slane %v5156, 1
  %v5158 = vmax.f32 %v5156, %v5157
  %v5159 = vmax.f32 %v3595, %v3603
  %v5160 = vrot.slane %v5159, 4
  %v5161 = vmax.f32 %v5159, %v5160
  %v5162 = vrot.slane %v5161, 2
  %v5163 = vmax.f32 %v5161, %v5162
  %v5164 = vrot.slane %v5163, 1
  %v5165 = vmax.f32 %v5163, %v5164
  %v5166 = vmax.f32 %v3596, %v3604
  %v5167 = vrot.slane %v5166, 4
  %v5168 = vmax.f32 %v5166, %v5167
  %v5169 = vrot.slane %v5168, 2
  %v5170 = vmax.f32 %v5168, %v5169
  %v5171 = vrot.slane %v5170, 1
  %v5172 = vmax.f32 %v5170, %v5171
  %v5173 = vmax.f32 %v3597, %v3605
  %v5174 = vrot.slane %v5173, 4
  %v5175 = vmax.f32 %v5173, %v5174
  %v5176 = vrot.slane %v5175, 2
  %v5177 = vmax.f32 %v5175, %v5176
  %v5178 = vrot.slane %v5177, 1
  %v5179 = vmax.f32 %v5177, %v5178
  %v5180 = vmax.f32 %v3598, %v3606
  %v5181 = vrot.slane %v5180, 4
  %v5182 = vmax.f32 %v5180, %v5181
  %v5183 = vrot.slane %v5182, 2
  %v5184 = vmax.f32 %v5182, %v5183
  %v5185 = vrot.slane %v5184, 1
  %v5186 = vmax.f32 %v5184, %v5185
  %v5187 = vmax.f32 %v3599, %v3607
  %v5188 = vrot.slane %v5187, 4
  %v5189 = vmax.f32 %v5187, %v5188
  %v5190 = vrot.slane %v5189, 2
  %v5191 = vmax.f32 %v5189, %v5190
  %v5192 = vrot.slane %v5191, 1
  %v5193 = vmax.f32 %v5191, %v5192
  %v5194 = vmax.f32 %v3600, %v3608
  %v5195 = vrot.slane %v5194, 4
  %v5196 = vmax.f32 %v5194, %v5195
  %v5197 = vrot.slane %v5196, 2
  %v5198 = vmax.f32 %v5196, %v5197
  %v5199 = vrot.slane %v5198, 1
  %v5200 = vmax.f32 %v5198, %v5199
  %v5201 = vmax.f32 %v3609, %v3617
  %v5202 = vrot.slane %v5201, 4
  %v5203 = vmax.f32 %v5201, %v5202
  %v5204 = vrot.slane %v5203, 2
  %v5205 = vmax.f32 %v5203, %v5204
  %v5206 = vrot.slane %v5205, 1
  %v5207 = vmax.f32 %v5205, %v5206
  %v5208 = vmax.f32 %v3610, %v3618
  %v5209 = vrot.slane %v5208, 4
  %v5210 = vmax.f32 %v5208, %v5209
  %v5211 = vrot.slane %v5210, 2
  %v5212 = vmax.f32 %v5210, %v5211
  %v5213 = vrot.slane %v5212, 1
  %v5214 = vmax.f32 %v5212, %v5213
  %v5215 = vmax.f32 %v3611, %v3619
  %v5216 = vrot.slane %v5215, 4
  %v5217 = vmax.f32 %v5215, %v5216
  %v5218 = vrot.slane %v5217, 2
  %v5219 = vmax.f32 %v5217, %v5218
  %v5220 = vrot.slane %v5219, 1
  %v5221 = vmax.f32 %v5219, %v5220
  %v5222 = vmax.f32 %v3612, %v3620
  %v5223 = vrot.slane %v5222, 4
  %v5224 = vmax.f32 %v5222, %v5223
  %v5225 = vrot.slane %v5224, 2
  %v5226 = vmax.f32 %v5224, %v5225
  %v5227 = vrot.slane %v5226, 1
  %v5228 = vmax.f32 %v5226, %v5227
  %v5229 = vmax.f32 %v3613, %v3621
  %v5230 = vrot.slane %v5229, 4
  %v5231 = vmax.f32 %v5229, %v5230
  %v5232 = vrot.slane %v5231, 2
  %v5233 = vmax.f32 %v5231, %v5232
  %v5234 = vrot.slane %v5233, 1
  %v5235 = vmax.f32 %v5233, %v5234
  %v5236 = vmax.f32 %v3614, %v3622
  %v5237 = vrot.slane %v5236, 4
  %v5238 = vmax.f32 %v5236, %v5237
  %v5239 = vrot.slane %v5238, 2
  %v5240 = vmax.f32 %v5238, %v5239
  %v5241 = vrot.slane %v5240, 1
  %v5242 = vmax.f32 %v5240, %v5241
  %v5243 = vmax.f32 %v3615, %v3623
  %v5244 = vrot.slane %v5243, 4
  %v5245 = vmax.f32 %v5243, %v5244
  %v5246 = vrot.slane %v5245, 2
  %v5247 = vmax.f32 %v5245, %v5246
  %v5248 = vrot.slane %v5247, 1
  %v5249 = vmax.f32 %v5247, %v5248
  %v5250 = vmax.f32 %v3616, %v3624
  %v5251 = vrot.slane %v5250, 4
  %v5252 = vmax.f32 %v5250, %v5251
  %v5253 = vrot.slane %v5252, 2
  %v5254 = vmax.f32 %v5252, %v5253
  %v5255 = vrot.slane %v5254, 1
  %v5256 = vmax.f32 %v5254, %v5255
  %v5257 = vmax.f32 %v3625, %v3633
  %v5258 = vrot.slane %v5257, 4
  %v5259 = vmax.f32 %v5257, %v5258
  %v5260 = vrot.slane %v5259, 2
  %v5261 = vmax.f32 %v5259, %v5260
  %v5262 = vrot.slane %v5261, 1
  %v5263 = vmax.f32 %v5261, %v5262
  %v5264 = vmax.f32 %v3626, %v3634
  %v5265 = vrot.slane %v5264, 4
  %v5266 = vmax.f32 %v5264, %v5265
  %v5267 = vrot.slane %v5266, 2
  %v5268 = vmax.f32 %v5266, %v5267
  %v5269 = vrot.slane %v5268, 1
  %v5270 = vmax.f32 %v5268, %v5269
  %v5271 = vmax.f32 %v3627, %v3635
  %v5272 = vrot.slane %v5271, 4
  %v5273 = vmax.f32 %v5271, %v5272
  %v5274 = vrot.slane %v5273, 2
  %v5275 = vmax.f32 %v5273, %v5274
  %v5276 = vrot.slane %v5275, 1
  %v5277 = vmax.f32 %v5275, %v5276
  %v5278 = vmax.f32 %v3628, %v3636
  %v5279 = vrot.slane %v5278, 4
  %v5280 = vmax.f32 %v5278, %v5279
  %v5281 = vrot.slane %v5280, 2
  %v5282 = vmax.f32 %v5280, %v5281
  %v5283 = vrot.slane %v5282, 1
  %v5284 = vmax.f32 %v5282, %v5283
  %v5285 = vmax.f32 %v3629, %v3637
  %v5286 = vrot.slane %v5285, 4
  %v5287 = vmax.f32 %v5285, %v5286
  %v5288 = vrot.slane %v5287, 2
  %v5289 = vmax.f32 %v5287, %v5288
  %v5290 = vrot.slane %v5289, 1
  %v5291 = vmax.f32 %v5289, %v5290
  %v5292 = vmax.f32 %v3630, %v3638
  %v5293 = vrot.slane %v5292, 4
  %v5294 = vmax.f32 %v5292, %v5293
  %v5295 = vrot.slane %v5294, 2
  %v5296 = vmax.f32 %v5294, %v5295
  %v5297 = vrot.slane %v5296, 1
  %v5298 = vmax.f32 %v5296, %v5297
  %v5299 = vmax.f32 %v3631, %v3639
  %v5300 = vrot.slane %v5299, 4
  %v5301 = vmax.f32 %v5299, %v5300
  %v5302 = vrot.slane %v5301, 2
  %v5303 = vmax.f32 %v5301, %v5302
  %v5304 = vrot.slane %v5303, 1
  %v5305 = vmax.f32 %v5303, %v5304
  %v5306 = vmax.f32 %v3632, %v3640
  %v5307 = vrot.slane %v5306, 4
  %v5308 = vmax.f32 %v5306, %v5307
  %v5309 = vrot.slane %v5308, 2
  %v5310 = vmax.f32 %v5308, %v5309
  %v5311 = vrot.slane %v5310, 1
  %v5312 = vmax.f32 %v5310, %v5311
  %v5313 = vmax.f32 %v3641, %v3649
  %v5314 = vrot.slane %v5313, 4
  %v5315 = vmax.f32 %v5313, %v5314
  %v5316 = vrot.slane %v5315, 2
  %v5317 = vmax.f32 %v5315, %v5316
  %v5318 = vrot.slane %v5317, 1
  %v5319 = vmax.f32 %v5317, %v5318
  %v5320 = vmax.f32 %v3642, %v3650
  %v5321 = vrot.slane %v5320, 4
  %v5322 = vmax.f32 %v5320, %v5321
  %v5323 = vrot.slane %v5322, 2
  %v5324 = vmax.f32 %v5322, %v5323
  %v5325 = vrot.slane %v5324, 1
  %v5326 = vmax.f32 %v5324, %v5325
  %v5327 = vmax.f32 %v3643, %v3651
  %v5328 = vrot.slane %v5327, 4
  %v5329 = vmax.f32 %v5327, %v5328
  %v5330 = vrot.slane %v5329, 2
  %v5331 = vmax.f32 %v5329, %v5330
  %v5332 = vrot.slane %v5331, 1
  %v5333 = vmax.f32 %v5331, %v5332
  %v5334 = vmax.f32 %v3644, %v3652
  %v5335 = vrot.slane %v5334, 4
  %v5336 = vmax.f32 %v5334, %v5335
  %v5337 = vrot.slane %v5336, 2
  %v5338 = vmax.f32 %v5336, %v5337
  %v5339 = vrot.slane %v5338, 1
  %v5340 = vmax.f32 %v5338, %v5339
  %v5341 = vmax.f32 %v3645, %v3653
  %v5342 = vrot.slane %v5341, 4
  %v5343 = vmax.f32 %v5341, %v5342
  %v5344 = vrot.slane %v5343, 2
  %v5345 = vmax.f32 %v5343, %v5344
  %v5346 = vrot.slane %v5345, 1
  %v5347 = vmax.f32 %v5345, %v5346
  %v5348 = vmax.f32 %v3646, %v3654
  %v5349 = vrot.slane %v5348, 4
  %v5350 = vmax.f32 %v5348, %v5349
  %v5351 = vrot.slane %v5350, 2
  %v5352 = vmax.f32 %v5350, %v5351
  %v5353 = vrot.slane %v5352, 1
  %v5354 = vmax.f32 %v5352, %v5353
  %v5355 = vmax.f32 %v3647, %v3655
  %v5356 = vrot.slane %v5355, 4
  %v5357 = vmax.f32 %v5355, %v5356
  %v5358 = vrot.slane %v5357, 2
  %v5359 = vmax.f32 %v5357, %v5358
  %v5360 = vrot.slane %v5359, 1
  %v5361 = vmax.f32 %v5359, %v5360
  %v5362 = vmax.f32 %v3648, %v3656
  %v5363 = vrot.slane %v5362, 4
  %v5364 = vmax.f32 %v5362, %v5363
  %v5365 = vrot.slane %v5364, 2
  %v5366 = vmax.f32 %v5364, %v5365
  %v5367 = vrot.slane %v5366, 1
  %v5368 = vmax.f32 %v5366, %v5367
  %v5369 = vmax.f32 %v3657, %v3665
  %v5370 = vrot.slane %v5369, 4
  %v5371 = vmax.f32 %v5369, %v5370
  %v5372 = vrot.slane %v5371, 2
  %v5373 = vmax.f32 %v5371, %v5372
  %v5374 = vrot.slane %v5373, 1
  %v5375 = vmax.f32 %v5373, %v5374
  %v5376 = vmax.f32 %v3658, %v3666
  %v5377 = vrot.slane %v5376, 4
  %v5378 = vmax.f32 %v5376, %v5377
  %v5379 = vrot.slane %v5378, 2
  %v5380 = vmax.f32 %v5378, %v5379
  %v5381 = vrot.slane %v5380, 1
  %v5382 = vmax.f32 %v5380, %v5381
  %v5383 = vmax.f32 %v3659, %v3667
  %v5384 = vrot.slane %v5383, 4
  %v5385 = vmax.f32 %v5383, %v5384
  %v5386 = vrot.slane %v5385, 2
  %v5387 = vmax.f32 %v5385, %v5386
  %v5388 = vrot.slane %v5387, 1
  %v5389 = vmax.f32 %v5387, %v5388
  %v5390 = vmax.f32 %v3660, %v3668
  %v5391 = vrot.slane %v5390, 4
  %v5392 = vmax.f32 %v5390, %v5391
  %v5393 = vrot.slane %v5392, 2
  %v5394 = vmax.f32 %v5392, %v5393
  %v5395 = vrot.slane %v5394, 1
  %v5396 = vmax.f32 %v5394, %v5395
  %v5397 = vmax.f32 %v3661, %v3669
  %v5398 = vrot.slane %v5397, 4
  %v5399 = vmax.f32 %v5397, %v5398
  %v5400 = vrot.slane %v5399, 2
  %v5401 = vmax.f32 %v5399, %v5400
  %v5402 = vrot.slane %v5401, 1
  %v5403 = vmax.f32 %v5401, %v5402
  %v5404 = vmax.f32 %v3662, %v3670
  %v5405 = vrot.slane %v5404, 4
  %v5406 = vmax.f32 %v5404, %v5405
  %v5407 = vrot.slane %v5406, 2
  %v5408 = vmax.f32 %v5406, %v5407
  %v5409 = vrot.slane %v5408, 1
  %v5410 = vmax.f32 %v5408, %v5409
  %v5411 = vmax.f32 %v3663, %v3671
  %v5412 = vrot.slane %v5411, 4
  %v5413 = vmax.f32 %v5411, %v5412
  %v5414 = vrot.slane %v5413, 2
  %v5415 = vmax.f32 %v5413, %v5414
  %v5416 = vrot.slane %v5415, 1
  %v5417 = vmax.f32 %v5415, %v5416
  %v5418 = vmax.f32 %v3664, %v3672
  %v5419 = vrot.slane %v5418, 4
  %v5420 = vmax.f32 %v5418, %v5419
  %v5421 = vrot.slane %v5420, 2
  %v5422 = vmax.f32 %v5420, %v5421
  %v5423 = vrot.slane %v5422, 1
  %v5424 = vmax.f32 %v5422, %v5423
  %v5425 = vmax.f32 %v3673, %v3681
  %v5426 = vrot.slane %v5425, 4
  %v5427 = vmax.f32 %v5425, %v5426
  %v5428 = vrot.slane %v5427, 2
  %v5429 = vmax.f32 %v5427, %v5428
  %v5430 = vrot.slane %v5429, 1
  %v5431 = vmax.f32 %v5429, %v5430
  %v5432 = vmax.f32 %v3674, %v3682
  %v5433 = vrot.slane %v5432, 4
  %v5434 = vmax.f32 %v5432, %v5433
  %v5435 = vrot.slane %v5434, 2
  %v5436 = vmax.f32 %v5434, %v5435
  %v5437 = vrot.slane %v5436, 1
  %v5438 = vmax.f32 %v5436, %v5437
  %v5439 = vmax.f32 %v3675, %v3683
  %v5440 = vrot.slane %v5439, 4
  %v5441 = vmax.f32 %v5439, %v5440
  %v5442 = vrot.slane %v5441, 2
  %v5443 = vmax.f32 %v5441, %v5442
  %v5444 = vrot.slane %v5443, 1
  %v5445 = vmax.f32 %v5443, %v5444
  %v5446 = vmax.f32 %v3676, %v3684
  %v5447 = vrot.slane %v5446, 4
  %v5448 = vmax.f32 %v5446, %v5447
  %v5449 = vrot.slane %v5448, 2
  %v5450 = vmax.f32 %v5448, %v5449
  %v5451 = vrot.slane %v5450, 1
  %v5452 = vmax.f32 %v5450, %v5451
  %v5453 = vmax.f32 %v3677, %v3685
  %v5454 = vrot.slane %v5453, 4
  %v5455 = vmax.f32 %v5453, %v5454
  %v5456 = vrot.slane %v5455, 2
  %v5457 = vmax.f32 %v5455, %v5456
  %v5458 = vrot.slane %v5457, 1
  %v5459 = vmax.f32 %v5457, %v5458
  %v5460 = vmax.f32 %v3678, %v3686
  %v5461 = vrot.slane %v5460, 4
  %v5462 = vmax.f32 %v5460, %v5461
  %v5463 = vrot.slane %v5462, 2
  %v5464 = vmax.f32 %v5462, %v5463
  %v5465 = vrot.slane %v5464, 1
  %v5466 = vmax.f32 %v5464, %v5465
  %v5467 = vmax.f32 %v3679, %v3687
  %v5468 = vrot.slane %v5467, 4
  %v5469 = vmax.f32 %v5467, %v5468
  %v5470 = vrot.slane %v5469, 2
  %v5471 = vmax.f32 %v5469, %v5470
  %v5472 = vrot.slane %v5471, 1
  %v5473 = vmax.f32 %v5471, %v5472
  %v5474 = vmax.f32 %v3680, %v3688
  %v5475 = vrot.slane %v5474, 4
  %v5476 = vmax.f32 %v5474, %v5475
  %v5477 = vrot.slane %v5476, 2
  %v5478 = vmax.f32 %v5476, %v5477
  %v5479 = vrot.slane %v5478, 1
  %v5480 = vmax.f32 %v5478, %v5479
  %vm5737 = vcmask 1041409
  %v5738 = vsel %vm5737, %v3751, %v3695
  %vm5739 = vcmask 1042434
  %v5740 = vsel %vm5739, %v3807, %v5738
  %vm5741 = vcmask 1043459
  %v5742 = vsel %vm5741, %v3863, %v5740
  %vm5743 = vcmask 1044484
  %v5744 = vsel %vm5743, %v3919, %v5742
  %vm5745 = vcmask 1045509
  %v5746 = vsel %vm5745, %v3975, %v5744
  %vm5747 = vcmask 1046534
  %v5748 = vsel %vm5747, %v4031, %v5746
  %vm5749 = vcmask 1047559
  %v5750 = vsel %vm5749, %v4087, %v5748
  %v5751 = vsel %vm5737, %v3758, %v3702
  %v5752 = vsel %vm5739, %v3814, %v5751
  %v5753 = vsel %vm5741, %v3870, %v5752
  %v5754 = vsel %vm5743, %v3926, %v5753
  %v5755 = vsel %vm5745, %v3982, %v5754
  %v5756 = vsel %vm5747, %v4038, %v5755
  %v5757 = vsel %vm5749, %v4094, %v5756
  %v5758 = vsel %vm5737, %v3765, %v3709
  %v5759 = vsel %vm5739, %v3821, %v5758
  %v5760 = vsel %vm5741, %v3877, %v5759
  %v5761 = vsel %vm5743, %v3933, %v5760
  %v5762 = vsel %vm5745, %v3989, %v5761
  %v5763 = vsel %vm5747, %v4045, %v5762
  %v5764 = vsel %vm5749, %v4101, %v5763
  %v5765 = vsel %vm5737, %v3772, %v3716
  %v5766 = vsel %vm5739, %v3828, %v5765
  %v5767 = vsel %vm5741, %v3884, %v5766
  %v5768 = vsel %vm5743, %v3940, %v5767
  %v5769 = vsel %vm5745, %v3996, %v5768
  %v5770 = vsel %vm5747, %v4052, %v5769
  %v5771 = vsel %vm5749, %v4108, %v5770
  %v5772 = vsel %vm5737, %v3779, %v3723
  %v5773 = vsel %vm5739, %v3835, %v5772
  %v5774 = vsel %vm5741, %v3891, %v5773
  %v5775 = vsel %vm5743, %v3947, %v5774
  %v5776 = vsel %vm5745, %v4003, %v5775
  %v5777 = vsel %vm5747, %v4059, %v5776
  %v5778 = vsel %vm5749, %v4115, %v5777
  %v5779 = vsel %vm5737, %v3786, %v3730
  %v5780 = vsel %vm5739, %v3842, %v5779
  %v5781 = vsel %vm5741, %v3898, %v5780
  %v5782 = vsel %vm5743, %v3954, %v5781
  %v5783 = vsel %vm5745, %v4010, %v5782
  %v5784 = vsel %vm5747, %v4066, %v5783
  %v5785 = vsel %vm5749, %v4122, %v5784
  %v5786 = vsel %vm5737, %v3793, %v3737
  %v5787 = vsel %vm5739, %v3849, %v5786
  %v5788 = vsel %vm5741, %v3905, %v5787
  %v5789 = vsel %vm5743, %v3961, %v5788
  %v5790 = vsel %vm5745, %v4017, %v5789
  %v5791 = vsel %vm5747, %v4073, %v5790
  %v5792 = vsel %vm5749, %v4129, %v5791
  %v5793 = vsel %vm5737, %v3800, %v3744
  %v5794 = vsel %vm5739, %v3856, %v5793
  %v5795 = vsel %vm5741, %v3912, %v5794
  %v5796 = vsel %vm5743, %v3968, %v5795
  %v5797 = vsel %vm5745, %v4024, %v5796
  %v5798 = vsel %vm5747, %v4080, %v5797
  %v5799 = vsel %vm5749, %v4136, %v5798
  %v5800 = vsel %vm5737, %v4199, %v4143
  %v5801 = vsel %vm5739, %v4255, %v5800
  %v5802 = vsel %vm5741, %v4311, %v5801
  %v5803 = vsel %vm5743, %v4367, %v5802
  %v5804 = vsel %vm5745, %v4423, %v5803
  %v5805 = vsel %vm5747, %v4479, %v5804
  %v5806 = vsel %vm5749, %v4535, %v5805
  %v5807 = vsel %vm5737, %v4206, %v4150
  %v5808 = vsel %vm5739, %v4262, %v5807
  %v5809 = vsel %vm5741, %v4318, %v5808
  %v5810 = vsel %vm5743, %v4374, %v5809
  %v5811 = vsel %vm5745, %v4430, %v5810
  %v5812 = vsel %vm5747, %v4486, %v5811
  %v5813 = vsel %vm5749, %v4542, %v5812
  %v5814 = vsel %vm5737, %v4213, %v4157
  %v5815 = vsel %vm5739, %v4269, %v5814
  %v5816 = vsel %vm5741, %v4325, %v5815
  %v5817 = vsel %vm5743, %v4381, %v5816
  %v5818 = vsel %vm5745, %v4437, %v5817
  %v5819 = vsel %vm5747, %v4493, %v5818
  %v5820 = vsel %vm5749, %v4549, %v5819
  %v5821 = vsel %vm5737, %v4220, %v4164
  %v5822 = vsel %vm5739, %v4276, %v5821
  %v5823 = vsel %vm5741, %v4332, %v5822
  %v5824 = vsel %vm5743, %v4388, %v5823
  %v5825 = vsel %vm5745, %v4444, %v5824
  %v5826 = vsel %vm5747, %v4500, %v5825
  %v5827 = vsel %vm5749, %v4556, %v5826
  %v5828 = vsel %vm5737, %v4227, %v4171
  %v5829 = vsel %vm5739, %v4283, %v5828
  %v5830 = vsel %vm5741, %v4339, %v5829
  %v5831 = vsel %vm5743, %v4395, %v5830
  %v5832 = vsel %vm5745, %v4451, %v5831
  %v5833 = vsel %vm5747, %v4507, %v5832
  %v5834 = vsel %vm5749, %v4563, %v5833
  %v5835 = vsel %vm5737, %v4234, %v4178
  %v5836 = vsel %vm5739, %v4290, %v5835
  %v5837 = vsel %vm5741, %v4346, %v5836
  %v5838 = vsel %vm5743, %v4402, %v5837
  %v5839 = vsel %vm5745, %v4458, %v5838
  %v5840 = vsel %vm5747, %v4514, %v5839
  %v5841 = vsel %vm5749, %v4570, %v5840
  %v5842 = vsel %vm5737, %v4241, %v4185
  %v5843 = vsel %vm5739, %v4297, %v5842
  %v5844 = vsel %vm5741, %v4353, %v5843
  %v5845 = vsel %vm5743, %v4409, %v5844
  %v5846 = vsel %vm5745, %v4465, %v5845
  %v5847 = vsel %vm5747, %v4521, %v5846
  %v5848 = vsel %vm5749, %v4577, %v5847
  %v5849 = vsel %vm5737, %v4248, %v4192
  %v5850 = vsel %vm5739, %v4304, %v5849
  %v5851 = vsel %vm5741, %v4360, %v5850
  %v5852 = vsel %vm5743, %v4416, %v5851
  %v5853 = vsel %vm5745, %v4472, %v5852
  %v5854 = vsel %vm5747, %v4528, %v5853
  %v5855 = vsel %vm5749, %v4584, %v5854
  %v5856 = vsel %vm5737, %v4647, %v4591
  %v5857 = vsel %vm5739, %v4703, %v5856
  %v5858 = vsel %vm5741, %v4759, %v5857
  %v5859 = vsel %vm5743, %v4815, %v5858
  %v5860 = vsel %vm5745, %v4871, %v5859
  %v5861 = vsel %vm5747, %v4927, %v5860
  %v5862 = vsel %vm5749, %v4983, %v5861
  %v5863 = vsel %vm5737, %v4654, %v4598
  %v5864 = vsel %vm5739, %v4710, %v5863
  %v5865 = vsel %vm5741, %v4766, %v5864
  %v5866 = vsel %vm5743, %v4822, %v5865
  %v5867 = vsel %vm5745, %v4878, %v5866
  %v5868 = vsel %vm5747, %v4934, %v5867
  %v5869 = vsel %vm5749, %v4990, %v5868
  %v5870 = vsel %vm5737, %v4661, %v4605
  %v5871 = vsel %vm5739, %v4717, %v5870
  %v5872 = vsel %vm5741, %v4773, %v5871
  %v5873 = vsel %vm5743, %v4829, %v5872
  %v5874 = vsel %vm5745, %v4885, %v5873
  %v5875 = vsel %vm5747, %v4941, %v5874
  %v5876 = vsel %vm5749, %v4997, %v5875
  %v5877 = vsel %vm5737, %v4668, %v4612
  %v5878 = vsel %vm5739, %v4724, %v5877
  %v5879 = vsel %vm5741, %v4780, %v5878
  %v5880 = vsel %vm5743, %v4836, %v5879
  %v5881 = vsel %vm5745, %v4892, %v5880
  %v5882 = vsel %vm5747, %v4948, %v5881
  %v5883 = vsel %vm5749, %v5004, %v5882
  %v5884 = vsel %vm5737, %v4675, %v4619
  %v5885 = vsel %vm5739, %v4731, %v5884
  %v5886 = vsel %vm5741, %v4787, %v5885
  %v5887 = vsel %vm5743, %v4843, %v5886
  %v5888 = vsel %vm5745, %v4899, %v5887
  %v5889 = vsel %vm5747, %v4955, %v5888
  %v5890 = vsel %vm5749, %v5011, %v5889
  %v5891 = vsel %vm5737, %v4682, %v4626
  %v5892 = vsel %vm5739, %v4738, %v5891
  %v5893 = vsel %vm5741, %v4794, %v5892
  %v5894 = vsel %vm5743, %v4850, %v5893
  %v5895 = vsel %vm5745, %v4906, %v5894
  %v5896 = vsel %vm5747, %v4962, %v5895
  %v5897 = vsel %vm5749, %v5018, %v5896
  %v5898 = vsel %vm5737, %v4689, %v4633
  %v5899 = vsel %vm5739, %v4745, %v5898
  %v5900 = vsel %vm5741, %v4801, %v5899
  %v5901 = vsel %vm5743, %v4857, %v5900
  %v5902 = vsel %vm5745, %v4913, %v5901
  %v5903 = vsel %vm5747, %v4969, %v5902
  %v5904 = vsel %vm5749, %v5025, %v5903
  %v5905 = vsel %vm5737, %v4696, %v4640
  %v5906 = vsel %vm5739, %v4752, %v5905
  %v5907 = vsel %vm5741, %v4808, %v5906
  %v5908 = vsel %vm5743, %v4864, %v5907
  %v5909 = vsel %vm5745, %v4920, %v5908
  %v5910 = vsel %vm5747, %v4976, %v5909
  %v5911 = vsel %vm5749, %v5032, %v5910
  %v5912 = vsel %vm5737, %v5095, %v5039
  %v5913 = vsel %vm5739, %v5151, %v5912
  %v5914 = vsel %vm5741, %v5207, %v5913
  %v5915 = vsel %vm5743, %v5263, %v5914
  %v5916 = vsel %vm5745, %v5319, %v5915
  %v5917 = vsel %vm5747, %v5375, %v5916
  %v5918 = vsel %vm5749, %v5431, %v5917
  %v5919 = vsel %vm5737, %v5102, %v5046
  %v5920 = vsel %vm5739, %v5158, %v5919
  %v5921 = vsel %vm5741, %v5214, %v5920
  %v5922 = vsel %vm5743, %v5270, %v5921
  %v5923 = vsel %vm5745, %v5326, %v5922
  %v5924 = vsel %vm5747, %v5382, %v5923
  %v5925 = vsel %vm5749, %v5438, %v5924
  %v5926 = vsel %vm5737, %v5109, %v5053
  %v5927 = vsel %vm5739, %v5165, %v5926
  %v5928 = vsel %vm5741, %v5221, %v5927
  %v5929 = vsel %vm5743, %v5277, %v5928
  %v5930 = vsel %vm5745, %v5333, %v5929
  %v5931 = vsel %vm5747, %v5389, %v5930
  %v5932 = vsel %vm5749, %v5445, %v5931
  %v5933 = vsel %vm5737, %v5116, %v5060
  %v5934 = vsel %vm5739, %v5172, %v5933
  %v5935 = vsel %vm5741, %v5228, %v5934
  %v5936 = vsel %vm5743, %v5284, %v5935
  %v5937 = vsel %vm5745, %v5340, %v5936
  %v5938 = vsel %vm5747, %v5396, %v5937
  %v5939 = vsel %vm5749, %v5452, %v5938
  %v5940 = vsel %vm5737, %v5123, %v5067
  %v5941 = vsel %vm5739, %v5179, %v5940
  %v5942 = vsel %vm5741, %v5235, %v5941
  %v5943 = vsel %vm5743, %v5291, %v5942
  %v5944 = vsel %vm5745, %v5347, %v5943
  %v5945 = vsel %vm5747, %v5403, %v5944
  %v5946 = vsel %vm5749, %v5459, %v5945
  %v5947 = vsel %vm5737, %v5130, %v5074
  %v5948 = vsel %vm5739, %v5186, %v5947
  %v5949 = vsel %vm5741, %v5242, %v5948
  %v5950 = vsel %vm5743, %v5298, %v5949
  %v5951 = vsel %vm5745, %v5354, %v5950
  %v5952 = vsel %vm5747, %v5410, %v5951
  %v5953 = vsel %vm5749, %v5466, %v5952
  %v5954 = vsel %vm5737, %v5137, %v5081
  %v5955 = vsel %vm5739, %v5193, %v5954
  %v5956 = vsel %vm5741, %v5249, %v5955
  %v5957 = vsel %vm5743, %v5305, %v5956
  %v5958 = vsel %vm5745, %v5361, %v5957
  %v5959 = vsel %vm5747, %v5417, %v5958
  %v5960 = vsel %vm5749, %v5473, %v5959
  %v5961 = vsel %vm5737, %v5144, %v5088
  %v5962 = vsel %vm5739, %v5200, %v5961
  %v5963 = vsel %vm5741, %v5256, %v5962
  %v5964 = vsel %vm5743, %v5312, %v5963
  %v5965 = vsel %vm5745, %v5368, %v5964
  %v5966 = vsel %vm5747, %v5424, %v5965
  %v5967 = vsel %vm5749, %v5480, %v5966
  %6000 = vst [vmem:[%s9] sm:$0xff] %v5750
  %6001 = vst [vmem:[%s9 + $0x8] sm:$0xff] %v5757
  %6002 = vst [vmem:[%s9 + $0x10] sm:$0xff] %v5764
  %6003 = vst [vmem:[%s9 + $0x18] sm:$0xff] %v5771
  %6004 = vst [vmem:[%s9 + $0x20] sm:$0xff] %v5778
  %6005 = vst [vmem:[%s9 + $0x28] sm:$0xff] %v5785
  %6006 = vst [vmem:[%s9 + $0x30] sm:$0xff] %v5792
  %6007 = vst [vmem:[%s9 + $0x38] sm:$0xff] %v5799
  %6008 = vst [vmem:[%s9 + $0x40] sm:$0xff] %v5806
  %6009 = vst [vmem:[%s9 + $0x48] sm:$0xff] %v5813
  %6010 = vst [vmem:[%s9 + $0x50] sm:$0xff] %v5820
  %6011 = vst [vmem:[%s9 + $0x58] sm:$0xff] %v5827
  %6012 = vst [vmem:[%s9 + $0x60] sm:$0xff] %v5834
  %6013 = vst [vmem:[%s9 + $0x68] sm:$0xff] %v5841
  %6014 = vst [vmem:[%s9 + $0x70] sm:$0xff] %v5848
  %6015 = vst [vmem:[%s9 + $0x78] sm:$0xff] %v5855
  %6016 = vst [vmem:[%s9 + $0x80] sm:$0xff] %v5862
  %6017 = vst [vmem:[%s9 + $0x88] sm:$0xff] %v5869
  %6018 = vst [vmem:[%s9 + $0x90] sm:$0xff] %v5876
  %6019 = vst [vmem:[%s9 + $0x98] sm:$0xff] %v5883
  %6020 = vst [vmem:[%s9 + $0xa0] sm:$0xff] %v5890
  %6021 = vst [vmem:[%s9 + $0xa8] sm:$0xff] %v5897
  %6022 = vst [vmem:[%s9 + $0xb0] sm:$0xff] %v5904
  %6023 = vst [vmem:[%s9 + $0xb8] sm:$0xff] %v5911
  %6024 = vst [vmem:[%s9 + $0xc0] sm:$0xff] %v5918
  %6025 = vst [vmem:[%s9 + $0xc8] sm:$0xff] %v5925
  %6026 = vst [vmem:[%s9 + $0xd0] sm:$0xff] %v5932
  %6027 = vst [vmem:[%s9 + $0xd8] sm:$0xff] %v5939
  %6028 = vst [vmem:[%s9 + $0xe0] sm:$0xff] %v5946
  %6029 = vst [vmem:[%s9 + $0xe8] sm:$0xff] %v5953
  %6030 = vst [vmem:[%s9 + $0xf0] sm:$0xff] %v5960
  %6031 = vst [vmem:[%s9 + $0xf8] sm:$0xff] %v5967
  // Predicated region
  $region38: #{pointnet2_cls_forward.3} parent=0 // pred_check
    _
  $region39: #{pointnet2_cls_forward.3} parent=0 // pred_check_branch
    %6033 = sbr.rel (0) target = $region41
  $region40: #{pointnet2_cls_forward.3} parent=0 // pred_region
    _
  $region41: #{pointnet2_cls_forward.3} parent=0 // pred_fallthru
    _
  // Predicated region
  $region42: #{pointnet2_cls_forward.3} parent=0 // pred_check
    _
  $region43: #{pointnet2_cls_forward.3} parent=0 // pred_check_branch
    %6035 = sbr.rel (0) target = $region45
  $region44: #{pointnet2_cls_forward.3} parent=0 // pred_region
    _
  $region45: #{pointnet2_cls_forward.3} parent=0 // pred_fallthru
    _

// kernel: pointnet2_cls_forward.4
$region0: #{pointnet2_cls_forward.4}
  #allocation0 [shape = 'u32[]', space=smem, size = 0x4, offset = 0x4, fixed_abs, tag = 'smem constant byte address 0x4 - core index']
  #allocation1 [shape = 'u32[72,128]{1,0:T(1,128)}', space=vmem, size = 0x9000, scoped, tag = 'internal scratch']
  %s0 = inlined_call_operand.vmem [shape: bf16[128,1032], index: 0, kind: input, shape index: {}]
  %s1 = inlined_call_operand.vmem [shape: bf16[1032,64], index: 1, kind: input, shape index: {}]
  %s2 = inlined_call_operand.vmem [shape: f32[1,64], index: 2, kind: input, shape index: {}]
  %s3 = inlined_call_operand.vmem [shape: bf16[64,64], index: 3, kind: input, shape index: {}]
  %s4 = inlined_call_operand.vmem [shape: f32[1,64], index: 4, kind: input, shape index: {}]
  %s5 = inlined_call_operand.vmem [shape: bf16[64,128], index: 5, kind: input, shape index: {}]
  %s6 = inlined_call_operand.vmem [shape: f32[1,128], index: 6, kind: input, shape index: {}]
  %s7 = inlined_call_operand.vmem [shape: bf16[128,1024], index: 7, kind: input, shape index: {}]
  %s8 = inlined_call_operand.vmem [shape: f32[1,1024], index: 8, kind: input, shape index: {}]
  %s9 = inlined_call_operand.vmem [shape: f32[16,1024], index: 9, kind: output, shape index: {}]
  %s10 = sld [smem:[#allocation0]]
  $region46: #{pointnet2_cls_forward.4} parent=0
    _
  %s12 = ssub.s32 1, %s10
  %s13 = scalar_select 0, %s12, %s10
  // Predicated region
  $region2: #{pointnet2_cls_forward.4} parent=0 // pred_check
    _
  $region3: #{pointnet2_cls_forward.4} parent=0 // pred_check_branch
    %15 = sbr.rel (0) target = $region5
  $region4: #{pointnet2_cls_forward.4} parent=0 // pred_region
    _
  $region5: #{pointnet2_cls_forward.4} parent=0 // pred_fallthru
    _
  // Predicated region
  $region6: #{pointnet2_cls_forward.4} parent=0 // pred_check
    _
  $region7: #{pointnet2_cls_forward.4} parent=0 // pred_check_branch
    %17 = sbr.rel (0) target = $region9
  $region8: #{pointnet2_cls_forward.4} parent=0 // pred_region
    _
  $region9: #{pointnet2_cls_forward.4} parent=0 // pred_fallthru
    _
  // Predicated region
  $region10: #{pointnet2_cls_forward.4} parent=0 // pred_check
    _
  $region11: #{pointnet2_cls_forward.4} parent=0 // pred_check_branch
    %19 = sbr.rel (0) target = $region13
  $region12: #{pointnet2_cls_forward.4} parent=0 // pred_region
    _
  $region13: #{pointnet2_cls_forward.4} parent=0 // pred_fallthru
    _
  // Predicated region
  $region14: #{pointnet2_cls_forward.4} parent=0 // pred_check
    _
  $region15: #{pointnet2_cls_forward.4} parent=0 // pred_check_branch
    %21 = sbr.rel (0) target = $region17
  $region16: #{pointnet2_cls_forward.4} parent=0 // pred_region
    _
  $region17: #{pointnet2_cls_forward.4} parent=0 // pred_fallthru
    _
  // Predicated region
  $region18: #{pointnet2_cls_forward.4} parent=0 // pred_check
    _
  $region19: #{pointnet2_cls_forward.4} parent=0 // pred_check_branch
    %23 = sbr.rel (0) target = $region21
  $region20: #{pointnet2_cls_forward.4} parent=0 // pred_region
    _
  $region21: #{pointnet2_cls_forward.4} parent=0 // pred_fallthru
    _
  // Predicated region
  $region22: #{pointnet2_cls_forward.4} parent=0 // pred_check
    _
  $region23: #{pointnet2_cls_forward.4} parent=0 // pred_check_branch
    %25 = sbr.rel (0) target = $region25
  $region24: #{pointnet2_cls_forward.4} parent=0 // pred_region
    _
  $region25: #{pointnet2_cls_forward.4} parent=0 // pred_fallthru
    _
  // Predicated region
  $region26: #{pointnet2_cls_forward.4} parent=0 // pred_check
    _
  $region27: #{pointnet2_cls_forward.4} parent=0 // pred_check_branch
    %27 = sbr.rel (0) target = $region29
  $region28: #{pointnet2_cls_forward.4} parent=0 // pred_region
    _
  $region29: #{pointnet2_cls_forward.4} parent=0 // pred_fallthru
    _
  // Predicated region
  $region30: #{pointnet2_cls_forward.4} parent=0 // pred_check
    _
  $region31: #{pointnet2_cls_forward.4} parent=0 // pred_check_branch
    %29 = sbr.rel (0) target = $region33
  $region32: #{pointnet2_cls_forward.4} parent=0 // pred_region
    _
  $region33: #{pointnet2_cls_forward.4} parent=0 // pred_fallthru
    _
  // Predicated region
  $region34: #{pointnet2_cls_forward.4} parent=0 // pred_check
    _
  $region35: #{pointnet2_cls_forward.4} parent=0 // pred_check_branch
    %31 = sbr.rel (0) target = $region37
  $region36: #{pointnet2_cls_forward.4} parent=0 // pred_region
    _
  $region37: #{pointnet2_cls_forward.4} parent=0 // pred_fallthru
    _
  %v33 = vld [vmem:[%s0] sm:$0xff]
  %v34 = vld [vmem:[%s0 + $0x8] sm:$0xff]
  %v35 = vld [vmem:[%s0 + $0x10] sm:$0xff]
  %v36 = vld [vmem:[%s0 + $0x18] sm:$0xff]
  %v37 = vld [vmem:[%s0 + $0x20] sm:$0xf]
  %v38 = vld [vmem:[%s0 + $0x24] sm:$0xff]
  %v39 = vld [vmem:[%s0 + $0x2c] sm:$0xff]
  %v40 = vld [vmem:[%s0 + $0x34] sm:$0xff]
  %v41 = vld [vmem:[%s0 + $0x3c] sm:$0xff]
  %v42 = vld [vmem:[%s0 + $0x44] sm:$0xf]
  %v43 = vld [vmem:[%s0 + $0x48] sm:$0xff]
  %v44 = vld [vmem:[%s0 + $0x50] sm:$0xff]
  %v45 = vld [vmem:[%s0 + $0x58] sm:$0xff]
  %v46 = vld [vmem:[%s0 + $0x60] sm:$0xff]
  %v47 = vld [vmem:[%s0 + $0x68] sm:$0xf]
  %v48 = vld [vmem:[%s0 + $0x6c] sm:$0xff]
  %v49 = vld [vmem:[%s0 + $0x74] sm:$0xff]
  %v50 = vld [vmem:[%s0 + $0x7c] sm:$0xff]
  %v51 = vld [vmem:[%s0 + $0x84] sm:$0xff]
  %v52 = vld [vmem:[%s0 + $0x8c] sm:$0xf]
  %v53 = vld [vmem:[%s0 + $0x90] sm:$0xff]
  %v54 = vld [vmem:[%s0 + $0x98] sm:$0xff]
  %v55 = vld [vmem:[%s0 + $0xa0] sm:$0xff]
  %v56 = vld [vmem:[%s0 + $0xa8] sm:$0xff]
  %v57 = vld [vmem:[%s0 + $0xb0] sm:$0xf]
  %v58 = vld [vmem:[%s0 + $0xb4] sm:$0xff]
  %v59 = vld [vmem:[%s0 + $0xbc] sm:$0xff]
  %v60 = vld [vmem:[%s0 + $0xc4] sm:$0xff]
  %v61 = vld [vmem:[%s0 + $0xcc] sm:$0xff]
  %v62 = vld [vmem:[%s0 + $0xd4] sm:$0xf]
  %v63 = vld [vmem:[%s0 + $0xd8] sm:$0xff]
  %v64 = vld [vmem:[%s0 + $0xe0] sm:$0xff]
  %v65 = vld [vmem:[%s0 + $0xe8] sm:$0xff]
  %v66 = vld [vmem:[%s0 + $0xf0] sm:$0xff]
  %v67 = vld [vmem:[%s0 + $0xf8] sm:$0xf]
  %v68 = vld [vmem:[%s0 + $0xfc] sm:$0xff]
  %v69 = vld [vmem:[%s0 + $0x104] sm:$0xff]
  %v70 = vld [vmem:[%s0 + $0x10c] sm:$0xff]
  %v71 = vld [vmem:[%s0 + $0x114] sm:$0xff]
  %v72 = vld [vmem:[%s0 + $0x11c] sm:$0xf]
  %v73 = vld [vmem:[%s0 + $0x120] sm:$0xff]
  %v74 = vld [vmem:[%s0 + $0x128] sm:$0xff]
  %v75 = vld [vmem:[%s0 + $0x130] sm:$0xff]
  %v76 = vld [vmem:[%s0 + $0x138] sm:$0xff]
  %v77 = vld [vmem:[%s0 + $0x140] sm:$0xf]
  %v78 = vld [vmem:[%s0 + $0x144] sm:$0xff]
  %v79 = vld [vmem:[%s0 + $0x14c] sm:$0xff]
  %v80 = vld [vmem:[%s0 + $0x154] sm:$0xff]
  %v81 = vld [vmem:[%s0 + $0x15c] sm:$0xff]
  %v82 = vld [vmem:[%s0 + $0x164] sm:$0xf]
  %v83 = vld [vmem:[%s0 + $0x168] sm:$0xff]
  %v84 = vld [vmem:[%s0 + $0x170] sm:$0xff]
  %v85 = vld [vmem:[%s0 + $0x178] sm:$0xff]
  %v86 = vld [vmem:[%s0 + $0x180] sm:$0xff]
  %v87 = vld [vmem:[%s0 + $0x188] sm:$0xf]
  %v88 = vld [vmem:[%s0 + $0x18c] sm:$0xff]
  %v89 = vld [vmem:[%s0 + $0x194] sm:$0xff]
  %v90 = vld [vmem:[%s0 + $0x19c] sm:$0xff]
  %v91 = vld [vmem:[%s0 + $0x1a4] sm:$0xff]
  %v92 = vld [vmem:[%s0 + $0x1ac] sm:$0xf]
  %v93 = vld [vmem:[%s0 + $0x1b0] sm:$0xff]
  %v94 = vld [vmem:[%s0 + $0x1b8] sm:$0xff]
  %v95 = vld [vmem:[%s0 + $0x1c0] sm:$0xff]
  %v96 = vld [vmem:[%s0 + $0x1c8] sm:$0xff]
  %v97 = vld [vmem:[%s0 + $0x1d0] sm:$0xf]
  %v98 = vld [vmem:[%s0 + $0x1d4] sm:$0xff]
  %v99 = vld [vmem:[%s0 + $0x1dc] sm:$0xff]
  %v100 = vld [vmem:[%s0 + $0x1e4] sm:$0xff]
  %v101 = vld [vmem:[%s0 + $0x1ec] sm:$0xff]
  %v102 = vld [vmem:[%s0 + $0x1f4] sm:$0xf]
  %v103 = vld [vmem:[%s0 + $0x1f8] sm:$0xff]
  %v104 = vld [vmem:[%s0 + $0x200] sm:$0xff]
  %v105 = vld [vmem:[%s0 + $0x208] sm:$0xff]
  %v106 = vld [vmem:[%s0 + $0x210] sm:$0xff]
  %v107 = vld [vmem:[%s0 + $0x218] sm:$0xf]
  %v108 = vld [vmem:[%s0 + $0x21c] sm:$0xff]
  %v109 = vld [vmem:[%s0 + $0x224] sm:$0xff]
  %v110 = vld [vmem:[%s0 + $0x22c] sm:$0xff]
  %v111 = vld [vmem:[%s0 + $0x234] sm:$0xff]
  %v112 = vld [vmem:[%s0 + $0x23c] sm:$0xf]
  %v113 = vld [vmem:[%s1] sm:$0xf]
  %v114 = vld [vmem:[%s1 + $0x4] sm:$0xf]
  %v115 = vld [vmem:[%s1 + $0x8] sm:$0xf]
  %v116 = vld [vmem:[%s1 + $0xc] sm:$0xf]
  %v117 = vld [vmem:[%s1 + $0x10] sm:$0xf]
  %v118 = vld [vmem:[%s1 + $0x14] sm:$0xf]
  %v119 = vld [vmem:[%s1 + $0x18] sm:$0xf]
  %v120 = vld [vmem:[%s1 + $0x1c] sm:$0xf]
  %v121 = vld [vmem:[%s1 + $0x20] sm:$0xf]
  %v122 = vld [vmem:[%s1 + $0x24] sm:$0xf]
  %v123 = vld [vmem:[%s1 + $0x28] sm:$0xf]
  %v124 = vld [vmem:[%s1 + $0x2c] sm:$0xf]
  %v125 = vld [vmem:[%s1 + $0x30] sm:$0xf]
  %v126 = vld [vmem:[%s1 + $0x34] sm:$0xf]
  %v127 = vld [vmem:[%s1 + $0x38] sm:$0xf]
  %v128 = vld [vmem:[%s1 + $0x3c] sm:$0xf]
  %v129 = vld [vmem:[%s1 + $0x40] sm:$0xf]
  %v130 = vld [vmem:[%s1 + $0x44] sm:$0xf]
  %v131 = vld [vmem:[%s1 + $0x48] sm:$0xf]
  %v132 = vld [vmem:[%s1 + $0x4c] sm:$0xf]
  %v133 = vld [vmem:[%s1 + $0x50] sm:$0xf]
  %v134 = vld [vmem:[%s1 + $0x54] sm:$0xf]
  %v135 = vld [vmem:[%s1 + $0x58] sm:$0xf]
  %v136 = vld [vmem:[%s1 + $0x5c] sm:$0xf]
  %v137 = vld [vmem:[%s1 + $0x60] sm:$0xf]
  %v138 = vld [vmem:[%s1 + $0x64] sm:$0xf]
  %v139 = vld [vmem:[%s1 + $0x68] sm:$0xf]
  %v140 = vld [vmem:[%s1 + $0x6c] sm:$0xf]
  %v141 = vld [vmem:[%s1 + $0x70] sm:$0xf]
  %v142 = vld [vmem:[%s1 + $0x74] sm:$0xf]
  %v143 = vld [vmem:[%s1 + $0x78] sm:$0xf]
  %v144 = vld [vmem:[%s1 + $0x7c] sm:$0xf]
  %v145 = vld [vmem:[%s1 + $0x80] sm:$0xf]
  %v146 = vld [vmem:[%s1 + $0x84] sm:$0xf]
  %v147 = vld [vmem:[%s1 + $0x88] sm:$0xf]
  %v148 = vld [vmem:[%s1 + $0x8c] sm:$0xf]
  %v149 = vld [vmem:[%s1 + $0x90] sm:$0xf]
  %v150 = vld [vmem:[%s1 + $0x94] sm:$0xf]
  %v151 = vld [vmem:[%s1 + $0x98] sm:$0xf]
  %v152 = vld [vmem:[%s1 + $0x9c] sm:$0xf]
  %v153 = vld [vmem:[%s1 + $0xa0] sm:$0xf]
  %v154 = vld [vmem:[%s1 + $0xa4] sm:$0xf]
  %v155 = vld [vmem:[%s1 + $0xa8] sm:$0xf]
  %v156 = vld [vmem:[%s1 + $0xac] sm:$0xf]
  %v157 = vld [vmem:[%s1 + $0xb0] sm:$0xf]
  %v158 = vld [vmem:[%s1 + $0xb4] sm:$0xf]
  %v159 = vld [vmem:[%s1 + $0xb8] sm:$0xf]
  %v160 = vld [vmem:[%s1 + $0xbc] sm:$0xf]
  %v161 = vld [vmem:[%s1 + $0xc0] sm:$0xf]
  %v162 = vld [vmem:[%s1 + $0xc4] sm:$0xf]
  %v163 = vld [vmem:[%s1 + $0xc8] sm:$0xf]
  %v164 = vld [vmem:[%s1 + $0xcc] sm:$0xf]
  %v165 = vld [vmem:[%s1 + $0xd0] sm:$0xf]
  %v166 = vld [vmem:[%s1 + $0xd4] sm:$0xf]
  %v167 = vld [vmem:[%s1 + $0xd8] sm:$0xf]
  %v168 = vld [vmem:[%s1 + $0xdc] sm:$0xf]
  %v169 = vld [vmem:[%s1 + $0xe0] sm:$0xf]
  %v170 = vld [vmem:[%s1 + $0xe4] sm:$0xf]
  %v171 = vld [vmem:[%s1 + $0xe8] sm:$0xf]
  %v172 = vld [vmem:[%s1 + $0xec] sm:$0xf]
  %v173 = vld [vmem:[%s1 + $0xf0] sm:$0xf]
  %v174 = vld [vmem:[%s1 + $0xf4] sm:$0xf]
  %v175 = vld [vmem:[%s1 + $0xf8] sm:$0xf]
  %v176 = vld [vmem:[%s1 + $0xfc] sm:$0xf]
  %v177 = vld [vmem:[%s1 + $0x100] sm:$0xf]
  %v178 = vld [vmem:[%s1 + $0x104] sm:$0xf]
  %v179 = vld [vmem:[%s1 + $0x108] sm:$0xf]
  %v180 = vld [vmem:[%s1 + $0x10c] sm:$0xf]
  %v181 = vld [vmem:[%s1 + $0x110] sm:$0xf]
  %v182 = vld [vmem:[%s1 + $0x114] sm:$0xf]
  %v183 = vld [vmem:[%s1 + $0x118] sm:$0xf]
  %v184 = vld [vmem:[%s1 + $0x11c] sm:$0xf]
  %v185 = vld [vmem:[%s1 + $0x120] sm:$0xf]
  %v186 = vld [vmem:[%s1 + $0x124] sm:$0xf]
  %v187 = vld [vmem:[%s1 + $0x128] sm:$0xf]
  %v188 = vld [vmem:[%s1 + $0x12c] sm:$0xf]
  %v189 = vld [vmem:[%s1 + $0x130] sm:$0xf]
  %v190 = vld [vmem:[%s1 + $0x134] sm:$0xf]
  %v191 = vld [vmem:[%s1 + $0x138] sm:$0xf]
  %v192 = vld [vmem:[%s1 + $0x13c] sm:$0xf]
  %v193 = vld [vmem:[%s1 + $0x140] sm:$0xf]
  %v194 = vld [vmem:[%s1 + $0x144] sm:$0xf]
  %v195 = vld [vmem:[%s1 + $0x148] sm:$0xf]
  %v196 = vld [vmem:[%s1 + $0x14c] sm:$0xf]
  %v197 = vld [vmem:[%s1 + $0x150] sm:$0xf]
  %v198 = vld [vmem:[%s1 + $0x154] sm:$0xf]
  %v199 = vld [vmem:[%s1 + $0x158] sm:$0xf]
  %v200 = vld [vmem:[%s1 + $0x15c] sm:$0xf]
  %v201 = vld [vmem:[%s1 + $0x160] sm:$0xf]
  %v202 = vld [vmem:[%s1 + $0x164] sm:$0xf]
  %v203 = vld [vmem:[%s1 + $0x168] sm:$0xf]
  %v204 = vld [vmem:[%s1 + $0x16c] sm:$0xf]
  %v205 = vld [vmem:[%s1 + $0x170] sm:$0xf]
  %v206 = vld [vmem:[%s1 + $0x174] sm:$0xf]
  %v207 = vld [vmem:[%s1 + $0x178] sm:$0xf]
  %v208 = vld [vmem:[%s1 + $0x17c] sm:$0xf]
  %v209 = vld [vmem:[%s1 + $0x180] sm:$0xf]
  %v210 = vld [vmem:[%s1 + $0x184] sm:$0xf]
  %v211 = vld [vmem:[%s1 + $0x188] sm:$0xf]
  %v212 = vld [vmem:[%s1 + $0x18c] sm:$0xf]
  %v213 = vld [vmem:[%s1 + $0x190] sm:$0xf]
  %v214 = vld [vmem:[%s1 + $0x194] sm:$0xf]
  %v215 = vld [vmem:[%s1 + $0x198] sm:$0xf]
  %v216 = vld [vmem:[%s1 + $0x19c] sm:$0xf]
  %v217 = vld [vmem:[%s1 + $0x1a0] sm:$0xf]
  %v218 = vld [vmem:[%s1 + $0x1a4] sm:$0xf]
  %v219 = vld [vmem:[%s1 + $0x1a8] sm:$0xf]
  %v220 = vld [vmem:[%s1 + $0x1ac] sm:$0xf]
  %v221 = vld [vmem:[%s1 + $0x1b0] sm:$0xf]
  %v222 = vld [vmem:[%s1 + $0x1b4] sm:$0xf]
  %v223 = vld [vmem:[%s1 + $0x1b8] sm:$0xf]
  %v224 = vld [vmem:[%s1 + $0x1bc] sm:$0xf]
  %v225 = vld [vmem:[%s1 + $0x1c0] sm:$0xf]
  %v226 = vld [vmem:[%s1 + $0x1c4] sm:$0xf]
  %v227 = vld [vmem:[%s1 + $0x1c8] sm:$0xf]
  %v228 = vld [vmem:[%s1 + $0x1cc] sm:$0xf]
  %v229 = vld [vmem:[%s1 + $0x1d0] sm:$0xf]
  %v230 = vld [vmem:[%s1 + $0x1d4] sm:$0xf]
  %v231 = vld [vmem:[%s1 + $0x1d8] sm:$0xf]
  %v232 = vld [vmem:[%s1 + $0x1dc] sm:$0xf]
  %v233 = vld [vmem:[%s1 + $0x1e0] sm:$0xf]
  %v234 = vld [vmem:[%s1 + $0x1e4] sm:$0xf]
  %v235 = vld [vmem:[%s1 + $0x1e8] sm:$0xf]
  %v236 = vld [vmem:[%s1 + $0x1ec] sm:$0xf]
  %v237 = vld [vmem:[%s1 + $0x1f0] sm:$0xf]
  %v238 = vld [vmem:[%s1 + $0x1f4] sm:$0xf]
  %v239 = vld [vmem:[%s1 + $0x1f8] sm:$0xf]
  %v240 = vld [vmem:[%s1 + $0x1fc] sm:$0xf]
  %v241 = vld [vmem:[%s1 + $0x200] sm:$0xf]
  %v242 = vld [vmem:[%s2] sm:$0x1]
  %v244 = vperm.slane %v242, 0
  %v326 = vunpack.c.l.b16 %v33
  %v327 = vunpack.c.h.b16 %v33
  %v328 = vunpack.c.l.b16 %v34
  %v329 = vunpack.c.h.b16 %v34
  %v330 = vunpack.c.l.b16 %v35
  %v331 = vunpack.c.h.b16 %v35
  %v332 = vunpack.c.l.b16 %v36
  %v333 = vunpack.c.h.b16 %v36
  %v334 = vunpack.c.l.b16 %v37
  %v335 = vunpack.c.l.b16 %v38
  %v336 = vunpack.c.h.b16 %v38
  %v337 = vunpack.c.l.b16 %v39
  %v338 = vunpack.c.h.b16 %v39
  %v339 = vunpack.c.l.b16 %v40
  %v340 = vunpack.c.h.b16 %v40
  %v341 = vunpack.c.l.b16 %v41
  %v342 = vunpack.c.h.b16 %v41
  %v343 = vunpack.c.l.b16 %v42
  %v344 = vunpack.c.l.b16 %v43
  %v345 = vunpack.c.h.b16 %v43
  %v346 = vunpack.c.l.b16 %v44
  %v347 = vunpack.c.h.b16 %v44
  %v348 = vunpack.c.l.b16 %v45
  %v349 = vunpack.c.h.b16 %v45
  %v350 = vunpack.c.l.b16 %v46
  %v351 = vunpack.c.h.b16 %v46
  %v352 = vunpack.c.l.b16 %v47
  %v353 = vunpack.c.l.b16 %v48
  %v354 = vunpack.c.h.b16 %v48
  %v355 = vunpack.c.l.b16 %v49
  %v356 = vunpack.c.h.b16 %v49
  %v357 = vunpack.c.l.b16 %v50
  %v358 = vunpack.c.h.b16 %v50
  %v359 = vunpack.c.l.b16 %v51
  %v360 = vunpack.c.h.b16 %v51
  %v361 = vunpack.c.l.b16 %v52
  %v362 = vunpack.c.l.b16 %v53
  %v363 = vunpack.c.h.b16 %v53
  %v364 = vunpack.c.l.b16 %v54
  %v365 = vunpack.c.h.b16 %v54
  %v366 = vunpack.c.l.b16 %v55
  %v367 = vunpack.c.h.b16 %v55
  %v368 = vunpack.c.l.b16 %v56
  %v369 = vunpack.c.h.b16 %v56
  %v370 = vunpack.c.l.b16 %v57
  %v371 = vunpack.c.l.b16 %v58
  %v372 = vunpack.c.h.b16 %v58
  %v373 = vunpack.c.l.b16 %v59
  %v374 = vunpack.c.h.b16 %v59
  %v375 = vunpack.c.l.b16 %v60
  %v376 = vunpack.c.h.b16 %v60
  %v377 = vunpack.c.l.b16 %v61
  %v378 = vunpack.c.h.b16 %v61
  %v379 = vunpack.c.l.b16 %v62
  %v380 = vunpack.c.l.b16 %v63
  %v381 = vunpack.c.h.b16 %v63
  %v382 = vunpack.c.l.b16 %v64
  %v383 = vunpack.c.h.b16 %v64
  %v384 = vunpack.c.l.b16 %v65
  %v385 = vunpack.c.h.b16 %v65
  %v386 = vunpack.c.l.b16 %v66
  %v387 = vunpack.c.h.b16 %v66
  %v388 = vunpack.c.l.b16 %v67
  %v389 = vunpack.c.l.b16 %v68
  %v390 = vunpack.c.h.b16 %v68
  %v391 = vunpack.c.l.b16 %v69
  %v392 = vunpack.c.h.b16 %v69
  %v393 = vunpack.c.l.b16 %v70
  %v394 = vunpack.c.h.b16 %v70
  %v395 = vunpack.c.l.b16 %v71
  %v396 = vunpack.c.h.b16 %v71
  %v397 = vunpack.c.l.b16 %v72
  %v398 = vunpack.c.l.b16 %v73
  %v399 = vunpack.c.h.b16 %v73
  %v400 = vunpack.c.l.b16 %v74
  %v401 = vunpack.c.h.b16 %v74
  %v402 = vunpack.c.l.b16 %v75
  %v403 = vunpack.c.h.b16 %v75
  %v404 = vunpack.c.l.b16 %v76
  %v405 = vunpack.c.h.b16 %v76
  %v406 = vunpack.c.l.b16 %v77
  %v407 = vunpack.c.l.b16 %v78
  %v408 = vunpack.c.h.b16 %v78
  %v409 = vunpack.c.l.b16 %v79
  %v410 = vunpack.c.h.b16 %v79
  %v411 = vunpack.c.l.b16 %v80
  %v412 = vunpack.c.h.b16 %v80
  %v413 = vunpack.c.l.b16 %v81
  %v414 = vunpack.c.h.b16 %v81
  %v415 = vunpack.c.l.b16 %v82
  %v416 = vunpack.c.l.b16 %v83
  %v417 = vunpack.c.h.b16 %v83
  %v418 = vunpack.c.l.b16 %v84
  %v419 = vunpack.c.h.b16 %v84
  %v420 = vunpack.c.l.b16 %v85
  %v421 = vunpack.c.h.b16 %v85
  %v422 = vunpack.c.l.b16 %v86
  %v423 = vunpack.c.h.b16 %v86
  %v424 = vunpack.c.l.b16 %v87
  %v425 = vunpack.c.l.b16 %v88
  %v426 = vunpack.c.h.b16 %v88
  %v427 = vunpack.c.l.b16 %v89
  %v428 = vunpack.c.h.b16 %v89
  %v429 = vunpack.c.l.b16 %v90
  %v430 = vunpack.c.h.b16 %v90
  %v431 = vunpack.c.l.b16 %v91
  %v432 = vunpack.c.h.b16 %v91
  %v433 = vunpack.c.l.b16 %v92
  %v434 = vunpack.c.l.b16 %v93
  %v435 = vunpack.c.h.b16 %v93
  %v436 = vunpack.c.l.b16 %v94
  %v437 = vunpack.c.h.b16 %v94
  %v438 = vunpack.c.l.b16 %v95
  %v439 = vunpack.c.h.b16 %v95
  %v440 = vunpack.c.l.b16 %v96
  %v441 = vunpack.c.h.b16 %v96
  %v442 = vunpack.c.l.b16 %v97
  %v443 = vunpack.c.l.b16 %v98
  %v444 = vunpack.c.h.b16 %v98
  %v445 = vunpack.c.l.b16 %v99
  %v446 = vunpack.c.h.b16 %v99
  %v447 = vunpack.c.l.b16 %v100
  %v448 = vunpack.c.h.b16 %v100
  %v449 = vunpack.c.l.b16 %v101
  %v450 = vunpack.c.h.b16 %v101
  %v451 = vunpack.c.l.b16 %v102
  %v452 = vunpack.c.l.b16 %v103
  %v453 = vunpack.c.h.b16 %v103
  %v454 = vunpack.c.l.b16 %v104
  %v455 = vunpack.c.h.b16 %v104
  %v456 = vunpack.c.l.b16 %v105
  %v457 = vunpack.c.h.b16 %v105
  %v458 = vunpack.c.l.b16 %v106
  %v459 = vunpack.c.h.b16 %v106
  %v460 = vunpack.c.l.b16 %v107
  %v461 = vunpack.c.l.b16 %v108
  %v462 = vunpack.c.h.b16 %v108
  %v463 = vunpack.c.l.b16 %v109
  %v464 = vunpack.c.h.b16 %v109
  %v465 = vunpack.c.l.b16 %v110
  %v466 = vunpack.c.h.b16 %v110
  %v467 = vunpack.c.l.b16 %v111
  %v468 = vunpack.c.h.b16 %v111
  %v469 = vunpack.c.l.b16 %v112
  %v470 = vpack.c.b16 %v335, %v326
  %v471 = vpack.c.b16 %v336, %v327
  %v472 = vpack.c.b16 %v337, %v328
  %v473 = vpack.c.b16 %v338, %v329
  %v474 = vpack.c.b16 %v339, %v330
  %v475 = vpack.c.b16 %v340, %v331
  %v476 = vpack.c.b16 %v341, %v332
  %v477 = vpack.c.b16 %v342, %v333
  %v478 = vpack.c.b16 %v343, %v334
  %v479 = vpack.c.b16 %v353, %v344
  %v480 = vpack.c.b16 %v354, %v345
  %v481 = vpack.c.b16 %v355, %v346
  %v482 = vpack.c.b16 %v356, %v347
  %v483 = vpack.c.b16 %v357, %v348
  %v484 = vpack.c.b16 %v358, %v349
  %v485 = vpack.c.b16 %v359, %v350
  %v486 = vpack.c.b16 %v360, %v351
  %v487 = vpack.c.b16 %v361, %v352
  %v488 = vpack.c.b16 %v371, %v362
  %v489 = vpack.c.b16 %v372, %v363
  %v490 = vpack.c.b16 %v373, %v364
  %v491 = vpack.c.b16 %v374, %v365
  %v492 = vpack.c.b16 %v375, %v366
  %v493 = vpack.c.b16 %v376, %v367
  %v494 = vpack.c.b16 %v377, %v368
  %v495 = vpack.c.b16 %v378, %v369
  %v496 = vpack.c.b16 %v379, %v370
  %v497 = vpack.c.b16 %v389, %v380
  %v498 = vpack.c.b16 %v390, %v381
  %v499 = vpack.c.b16 %v391, %v382
  %v500 = vpack.c.b16 %v392, %v383
  %v501 = vpack.c.b16 %v393, %v384
  %v502 = vpack.c.b16 %v394, %v385
  %v503 = vpack.c.b16 %v395, %v386
  %v504 = vpack.c.b16 %v396, %v387
  %v505 = vpack.c.b16 %v397, %v388
  %v506 = vpack.c.b16 %v407, %v398
  %v507 = vpack.c.b16 %v408, %v399
  %v508 = vpack.c.b16 %v409, %v400
  %v509 = vpack.c.b16 %v410, %v401
  %v510 = vpack.c.b16 %v411, %v402
  %v511 = vpack.c.b16 %v412, %v403
  %v512 = vpack.c.b16 %v413, %v404
  %v513 = vpack.c.b16 %v414, %v405
  %v514 = vpack.c.b16 %v415, %v406
  %v515 = vpack.c.b16 %v425, %v416
  %v516 = vpack.c.b16 %v426, %v417
  %v517 = vpack.c.b16 %v427, %v418
  %v518 = vpack.c.b16 %v428, %v419
  %v519 = vpack.c.b16 %v429, %v420
  %v520 = vpack.c.b16 %v430, %v421
  %v521 = vpack.c.b16 %v431, %v422
  %v522 = vpack.c.b16 %v432, %v423
  %v523 = vpack.c.b16 %v433, %v424
  %v524 = vpack.c.b16 %v443, %v434
  %v525 = vpack.c.b16 %v444, %v435
  %v526 = vpack.c.b16 %v445, %v436
  %v527 = vpack.c.b16 %v446, %v437
  %v528 = vpack.c.b16 %v447, %v438
  %v529 = vpack.c.b16 %v448, %v439
  %v530 = vpack.c.b16 %v449, %v440
  %v531 = vpack.c.b16 %v450, %v441
  %v532 = vpack.c.b16 %v451, %v442
  %v533 = vpack.c.b16 %v461, %v452
  %v534 = vpack.c.b16 %v462, %v453
  %v535 = vpack.c.b16 %v463, %v454
  %v536 = vpack.c.b16 %v464, %v455
  %v537 = vpack.c.b16 %v465, %v456
  %v538 = vpack.c.b16 %v466, %v457
  %v539 = vpack.c.b16 %v467, %v458
  %v540 = vpack.c.b16 %v468, %v459
  %v541 = vpack.c.b16 %v469, %v460
  %v735 = vunpack.c.l.b16 %v113
  %v736 = vunpack.c.l.b16 %v114
  %v737 = vunpack.c.l.b16 %v115
  %v738 = vunpack.c.l.b16 %v116
  %v739 = vunpack.c.l.b16 %v117
  %v740 = vunpack.c.l.b16 %v118
  %v741 = vunpack.c.l.b16 %v119
  %v742 = vunpack.c.l.b16 %v120
  %v743 = vunpack.c.l.b16 %v121
  %v744 = vunpack.c.l.b16 %v122
  %v745 = vunpack.c.l.b16 %v123
  %v746 = vunpack.c.l.b16 %v124
  %v747 = vunpack.c.l.b16 %v125
  %v748 = vunpack.c.l.b16 %v126
  %v749 = vunpack.c.l.b16 %v127
  %v750 = vunpack.c.l.b16 %v128
  %v751 = vunpack.c.l.b16 %v129
  %v752 = vunpack.c.l.b16 %v130
  %v753 = vunpack.c.l.b16 %v131
  %v754 = vunpack.c.l.b16 %v132
  %v755 = vunpack.c.l.b16 %v133
  %v756 = vunpack.c.l.b16 %v134
  %v757 = vunpack.c.l.b16 %v135
  %v758 = vunpack.c.l.b16 %v136
  %v759 = vunpack.c.l.b16 %v137
  %v760 = vunpack.c.l.b16 %v138
  %v761 = vunpack.c.l.b16 %v139
  %v762 = vunpack.c.l.b16 %v140
  %v763 = vunpack.c.l.b16 %v141
  %v764 = vunpack.c.l.b16 %v142
  %v765 = vunpack.c.l.b16 %v143
  %v766 = vunpack.c.l.b16 %v144
  %v767 = vunpack.c.l.b16 %v145
  %v768 = vunpack.c.l.b16 %v146
  %v769 = vunpack.c.l.b16 %v147
  %v770 = vunpack.c.l.b16 %v148
  %v771 = vunpack.c.l.b16 %v149
  %v772 = vunpack.c.l.b16 %v150
  %v773 = vunpack.c.l.b16 %v151
  %v774 = vunpack.c.l.b16 %v152
  %v775 = vunpack.c.l.b16 %v153
  %v776 = vunpack.c.l.b16 %v154
  %v777 = vunpack.c.l.b16 %v155
  %v778 = vunpack.c.l.b16 %v156
  %v779 = vunpack.c.l.b16 %v157
  %v780 = vunpack.c.l.b16 %v158
  %v781 = vunpack.c.l.b16 %v159
  %v782 = vunpack.c.l.b16 %v160
  %v783 = vunpack.c.l.b16 %v161
  %v784 = vunpack.c.l.b16 %v162
  %v785 = vunpack.c.l.b16 %v163
  %v786 = vunpack.c.l.b16 %v164
  %v787 = vunpack.c.l.b16 %v165
  %v788 = vunpack.c.l.b16 %v166
  %v789 = vunpack.c.l.b16 %v167
  %v790 = vunpack.c.l.b16 %v168
  %v791 = vunpack.c.l.b16 %v169
  %v792 = vunpack.c.l.b16 %v170
  %v793 = vunpack.c.l.b16 %v171
  %v794 = vunpack.c.l.b16 %v172
  %v795 = vunpack.c.l.b16 %v173
  %v796 = vunpack.c.l.b16 %v174
  %v797 = vunpack.c.l.b16 %v175
  %v798 = vunpack.c.l.b16 %v176
  %v799 = vunpack.c.l.b16 %v177
  %v800 = vunpack.c.l.b16 %v178
  %v801 = vunpack.c.l.b16 %v179
  %v802 = vunpack.c.l.b16 %v180
  %v803 = vunpack.c.l.b16 %v181
  %v804 = vunpack.c.l.b16 %v182
  %v805 = vunpack.c.l.b16 %v183
  %v806 = vunpack.c.l.b16 %v184
  %v807 = vunpack.c.l.b16 %v185
  %v808 = vunpack.c.l.b16 %v186
  %v809 = vunpack.c.l.b16 %v187
  %v810 = vunpack.c.l.b16 %v188
  %v811 = vunpack.c.l.b16 %v189
  %v812 = vunpack.c.l.b16 %v190
  %v813 = vunpack.c.l.b16 %v191
  %v814 = vunpack.c.l.b16 %v192
  %v815 = vunpack.c.l.b16 %v193
  %v816 = vunpack.c.l.b16 %v194
  %v817 = vunpack.c.l.b16 %v195
  %v818 = vunpack.c.l.b16 %v196
  %v819 = vunpack.c.l.b16 %v197
  %v820 = vunpack.c.l.b16 %v198
  %v821 = vunpack.c.l.b16 %v199
  %v822 = vunpack.c.l.b16 %v200
  %v823 = vunpack.c.l.b16 %v201
  %v824 = vunpack.c.l.b16 %v202
  %v825 = vunpack.c.l.b16 %v203
  %v826 = vunpack.c.l.b16 %v204
  %v827 = vunpack.c.l.b16 %v205
  %v828 = vunpack.c.l.b16 %v206
  %v829 = vunpack.c.l.b16 %v207
  %v830 = vunpack.c.l.b16 %v208
  %v831 = vunpack.c.l.b16 %v209
  %v832 = vunpack.c.l.b16 %v210
  %v833 = vunpack.c.l.b16 %v211
  %v834 = vunpack.c.l.b16 %v212
  %v835 = vunpack.c.l.b16 %v213
  %v836 = vunpack.c.l.b16 %v214
  %v837 = vunpack.c.l.b16 %v215
  %v838 = vunpack.c.l.b16 %v216
  %v839 = vunpack.c.l.b16 %v217
  %v840 = vunpack.c.l.b16 %v218
  %v841 = vunpack.c.l.b16 %v219
  %v842 = vunpack.c.l.b16 %v220
  %v843 = vunpack.c.l.b16 %v221
  %v844 = vunpack.c.l.b16 %v222
  %v845 = vunpack.c.l.b16 %v223
  %v846 = vunpack.c.l.b16 %v224
  %v847 = vunpack.c.l.b16 %v225
  %v848 = vunpack.c.l.b16 %v226
  %v849 = vunpack.c.l.b16 %v227
  %v850 = vunpack.c.l.b16 %v228
  %v851 = vunpack.c.l.b16 %v229
  %v852 = vunpack.c.l.b16 %v230
  %v853 = vunpack.c.l.b16 %v231
  %v854 = vunpack.c.l.b16 %v232
  %v855 = vunpack.c.l.b16 %v233
  %v856 = vunpack.c.l.b16 %v234
  %v857 = vunpack.c.l.b16 %v235
  %v858 = vunpack.c.l.b16 %v236
  %v859 = vunpack.c.l.b16 %v237
  %v860 = vunpack.c.l.b16 %v238
  %v861 = vunpack.c.l.b16 %v239
  %v862 = vunpack.c.l.b16 %v240
  %v863 = vunpack.c.l.b16 %v241
  %v864 = vpack.c.b16 %v736, %v735
  %v865 = vpack.c.b16 %v738, %v737
  %v866 = vpack.c.b16 %v740, %v739
  %v867 = vpack.c.b16 %v742, %v741
  %v868 = vpack.c.b16 %v744, %v743
  %v869 = vpack.c.b16 %v746, %v745
  %v870 = vpack.c.b16 %v748, %v747
  %v871 = vpack.c.b16 %v750, %v749
  %v872 = vpack.c.b16 %v752, %v751
  %v873 = vpack.c.b16 %v754, %v753
  %v874 = vpack.c.b16 %v756, %v755
  %v875 = vpack.c.b16 %v758, %v757
  %v876 = vpack.c.b16 %v760, %v759
  %v877 = vpack.c.b16 %v762, %v761
  %v878 = vpack.c.b16 %v764, %v763
  %v879 = vpack.c.b16 %v766, %v765
  %v880 = vpack.c.b16 %v768, %v767
  %v881 = vpack.c.b16 %v770, %v769
  %v882 = vpack.c.b16 %v772, %v771
  %v883 = vpack.c.b16 %v774, %v773
  %v884 = vpack.c.b16 %v776, %v775
  %v885 = vpack.c.b16 %v778, %v777
  %v886 = vpack.c.b16 %v780, %v779
  %v887 = vpack.c.b16 %v782, %v781
  %v888 = vpack.c.b16 %v784, %v783
  %v889 = vpack.c.b16 %v786, %v785
  %v890 = vpack.c.b16 %v788, %v787
  %v891 = vpack.c.b16 %v790, %v789
  %v892 = vpack.c.b16 %v792, %v791
  %v893 = vpack.c.b16 %v794, %v793
  %v894 = vpack.c.b16 %v796, %v795
  %v895 = vpack.c.b16 %v798, %v797
  %v896 = vpack.c.b16 %v800, %v799
  %v897 = vpack.c.b16 %v802, %v801
  %v898 = vpack.c.b16 %v804, %v803
  %v899 = vpack.c.b16 %v806, %v805
  %v900 = vpack.c.b16 %v808, %v807
  %v901 = vpack.c.b16 %v810, %v809
  %v902 = vpack.c.b16 %v812, %v811
  %v903 = vpack.c.b16 %v814, %v813
  %v904 = vpack.c.b16 %v816, %v815
  %v905 = vpack.c.b16 %v818, %v817
  %v906 = vpack.c.b16 %v820, %v819
  %v907 = vpack.c.b16 %v822, %v821
  %v908 = vpack.c.b16 %v824, %v823
  %v909 = vpack.c.b16 %v826, %v825
  %v910 = vpack.c.b16 %v828, %v827
  %v911 = vpack.c.b16 %v830, %v829
  %v912 = vpack.c.b16 %v832, %v831
  %v913 = vpack.c.b16 %v834, %v833
  %v914 = vpack.c.b16 %v836, %v835
  %v915 = vpack.c.b16 %v838, %v837
  %v916 = vpack.c.b16 %v840, %v839
  %v917 = vpack.c.b16 %v842, %v841
  %v918 = vpack.c.b16 %v844, %v843
  %v919 = vpack.c.b16 %v846, %v845
  %v920 = vpack.c.b16 %v848, %v847
  %v921 = vpack.c.b16 %v850, %v849
  %v922 = vpack.c.b16 %v852, %v851
  %v923 = vpack.c.b16 %v854, %v853
  %v924 = vpack.c.b16 %v856, %v855
  %v925 = vpack.c.b16 %v858, %v857
  %v926 = vpack.c.b16 %v860, %v859
  %v927 = vpack.c.b16 %v862, %v861
  %v928 = vpack.c.b16 %v863, %v863
  %vm993 = vcmask 64512
  %v995 = vsel %vm993, %v478, 0
  %v998 = vsel %vm993, %v487, 0
  %v1001 = vsel %vm993, %v496, 0
  %v1004 = vsel %vm993, %v505, 0
  %v1007 = vsel %vm993, %v514, 0
  %v1010 = vsel %vm993, %v523, 0
  %v1013 = vsel %vm993, %v532, 0
  %v1016 = vsel %vm993, %v541, 0
  %vm1018 = vcmask 1043456
  %v1020 = vsel %vm1018, %v928, 0
  %1022 = vmatpush.bf16.msra.mxu0 %v871
  %1023 = vmatpush.bf16.msra.mxu0 %v870
  %1024 = vmatpush.bf16.msra.mxu0 %v869
  %1025 = vmatpush.bf16.msra.mxu0 %v868
  %1026 = vmatpush.bf16.msra.mxu0 %v867
  %1027 = vmatpush.bf16.msra.mxu0 %v866
  %1028 = vmatpush.bf16.msra.mxu0 %v865
  %1029 = vmatpush.bf16.msra.mxu0 %v864
  %1030 = vmatmul.bf16.gmra.mxu0 %v470
  %v1031 = vpop.f32.mrf.mxu0
  %v1032 = vadd.f32 %v244, %v1031
  %v1033 = vpop.f32.mrf.mxu0
  %v1034 = vadd.f32 %v244, %v1033
  %1035 = vmatmul.bf16.gmra.mxu0 %v479
  %v1036 = vpop.f32.mrf.mxu0
  %v1037 = vadd.f32 %v244, %v1036
  %v1038 = vpop.f32.mrf.mxu0
  %v1039 = vadd.f32 %v244, %v1038
  %1040 = vmatmul.bf16.gmra.mxu0 %v488
  %v1041 = vpop.f32.mrf.mxu0
  %v1042 = vadd.f32 %v244, %v1041
  %v1043 = vpop.f32.mrf.mxu0
  %v1044 = vadd.f32 %v244, %v1043
  %1045 = vmatmul.bf16.gmra.mxu0 %v497
  %v1046 = vpop.f32.mrf.mxu0
  %v1047 = vadd.f32 %v244, %v1046
  %v1048 = vpop.f32.mrf.mxu0
  %v1049 = vadd.f32 %v244, %v1048
  %1050 = vmatmul.bf16.gmra.mxu0 %v506
  %v1051 = vpop.f32.mrf.mxu0
  %v1052 = vadd.f32 %v244, %v1051
  %v1053 = vpop.f32.mrf.mxu0
  %v1054 = vadd.f32 %v244, %v1053
  %1055 = vmatmul.bf16.gmra.mxu0 %v515
  %v1056 = vpop.f32.mrf.mxu0
  %v1057 = vadd.f32 %v244, %v1056
  %v1058 = vpop.f32.mrf.mxu0
  %v1059 = vadd.f32 %v244, %v1058
  %1060 = vmatmul.bf16.gmra.mxu0 %v524
  %v1061 = vpop.f32.mrf.mxu0
  %v1062 = vadd.f32 %v244, %v1061
  %v1063 = vpop.f32.mrf.mxu0
  %v1064 = vadd.f32 %v244, %v1063
  %1065 = vmatmul.bf16.gmra.mxu0 %v533
  %v1066 = vpop.f32.mrf.mxu0
  %v1067 = vadd.f32 %v244, %v1066
  %v1068 = vpop.f32.mrf.mxu0
  %v1069 = vadd.f32 %v244, %v1068
  %1070 = vdwg.mxu0
  %1071 = vmatpush.bf16.msra.mxu0 %v879
  %1072 = vmatpush.bf16.msra.mxu0 %v878
  %1073 = vmatpush.bf16.msra.mxu0 %v877
  %1074 = vmatpush.bf16.msra.mxu0 %v876
  %1075 = vmatpush.bf16.msra.mxu0 %v875
  %1076 = vmatpush.bf16.msra.mxu0 %v874
  %1077 = vmatpush.bf16.msra.mxu0 %v873
  %1078 = vmatpush.bf16.msra.mxu0 %v872
  %1079 = vmatmul.bf16.gmra.mxu0 %v471
  %v1080 = vpop.f32.mrf.mxu0
  %v1081 = vadd.f32 %v1032, %v1080
  %v1082 = vpop.f32.mrf.mxu0
  %v1083 = vadd.f32 %v1034, %v1082
  %1084 = vmatmul.bf16.gmra.mxu0 %v480
  %v1085 = vpop.f32.mrf.mxu0
  %v1086 = vadd.f32 %v1037, %v1085
  %v1087 = vpop.f32.mrf.mxu0
  %v1088 = vadd.f32 %v1039, %v1087
  %1089 = vmatmul.bf16.gmra.mxu0 %v489
  %v1090 = vpop.f32.mrf.mxu0
  %v1091 = vadd.f32 %v1042, %v1090
  %v1092 = vpop.f32.mrf.mxu0
  %v1093 = vadd.f32 %v1044, %v1092
  %1094 = vmatmul.bf16.gmra.mxu0 %v498
  %v1095 = vpop.f32.mrf.mxu0
  %v1096 = vadd.f32 %v1047, %v1095
  %v1097 = vpop.f32.mrf.mxu0
  %v1098 = vadd.f32 %v1049, %v1097
  %1099 = vmatmul.bf16.gmra.mxu0 %v507
  %v1100 = vpop.f32.mrf.mxu0
  %v1101 = vadd.f32 %v1052, %v1100
  %v1102 = vpop.f32.mrf.mxu0
  %v1103 = vadd.f32 %v1054, %v1102
  %1104 = vmatmul.bf16.gmra.mxu0 %v516
  %v1105 = vpop.f32.mrf.mxu0
  %v1106 = vadd.f32 %v1057, %v1105
  %v1107 = vpop.f32.mrf.mxu0
  %v1108 = vadd.f32 %v1059, %v1107
  %1109 = vmatmul.bf16.gmra.mxu0 %v525
  %v1110 = vpop.f32.mrf.mxu0
  %v1111 = vadd.f32 %v1062, %v1110
  %v1112 = vpop.f32.mrf.mxu0
  %v1113 = vadd.f32 %v1064, %v1112
  %1114 = vmatmul.bf16.gmra.mxu0 %v534
  %v1115 = vpop.f32.mrf.mxu0
  %v1116 = vadd.f32 %v1067, %v1115
  %v1117 = vpop.f32.mrf.mxu0
  %v1118 = vadd.f32 %v1069, %v1117
  %1119 = vdwg.mxu0
  %1120 = vmatpush.bf16.msra.mxu0 %v887
  %1121 = vmatpush.bf16.msra.mxu0 %v886
  %1122 = vmatpush.bf16.msra.mxu0 %v885
  %1123 = vmatpush.bf16.msra.mxu0 %v884
  %1124 = vmatpush.bf16.msra.mxu0 %v883
  %1125 = vmatpush.bf16.msra.mxu0 %v882
  %1126 = vmatpush.bf16.msra.mxu0 %v881
  %1127 = vmatpush.bf16.msra.mxu0 %v880
  %1128 = vmatmul.bf16.gmra.mxu0 %v472
  %v1129 = vpop.f32.mrf.mxu0
  %v1130 = vadd.f32 %v1081, %v1129
  %v1131 = vpop.f32.mrf.mxu0
  %v1132 = vadd.f32 %v1083, %v1131
  %1133 = vmatmul.bf16.gmra.mxu0 %v481
  %v1134 = vpop.f32.mrf.mxu0
  %v1135 = vadd.f32 %v1086, %v1134
  %v1136 = vpop.f32.mrf.mxu0
  %v1137 = vadd.f32 %v1088, %v1136
  %1138 = vmatmul.bf16.gmra.mxu0 %v490
  %v1139 = vpop.f32.mrf.mxu0
  %v1140 = vadd.f32 %v1091, %v1139
  %v1141 = vpop.f32.mrf.mxu0
  %v1142 = vadd.f32 %v1093, %v1141
  %1143 = vmatmul.bf16.gmra.mxu0 %v499
  %v1144 = vpop.f32.mrf.mxu0
  %v1145 = vadd.f32 %v1096, %v1144
  %v1146 = vpop.f32.mrf.mxu0
  %v1147 = vadd.f32 %v1098, %v1146
  %1148 = vmatmul.bf16.gmra.mxu0 %v508
  %v1149 = vpop.f32.mrf.mxu0
  %v1150 = vadd.f32 %v1101, %v1149
  %v1151 = vpop.f32.mrf.mxu0
  %v1152 = vadd.f32 %v1103, %v1151
  %1153 = vmatmul.bf16.gmra.mxu0 %v517
  %v1154 = vpop.f32.mrf.mxu0
  %v1155 = vadd.f32 %v1106, %v1154
  %v1156 = vpop.f32.mrf.mxu0
  %v1157 = vadd.f32 %v1108, %v1156
  %1158 = vmatmul.bf16.gmra.mxu0 %v526
  %v1159 = vpop.f32.mrf.mxu0
  %v1160 = vadd.f32 %v1111, %v1159
  %v1161 = vpop.f32.mrf.mxu0
  %v1162 = vadd.f32 %v1113, %v1161
  %1163 = vmatmul.bf16.gmra.mxu0 %v535
  %v1164 = vpop.f32.mrf.mxu0
  %v1165 = vadd.f32 %v1116, %v1164
  %v1166 = vpop.f32.mrf.mxu0
  %v1167 = vadd.f32 %v1118, %v1166
  %1168 = vdwg.mxu0
  %1169 = vmatpush.bf16.msra.mxu0 %v895
  %1170 = vmatpush.bf16.msra.mxu0 %v894
  %1171 = vmatpush.bf16.msra.mxu0 %v893
  %1172 = vmatpush.bf16.msra.mxu0 %v892
  %1173 = vmatpush.bf16.msra.mxu0 %v891
  %1174 = vmatpush.bf16.msra.mxu0 %v890
  %1175 = vmatpush.bf16.msra.mxu0 %v889
  %1176 = vmatpush.bf16.msra.mxu0 %v888
  %1177 = vmatmul.bf16.gmra.mxu0 %v473
  %v1178 = vpop.f32.mrf.mxu0
  %v1179 = vadd.f32 %v1130, %v1178
  %v1180 = vpop.f32.mrf.mxu0
  %v1181 = vadd.f32 %v1132, %v1180
  %1182 = vmatmul.bf16.gmra.mxu0 %v482
  %v1183 = vpop.f32.mrf.mxu0
  %v1184 = vadd.f32 %v1135, %v1183
  %v1185 = vpop.f32.mrf.mxu0
  %v1186 = vadd.f32 %v1137, %v1185
  %1187 = vmatmul.bf16.gmra.mxu0 %v491
  %v1188 = vpop.f32.mrf.mxu0
  %v1189 = vadd.f32 %v1140, %v1188
  %v1190 = vpop.f32.mrf.mxu0
  %v1191 = vadd.f32 %v1142, %v1190
  %1192 = vmatmul.bf16.gmra.mxu0 %v500
  %v1193 = vpop.f32.mrf.mxu0
  %v1194 = vadd.f32 %v1145, %v1193
  %v1195 = vpop.f32.mrf.mxu0
  %v1196 = vadd.f32 %v1147, %v1195
  %1197 = vmatmul.bf16.gmra.mxu0 %v509
  %v1198 = vpop.f32.mrf.mxu0
  %v1199 = vadd.f32 %v1150, %v1198
  %v1200 = vpop.f32.mrf.mxu0
  %v1201 = vadd.f32 %v1152, %v1200
  %1202 = vmatmul.bf16.gmra.mxu0 %v518
  %v1203 = vpop.f32.mrf.mxu0
  %v1204 = vadd.f32 %v1155, %v1203
  %v1205 = vpop.f32.mrf.mxu0
  %v1206 = vadd.f32 %v1157, %v1205
  %1207 = vmatmul.bf16.gmra.mxu0 %v527
  %v1208 = vpop.f32.mrf.mxu0
  %v1209 = vadd.f32 %v1160, %v1208
  %v1210 = vpop.f32.mrf.mxu0
  %v1211 = vadd.f32 %v1162, %v1210
  %1212 = vmatmul.bf16.gmra.mxu0 %v536
  %v1213 = vpop.f32.mrf.mxu0
  %v1214 = vadd.f32 %v1165, %v1213
  %v1215 = vpop.f32.mrf.mxu0
  %v1216 = vadd.f32 %v1167, %v1215
  %1217 = vdwg.mxu0
  %1218 = vmatpush.bf16.msra.mxu0 %v903
  %1219 = vmatpush.bf16.msra.mxu0 %v902
  %1220 = vmatpush.bf16.msra.mxu0 %v901
  %1221 = vmatpush.bf16.msra.mxu0 %v900
  %1222 = vmatpush.bf16.msra.mxu0 %v899
  %1223 = vmatpush.bf16.msra.mxu0 %v898
  %1224 = vmatpush.bf16.msra.mxu0 %v897
  %1225 = vmatpush.bf16.msra.mxu0 %v896
  %1226 = vmatmul.bf16.gmra.mxu0 %v474
  %v1227 = vpop.f32.mrf.mxu0
  %v1228 = vadd.f32 %v1179, %v1227
  %v1229 = vpop.f32.mrf.mxu0
  %v1230 = vadd.f32 %v1181, %v1229
  %1231 = vmatmul.bf16.gmra.mxu0 %v483
  %v1232 = vpop.f32.mrf.mxu0
  %v1233 = vadd.f32 %v1184, %v1232
  %v1234 = vpop.f32.mrf.mxu0
  %v1235 = vadd.f32 %v1186, %v1234
  %1236 = vmatmul.bf16.gmra.mxu0 %v492
  %v1237 = vpop.f32.mrf.mxu0
  %v1238 = vadd.f32 %v1189, %v1237
  %v1239 = vpop.f32.mrf.mxu0
  %v1240 = vadd.f32 %v1191, %v1239
  %1241 = vmatmul.bf16.gmra.mxu0 %v501
  %v1242 = vpop.f32.mrf.mxu0
  %v1243 = vadd.f32 %v1194, %v1242
  %v1244 = vpop.f32.mrf.mxu0
  %v1245 = vadd.f32 %v1196, %v1244
  %1246 = vmatmul.bf16.gmra.mxu0 %v510
  %v1247 = vpop.f32.mrf.mxu0
  %v1248 = vadd.f32 %v1199, %v1247
  %v1249 = vpop.f32.mrf.mxu0
  %v1250 = vadd.f32 %v1201, %v1249
  %1251 = vmatmul.bf16.gmra.mxu0 %v519
  %v1252 = vpop.f32.mrf.mxu0
  %v1253 = vadd.f32 %v1204, %v1252
  %v1254 = vpop.f32.mrf.mxu0
  %v1255 = vadd.f32 %v1206, %v1254
  %1256 = vmatmul.bf16.gmra.mxu0 %v528
  %v1257 = vpop.f32.mrf.mxu0
  %v1258 = vadd.f32 %v1209, %v1257
  %v1259 = vpop.f32.mrf.mxu0
  %v1260 = vadd.f32 %v1211, %v1259
  %1261 = vmatmul.bf16.gmra.mxu0 %v537
  %v1262 = vpop.f32.mrf.mxu0
  %v1263 = vadd.f32 %v1214, %v1262
  %v1264 = vpop.f32.mrf.mxu0
  %v1265 = vadd.f32 %v1216, %v1264
  %1266 = vdwg.mxu0
  %1267 = vmatpush.bf16.msra.mxu0 %v911
  %1268 = vmatpush.bf16.msra.mxu0 %v910
  %1269 = vmatpush.bf16.msra.mxu0 %v909
  %1270 = vmatpush.bf16.msra.mxu0 %v908
  %1271 = vmatpush.bf16.msra.mxu0 %v907
  %1272 = vmatpush.bf16.msra.mxu0 %v906
  %1273 = vmatpush.bf16.msra.mxu0 %v905
  %1274 = vmatpush.bf16.msra.mxu0 %v904
  %1275 = vmatmul.bf16.gmra.mxu0 %v475
  %v1276 = vpop.f32.mrf.mxu0
  %v1277 = vadd.f32 %v1228, %v1276
  %v1278 = vpop.f32.mrf.mxu0
  %v1279 = vadd.f32 %v1230, %v1278
  %1280 = vmatmul.bf16.gmra.mxu0 %v484
  %v1281 = vpop.f32.mrf.mxu0
  %v1282 = vadd.f32 %v1233, %v1281
  %v1283 = vpop.f32.mrf.mxu0
  %v1284 = vadd.f32 %v1235, %v1283
  %1285 = vmatmul.bf16.gmra.mxu0 %v493
  %v1286 = vpop.f32.mrf.mxu0
  %v1287 = vadd.f32 %v1238, %v1286
  %v1288 = vpop.f32.mrf.mxu0
  %v1289 = vadd.f32 %v1240, %v1288
  %1290 = vmatmul.bf16.gmra.mxu0 %v502
  %v1291 = vpop.f32.mrf.mxu0
  %v1292 = vadd.f32 %v1243, %v1291
  %v1293 = vpop.f32.mrf.mxu0
  %v1294 = vadd.f32 %v1245, %v1293
  %1295 = vmatmul.bf16.gmra.mxu0 %v511
  %v1296 = vpop.f32.mrf.mxu0
  %v1297 = vadd.f32 %v1248, %v1296
  %v1298 = vpop.f32.mrf.mxu0
  %v1299 = vadd.f32 %v1250, %v1298
  %1300 = vmatmul.bf16.gmra.mxu0 %v520
  %v1301 = vpop.f32.mrf.mxu0
  %v1302 = vadd.f32 %v1253, %v1301
  %v1303 = vpop.f32.mrf.mxu0
  %v1304 = vadd.f32 %v1255, %v1303
  %1305 = vmatmul.bf16.gmra.mxu0 %v529
  %v1306 = vpop.f32.mrf.mxu0
  %v1307 = vadd.f32 %v1258, %v1306
  %v1308 = vpop.f32.mrf.mxu0
  %v1309 = vadd.f32 %v1260, %v1308
  %1310 = vmatmul.bf16.gmra.mxu0 %v538
  %v1311 = vpop.f32.mrf.mxu0
  %v1312 = vadd.f32 %v1263, %v1311
  %v1313 = vpop.f32.mrf.mxu0
  %v1314 = vadd.f32 %v1265, %v1313
  %1315 = vdwg.mxu0
  %1316 = vmatpush.bf16.msra.mxu0 %v919
  %1317 = vmatpush.bf16.msra.mxu0 %v918
  %1318 = vmatpush.bf16.msra.mxu0 %v917
  %1319 = vmatpush.bf16.msra.mxu0 %v916
  %1320 = vmatpush.bf16.msra.mxu0 %v915
  %1321 = vmatpush.bf16.msra.mxu0 %v914
  %1322 = vmatpush.bf16.msra.mxu0 %v913
  %1323 = vmatpush.bf16.msra.mxu0 %v912
  %1324 = vmatmul.bf16.gmra.mxu0 %v476
  %v1325 = vpop.f32.mrf.mxu0
  %v1326 = vadd.f32 %v1277, %v1325
  %v1327 = vpop.f32.mrf.mxu0
  %v1328 = vadd.f32 %v1279, %v1327
  %1329 = vmatmul.bf16.gmra.mxu0 %v485
  %v1330 = vpop.f32.mrf.mxu0
  %v1331 = vadd.f32 %v1282, %v1330
  %v1332 = vpop.f32.mrf.mxu0
  %v1333 = vadd.f32 %v1284, %v1332
  %1334 = vmatmul.bf16.gmra.mxu0 %v494
  %v1335 = vpop.f32.mrf.mxu0
  %v1336 = vadd.f32 %v1287, %v1335
  %v1337 = vpop.f32.mrf.mxu0
  %v1338 = vadd.f32 %v1289, %v1337
  %1339 = vmatmul.bf16.gmra.mxu0 %v503
  %v1340 = vpop.f32.mrf.mxu0
  %v1341 = vadd.f32 %v1292, %v1340
  %v1342 = vpop.f32.mrf.mxu0
  %v1343 = vadd.f32 %v1294, %v1342
  %1344 = vmatmul.bf16.gmra.mxu0 %v512
  %v1345 = vpop.f32.mrf.mxu0
  %v1346 = vadd.f32 %v1297, %v1345
  %v1347 = vpop.f32.mrf.mxu0
  %v1348 = vadd.f32 %v1299, %v1347
  %1349 = vmatmul.bf16.gmra.mxu0 %v521
  %v1350 = vpop.f32.mrf.mxu0
  %v1351 = vadd.f32 %v1302, %v1350
  %v1352 = vpop.f32.mrf.mxu0
  %v1353 = vadd.f32 %v1304, %v1352
  %1354 = vmatmul.bf16.gmra.mxu0 %v530
  %v1355 = vpop.f32.mrf.mxu0
  %v1356 = vadd.f32 %v1307, %v1355
  %v1357 = vpop.f32.mrf.mxu0
  %v1358 = vadd.f32 %v1309, %v1357
  %1359 = vmatmul.bf16.gmra.mxu0 %v539
  %v1360 = vpop.f32.mrf.mxu0
  %v1361 = vadd.f32 %v1312, %v1360
  %v1362 = vpop.f32.mrf.mxu0
  %v1363 = vadd.f32 %v1314, %v1362
  %1364 = vdwg.mxu0
  %1365 = vmatpush.bf16.msra.mxu0 %v927
  %1366 = vmatpush.bf16.msra.mxu0 %v926
  %1367 = vmatpush.bf16.msra.mxu0 %v925
  %1368 = vmatpush.bf16.msra.mxu0 %v924
  %1369 = vmatpush.bf16.msra.mxu0 %v923
  %1370 = vmatpush.bf16.msra.mxu0 %v922
  %1371 = vmatpush.bf16.msra.mxu0 %v921
  %1372 = vmatpush.bf16.msra.mxu0 %v920
  %1373 = vmatmul.bf16.gmra.mxu0 %v477
  %v1374 = vpop.f32.mrf.mxu0
  %v1375 = vadd.f32 %v1326, %v1374
  %v1376 = vpop.f32.mrf.mxu0
  %v1377 = vadd.f32 %v1328, %v1376
  %1378 = vmatmul.bf16.gmra.mxu0 %v486
  %v1379 = vpop.f32.mrf.mxu0
  %v1380 = vadd.f32 %v1331, %v1379
  %v1381 = vpop.f32.mrf.mxu0
  %v1382 = vadd.f32 %v1333, %v1381
  %1383 = vmatmul.bf16.gmra.mxu0 %v495
  %v1384 = vpop.f32.mrf.mxu0
  %v1385 = vadd.f32 %v1336, %v1384
  %v1386 = vpop.f32.mrf.mxu0
  %v1387 = vadd.f32 %v1338, %v1386
  %1388 = vmatmul.bf16.gmra.mxu0 %v504
  %v1389 = vpop.f32.mrf.mxu0
  %v1390 = vadd.f32 %v1341, %v1389
  %v1391 = vpop.f32.mrf.mxu0
  %v1392 = vadd.f32 %v1343, %v1391
  %1393 = vmatmul.bf16.gmra.mxu0 %v513
  %v1394 = vpop.f32.mrf.mxu0
  %v1395 = vadd.f32 %v1346, %v1394
  %v1396 = vpop.f32.mrf.mxu0
  %v1397 = vadd.f32 %v1348, %v1396
  %1398 = vmatmul.bf16.gmra.mxu0 %v522
  %v1399 = vpop.f32.mrf.mxu0
  %v1400 = vadd.f32 %v1351, %v1399
  %v1401 = vpop.f32.mrf.mxu0
  %v1402 = vadd.f32 %v1353, %v1401
  %1403 = vmatmul.bf16.gmra.mxu0 %v531
  %v1404 = vpop.f32.mrf.mxu0
  %v1405 = vadd.f32 %v1356, %v1404
  %v1406 = vpop.f32.mrf.mxu0
  %v1407 = vadd.f32 %v1358, %v1406
  %1408 = vmatmul.bf16.gmra.mxu0 %v540
  %v1409 = vpop.f32.mrf.mxu0
  %v1410 = vadd.f32 %v1361, %v1409
  %v1411 = vpop.f32.mrf.mxu0
  %v1412 = vadd.f32 %v1363, %v1411
  %1413 = vdwg.mxu0
  %1414 = vmatpush.bf16.msra.mxu0 0
  %1415 = vmatpush.bf16.msra.mxu0 0
  %1416 = vmatpush.bf16.msra.mxu0 0
  %1417 = vmatpush.bf16.msra.mxu0 0
  %1418 = vmatpush.bf16.msra.mxu0 0
  %1419 = vmatpush.bf16.msra.mxu0 0
  %1420 = vmatpush.bf16.msra.mxu0 0
  %1421 = vmatpush.bf16.msra.mxu0 %v1020
  %1422 = vmatmul.bf16.gmra.mxu0 %v995
  %v1423 = vpop.f32.mrf.mxu0
  %v1424 = vadd.f32 %v1375, %v1423
  %v1425 = vpop.f32.mrf.mxu0
  %v1426 = vadd.f32 %v1377, %v1425
  %1427 = vmatmul.bf16.gmra.mxu0 %v998
  %v1428 = vpop.f32.mrf.mxu0
  %v1429 = vadd.f32 %v1380, %v1428
  %v1430 = vpop.f32.mrf.mxu0
  %v1431 = vadd.f32 %v1382, %v1430
  %1432 = vmatmul.bf16.gmra.mxu0 %v1001
  %v1433 = vpop.f32.mrf.mxu0
  %v1434 = vadd.f32 %v1385, %v1433
  %v1435 = vpop.f32.mrf.mxu0
  %v1436 = vadd.f32 %v1387, %v1435
  %1437 = vmatmul.bf16.gmra.mxu0 %v1004
  %v1438 = vpop.f32.mrf.mxu0
  %v1439 = vadd.f32 %v1390, %v1438
  %v1440 = vpop.f32.mrf.mxu0
  %v1441 = vadd.f32 %v1392, %v1440
  %1442 = vmatmul.bf16.gmra.mxu0 %v1007
  %v1443 = vpop.f32.mrf.mxu0
  %v1444 = vadd.f32 %v1395, %v1443
  %v1445 = vpop.f32.mrf.mxu0
  %v1446 = vadd.f32 %v1397, %v1445
  %1447 = vmatmul.bf16.gmra.mxu0 %v1010
  %v1448 = vpop.f32.mrf.mxu0
  %v1449 = vadd.f32 %v1400, %v1448
  %v1450 = vpop.f32.mrf.mxu0
  %v1451 = vadd.f32 %v1402, %v1450
  %1452 = vmatmul.bf16.gmra.mxu0 %v1013
  %v1453 = vpop.f32.mrf.mxu0
  %v1454 = vadd.f32 %v1405, %v1453
  %v1455 = vpop.f32.mrf.mxu0
  %v1456 = vadd.f32 %v1407, %v1455
  %1457 = vmatmul.bf16.gmra.mxu0 %v1016
  %v1458 = vpop.f32.mrf.mxu0
  %v1459 = vadd.f32 %v1410, %v1458
  %v1460 = vpop.f32.mrf.mxu0
  %v1461 = vadd.f32 %v1412, %v1460
  %1462 = vdwg.mxu0
  %v1463 = vmax.f32 %v1424, 0.0
  %v1464 = vmax.f32 %v1426, 0.0
  %v1465 = vmax.f32 %v1429, 0.0
  %v1466 = vmax.f32 %v1431, 0.0
  %v1467 = vmax.f32 %v1434, 0.0
  %v1468 = vmax.f32 %v1436, 0.0
  %v1469 = vmax.f32 %v1439, 0.0
  %v1470 = vmax.f32 %v1441, 0.0
  %v1471 = vmax.f32 %v1444, 0.0
  %v1472 = vmax.f32 %v1446, 0.0
  %v1473 = vmax.f32 %v1449, 0.0
  %v1474 = vmax.f32 %v1451, 0.0
  %v1475 = vmax.f32 %v1454, 0.0
  %v1476 = vmax.f32 %v1456, 0.0
  %v1477 = vmax.f32 %v1459, 0.0
  %v1478 = vmax.f32 %v1461, 0.0
  %v1479 = vpack.c.bf16 %v1464, %v1463
  %v1480 = vpack.c.bf16 %v1466, %v1465
  %v1481 = vpack.c.bf16 %v1468, %v1467
  %v1482 = vpack.c.bf16 %v1470, %v1469
  %v1483 = vpack.c.bf16 %v1472, %v1471
  %v1484 = vpack.c.bf16 %v1474, %v1473
  %v1485 = vpack.c.bf16 %v1476, %v1475
  %v1486 = vpack.c.bf16 %v1478, %v1477
  %v1487 = vld [vmem:[%s3] sm:$0xf]
  %v1488 = vld [vmem:[%s3 + $0x4] sm:$0xf]
  %v1489 = vld [vmem:[%s3 + $0x8] sm:$0xf]
  %v1490 = vld [vmem:[%s3 + $0xc] sm:$0xf]
  %v1491 = vld [vmem:[%s3 + $0x10] sm:$0xf]
  %v1492 = vld [vmem:[%s3 + $0x14] sm:$0xf]
  %v1493 = vld [vmem:[%s3 + $0x18] sm:$0xf]
  %v1494 = vld [vmem:[%s3 + $0x1c] sm:$0xf]
  %v1495 = vld [vmem:[%s4] sm:$0x1]
  %v1497 = vperm.slane %v1495, 0
  %v1507 = vunpack.c.l.b16 %v1487
  %v1508 = vunpack.c.l.b16 %v1488
  %v1509 = vunpack.c.l.b16 %v1489
  %v1510 = vunpack.c.l.b16 %v1490
  %v1511 = vunpack.c.l.b16 %v1491
  %v1512 = vunpack.c.l.b16 %v1492
  %v1513 = vunpack.c.l.b16 %v1493
  %v1514 = vunpack.c.l.b16 %v1494
  %v1515 = vpack.c.b16 %v1508, %v1507
  %v1516 = vpack.c.b16 %v1510, %v1509
  %v1517 = vpack.c.b16 %v1512, %v1511
  %v1518 = vpack.c.b16 %v1514, %v1513
  %vm1523 = vcmask 523264
  %v1525 = vsel %vm1523, %v1479, 0
  %v1528 = vsel %vm1523, %v1480, 0
  %v1531 = vsel %vm1523, %v1481, 0
  %v1534 = vsel %vm1523, %v1482, 0
  %v1537 = vsel %vm1523, %v1483, 0
  %v1540 = vsel %vm1523, %v1484, 0
  %v1543 = vsel %vm1523, %v1485, 0
  %v1546 = vsel %vm1523, %v1486, 0
  %1548 = vmatpush.bf16.msra.mxu0 0
  %1549 = vmatpush.bf16.msra.mxu0 0
  %1550 = vmatpush.bf16.msra.mxu0 0
  %1551 = vmatpush.bf16.msra.mxu0 0
  %1552 = vmatpush.bf16.msra.mxu0 %v1518
  %1553 = vmatpush.bf16.msra.mxu0 %v1517
  %1554 = vmatpush.bf16.msra.mxu0 %v1516
  %1555 = vmatpush.bf16.msra.mxu0 %v1515
  %1556 = vmatmul.bf16.gmra.mxu0 %v1525
  %v1557 = vpop.f32.mrf.mxu0
  %v1558 = vadd.f32 %v1497, %v1557
  %v1559 = vpop.f32.mrf.mxu0
  %v1560 = vadd.f32 %v1497, %v1559
  %1561 = vmatmul.bf16.gmra.mxu0 %v1528
  %v1562 = vpop.f32.mrf.mxu0
  %v1563 = vadd.f32 %v1497, %v1562
  %v1564 = vpop.f32.mrf.mxu0
  %v1565 = vadd.f32 %v1497, %v1564
  %1566 = vmatmul.bf16.gmra.mxu0 %v1531
  %v1567 = vpop.f32.mrf.mxu0
  %v1568 = vadd.f32 %v1497, %v1567
  %v1569 = vpop.f32.mrf.mxu0
  %v1570 = vadd.f32 %v1497, %v1569
  %1571 = vmatmul.bf16.gmra.mxu0 %v1534
  %v1572 = vpop.f32.mrf.mxu0
  %v1573 = vadd.f32 %v1497, %v1572
  %v1574 = vpop.f32.mrf.mxu0
  %v1575 = vadd.f32 %v1497, %v1574
  %1576 = vmatmul.bf16.gmra.mxu0 %v1537
  %v1577 = vpop.f32.mrf.mxu0
  %v1578 = vadd.f32 %v1497, %v1577
  %v1579 = vpop.f32.mrf.mxu0
  %v1580 = vadd.f32 %v1497, %v1579
  %1581 = vmatmul.bf16.gmra.mxu0 %v1540
  %v1582 = vpop.f32.mrf.mxu0
  %v1583 = vadd.f32 %v1497, %v1582
  %v1584 = vpop.f32.mrf.mxu0
  %v1585 = vadd.f32 %v1497, %v1584
  %1586 = vmatmul.bf16.gmra.mxu0 %v1543
  %v1587 = vpop.f32.mrf.mxu0
  %v1588 = vadd.f32 %v1497, %v1587
  %v1589 = vpop.f32.mrf.mxu0
  %v1590 = vadd.f32 %v1497, %v1589
  %1591 = vmatmul.bf16.gmra.mxu0 %v1546
  %v1592 = vpop.f32.mrf.mxu0
  %v1593 = vadd.f32 %v1497, %v1592
  %v1594 = vpop.f32.mrf.mxu0
  %v1595 = vadd.f32 %v1497, %v1594
  %1596 = vdwg.mxu0
  %v1597 = vmax.f32 %v1558, 0.0
  %v1598 = vmax.f32 %v1560, 0.0
  %v1599 = vmax.f32 %v1563, 0.0
  %v1600 = vmax.f32 %v1565, 0.0
  %v1601 = vmax.f32 %v1568, 0.0
  %v1602 = vmax.f32 %v1570, 0.0
  %v1603 = vmax.f32 %v1573, 0.0
  %v1604 = vmax.f32 %v1575, 0.0
  %v1605 = vmax.f32 %v1578, 0.0
  %v1606 = vmax.f32 %v1580, 0.0
  %v1607 = vmax.f32 %v1583, 0.0
  %v1608 = vmax.f32 %v1585, 0.0
  %v1609 = vmax.f32 %v1588, 0.0
  %v1610 = vmax.f32 %v1590, 0.0
  %v1611 = vmax.f32 %v1593, 0.0
  %v1612 = vmax.f32 %v1595, 0.0
  %v1613 = vpack.c.bf16 %v1598, %v1597
  %v1614 = vpack.c.bf16 %v1600, %v1599
  %v1615 = vpack.c.bf16 %v1602, %v1601
  %v1616 = vpack.c.bf16 %v1604, %v1603
  %v1617 = vpack.c.bf16 %v1606, %v1605
  %v1618 = vpack.c.bf16 %v1608, %v1607
  %v1619 = vpack.c.bf16 %v1610, %v1609
  %v1620 = vpack.c.bf16 %v1612, %v1611
  %v1621 = vld [vmem:[%s5] sm:$0xf]
  %v1622 = vld [vmem:[%s5 + $0x4] sm:$0xf]
  %v1623 = vld [vmem:[%s5 + $0x8] sm:$0xf]
  %v1624 = vld [vmem:[%s5 + $0xc] sm:$0xf]
  %v1625 = vld [vmem:[%s5 + $0x10] sm:$0xf]
  %v1626 = vld [vmem:[%s5 + $0x14] sm:$0xf]
  %v1627 = vld [vmem:[%s5 + $0x18] sm:$0xf]
  %v1628 = vld [vmem:[%s5 + $0x1c] sm:$0xf]
  %v1629 = vld [vmem:[%s6] sm:$0x1]
  %v1631 = vperm.slane %v1629, 0
  %v1641 = vunpack.c.l.b16 %v1621
  %v1642 = vunpack.c.l.b16 %v1622
  %v1643 = vunpack.c.l.b16 %v1623
  %v1644 = vunpack.c.l.b16 %v1624
  %v1645 = vunpack.c.l.b16 %v1625
  %v1646 = vunpack.c.l.b16 %v1626
  %v1647 = vunpack.c.l.b16 %v1627
  %v1648 = vunpack.c.l.b16 %v1628
  %v1649 = vpack.c.b16 %v1642, %v1641
  %v1650 = vpack.c.b16 %v1644, %v1643
  %v1651 = vpack.c.b16 %v1646, %v1645
  %v1652 = vpack.c.b16 %v1648, %v1647
  %v1658 = vsel %vm1523, %v1613, 0
  %v1661 = vsel %vm1523, %v1614, 0
  %v1664 = vsel %vm1523, %v1615, 0
  %v1667 = vsel %vm1523, %v1616, 0
  %v1670 = vsel %vm1523, %v1617, 0
  %v1673 = vsel %vm1523, %v1618, 0
  %v1676 = vsel %vm1523, %v1619, 0
  %v1679 = vsel %vm1523, %v1620, 0
  %1681 = vmatpush.bf16.msra.mxu0 0
  %1682 = vmatpush.bf16.msra.mxu0 0
  %1683 = vmatpush.bf16.msra.mxu0 0
  %1684 = vmatpush.bf16.msra.mxu0 0
  %1685 = vmatpush.bf16.msra.mxu0 %v1652
  %1686 = vmatpush.bf16.msra.mxu0 %v1651
  %1687 = vmatpush.bf16.msra.mxu0 %v1650
  %1688 = vmatpush.bf16.msra.mxu0 %v1649
  %1689 = vmatmul.bf16.gmra.mxu0 %v1658
  %v1690 = vpop.f32.mrf.mxu0
  %v1691 = vadd.f32 %v1631, %v1690
  %v1692 = vpop.f32.mrf.mxu0
  %v1693 = vadd.f32 %v1631, %v1692
  %1694 = vmatmul.bf16.gmra.mxu0 %v1661
  %v1695 = vpop.f32.mrf.mxu0
  %v1696 = vadd.f32 %v1631, %v1695
  %v1697 = vpop.f32.mrf.mxu0
  %v1698 = vadd.f32 %v1631, %v1697
  %1699 = vmatmul.bf16.gmra.mxu0 %v1664
  %v1700 = vpop.f32.mrf.mxu0
  %v1701 = vadd.f32 %v1631, %v1700
  %v1702 = vpop.f32.mrf.mxu0
  %v1703 = vadd.f32 %v1631, %v1702
  %1704 = vmatmul.bf16.gmra.mxu0 %v1667
  %v1705 = vpop.f32.mrf.mxu0
  %v1706 = vadd.f32 %v1631, %v1705
  %v1707 = vpop.f32.mrf.mxu0
  %v1708 = vadd.f32 %v1631, %v1707
  %1709 = vmatmul.bf16.gmra.mxu0 %v1670
  %v1710 = vpop.f32.mrf.mxu0
  %v1711 = vadd.f32 %v1631, %v1710
  %v1712 = vpop.f32.mrf.mxu0
  %v1713 = vadd.f32 %v1631, %v1712
  %1714 = vmatmul.bf16.gmra.mxu0 %v1673
  %v1715 = vpop.f32.mrf.mxu0
  %v1716 = vadd.f32 %v1631, %v1715
  %v1717 = vpop.f32.mrf.mxu0
  %v1718 = vadd.f32 %v1631, %v1717
  %1719 = vmatmul.bf16.gmra.mxu0 %v1676
  %v1720 = vpop.f32.mrf.mxu0
  %v1721 = vadd.f32 %v1631, %v1720
  %v1722 = vpop.f32.mrf.mxu0
  %v1723 = vadd.f32 %v1631, %v1722
  %1724 = vmatmul.bf16.gmra.mxu0 %v1679
  %v1725 = vpop.f32.mrf.mxu0
  %v1726 = vadd.f32 %v1631, %v1725
  %v1727 = vpop.f32.mrf.mxu0
  %v1728 = vadd.f32 %v1631, %v1727
  %1729 = vdwg.mxu0
  %v1730 = vmax.f32 %v1691, 0.0
  %v1731 = vmax.f32 %v1693, 0.0
  %v1732 = vmax.f32 %v1696, 0.0
  %v1733 = vmax.f32 %v1698, 0.0
  %v1734 = vmax.f32 %v1701, 0.0
  %v1735 = vmax.f32 %v1703, 0.0
  %v1736 = vmax.f32 %v1706, 0.0
  %v1737 = vmax.f32 %v1708, 0.0
  %v1738 = vmax.f32 %v1711, 0.0
  %v1739 = vmax.f32 %v1713, 0.0
  %v1740 = vmax.f32 %v1716, 0.0
  %v1741 = vmax.f32 %v1718, 0.0
  %v1742 = vmax.f32 %v1721, 0.0
  %v1743 = vmax.f32 %v1723, 0.0
  %v1744 = vmax.f32 %v1726, 0.0
  %v1745 = vmax.f32 %v1728, 0.0
  %v1746 = vpack.c.bf16 %v1731, %v1730
  %v1747 = vpack.c.bf16 %v1733, %v1732
  %v1748 = vpack.c.bf16 %v1735, %v1734
  %v1749 = vpack.c.bf16 %v1737, %v1736
  %v1750 = vpack.c.bf16 %v1739, %v1738
  %v1751 = vpack.c.bf16 %v1741, %v1740
  %v1752 = vpack.c.bf16 %v1743, %v1742
  %v1753 = vpack.c.bf16 %v1745, %v1744
  %v1754 = vld [vmem:[%s7] sm:$0xff]
  %v1755 = vld [vmem:[%s7 + $0x8] sm:$0xff]
  %v1756 = vld [vmem:[%s7 + $0x10] sm:$0xff]
  %v1757 = vld [vmem:[%s7 + $0x18] sm:$0xff]
  %v1758 = vld [vmem:[%s7 + $0x20] sm:$0xff]
  %v1759 = vld [vmem:[%s7 + $0x28] sm:$0xff]
  %v1760 = vld [vmem:[%s7 + $0x30] sm:$0xff]
  %v1761 = vld [vmem:[%s7 + $0x38] sm:$0xff]
  %v1762 = vld [vmem:[%s7 + $0x40] sm:$0xff]
  %v1763 = vld [vmem:[%s7 + $0x48] sm:$0xff]
  %v1764 = vld [vmem:[%s7 + $0x50] sm:$0xff]
  %v1765 = vld [vmem:[%s7 + $0x58] sm:$0xff]
  %v1766 = vld [vmem:[%s7 + $0x60] sm:$0xff]
  %v1767 = vld [vmem:[%s7 + $0x68] sm:$0xff]
  %v1768 = vld [vmem:[%s7 + $0x70] sm:$0xff]
  %v1769 = vld [vmem:[%s7 + $0x78] sm:$0xff]
  %v1770 = vld [vmem:[%s7 + $0x80] sm:$0xff]
  %v1771 = vld [vmem:[%s7 + $0x88] sm:$0xff]
  %v1772 = vld [vmem:[%s7 + $0x90] sm:$0xff]
  %v1773 = vld [vmem:[%s7 + $0x98] sm:$0xff]
  %v1774 = vld [vmem:[%s7 + $0xa0] sm:$0xff]
  %v1775 = vld [vmem:[%s7 + $0xa8] sm:$0xff]
  %v1776 = vld [vmem:[%s7 + $0xb0] sm:$0xff]
  %v1777 = vld [vmem:[%s7 + $0xb8] sm:$0xff]
  %v1778 = vld [vmem:[%s7 + $0xc0] sm:$0xff]
  %v1779 = vld [vmem:[%s7 + $0xc8] sm:$0xff]
  %v1780 = vld [vmem:[%s7 + $0xd0] sm:$0xff]
  %v1781 = vld [vmem:[%s7 + $0xd8] sm:$0xff]
  %v1782 = vld [vmem:[%s7 + $0xe0] sm:$0xff]
  %v1783 = vld [vmem:[%s7 + $0xe8] sm:$0xff]
  %v1784 = vld [vmem:[%s7 + $0xf0] sm:$0xff]
  %v1785 = vld [vmem:[%s7 + $0xf8] sm:$0xff]
  %v1786 = vld [vmem:[%s7 + $0x100] sm:$0xff]
  %v1787 = vld [vmem:[%s7 + $0x108] sm:$0xff]
  %v1788 = vld [vmem:[%s7 + $0x110] sm:$0xff]
  %v1789 = vld [vmem:[%s7 + $0x118] sm:$0xff]
  %v1790 = vld [vmem:[%s7 + $0x120] sm:$0xff]
  %v1791 = vld [vmem:[%s7 + $0x128] sm:$0xff]
  %v1792 = vld [vmem:[%s7 + $0x130] sm:$0xff]
  %v1793 = vld [vmem:[%s7 + $0x138] sm:$0xff]
  %v1794 = vld [vmem:[%s7 + $0x140] sm:$0xff]
  %v1795 = vld [vmem:[%s7 + $0x148] sm:$0xff]
  %v1796 = vld [vmem:[%s7 + $0x150] sm:$0xff]
  %v1797 = vld [vmem:[%s7 + $0x158] sm:$0xff]
  %v1798 = vld [vmem:[%s7 + $0x160] sm:$0xff]
  %v1799 = vld [vmem:[%s7 + $0x168] sm:$0xff]
  %v1800 = vld [vmem:[%s7 + $0x170] sm:$0xff]
  %v1801 = vld [vmem:[%s7 + $0x178] sm:$0xff]
  %v1802 = vld [vmem:[%s7 + $0x180] sm:$0xff]
  %v1803 = vld [vmem:[%s7 + $0x188] sm:$0xff]
  %v1804 = vld [vmem:[%s7 + $0x190] sm:$0xff]
  %v1805 = vld [vmem:[%s7 + $0x198] sm:$0xff]
  %v1806 = vld [vmem:[%s7 + $0x1a0] sm:$0xff]
  %v1807 = vld [vmem:[%s7 + $0x1a8] sm:$0xff]
  %v1808 = vld [vmem:[%s7 + $0x1b0] sm:$0xff]
  %v1809 = vld [vmem:[%s7 + $0x1b8] sm:$0xff]
  %v1810 = vld [vmem:[%s7 + $0x1c0] sm:$0xff]
  %v1811 = vld [vmem:[%s7 + $0x1c8] sm:$0xff]
  %v1812 = vld [vmem:[%s7 + $0x1d0] sm:$0xff]
  %v1813 = vld [vmem:[%s7 + $0x1d8] sm:$0xff]
  %v1814 = vld [vmem:[%s7 + $0x1e0] sm:$0xff]
  %v1815 = vld [vmem:[%s7 + $0x1e8] sm:$0xff]
  %v1816 = vld [vmem:[%s7 + $0x1f0] sm:$0xff]
  %v1817 = vld [vmem:[%s7 + $0x1f8] sm:$0xff]
  %v1818 = vld [vmem:[%s8] sm:$0xff]
  %v1820 = vperm.slane %v1818, 0
  %v1821 = vperm.slane %v1818, 1
  %v1822 = vperm.slane %v1818, 2
  %v1823 = vperm.slane %v1818, 3
  %v1824 = vperm.slane %v1818, 4
  %v1825 = vperm.slane %v1818, 5
  %v1826 = vperm.slane %v1818, 6
  %v1827 = vperm.slane %v1818, 7
  %v1900 = vunpack.c.l.b16 %v1754
  %v1901 = vunpack.c.h.b16 %v1754
  %v1902 = vunpack.c.l.b16 %v1755
  %v1903 = vunpack.c.h.b16 %v1755
  %v1904 = vunpack.c.l.b16 %v1756
  %v1905 = vunpack.c.h.b16 %v1756
  %v1906 = vunpack.c.l.b16 %v1757
  %v1907 = vunpack.c.h.b16 %v1757
  %v1908 = vunpack.c.l.b16 %v1758
  %v1909 = vunpack.c.h.b16 %v1758
  %v1910 = vunpack.c.l.b16 %v1759
  %v1911 = vunpack.c.h.b16 %v1759
  %v1912 = vunpack.c.l.b16 %v1760
  %v1913 = vunpack.c.h.b16 %v1760
  %v1914 = vunpack.c.l.b16 %v1761
  %v1915 = vunpack.c.h.b16 %v1761
  %v1916 = vunpack.c.l.b16 %v1762
  %v1917 = vunpack.c.h.b16 %v1762
  %v1918 = vunpack.c.l.b16 %v1763
  %v1919 = vunpack.c.h.b16 %v1763
  %v1920 = vunpack.c.l.b16 %v1764
  %v1921 = vunpack.c.h.b16 %v1764
  %v1922 = vunpack.c.l.b16 %v1765
  %v1923 = vunpack.c.h.b16 %v1765
  %v1924 = vunpack.c.l.b16 %v1766
  %v1925 = vunpack.c.h.b16 %v1766
  %v1926 = vunpack.c.l.b16 %v1767
  %v1927 = vunpack.c.h.b16 %v1767
  %v1928 = vunpack.c.l.b16 %v1768
  %v1929 = vunpack.c.h.b16 %v1768
  %v1930 = vunpack.c.l.b16 %v1769
  %v1931 = vunpack.c.h.b16 %v1769
  %v1932 = vunpack.c.l.b16 %v1770
  %v1933 = vunpack.c.h.b16 %v1770
  %v1934 = vunpack.c.l.b16 %v1771
  %v1935 = vunpack.c.h.b16 %v1771
  %v1936 = vunpack.c.l.b16 %v1772
  %v1937 = vunpack.c.h.b16 %v1772
  %v1938 = vunpack.c.l.b16 %v1773
  %v1939 = vunpack.c.h.b16 %v1773
  %v1940 = vunpack.c.l.b16 %v1774
  %v1941 = vunpack.c.h.b16 %v1774
  %v1942 = vunpack.c.l.b16 %v1775
  %v1943 = vunpack.c.h.b16 %v1775
  %v1944 = vunpack.c.l.b16 %v1776
  %v1945 = vunpack.c.h.b16 %v1776
  %v1946 = vunpack.c.l.b16 %v1777
  %v1947 = vunpack.c.h.b16 %v1777
  %v1948 = vunpack.c.l.b16 %v1778
  %v1949 = vunpack.c.h.b16 %v1778
  %v1950 = vunpack.c.l.b16 %v1779
  %v1951 = vunpack.c.h.b16 %v1779
  %v1952 = vunpack.c.l.b16 %v1780
  %v1953 = vunpack.c.h.b16 %v1780
  %v1954 = vunpack.c.l.b16 %v1781
  %v1955 = vunpack.c.h.b16 %v1781
  %v1956 = vunpack.c.l.b16 %v1782
  %v1957 = vunpack.c.h.b16 %v1782
  %v1958 = vunpack.c.l.b16 %v1783
  %v1959 = vunpack.c.h.b16 %v1783
  %v1960 = vunpack.c.l.b16 %v1784
  %v1961 = vunpack.c.h.b16 %v1784
  %v1962 = vunpack.c.l.b16 %v1785
  %v1963 = vunpack.c.h.b16 %v1785
  %v1964 = vunpack.c.l.b16 %v1786
  %v1965 = vunpack.c.h.b16 %v1786
  %v1966 = vunpack.c.l.b16 %v1787
  %v1967 = vunpack.c.h.b16 %v1787
  %v1968 = vunpack.c.l.b16 %v1788
  %v1969 = vunpack.c.h.b16 %v1788
  %v1970 = vunpack.c.l.b16 %v1789
  %v1971 = vunpack.c.h.b16 %v1789
  %v1972 = vunpack.c.l.b16 %v1790
  %v1973 = vunpack.c.h.b16 %v1790
  %v1974 = vunpack.c.l.b16 %v1791
  %v1975 = vunpack.c.h.b16 %v1791
  %v1976 = vunpack.c.l.b16 %v1792
  %v1977 = vunpack.c.h.b16 %v1792
  %v1978 = vunpack.c.l.b16 %v1793
  %v1979 = vunpack.c.h.b16 %v1793
  %v1980 = vunpack.c.l.b16 %v1794
  %v1981 = vunpack.c.h.b16 %v1794
  %v1982 = vunpack.c.l.b16 %v1795
  %v1983 = vunpack.c.h.b16 %v1795
  %v1984 = vunpack.c.l.b16 %v1796
  %v1985 = vunpack.c.h.b16 %v1796
  %v1986 = vunpack.c.l.b16 %v1797
  %v1987 = vunpack.c.h.b16 %v1797
  %v1988 = vunpack.c.l.b16 %v1798
  %v1989 = vunpack.c.h.b16 %v1798
  %v1990 = vunpack.c.l.b16 %v1799
  %v1991 = vunpack.c.h.b16 %v1799
  %v1992 = vunpack.c.l.b16 %v1800
  %v1993 = vunpack.c.h.b16 %v1800
  %v1994 = vunpack.c.l.b16 %v1801
  %v1995 = vunpack.c.h.b16 %v1801
  %v1996 = vunpack.c.l.b16 %v1802
  %v1997 = vunpack.c.h.b16 %v1802
  %v1998 = vunpack.c.l.b16 %v1803
  %v1999 = vunpack.c.h.b16 %v1803
  %v2000 = vunpack.c.l.b16 %v1804
  %v2001 = vunpack.c.h.b16 %v1804
  %v2002 = vunpack.c.l.b16 %v1805
  %v2003 = vunpack.c.h.b16 %v1805
  %v2004 = vunpack.c.l.b16 %v1806
  %v2005 = vunpack.c.h.b16 %v1806
  %v2006 = vunpack.c.l.b16 %v1807
  %v2007 = vunpack.c.h.b16 %v1807
  %v2008 = vunpack.c.l.b16 %v1808
  %v2009 = vunpack.c.h.b16 %v1808
  %v2010 = vunpack.c.l.b16 %v1809
  %v2011 = vunpack.c.h.b16 %v1809
  %v2012 = vunpack.c.l.b16 %v1810
  %v2013 = vunpack.c.h.b16 %v1810
  %v2014 = vunpack.c.l.b16 %v1811
  %v2015 = vunpack.c.h.b16 %v1811
  %v2016 = vunpack.c.l.b16 %v1812
  %v2017 = vunpack.c.h.b16 %v1812
  %v2018 = vunpack.c.l.b16 %v1813
  %v2019 = vunpack.c.h.b16 %v1813
  %v2020 = vunpack.c.l.b16 %v1814
  %v2021 = vunpack.c.h.b16 %v1814
  %v2022 = vunpack.c.l.b16 %v1815
  %v2023 = vunpack.c.h.b16 %v1815
  %v2024 = vunpack.c.l.b16 %v1816
  %v2025 = vunpack.c.h.b16 %v1816
  %v2026 = vunpack.c.l.b16 %v1817
  %v2027 = vunpack.c.h.b16 %v1817
  %v2028 = vpack.c.b16 %v1908, %v1900
  %v2029 = vpack.c.b16 %v1909, %v1901
  %v2030 = vpack.c.b16 %v1910, %v1902
  %v2031 = vpack.c.b16 %v1911, %v1903
  %v2032 = vpack.c.b16 %v1912, %v1904
  %v2033 = vpack.c.b16 %v1913, %v1905
  %v2034 = vpack.c.b16 %v1914, %v1906
  %v2035 = vpack.c.b16 %v1915, %v1907
  %v2036 = vpack.c.b16 %v1924, %v1916
  %v2037 = vpack.c.b16 %v1925, %v1917
  %v2038 = vpack.c.b16 %v1926, %v1918
  %v2039 = vpack.c.b16 %v1927, %v1919
  %v2040 = vpack.c.b16 %v1928, %v1920
  %v2041 = vpack.c.b16 %v1929, %v1921
  %v2042 = vpack.c.b16 %v1930, %v1922
  %v2043 = vpack.c.b16 %v1931, %v1923
  %v2044 = vpack.c.b16 %v1940, %v1932
  %v2045 = vpack.c.b16 %v1941, %v1933
  %v2046 = vpack.c.b16 %v1942, %v1934
  %v2047 = vpack.c.b16 %v1943, %v1935
  %v2048 = vpack.c.b16 %v1944, %v1936
  %v2049 = vpack.c.b16 %v1945, %v1937
  %v2050 = vpack.c.b16 %v1946, %v1938
  %v2051 = vpack.c.b16 %v1947, %v1939
  %v2052 = vpack.c.b16 %v1956, %v1948
  %v2053 = vpack.c.b16 %v1957, %v1949
  %v2054 = vpack.c.b16 %v1958, %v1950
  %v2055 = vpack.c.b16 %v1959, %v1951
  %v2056 = vpack.c.b16 %v1960, %v1952
  %v2057 = vpack.c.b16 %v1961, %v1953
  %v2058 = vpack.c.b16 %v1962, %v1954
  %v2059 = vpack.c.b16 %v1963, %v1955
  %v2060 = vpack.c.b16 %v1972, %v1964
  %v2061 = vpack.c.b16 %v1973, %v1965
  %v2062 = vpack.c.b16 %v1974, %v1966
  %v2063 = vpack.c.b16 %v1975, %v1967
  %v2064 = vpack.c.b16 %v1976, %v1968
  %v2065 = vpack.c.b16 %v1977, %v1969
  %v2066 = vpack.c.b16 %v1978, %v1970
  %v2067 = vpack.c.b16 %v1979, %v1971
  %v2068 = vpack.c.b16 %v1988, %v1980
  %v2069 = vpack.c.b16 %v1989, %v1981
  %v2070 = vpack.c.b16 %v1990, %v1982
  %v2071 = vpack.c.b16 %v1991, %v1983
  %v2072 = vpack.c.b16 %v1992, %v1984
  %v2073 = vpack.c.b16 %v1993, %v1985
  %v2074 = vpack.c.b16 %v1994, %v1986
  %v2075 = vpack.c.b16 %v1995, %v1987
  %v2076 = vpack.c.b16 %v2004, %v1996
  %v2077 = vpack.c.b16 %v2005, %v1997
  %v2078 = vpack.c.b16 %v2006, %v1998
  %v2079 = vpack.c.b16 %v2007, %v1999
  %v2080 = vpack.c.b16 %v2008, %v2000
  %v2081 = vpack.c.b16 %v2009, %v2001
  %v2082 = vpack.c.b16 %v2010, %v2002
  %v2083 = vpack.c.b16 %v2011, %v2003
  %v2084 = vpack.c.b16 %v2020, %v2012
  %v2085 = vpack.c.b16 %v2021, %v2013
  %v2086 = vpack.c.b16 %v2022, %v2014
  %v2087 = vpack.c.b16 %v2023, %v2015
  %v2088 = vpack.c.b16 %v2024, %v2016
  %v2089 = vpack.c.b16 %v2025, %v2017
  %v2090 = vpack.c.b16 %v2026, %v2018
  %v2091 = vpack.c.b16 %v2027, %v2019
  %2156 = vmatpush.bf16.msra.mxu0 %v2084
  %2157 = vmatpush.bf16.msra.mxu0 %v2076
  %2158 = vmatpush.bf16.msra.mxu0 %v2068
  %2159 = vmatpush.bf16.msra.mxu0 %v2060
  %2160 = vmatpush.bf16.msra.mxu0 %v2052
  %2161 = vmatpush.bf16.msra.mxu0 %v2044
  %2162 = vmatpush.bf16.msra.mxu0 %v2036
  %2163 = vmatpush.bf16.msra.mxu0 %v2028
  %2164 = vmatmul.bf16.gmra.mxu0 %v1746
  %v2165 = vpop.f32.mrf.mxu0
  %v2166 = vadd.f32 %v1820, %v2165
  %v2167 = vpop.f32.mrf.mxu0
  %v2168 = vadd.f32 %v1820, %v2167
  %2169 = vmatmul.bf16.gmra.mxu0 %v1747
  %v2170 = vpop.f32.mrf.mxu0
  %v2171 = vadd.f32 %v1820, %v2170
  %v2172 = vpop.f32.mrf.mxu0
  %v2173 = vadd.f32 %v1820, %v2172
  %2174 = vmatmul.bf16.gmra.mxu0 %v1748
  %v2175 = vpop.f32.mrf.mxu0
  %v2176 = vadd.f32 %v1820, %v2175
  %v2177 = vpop.f32.mrf.mxu0
  %v2178 = vadd.f32 %v1820, %v2177
  %2179 = vmatmul.bf16.gmra.mxu0 %v1749
  %v2180 = vpop.f32.mrf.mxu0
  %v2181 = vadd.f32 %v1820, %v2180
  %v2182 = vpop.f32.mrf.mxu0
  %v2183 = vadd.f32 %v1820, %v2182
  %2184 = vmatmul.bf16.gmra.mxu0 %v1750
  %v2185 = vpop.f32.mrf.mxu0
  %v2186 = vadd.f32 %v1820, %v2185
  %v2187 = vpop.f32.mrf.mxu0
  %v2188 = vadd.f32 %v1820, %v2187
  %2189 = vmatmul.bf16.gmra.mxu0 %v1751
  %v2190 = vpop.f32.mrf.mxu0
  %v2191 = vadd.f32 %v1820, %v2190
  %v2192 = vpop.f32.mrf.mxu0
  %v2193 = vadd.f32 %v1820, %v2192
  %2194 = vmatmul.bf16.gmra.mxu0 %v1752
  %v2195 = vpop.f32.mrf.mxu0
  %v2196 = vadd.f32 %v1820, %v2195
  %v2197 = vpop.f32.mrf.mxu0
  %v2198 = vadd.f32 %v1820, %v2197
  %2199 = vmatmul.bf16.gmra.mxu0 %v1753
  %v2200 = vpop.f32.mrf.mxu0
  %v2201 = vadd.f32 %v1820, %v2200
  %v2202 = vpop.f32.mrf.mxu0
  %v2203 = vadd.f32 %v1820, %v2202
  %2204 = vdwg.mxu0
  %2205 = vmatpush.bf16.msra.mxu0 %v2085
  %2206 = vmatpush.bf16.msra.mxu0 %v2077
  %2207 = vmatpush.bf16.msra.mxu0 %v2069
  %2208 = vmatpush.bf16.msra.mxu0 %v2061
  %2209 = vmatpush.bf16.msra.mxu0 %v2053
  %2210 = vmatpush.bf16.msra.mxu0 %v2045
  %2211 = vmatpush.bf16.msra.mxu0 %v2037
  %2212 = vmatpush.bf16.msra.mxu0 %v2029
  %2213 = vmatmul.bf16.gmra.mxu0 %v1746
  %v2214 = vpop.f32.mrf.mxu0
  %v2215 = vadd.f32 %v1821, %v2214
  %v2216 = vpop.f32.mrf.mxu0
  %v2217 = vadd.f32 %v1821, %v2216
  %2218 = vmatmul.bf16.gmra.mxu0 %v1747
  %v2219 = vpop.f32.mrf.mxu0
  %v2220 = vadd.f32 %v1821, %v2219
  %v2221 = vpop.f32.mrf.mxu0
  %v2222 = vadd.f32 %v1821, %v2221
  %2223 = vmatmul.bf16.gmra.mxu0 %v1748
  %v2224 = vpop.f32.mrf.mxu0
  %v2225 = vadd.f32 %v1821, %v2224
  %v2226 = vpop.f32.mrf.mxu0
  %v2227 = vadd.f32 %v1821, %v2226
  %2228 = vmatmul.bf16.gmra.mxu0 %v1749
  %v2229 = vpop.f32.mrf.mxu0
  %v2230 = vadd.f32 %v1821, %v2229
  %v2231 = vpop.f32.mrf.mxu0
  %v2232 = vadd.f32 %v1821, %v2231
  %2233 = vmatmul.bf16.gmra.mxu0 %v1750
  %v2234 = vpop.f32.mrf.mxu0
  %v2235 = vadd.f32 %v1821, %v2234
  %v2236 = vpop.f32.mrf.mxu0
  %v2237 = vadd.f32 %v1821, %v2236
  %2238 = vmatmul.bf16.gmra.mxu0 %v1751
  %v2239 = vpop.f32.mrf.mxu0
  %v2240 = vadd.f32 %v1821, %v2239
  %v2241 = vpop.f32.mrf.mxu0
  %v2242 = vadd.f32 %v1821, %v2241
  %2243 = vmatmul.bf16.gmra.mxu0 %v1752
  %v2244 = vpop.f32.mrf.mxu0
  %v2245 = vadd.f32 %v1821, %v2244
  %v2246 = vpop.f32.mrf.mxu0
  %v2247 = vadd.f32 %v1821, %v2246
  %2248 = vmatmul.bf16.gmra.mxu0 %v1753
  %v2249 = vpop.f32.mrf.mxu0
  %v2250 = vadd.f32 %v1821, %v2249
  %v2251 = vpop.f32.mrf.mxu0
  %v2252 = vadd.f32 %v1821, %v2251
  %2253 = vdwg.mxu0
  %2254 = vmatpush.bf16.msra.mxu0 %v2086
  %2255 = vmatpush.bf16.msra.mxu0 %v2078
  %2256 = vmatpush.bf16.msra.mxu0 %v2070
  %2257 = vmatpush.bf16.msra.mxu0 %v2062
  %2258 = vmatpush.bf16.msra.mxu0 %v2054
  %2259 = vmatpush.bf16.msra.mxu0 %v2046
  %2260 = vmatpush.bf16.msra.mxu0 %v2038
  %2261 = vmatpush.bf16.msra.mxu0 %v2030
  %2262 = vmatmul.bf16.gmra.mxu0 %v1746
  %v2263 = vpop.f32.mrf.mxu0
  %v2264 = vadd.f32 %v1822, %v2263
  %v2265 = vpop.f32.mrf.mxu0
  %v2266 = vadd.f32 %v1822, %v2265
  %2267 = vmatmul.bf16.gmra.mxu0 %v1747
  %v2268 = vpop.f32.mrf.mxu0
  %v2269 = vadd.f32 %v1822, %v2268
  %v2270 = vpop.f32.mrf.mxu0
  %v2271 = vadd.f32 %v1822, %v2270
  %2272 = vmatmul.bf16.gmra.mxu0 %v1748
  %v2273 = vpop.f32.mrf.mxu0
  %v2274 = vadd.f32 %v1822, %v2273
  %v2275 = vpop.f32.mrf.mxu0
  %v2276 = vadd.f32 %v1822, %v2275
  %2277 = vmatmul.bf16.gmra.mxu0 %v1749
  %v2278 = vpop.f32.mrf.mxu0
  %v2279 = vadd.f32 %v1822, %v2278
  %v2280 = vpop.f32.mrf.mxu0
  %v2281 = vadd.f32 %v1822, %v2280
  %2282 = vmatmul.bf16.gmra.mxu0 %v1750
  %v2283 = vpop.f32.mrf.mxu0
  %v2284 = vadd.f32 %v1822, %v2283
  %v2285 = vpop.f32.mrf.mxu0
  %v2286 = vadd.f32 %v1822, %v2285
  %2287 = vmatmul.bf16.gmra.mxu0 %v1751
  %v2288 = vpop.f32.mrf.mxu0
  %v2289 = vadd.f32 %v1822, %v2288
  %v2290 = vpop.f32.mrf.mxu0
  %v2291 = vadd.f32 %v1822, %v2290
  %2292 = vmatmul.bf16.gmra.mxu0 %v1752
  %v2293 = vpop.f32.mrf.mxu0
  %v2294 = vadd.f32 %v1822, %v2293
  %v2295 = vpop.f32.mrf.mxu0
  %v2296 = vadd.f32 %v1822, %v2295
  %2297 = vmatmul.bf16.gmra.mxu0 %v1753
  %v2298 = vpop.f32.mrf.mxu0
  %v2299 = vadd.f32 %v1822, %v2298
  %v2300 = vpop.f32.mrf.mxu0
  %v2301 = vadd.f32 %v1822, %v2300
  %2302 = vdwg.mxu0
  %2303 = vmatpush.bf16.msra.mxu0 %v2087
  %2304 = vmatpush.bf16.msra.mxu0 %v2079
  %2305 = vmatpush.bf16.msra.mxu0 %v2071
  %2306 = vmatpush.bf16.msra.mxu0 %v2063
  %2307 = vmatpush.bf16.msra.mxu0 %v2055
  %2308 = vmatpush.bf16.msra.mxu0 %v2047
  %2309 = vmatpush.bf16.msra.mxu0 %v2039
  %2310 = vmatpush.bf16.msra.mxu0 %v2031
  %2311 = vmatmul.bf16.gmra.mxu0 %v1746
  %v2312 = vpop.f32.mrf.mxu0
  %v2313 = vadd.f32 %v1823, %v2312
  %v2314 = vpop.f32.mrf.mxu0
  %v2315 = vadd.f32 %v1823, %v2314
  %2316 = vmatmul.bf16.gmra.mxu0 %v1747
  %v2317 = vpop.f32.mrf.mxu0
  %v2318 = vadd.f32 %v1823, %v2317
  %v2319 = vpop.f32.mrf.mxu0
  %v2320 = vadd.f32 %v1823, %v2319
  %2321 = vmatmul.bf16.gmra.mxu0 %v1748
  %v2322 = vpop.f32.mrf.mxu0
  %v2323 = vadd.f32 %v1823, %v2322
  %v2324 = vpop.f32.mrf.mxu0
  %v2325 = vadd.f32 %v1823, %v2324
  %2326 = vmatmul.bf16.gmra.mxu0 %v1749
  %v2327 = vpop.f32.mrf.mxu0
  %v2328 = vadd.f32 %v1823, %v2327
  %v2329 = vpop.f32.mrf.mxu0
  %v2330 = vadd.f32 %v1823, %v2329
  %2331 = vmatmul.bf16.gmra.mxu0 %v1750
  %v2332 = vpop.f32.mrf.mxu0
  %v2333 = vadd.f32 %v1823, %v2332
  %v2334 = vpop.f32.mrf.mxu0
  %v2335 = vadd.f32 %v1823, %v2334
  %2336 = vmatmul.bf16.gmra.mxu0 %v1751
  %v2337 = vpop.f32.mrf.mxu0
  %v2338 = vadd.f32 %v1823, %v2337
  %v2339 = vpop.f32.mrf.mxu0
  %v2340 = vadd.f32 %v1823, %v2339
  %2341 = vmatmul.bf16.gmra.mxu0 %v1752
  %v2342 = vpop.f32.mrf.mxu0
  %v2343 = vadd.f32 %v1823, %v2342
  %v2344 = vpop.f32.mrf.mxu0
  %v2345 = vadd.f32 %v1823, %v2344
  %2346 = vmatmul.bf16.gmra.mxu0 %v1753
  %v2347 = vpop.f32.mrf.mxu0
  %v2348 = vadd.f32 %v1823, %v2347
  %v2349 = vpop.f32.mrf.mxu0
  %v2350 = vadd.f32 %v1823, %v2349
  %2351 = vdwg.mxu0
  %2352 = vmatpush.bf16.msra.mxu0 %v2088
  %2353 = vmatpush.bf16.msra.mxu0 %v2080
  %2354 = vmatpush.bf16.msra.mxu0 %v2072
  %2355 = vmatpush.bf16.msra.mxu0 %v2064
  %2356 = vmatpush.bf16.msra.mxu0 %v2056
  %2357 = vmatpush.bf16.msra.mxu0 %v2048
  %2358 = vmatpush.bf16.msra.mxu0 %v2040
  %2359 = vmatpush.bf16.msra.mxu0 %v2032
  %2360 = vmatmul.bf16.gmra.mxu0 %v1746
  %v2361 = vpop.f32.mrf.mxu0
  %v2362 = vadd.f32 %v1824, %v2361
  %v2363 = vpop.f32.mrf.mxu0
  %v2364 = vadd.f32 %v1824, %v2363
  %2365 = vmatmul.bf16.gmra.mxu0 %v1747
  %v2366 = vpop.f32.mrf.mxu0
  %v2367 = vadd.f32 %v1824, %v2366
  %v2368 = vpop.f32.mrf.mxu0
  %v2369 = vadd.f32 %v1824, %v2368
  %2370 = vmatmul.bf16.gmra.mxu0 %v1748
  %v2371 = vpop.f32.mrf.mxu0
  %v2372 = vadd.f32 %v1824, %v2371
  %v2373 = vpop.f32.mrf.mxu0
  %v2374 = vadd.f32 %v1824, %v2373
  %2375 = vmatmul.bf16.gmra.mxu0 %v1749
  %v2376 = vpop.f32.mrf.mxu0
  %v2377 = vadd.f32 %v1824, %v2376
  %v2378 = vpop.f32.mrf.mxu0
  %v2379 = vadd.f32 %v1824, %v2378
  %2380 = vmatmul.bf16.gmra.mxu0 %v1750
  %v2381 = vpop.f32.mrf.mxu0
  %v2382 = vadd.f32 %v1824, %v2381
  %v2383 = vpop.f32.mrf.mxu0
  %v2384 = vadd.f32 %v1824, %v2383
  %2385 = vmatmul.bf16.gmra.mxu0 %v1751
  %v2386 = vpop.f32.mrf.mxu0
  %v2387 = vadd.f32 %v1824, %v2386
  %v2388 = vpop.f32.mrf.mxu0
  %v2389 = vadd.f32 %v1824, %v2388
  %2390 = vmatmul.bf16.gmra.mxu0 %v1752
  %v2391 = vpop.f32.mrf.mxu0
  %v2392 = vadd.f32 %v1824, %v2391
  %v2393 = vpop.f32.mrf.mxu0
  %v2394 = vadd.f32 %v1824, %v2393
  %2395 = vmatmul.bf16.gmra.mxu0 %v1753
  %v2396 = vpop.f32.mrf.mxu0
  %v2397 = vadd.f32 %v1824, %v2396
  %v2398 = vpop.f32.mrf.mxu0
  %v2399 = vadd.f32 %v1824, %v2398
  %2400 = vdwg.mxu0
  %2401 = vmatpush.bf16.msra.mxu0 %v2089
  %2402 = vmatpush.bf16.msra.mxu0 %v2081
  %2403 = vmatpush.bf16.msra.mxu0 %v2073
  %2404 = vmatpush.bf16.msra.mxu0 %v2065
  %2405 = vmatpush.bf16.msra.mxu0 %v2057
  %2406 = vmatpush.bf16.msra.mxu0 %v2049
  %2407 = vmatpush.bf16.msra.mxu0 %v2041
  %2408 = vmatpush.bf16.msra.mxu0 %v2033
  %2409 = vmatmul.bf16.gmra.mxu0 %v1746
  %v2410 = vpop.f32.mrf.mxu0
  %v2411 = vadd.f32 %v1825, %v2410
  %v2412 = vpop.f32.mrf.mxu0
  %v2413 = vadd.f32 %v1825, %v2412
  %2414 = vmatmul.bf16.gmra.mxu0 %v1747
  %v2415 = vpop.f32.mrf.mxu0
  %v2416 = vadd.f32 %v1825, %v2415
  %v2417 = vpop.f32.mrf.mxu0
  %v2418 = vadd.f32 %v1825, %v2417
  %2419 = vmatmul.bf16.gmra.mxu0 %v1748
  %v2420 = vpop.f32.mrf.mxu0
  %v2421 = vadd.f32 %v1825, %v2420
  %v2422 = vpop.f32.mrf.mxu0
  %v2423 = vadd.f32 %v1825, %v2422
  %2424 = vmatmul.bf16.gmra.mxu0 %v1749
  %v2425 = vpop.f32.mrf.mxu0
  %v2426 = vadd.f32 %v1825, %v2425
  %v2427 = vpop.f32.mrf.mxu0
  %v2428 = vadd.f32 %v1825, %v2427
  %2429 = vmatmul.bf16.gmra.mxu0 %v1750
  %v2430 = vpop.f32.mrf.mxu0
  %v2431 = vadd.f32 %v1825, %v2430
  %v2432 = vpop.f32.mrf.mxu0
  %v2433 = vadd.f32 %v1825, %v2432
  %2434 = vmatmul.bf16.gmra.mxu0 %v1751
  %v2435 = vpop.f32.mrf.mxu0
  %v2436 = vadd.f32 %v1825, %v2435
  %v2437 = vpop.f32.mrf.mxu0
  %v2438 = vadd.f32 %v1825, %v2437
  %2439 = vmatmul.bf16.gmra.mxu0 %v1752
  %v2440 = vpop.f32.mrf.mxu0
  %v2441 = vadd.f32 %v1825, %v2440
  %v2442 = vpop.f32.mrf.mxu0
  %v2443 = vadd.f32 %v1825, %v2442
  %2444 = vmatmul.bf16.gmra.mxu0 %v1753
  %v2445 = vpop.f32.mrf.mxu0
  %v2446 = vadd.f32 %v1825, %v2445
  %v2447 = vpop.f32.mrf.mxu0
  %v2448 = vadd.f32 %v1825, %v2447
  %2449 = vdwg.mxu0
  %2450 = vmatpush.bf16.msra.mxu0 %v2090
  %2451 = vmatpush.bf16.msra.mxu0 %v2082
  %2452 = vmatpush.bf16.msra.mxu0 %v2074
  %2453 = vmatpush.bf16.msra.mxu0 %v2066
  %2454 = vmatpush.bf16.msra.mxu0 %v2058
  %2455 = vmatpush.bf16.msra.mxu0 %v2050
  %2456 = vmatpush.bf16.msra.mxu0 %v2042
  %2457 = vmatpush.bf16.msra.mxu0 %v2034
  %2458 = vmatmul.bf16.gmra.mxu0 %v1746
  %v2459 = vpop.f32.mrf.mxu0
  %v2460 = vadd.f32 %v1826, %v2459
  %v2461 = vpop.f32.mrf.mxu0
  %v2462 = vadd.f32 %v1826, %v2461
  %2463 = vmatmul.bf16.gmra.mxu0 %v1747
  %v2464 = vpop.f32.mrf.mxu0
  %v2465 = vadd.f32 %v1826, %v2464
  %v2466 = vpop.f32.mrf.mxu0
  %v2467 = vadd.f32 %v1826, %v2466
  %2468 = vmatmul.bf16.gmra.mxu0 %v1748
  %v2469 = vpop.f32.mrf.mxu0
  %v2470 = vadd.f32 %v1826, %v2469
  %v2471 = vpop.f32.mrf.mxu0
  %v2472 = vadd.f32 %v1826, %v2471
  %2473 = vmatmul.bf16.gmra.mxu0 %v1749
  %v2474 = vpop.f32.mrf.mxu0
  %v2475 = vadd.f32 %v1826, %v2474
  %v2476 = vpop.f32.mrf.mxu0
  %v2477 = vadd.f32 %v1826, %v2476
  %2478 = vmatmul.bf16.gmra.mxu0 %v1750
  %v2479 = vpop.f32.mrf.mxu0
  %v2480 = vadd.f32 %v1826, %v2479
  %v2481 = vpop.f32.mrf.mxu0
  %v2482 = vadd.f32 %v1826, %v2481
  %2483 = vmatmul.bf16.gmra.mxu0 %v1751
  %v2484 = vpop.f32.mrf.mxu0
  %v2485 = vadd.f32 %v1826, %v2484
  %v2486 = vpop.f32.mrf.mxu0
  %v2487 = vadd.f32 %v1826, %v2486
  %2488 = vmatmul.bf16.gmra.mxu0 %v1752
  %v2489 = vpop.f32.mrf.mxu0
  %v2490 = vadd.f32 %v1826, %v2489
  %v2491 = vpop.f32.mrf.mxu0
  %v2492 = vadd.f32 %v1826, %v2491
  %2493 = vmatmul.bf16.gmra.mxu0 %v1753
  %v2494 = vpop.f32.mrf.mxu0
  %v2495 = vadd.f32 %v1826, %v2494
  %v2496 = vpop.f32.mrf.mxu0
  %v2497 = vadd.f32 %v1826, %v2496
  %2498 = vdwg.mxu0
  %2499 = vmatpush.bf16.msra.mxu0 %v2091
  %2500 = vmatpush.bf16.msra.mxu0 %v2083
  %2501 = vmatpush.bf16.msra.mxu0 %v2075
  %2502 = vmatpush.bf16.msra.mxu0 %v2067
  %2503 = vmatpush.bf16.msra.mxu0 %v2059
  %2504 = vmatpush.bf16.msra.mxu0 %v2051
  %2505 = vmatpush.bf16.msra.mxu0 %v2043
  %2506 = vmatpush.bf16.msra.mxu0 %v2035
  %2507 = vmatmul.bf16.gmra.mxu0 %v1746
  %v2508 = vpop.f32.mrf.mxu0
  %v2509 = vadd.f32 %v1827, %v2508
  %v2510 = vpop.f32.mrf.mxu0
  %v2511 = vadd.f32 %v1827, %v2510
  %2512 = vmatmul.bf16.gmra.mxu0 %v1747
  %v2513 = vpop.f32.mrf.mxu0
  %v2514 = vadd.f32 %v1827, %v2513
  %v2515 = vpop.f32.mrf.mxu0
  %v2516 = vadd.f32 %v1827, %v2515
  %2517 = vmatmul.bf16.gmra.mxu0 %v1748
  %v2518 = vpop.f32.mrf.mxu0
  %v2519 = vadd.f32 %v1827, %v2518
  %v2520 = vpop.f32.mrf.mxu0
  %v2521 = vadd.f32 %v1827, %v2520
  %2522 = vmatmul.bf16.gmra.mxu0 %v1749
  %v2523 = vpop.f32.mrf.mxu0
  %v2524 = vadd.f32 %v1827, %v2523
  %v2525 = vpop.f32.mrf.mxu0
  %v2526 = vadd.f32 %v1827, %v2525
  %2527 = vmatmul.bf16.gmra.mxu0 %v1750
  %v2528 = vpop.f32.mrf.mxu0
  %v2529 = vadd.f32 %v1827, %v2528
  %v2530 = vpop.f32.mrf.mxu0
  %v2531 = vadd.f32 %v1827, %v2530
  %2532 = vmatmul.bf16.gmra.mxu0 %v1751
  %v2533 = vpop.f32.mrf.mxu0
  %v2534 = vadd.f32 %v1827, %v2533
  %v2535 = vpop.f32.mrf.mxu0
  %v2536 = vadd.f32 %v1827, %v2535
  %2537 = vmatmul.bf16.gmra.mxu0 %v1752
  %v2538 = vpop.f32.mrf.mxu0
  %v2539 = vadd.f32 %v1827, %v2538
  %v2540 = vpop.f32.mrf.mxu0
  %v2541 = vadd.f32 %v1827, %v2540
  %2542 = vmatmul.bf16.gmra.mxu0 %v1753
  %v2543 = vpop.f32.mrf.mxu0
  %v2544 = vadd.f32 %v1827, %v2543
  %v2545 = vpop.f32.mrf.mxu0
  %v2546 = vadd.f32 %v1827, %v2545
  %2547 = vdwg.mxu0
  %v2548 = vmax.f32 %v2166, 0.0
  %v2549 = vmax.f32 %v2215, 0.0
  %v2550 = vmax.f32 %v2264, 0.0
  %v2551 = vmax.f32 %v2313, 0.0
  %v2552 = vmax.f32 %v2362, 0.0
  %v2553 = vmax.f32 %v2411, 0.0
  %v2554 = vmax.f32 %v2460, 0.0
  %v2555 = vmax.f32 %v2509, 0.0
  %v2556 = vmax.f32 %v2168, 0.0
  %v2557 = vmax.f32 %v2217, 0.0
  %v2558 = vmax.f32 %v2266, 0.0
  %v2559 = vmax.f32 %v2315, 0.0
  %v2560 = vmax.f32 %v2364, 0.0
  %v2561 = vmax.f32 %v2413, 0.0
  %v2562 = vmax.f32 %v2462, 0.0
  %v2563 = vmax.f32 %v2511, 0.0
  %v2564 = vmax.f32 %v2171, 0.0
  %v2565 = vmax.f32 %v2220, 0.0
  %v2566 = vmax.f32 %v2269, 0.0
  %v2567 = vmax.f32 %v2318, 0.0
  %v2568 = vmax.f32 %v2367, 0.0
  %v2569 = vmax.f32 %v2416, 0.0
  %v2570 = vmax.f32 %v2465, 0.0
  %v2571 = vmax.f32 %v2514, 0.0
  %v2572 = vmax.f32 %v2173, 0.0
  %v2573 = vmax.f32 %v2222, 0.0
  %v2574 = vmax.f32 %v2271, 0.0
  %v2575 = vmax.f32 %v2320, 0.0
  %v2576 = vmax.f32 %v2369, 0.0
  %v2577 = vmax.f32 %v2418, 0.0
  %v2578 = vmax.f32 %v2467, 0.0
  %v2579 = vmax.f32 %v2516, 0.0
  %v2580 = vmax.f32 %v2176, 0.0
  %v2581 = vmax.f32 %v2225, 0.0
  %v2582 = vmax.f32 %v2274, 0.0
  %v2583 = vmax.f32 %v2323, 0.0
  %v2584 = vmax.f32 %v2372, 0.0
  %v2585 = vmax.f32 %v2421, 0.0
  %v2586 = vmax.f32 %v2470, 0.0
  %v2587 = vmax.f32 %v2519, 0.0
  %v2588 = vmax.f32 %v2178, 0.0
  %v2589 = vmax.f32 %v2227, 0.0
  %v2590 = vmax.f32 %v2276, 0.0
  %v2591 = vmax.f32 %v2325, 0.0
  %v2592 = vmax.f32 %v2374, 0.0
  %v2593 = vmax.f32 %v2423, 0.0
  %v2594 = vmax.f32 %v2472, 0.0
  %v2595 = vmax.f32 %v2521, 0.0
  %v2596 = vmax.f32 %v2181, 0.0
  %v2597 = vmax.f32 %v2230, 0.0
  %v2598 = vmax.f32 %v2279, 0.0
  %v2599 = vmax.f32 %v2328, 0.0
  %v2600 = vmax.f32 %v2377, 0.0
  %v2601 = vmax.f32 %v2426, 0.0
  %v2602 = vmax.f32 %v2475, 0.0
  %v2603 = vmax.f32 %v2524, 0.0
  %v2604 = vmax.f32 %v2183, 0.0
  %v2605 = vmax.f32 %v2232, 0.0
  %v2606 = vmax.f32 %v2281, 0.0
  %v2607 = vmax.f32 %v2330, 0.0
  %v2608 = vmax.f32 %v2379, 0.0
  %v2609 = vmax.f32 %v2428, 0.0
  %v2610 = vmax.f32 %v2477, 0.0
  %v2611 = vmax.f32 %v2526, 0.0
  %v2612 = vmax.f32 %v2186, 0.0
  %v2613 = vmax.f32 %v2235, 0.0
  %v2614 = vmax.f32 %v2284, 0.0
  %v2615 = vmax.f32 %v2333, 0.0
  %v2616 = vmax.f32 %v2382, 0.0
  %v2617 = vmax.f32 %v2431, 0.0
  %v2618 = vmax.f32 %v2480, 0.0
  %v2619 = vmax.f32 %v2529, 0.0
  %v2620 = vmax.f32 %v2188, 0.0
  %v2621 = vmax.f32 %v2237, 0.0
  %v2622 = vmax.f32 %v2286, 0.0
  %v2623 = vmax.f32 %v2335, 0.0
  %v2624 = vmax.f32 %v2384, 0.0
  %v2625 = vmax.f32 %v2433, 0.0
  %v2626 = vmax.f32 %v2482, 0.0
  %v2627 = vmax.f32 %v2531, 0.0
  %v2628 = vmax.f32 %v2191, 0.0
  %v2629 = vmax.f32 %v2240, 0.0
  %v2630 = vmax.f32 %v2289, 0.0
  %v2631 = vmax.f32 %v2338, 0.0
  %v2632 = vmax.f32 %v2387, 0.0
  %v2633 = vmax.f32 %v2436, 0.0
  %v2634 = vmax.f32 %v2485, 0.0
  %v2635 = vmax.f32 %v2534, 0.0
  %v2636 = vmax.f32 %v2193, 0.0
  %v2637 = vmax.f32 %v2242, 0.0
  %v2638 = vmax.f32 %v2291, 0.0
  %v2639 = vmax.f32 %v2340, 0.0
  %v2640 = vmax.f32 %v2389, 0.0
  %v2641 = vmax.f32 %v2438, 0.0
  %v2642 = vmax.f32 %v2487, 0.0
  %v2643 = vmax.f32 %v2536, 0.0
  %v2644 = vmax.f32 %v2196, 0.0
  %v2645 = vmax.f32 %v2245, 0.0
  %v2646 = vmax.f32 %v2294, 0.0
  %v2647 = vmax.f32 %v2343, 0.0
  %v2648 = vmax.f32 %v2392, 0.0
  %v2649 = vmax.f32 %v2441, 0.0
  %v2650 = vmax.f32 %v2490, 0.0
  %v2651 = vmax.f32 %v2539, 0.0
  %v2652 = vmax.f32 %v2198, 0.0
  %v2653 = vmax.f32 %v2247, 0.0
  %v2654 = vmax.f32 %v2296, 0.0
  %v2655 = vmax.f32 %v2345, 0.0
  %v2656 = vmax.f32 %v2394, 0.0
  %v2657 = vmax.f32 %v2443, 0.0
  %v2658 = vmax.f32 %v2492, 0.0
  %v2659 = vmax.f32 %v2541, 0.0
  %v2660 = vmax.f32 %v2201, 0.0
  %v2661 = vmax.f32 %v2250, 0.0
  %v2662 = vmax.f32 %v2299, 0.0
  %v2663 = vmax.f32 %v2348, 0.0
  %v2664 = vmax.f32 %v2397, 0.0
  %v2665 = vmax.f32 %v2446, 0.0
  %v2666 = vmax.f32 %v2495, 0.0
  %v2667 = vmax.f32 %v2544, 0.0
  %v2668 = vmax.f32 %v2203, 0.0
  %v2669 = vmax.f32 %v2252, 0.0
  %v2670 = vmax.f32 %v2301, 0.0
  %v2671 = vmax.f32 %v2350, 0.0
  %v2672 = vmax.f32 %v2399, 0.0
  %v2673 = vmax.f32 %v2448, 0.0
  %v2674 = vmax.f32 %v2497, 0.0
  %v2675 = vmax.f32 %v2546, 0.0
  %v2676 = vrot.slane %v2548, 4
  %v2677 = vmax.f32 %v2548, %v2676
  %v2678 = vrot.slane %v2677, 2
  %v2679 = vmax.f32 %v2677, %v2678
  %v2680 = vrot.slane %v2679, 1
  %v2681 = vmax.f32 %v2679, %v2680
  %v2682 = vrot.slane %v2549, 4
  %v2683 = vmax.f32 %v2549, %v2682
  %v2684 = vrot.slane %v2683, 2
  %v2685 = vmax.f32 %v2683, %v2684
  %v2686 = vrot.slane %v2685, 1
  %v2687 = vmax.f32 %v2685, %v2686
  %v2688 = vrot.slane %v2550, 4
  %v2689 = vmax.f32 %v2550, %v2688
  %v2690 = vrot.slane %v2689, 2
  %v2691 = vmax.f32 %v2689, %v2690
  %v2692 = vrot.slane %v2691, 1
  %v2693 = vmax.f32 %v2691, %v2692
  %v2694 = vrot.slane %v2551, 4
  %v2695 = vmax.f32 %v2551, %v2694
  %v2696 = vrot.slane %v2695, 2
  %v2697 = vmax.f32 %v2695, %v2696
  %v2698 = vrot.slane %v2697, 1
  %v2699 = vmax.f32 %v2697, %v2698
  %v2700 = vrot.slane %v2552, 4
  %v2701 = vmax.f32 %v2552, %v2700
  %v2702 = vrot.slane %v2701, 2
  %v2703 = vmax.f32 %v2701, %v2702
  %v2704 = vrot.slane %v2703, 1
  %v2705 = vmax.f32 %v2703, %v2704
  %v2706 = vrot.slane %v2553, 4
  %v2707 = vmax.f32 %v2553, %v2706
  %v2708 = vrot.slane %v2707, 2
  %v2709 = vmax.f32 %v2707, %v2708
  %v2710 = vrot.slane %v2709, 1
  %v2711 = vmax.f32 %v2709, %v2710
  %v2712 = vrot.slane %v2554, 4
  %v2713 = vmax.f32 %v2554, %v2712
  %v2714 = vrot.slane %v2713, 2
  %v2715 = vmax.f32 %v2713, %v2714
  %v2716 = vrot.slane %v2715, 1
  %v2717 = vmax.f32 %v2715, %v2716
  %v2718 = vrot.slane %v2555, 4
  %v2719 = vmax.f32 %v2555, %v2718
  %v2720 = vrot.slane %v2719, 2
  %v2721 = vmax.f32 %v2719, %v2720
  %v2722 = vrot.slane %v2721, 1
  %v2723 = vmax.f32 %v2721, %v2722
  %v2724 = vrot.slane %v2556, 4
  %v2725 = vmax.f32 %v2556, %v2724
  %v2726 = vrot.slane %v2725, 2
  %v2727 = vmax.f32 %v2725, %v2726
  %v2728 = vrot.slane %v2727, 1
  %v2729 = vmax.f32 %v2727, %v2728
  %v2730 = vrot.slane %v2557, 4
  %v2731 = vmax.f32 %v2557, %v2730
  %v2732 = vrot.slane %v2731, 2
  %v2733 = vmax.f32 %v2731, %v2732
  %v2734 = vrot.slane %v2733, 1
  %v2735 = vmax.f32 %v2733, %v2734
  %v2736 = vrot.slane %v2558, 4
  %v2737 = vmax.f32 %v2558, %v2736
  %v2738 = vrot.slane %v2737, 2
  %v2739 = vmax.f32 %v2737, %v2738
  %v2740 = vrot.slane %v2739, 1
  %v2741 = vmax.f32 %v2739, %v2740
  %v2742 = vrot.slane %v2559, 4
  %v2743 = vmax.f32 %v2559, %v2742
  %v2744 = vrot.slane %v2743, 2
  %v2745 = vmax.f32 %v2743, %v2744
  %v2746 = vrot.slane %v2745, 1
  %v2747 = vmax.f32 %v2745, %v2746
  %v2748 = vrot.slane %v2560, 4
  %v2749 = vmax.f32 %v2560, %v2748
  %v2750 = vrot.slane %v2749, 2
  %v2751 = vmax.f32 %v2749, %v2750
  %v2752 = vrot.slane %v2751, 1
  %v2753 = vmax.f32 %v2751, %v2752
  %v2754 = vrot.slane %v2561, 4
  %v2755 = vmax.f32 %v2561, %v2754
  %v2756 = vrot.slane %v2755, 2
  %v2757 = vmax.f32 %v2755, %v2756
  %v2758 = vrot.slane %v2757, 1
  %v2759 = vmax.f32 %v2757, %v2758
  %v2760 = vrot.slane %v2562, 4
  %v2761 = vmax.f32 %v2562, %v2760
  %v2762 = vrot.slane %v2761, 2
  %v2763 = vmax.f32 %v2761, %v2762
  %v2764 = vrot.slane %v2763, 1
  %v2765 = vmax.f32 %v2763, %v2764
  %v2766 = vrot.slane %v2563, 4
  %v2767 = vmax.f32 %v2563, %v2766
  %v2768 = vrot.slane %v2767, 2
  %v2769 = vmax.f32 %v2767, %v2768
  %v2770 = vrot.slane %v2769, 1
  %v2771 = vmax.f32 %v2769, %v2770
  %v2772 = vrot.slane %v2564, 4
  %v2773 = vmax.f32 %v2564, %v2772
  %v2774 = vrot.slane %v2773, 2
  %v2775 = vmax.f32 %v2773, %v2774
  %v2776 = vrot.slane %v2775, 1
  %v2777 = vmax.f32 %v2775, %v2776
  %v2778 = vrot.slane %v2565, 4
  %v2779 = vmax.f32 %v2565, %v2778
  %v2780 = vrot.slane %v2779, 2
  %v2781 = vmax.f32 %v2779, %v2780
  %v2782 = vrot.slane %v2781, 1
  %v2783 = vmax.f32 %v2781, %v2782
  %v2784 = vrot.slane %v2566, 4
  %v2785 = vmax.f32 %v2566, %v2784
  %v2786 = vrot.slane %v2785, 2
  %v2787 = vmax.f32 %v2785, %v2786
  %v2788 = vrot.slane %v2787, 1
  %v2789 = vmax.f32 %v2787, %v2788
  %v2790 = vrot.slane %v2567, 4
  %v2791 = vmax.f32 %v2567, %v2790
  %v2792 = vrot.slane %v2791, 2
  %v2793 = vmax.f32 %v2791, %v2792
  %v2794 = vrot.slane %v2793, 1
  %v2795 = vmax.f32 %v2793, %v2794
  %v2796 = vrot.slane %v2568, 4
  %v2797 = vmax.f32 %v2568, %v2796
  %v2798 = vrot.slane %v2797, 2
  %v2799 = vmax.f32 %v2797, %v2798
  %v2800 = vrot.slane %v2799, 1
  %v2801 = vmax.f32 %v2799, %v2800
  %v2802 = vrot.slane %v2569, 4
  %v2803 = vmax.f32 %v2569, %v2802
  %v2804 = vrot.slane %v2803, 2
  %v2805 = vmax.f32 %v2803, %v2804
  %v2806 = vrot.slane %v2805, 1
  %v2807 = vmax.f32 %v2805, %v2806
  %v2808 = vrot.slane %v2570, 4
  %v2809 = vmax.f32 %v2570, %v2808
  %v2810 = vrot.slane %v2809, 2
  %v2811 = vmax.f32 %v2809, %v2810
  %v2812 = vrot.slane %v2811, 1
  %v2813 = vmax.f32 %v2811, %v2812
  %v2814 = vrot.slane %v2571, 4
  %v2815 = vmax.f32 %v2571, %v2814
  %v2816 = vrot.slane %v2815, 2
  %v2817 = vmax.f32 %v2815, %v2816
  %v2818 = vrot.slane %v2817, 1
  %v2819 = vmax.f32 %v2817, %v2818
  %v2820 = vrot.slane %v2572, 4
  %v2821 = vmax.f32 %v2572, %v2820
  %v2822 = vrot.slane %v2821, 2
  %v2823 = vmax.f32 %v2821, %v2822
  %v2824 = vrot.slane %v2823, 1
  %v2825 = vmax.f32 %v2823, %v2824
  %v2826 = vrot.slane %v2573, 4
  %v2827 = vmax.f32 %v2573, %v2826
  %v2828 = vrot.slane %v2827, 2
  %v2829 = vmax.f32 %v2827, %v2828
  %v2830 = vrot.slane %v2829, 1
  %v2831 = vmax.f32 %v2829, %v2830
  %v2832 = vrot.slane %v2574, 4
  %v2833 = vmax.f32 %v2574, %v2832
  %v2834 = vrot.slane %v2833, 2
  %v2835 = vmax.f32 %v2833, %v2834
  %v2836 = vrot.slane %v2835, 1
  %v2837 = vmax.f32 %v2835, %v2836
  %v2838 = vrot.slane %v2575, 4
  %v2839 = vmax.f32 %v2575, %v2838
  %v2840 = vrot.slane %v2839, 2
  %v2841 = vmax.f32 %v2839, %v2840
  %v2842 = vrot.slane %v2841, 1
  %v2843 = vmax.f32 %v2841, %v2842
  %v2844 = vrot.slane %v2576, 4
  %v2845 = vmax.f32 %v2576, %v2844
  %v2846 = vrot.slane %v2845, 2
  %v2847 = vmax.f32 %v2845, %v2846
  %v2848 = vrot.slane %v2847, 1
  %v2849 = vmax.f32 %v2847, %v2848
  %v2850 = vrot.slane %v2577, 4
  %v2851 = vmax.f32 %v2577, %v2850
  %v2852 = vrot.slane %v2851, 2
  %v2853 = vmax.f32 %v2851, %v2852
  %v2854 = vrot.slane %v2853, 1
  %v2855 = vmax.f32 %v2853, %v2854
  %v2856 = vrot.slane %v2578, 4
  %v2857 = vmax.f32 %v2578, %v2856
  %v2858 = vrot.slane %v2857, 2
  %v2859 = vmax.f32 %v2857, %v2858
  %v2860 = vrot.slane %v2859, 1
  %v2861 = vmax.f32 %v2859, %v2860
  %v2862 = vrot.slane %v2579, 4
  %v2863 = vmax.f32 %v2579, %v2862
  %v2864 = vrot.slane %v2863, 2
  %v2865 = vmax.f32 %v2863, %v2864
  %v2866 = vrot.slane %v2865, 1
  %v2867 = vmax.f32 %v2865, %v2866
  %v2868 = vrot.slane %v2580, 4
  %v2869 = vmax.f32 %v2580, %v2868
  %v2870 = vrot.slane %v2869, 2
  %v2871 = vmax.f32 %v2869, %v2870
  %v2872 = vrot.slane %v2871, 1
  %v2873 = vmax.f32 %v2871, %v2872
  %v2874 = vrot.slane %v2581, 4
  %v2875 = vmax.f32 %v2581, %v2874
  %v2876 = vrot.slane %v2875, 2
  %v2877 = vmax.f32 %v2875, %v2876
  %v2878 = vrot.slane %v2877, 1
  %v2879 = vmax.f32 %v2877, %v2878
  %v2880 = vrot.slane %v2582, 4
  %v2881 = vmax.f32 %v2582, %v2880
  %v2882 = vrot.slane %v2881, 2
  %v2883 = vmax.f32 %v2881, %v2882
  %v2884 = vrot.slane %v2883, 1
  %v2885 = vmax.f32 %v2883, %v2884
  %v2886 = vrot.slane %v2583, 4
  %v2887 = vmax.f32 %v2583, %v2886
  %v2888 = vrot.slane %v2887, 2
  %v2889 = vmax.f32 %v2887, %v2888
  %v2890 = vrot.slane %v2889, 1
  %v2891 = vmax.f32 %v2889, %v2890
  %v2892 = vrot.slane %v2584, 4
  %v2893 = vmax.f32 %v2584, %v2892
  %v2894 = vrot.slane %v2893, 2
  %v2895 = vmax.f32 %v2893, %v2894
  %v2896 = vrot.slane %v2895, 1
  %v2897 = vmax.f32 %v2895, %v2896
  %v2898 = vrot.slane %v2585, 4
  %v2899 = vmax.f32 %v2585, %v2898
  %v2900 = vrot.slane %v2899, 2
  %v2901 = vmax.f32 %v2899, %v2900
  %v2902 = vrot.slane %v2901, 1
  %v2903 = vmax.f32 %v2901, %v2902
  %v2904 = vrot.slane %v2586, 4
  %v2905 = vmax.f32 %v2586, %v2904
  %v2906 = vrot.slane %v2905, 2
  %v2907 = vmax.f32 %v2905, %v2906
  %v2908 = vrot.slane %v2907, 1
  %v2909 = vmax.f32 %v2907, %v2908
  %v2910 = vrot.slane %v2587, 4
  %v2911 = vmax.f32 %v2587, %v2910
  %v2912 = vrot.slane %v2911, 2
  %v2913 = vmax.f32 %v2911, %v2912
  %v2914 = vrot.slane %v2913, 1
  %v2915 = vmax.f32 %v2913, %v2914
  %v2916 = vrot.slane %v2588, 4
  %v2917 = vmax.f32 %v2588, %v2916
  %v2918 = vrot.slane %v2917, 2
  %v2919 = vmax.f32 %v2917, %v2918
  %v2920 = vrot.slane %v2919, 1
  %v2921 = vmax.f32 %v2919, %v2920
  %v2922 = vrot.slane %v2589, 4
  %v2923 = vmax.f32 %v2589, %v2922
  %v2924 = vrot.slane %v2923, 2
  %v2925 = vmax.f32 %v2923, %v2924
  %v2926 = vrot.slane %v2925, 1
  %v2927 = vmax.f32 %v2925, %v2926
  %v2928 = vrot.slane %v2590, 4
  %v2929 = vmax.f32 %v2590, %v2928
  %v2930 = vrot.slane %v2929, 2
  %v2931 = vmax.f32 %v2929, %v2930
  %v2932 = vrot.slane %v2931, 1
  %v2933 = vmax.f32 %v2931, %v2932
  %v2934 = vrot.slane %v2591, 4
  %v2935 = vmax.f32 %v2591, %v2934
  %v2936 = vrot.slane %v2935, 2
  %v2937 = vmax.f32 %v2935, %v2936
  %v2938 = vrot.slane %v2937, 1
  %v2939 = vmax.f32 %v2937, %v2938
  %v2940 = vrot.slane %v2592, 4
  %v2941 = vmax.f32 %v2592, %v2940
  %v2942 = vrot.slane %v2941, 2
  %v2943 = vmax.f32 %v2941, %v2942
  %v2944 = vrot.slane %v2943, 1
  %v2945 = vmax.f32 %v2943, %v2944
  %v2946 = vrot.slane %v2593, 4
  %v2947 = vmax.f32 %v2593, %v2946
  %v2948 = vrot.slane %v2947, 2
  %v2949 = vmax.f32 %v2947, %v2948
  %v2950 = vrot.slane %v2949, 1
  %v2951 = vmax.f32 %v2949, %v2950
  %v2952 = vrot.slane %v2594, 4
  %v2953 = vmax.f32 %v2594, %v2952
  %v2954 = vrot.slane %v2953, 2
  %v2955 = vmax.f32 %v2953, %v2954
  %v2956 = vrot.slane %v2955, 1
  %v2957 = vmax.f32 %v2955, %v2956
  %v2958 = vrot.slane %v2595, 4
  %v2959 = vmax.f32 %v2595, %v2958
  %v2960 = vrot.slane %v2959, 2
  %v2961 = vmax.f32 %v2959, %v2960
  %v2962 = vrot.slane %v2961, 1
  %v2963 = vmax.f32 %v2961, %v2962
  %v2964 = vrot.slane %v2596, 4
  %v2965 = vmax.f32 %v2596, %v2964
  %v2966 = vrot.slane %v2965, 2
  %v2967 = vmax.f32 %v2965, %v2966
  %v2968 = vrot.slane %v2967, 1
  %v2969 = vmax.f32 %v2967, %v2968
  %v2970 = vrot.slane %v2597, 4
  %v2971 = vmax.f32 %v2597, %v2970
  %v2972 = vrot.slane %v2971, 2
  %v2973 = vmax.f32 %v2971, %v2972
  %v2974 = vrot.slane %v2973, 1
  %v2975 = vmax.f32 %v2973, %v2974
  %v2976 = vrot.slane %v2598, 4
  %v2977 = vmax.f32 %v2598, %v2976
  %v2978 = vrot.slane %v2977, 2
  %v2979 = vmax.f32 %v2977, %v2978
  %v2980 = vrot.slane %v2979, 1
  %v2981 = vmax.f32 %v2979, %v2980
  %v2982 = vrot.slane %v2599, 4
  %v2983 = vmax.f32 %v2599, %v2982
  %v2984 = vrot.slane %v2983, 2
  %v2985 = vmax.f32 %v2983, %v2984
  %v2986 = vrot.slane %v2985, 1
  %v2987 = vmax.f32 %v2985, %v2986
  %v2988 = vrot.slane %v2600, 4
  %v2989 = vmax.f32 %v2600, %v2988
  %v2990 = vrot.slane %v2989, 2
  %v2991 = vmax.f32 %v2989, %v2990
  %v2992 = vrot.slane %v2991, 1
  %v2993 = vmax.f32 %v2991, %v2992
  %v2994 = vrot.slane %v2601, 4
  %v2995 = vmax.f32 %v2601, %v2994
  %v2996 = vrot.slane %v2995, 2
  %v2997 = vmax.f32 %v2995, %v2996
  %v2998 = vrot.slane %v2997, 1
  %v2999 = vmax.f32 %v2997, %v2998
  %v3000 = vrot.slane %v2602, 4
  %v3001 = vmax.f32 %v2602, %v3000
  %v3002 = vrot.slane %v3001, 2
  %v3003 = vmax.f32 %v3001, %v3002
  %v3004 = vrot.slane %v3003, 1
  %v3005 = vmax.f32 %v3003, %v3004
  %v3006 = vrot.slane %v2603, 4
  %v3007 = vmax.f32 %v2603, %v3006
  %v3008 = vrot.slane %v3007, 2
  %v3009 = vmax.f32 %v3007, %v3008
  %v3010 = vrot.slane %v3009, 1
  %v3011 = vmax.f32 %v3009, %v3010
  %v3012 = vrot.slane %v2604, 4
  %v3013 = vmax.f32 %v2604, %v3012
  %v3014 = vrot.slane %v3013, 2
  %v3015 = vmax.f32 %v3013, %v3014
  %v3016 = vrot.slane %v3015, 1
  %v3017 = vmax.f32 %v3015, %v3016
  %v3018 = vrot.slane %v2605, 4
  %v3019 = vmax.f32 %v2605, %v3018
  %v3020 = vrot.slane %v3019, 2
  %v3021 = vmax.f32 %v3019, %v3020
  %v3022 = vrot.slane %v3021, 1
  %v3023 = vmax.f32 %v3021, %v3022
  %v3024 = vrot.slane %v2606, 4
  %v3025 = vmax.f32 %v2606, %v3024
  %v3026 = vrot.slane %v3025, 2
  %v3027 = vmax.f32 %v3025, %v3026
  %v3028 = vrot.slane %v3027, 1
  %v3029 = vmax.f32 %v3027, %v3028
  %v3030 = vrot.slane %v2607, 4
  %v3031 = vmax.f32 %v2607, %v3030
  %v3032 = vrot.slane %v3031, 2
  %v3033 = vmax.f32 %v3031, %v3032
  %v3034 = vrot.slane %v3033, 1
  %v3035 = vmax.f32 %v3033, %v3034
  %v3036 = vrot.slane %v2608, 4
  %v3037 = vmax.f32 %v2608, %v3036
  %v3038 = vrot.slane %v3037, 2
  %v3039 = vmax.f32 %v3037, %v3038
  %v3040 = vrot.slane %v3039, 1
  %v3041 = vmax.f32 %v3039, %v3040
  %v3042 = vrot.slane %v2609, 4
  %v3043 = vmax.f32 %v2609, %v3042
  %v3044 = vrot.slane %v3043, 2
  %v3045 = vmax.f32 %v3043, %v3044
  %v3046 = vrot.slane %v3045, 1
  %v3047 = vmax.f32 %v3045, %v3046
  %v3048 = vrot.slane %v2610, 4
  %v3049 = vmax.f32 %v2610, %v3048
  %v3050 = vrot.slane %v3049, 2
  %v3051 = vmax.f32 %v3049, %v3050
  %v3052 = vrot.slane %v3051, 1
  %v3053 = vmax.f32 %v3051, %v3052
  %v3054 = vrot.slane %v2611, 4
  %v3055 = vmax.f32 %v2611, %v3054
  %v3056 = vrot.slane %v3055, 2
  %v3057 = vmax.f32 %v3055, %v3056
  %v3058 = vrot.slane %v3057, 1
  %v3059 = vmax.f32 %v3057, %v3058
  %v3060 = vrot.slane %v2612, 4
  %v3061 = vmax.f32 %v2612, %v3060
  %v3062 = vrot.slane %v3061, 2
  %v3063 = vmax.f32 %v3061, %v3062
  %v3064 = vrot.slane %v3063, 1
  %v3065 = vmax.f32 %v3063, %v3064
  %v3066 = vrot.slane %v2613, 4
  %v3067 = vmax.f32 %v2613, %v3066
  %v3068 = vrot.slane %v3067, 2
  %v3069 = vmax.f32 %v3067, %v3068
  %v3070 = vrot.slane %v3069, 1
  %v3071 = vmax.f32 %v3069, %v3070
  %v3072 = vrot.slane %v2614, 4
  %v3073 = vmax.f32 %v2614, %v3072
  %v3074 = vrot.slane %v3073, 2
  %v3075 = vmax.f32 %v3073, %v3074
  %v3076 = vrot.slane %v3075, 1
  %v3077 = vmax.f32 %v3075, %v3076
  %v3078 = vrot.slane %v2615, 4
  %v3079 = vmax.f32 %v2615, %v3078
  %v3080 = vrot.slane %v3079, 2
  %v3081 = vmax.f32 %v3079, %v3080
  %v3082 = vrot.slane %v3081, 1
  %v3083 = vmax.f32 %v3081, %v3082
  %v3084 = vrot.slane %v2616, 4
  %v3085 = vmax.f32 %v2616, %v3084
  %v3086 = vrot.slane %v3085, 2
  %v3087 = vmax.f32 %v3085, %v3086
  %v3088 = vrot.slane %v3087, 1
  %v3089 = vmax.f32 %v3087, %v3088
  %v3090 = vrot.slane %v2617, 4
  %v3091 = vmax.f32 %v2617, %v3090
  %v3092 = vrot.slane %v3091, 2
  %v3093 = vmax.f32 %v3091, %v3092
  %v3094 = vrot.slane %v3093, 1
  %v3095 = vmax.f32 %v3093, %v3094
  %v3096 = vrot.slane %v2618, 4
  %v3097 = vmax.f32 %v2618, %v3096
  %v3098 = vrot.slane %v3097, 2
  %v3099 = vmax.f32 %v3097, %v3098
  %v3100 = vrot.slane %v3099, 1
  %v3101 = vmax.f32 %v3099, %v3100
  %v3102 = vrot.slane %v2619, 4
  %v3103 = vmax.f32 %v2619, %v3102
  %v3104 = vrot.slane %v3103, 2
  %v3105 = vmax.f32 %v3103, %v3104
  %v3106 = vrot.slane %v3105, 1
  %v3107 = vmax.f32 %v3105, %v3106
  %v3108 = vrot.slane %v2620, 4
  %v3109 = vmax.f32 %v2620, %v3108
  %v3110 = vrot.slane %v3109, 2
  %v3111 = vmax.f32 %v3109, %v3110
  %v3112 = vrot.slane %v3111, 1
  %v3113 = vmax.f32 %v3111, %v3112
  %v3114 = vrot.slane %v2621, 4
  %v3115 = vmax.f32 %v2621, %v3114
  %v3116 = vrot.slane %v3115, 2
  %v3117 = vmax.f32 %v3115, %v3116
  %v3118 = vrot.slane %v3117, 1
  %v3119 = vmax.f32 %v3117, %v3118
  %v3120 = vrot.slane %v2622, 4
  %v3121 = vmax.f32 %v2622, %v3120
  %v3122 = vrot.slane %v3121, 2
  %v3123 = vmax.f32 %v3121, %v3122
  %v3124 = vrot.slane %v3123, 1
  %v3125 = vmax.f32 %v3123, %v3124
  %v3126 = vrot.slane %v2623, 4
  %v3127 = vmax.f32 %v2623, %v3126
  %v3128 = vrot.slane %v3127, 2
  %v3129 = vmax.f32 %v3127, %v3128
  %v3130 = vrot.slane %v3129, 1
  %v3131 = vmax.f32 %v3129, %v3130
  %v3132 = vrot.slane %v2624, 4
  %v3133 = vmax.f32 %v2624, %v3132
  %v3134 = vrot.slane %v3133, 2
  %v3135 = vmax.f32 %v3133, %v3134
  %v3136 = vrot.slane %v3135, 1
  %v3137 = vmax.f32 %v3135, %v3136
  %v3138 = vrot.slane %v2625, 4
  %v3139 = vmax.f32 %v2625, %v3138
  %v3140 = vrot.slane %v3139, 2
  %v3141 = vmax.f32 %v3139, %v3140
  %v3142 = vrot.slane %v3141, 1
  %v3143 = vmax.f32 %v3141, %v3142
  %v3144 = vrot.slane %v2626, 4
  %v3145 = vmax.f32 %v2626, %v3144
  %v3146 = vrot.slane %v3145, 2
  %v3147 = vmax.f32 %v3145, %v3146
  %v3148 = vrot.slane %v3147, 1
  %v3149 = vmax.f32 %v3147, %v3148
  %v3150 = vrot.slane %v2627, 4
  %v3151 = vmax.f32 %v2627, %v3150
  %v3152 = vrot.slane %v3151, 2
  %v3153 = vmax.f32 %v3151, %v3152
  %v3154 = vrot.slane %v3153, 1
  %v3155 = vmax.f32 %v3153, %v3154
  %v3156 = vrot.slane %v2628, 4
  %v3157 = vmax.f32 %v2628, %v3156
  %v3158 = vrot.slane %v3157, 2
  %v3159 = vmax.f32 %v3157, %v3158
  %v3160 = vrot.slane %v3159, 1
  %v3161 = vmax.f32 %v3159, %v3160
  %v3162 = vrot.slane %v2629, 4
  %v3163 = vmax.f32 %v2629, %v3162
  %v3164 = vrot.slane %v3163, 2
  %v3165 = vmax.f32 %v3163, %v3164
  %v3166 = vrot.slane %v3165, 1
  %v3167 = vmax.f32 %v3165, %v3166
  %v3168 = vrot.slane %v2630, 4
  %v3169 = vmax.f32 %v2630, %v3168
  %v3170 = vrot.slane %v3169, 2
  %v3171 = vmax.f32 %v3169, %v3170
  %v3172 = vrot.slane %v3171, 1
  %v3173 = vmax.f32 %v3171, %v3172
  %v3174 = vrot.slane %v2631, 4
  %v3175 = vmax.f32 %v2631, %v3174
  %v3176 = vrot.slane %v3175, 2
  %v3177 = vmax.f32 %v3175, %v3176
  %v3178 = vrot.slane %v3177, 1
  %v3179 = vmax.f32 %v3177, %v3178
  %v3180 = vrot.slane %v2632, 4
  %v3181 = vmax.f32 %v2632, %v3180
  %v3182 = vrot.slane %v3181, 2
  %v3183 = vmax.f32 %v3181, %v3182
  %v3184 = vrot.slane %v3183, 1
  %v3185 = vmax.f32 %v3183, %v3184
  %v3186 = vrot.slane %v2633, 4
  %v3187 = vmax.f32 %v2633, %v3186
  %v3188 = vrot.slane %v3187, 2
  %v3189 = vmax.f32 %v3187, %v3188
  %v3190 = vrot.slane %v3189, 1
  %v3191 = vmax.f32 %v3189, %v3190
  %v3192 = vrot.slane %v2634, 4
  %v3193 = vmax.f32 %v2634, %v3192
  %v3194 = vrot.slane %v3193, 2
  %v3195 = vmax.f32 %v3193, %v3194
  %v3196 = vrot.slane %v3195, 1
  %v3197 = vmax.f32 %v3195, %v3196
  %v3198 = vrot.slane %v2635, 4
  %v3199 = vmax.f32 %v2635, %v3198
  %v3200 = vrot.slane %v3199, 2
  %v3201 = vmax.f32 %v3199, %v3200
  %v3202 = vrot.slane %v3201, 1
  %v3203 = vmax.f32 %v3201, %v3202
  %v3204 = vrot.slane %v2636, 4
  %v3205 = vmax.f32 %v2636, %v3204
  %v3206 = vrot.slane %v3205, 2
  %v3207 = vmax.f32 %v3205, %v3206
  %v3208 = vrot.slane %v3207, 1
  %v3209 = vmax.f32 %v3207, %v3208
  %v3210 = vrot.slane %v2637, 4
  %v3211 = vmax.f32 %v2637, %v3210
  %v3212 = vrot.slane %v3211, 2
  %v3213 = vmax.f32 %v3211, %v3212
  %v3214 = vrot.slane %v3213, 1
  %v3215 = vmax.f32 %v3213, %v3214
  %v3216 = vrot.slane %v2638, 4
  %v3217 = vmax.f32 %v2638, %v3216
  %v3218 = vrot.slane %v3217, 2
  %v3219 = vmax.f32 %v3217, %v3218
  %v3220 = vrot.slane %v3219, 1
  %v3221 = vmax.f32 %v3219, %v3220
  %v3222 = vrot.slane %v2639, 4
  %v3223 = vmax.f32 %v2639, %v3222
  %v3224 = vrot.slane %v3223, 2
  %v3225 = vmax.f32 %v3223, %v3224
  %v3226 = vrot.slane %v3225, 1
  %v3227 = vmax.f32 %v3225, %v3226
  %v3228 = vrot.slane %v2640, 4
  %v3229 = vmax.f32 %v2640, %v3228
  %v3230 = vrot.slane %v3229, 2
  %v3231 = vmax.f32 %v3229, %v3230
  %v3232 = vrot.slane %v3231, 1
  %v3233 = vmax.f32 %v3231, %v3232
  %v3234 = vrot.slane %v2641, 4
  %v3235 = vmax.f32 %v2641, %v3234
  %v3236 = vrot.slane %v3235, 2
  %v3237 = vmax.f32 %v3235, %v3236
  %v3238 = vrot.slane %v3237, 1
  %v3239 = vmax.f32 %v3237, %v3238
  %v3240 = vrot.slane %v2642, 4
  %v3241 = vmax.f32 %v2642, %v3240
  %v3242 = vrot.slane %v3241, 2
  %v3243 = vmax.f32 %v3241, %v3242
  %v3244 = vrot.slane %v3243, 1
  %v3245 = vmax.f32 %v3243, %v3244
  %v3246 = vrot.slane %v2643, 4
  %v3247 = vmax.f32 %v2643, %v3246
  %v3248 = vrot.slane %v3247, 2
  %v3249 = vmax.f32 %v3247, %v3248
  %v3250 = vrot.slane %v3249, 1
  %v3251 = vmax.f32 %v3249, %v3250
  %v3252 = vrot.slane %v2644, 4
  %v3253 = vmax.f32 %v2644, %v3252
  %v3254 = vrot.slane %v3253, 2
  %v3255 = vmax.f32 %v3253, %v3254
  %v3256 = vrot.slane %v3255, 1
  %v3257 = vmax.f32 %v3255, %v3256
  %v3258 = vrot.slane %v2645, 4
  %v3259 = vmax.f32 %v2645, %v3258
  %v3260 = vrot.slane %v3259, 2
  %v3261 = vmax.f32 %v3259, %v3260
  %v3262 = vrot.slane %v3261, 1
  %v3263 = vmax.f32 %v3261, %v3262
  %v3264 = vrot.slane %v2646, 4
  %v3265 = vmax.f32 %v2646, %v3264
  %v3266 = vrot.slane %v3265, 2
  %v3267 = vmax.f32 %v3265, %v3266
  %v3268 = vrot.slane %v3267, 1
  %v3269 = vmax.f32 %v3267, %v3268
  %v3270 = vrot.slane %v2647, 4
  %v3271 = vmax.f32 %v2647, %v3270
  %v3272 = vrot.slane %v3271, 2
  %v3273 = vmax.f32 %v3271, %v3272
  %v3274 = vrot.slane %v3273, 1
  %v3275 = vmax.f32 %v3273, %v3274
  %v3276 = vrot.slane %v2648, 4
  %v3277 = vmax.f32 %v2648, %v3276
  %v3278 = vrot.slane %v3277, 2
  %v3279 = vmax.f32 %v3277, %v3278
  %v3280 = vrot.slane %v3279, 1
  %v3281 = vmax.f32 %v3279, %v3280
  %v3282 = vrot.slane %v2649, 4
  %v3283 = vmax.f32 %v2649, %v3282
  %v3284 = vrot.slane %v3283, 2
  %v3285 = vmax.f32 %v3283, %v3284
  %v3286 = vrot.slane %v3285, 1
  %v3287 = vmax.f32 %v3285, %v3286
  %v3288 = vrot.slane %v2650, 4
  %v3289 = vmax.f32 %v2650, %v3288
  %v3290 = vrot.slane %v3289, 2
  %v3291 = vmax.f32 %v3289, %v3290
  %v3292 = vrot.slane %v3291, 1
  %v3293 = vmax.f32 %v3291, %v3292
  %v3294 = vrot.slane %v2651, 4
  %v3295 = vmax.f32 %v2651, %v3294
  %v3296 = vrot.slane %v3295, 2
  %v3297 = vmax.f32 %v3295, %v3296
  %v3298 = vrot.slane %v3297, 1
  %v3299 = vmax.f32 %v3297, %v3298
  %v3300 = vrot.slane %v2652, 4
  %v3301 = vmax.f32 %v2652, %v3300
  %v3302 = vrot.slane %v3301, 2
  %v3303 = vmax.f32 %v3301, %v3302
  %v3304 = vrot.slane %v3303, 1
  %v3305 = vmax.f32 %v3303, %v3304
  %v3306 = vrot.slane %v2653, 4
  %v3307 = vmax.f32 %v2653, %v3306
  %v3308 = vrot.slane %v3307, 2
  %v3309 = vmax.f32 %v3307, %v3308
  %v3310 = vrot.slane %v3309, 1
  %v3311 = vmax.f32 %v3309, %v3310
  %v3312 = vrot.slane %v2654, 4
  %v3313 = vmax.f32 %v2654, %v3312
  %v3314 = vrot.slane %v3313, 2
  %v3315 = vmax.f32 %v3313, %v3314
  %v3316 = vrot.slane %v3315, 1
  %v3317 = vmax.f32 %v3315, %v3316
  %v3318 = vrot.slane %v2655, 4
  %v3319 = vmax.f32 %v2655, %v3318
  %v3320 = vrot.slane %v3319, 2
  %v3321 = vmax.f32 %v3319, %v3320
  %v3322 = vrot.slane %v3321, 1
  %v3323 = vmax.f32 %v3321, %v3322
  %v3324 = vrot.slane %v2656, 4
  %v3325 = vmax.f32 %v2656, %v3324
  %v3326 = vrot.slane %v3325, 2
  %v3327 = vmax.f32 %v3325, %v3326
  %v3328 = vrot.slane %v3327, 1
  %v3329 = vmax.f32 %v3327, %v3328
  %v3330 = vrot.slane %v2657, 4
  %v3331 = vmax.f32 %v2657, %v3330
  %v3332 = vrot.slane %v3331, 2
  %v3333 = vmax.f32 %v3331, %v3332
  %v3334 = vrot.slane %v3333, 1
  %v3335 = vmax.f32 %v3333, %v3334
  %v3336 = vrot.slane %v2658, 4
  %v3337 = vmax.f32 %v2658, %v3336
  %v3338 = vrot.slane %v3337, 2
  %v3339 = vmax.f32 %v3337, %v3338
  %v3340 = vrot.slane %v3339, 1
  %v3341 = vmax.f32 %v3339, %v3340
  %v3342 = vrot.slane %v2659, 4
  %v3343 = vmax.f32 %v2659, %v3342
  %v3344 = vrot.slane %v3343, 2
  %v3345 = vmax.f32 %v3343, %v3344
  %v3346 = vrot.slane %v3345, 1
  %v3347 = vmax.f32 %v3345, %v3346
  %v3348 = vrot.slane %v2660, 4
  %v3349 = vmax.f32 %v2660, %v3348
  %v3350 = vrot.slane %v3349, 2
  %v3351 = vmax.f32 %v3349, %v3350
  %v3352 = vrot.slane %v3351, 1
  %v3353 = vmax.f32 %v3351, %v3352
  %v3354 = vrot.slane %v2661, 4
  %v3355 = vmax.f32 %v2661, %v3354
  %v3356 = vrot.slane %v3355, 2
  %v3357 = vmax.f32 %v3355, %v3356
  %v3358 = vrot.slane %v3357, 1
  %v3359 = vmax.f32 %v3357, %v3358
  %v3360 = vrot.slane %v2662, 4
  %v3361 = vmax.f32 %v2662, %v3360
  %v3362 = vrot.slane %v3361, 2
  %v3363 = vmax.f32 %v3361, %v3362
  %v3364 = vrot.slane %v3363, 1
  %v3365 = vmax.f32 %v3363, %v3364
  %v3366 = vrot.slane %v2663, 4
  %v3367 = vmax.f32 %v2663, %v3366
  %v3368 = vrot.slane %v3367, 2
  %v3369 = vmax.f32 %v3367, %v3368
  %v3370 = vrot.slane %v3369, 1
  %v3371 = vmax.f32 %v3369, %v3370
  %v3372 = vrot.slane %v2664, 4
  %v3373 = vmax.f32 %v2664, %v3372
  %v3374 = vrot.slane %v3373, 2
  %v3375 = vmax.f32 %v3373, %v3374
  %v3376 = vrot.slane %v3375, 1
  %v3377 = vmax.f32 %v3375, %v3376
  %v3378 = vrot.slane %v2665, 4
  %v3379 = vmax.f32 %v2665, %v3378
  %v3380 = vrot.slane %v3379, 2
  %v3381 = vmax.f32 %v3379, %v3380
  %v3382 = vrot.slane %v3381, 1
  %v3383 = vmax.f32 %v3381, %v3382
  %v3384 = vrot.slane %v2666, 4
  %v3385 = vmax.f32 %v2666, %v3384
  %v3386 = vrot.slane %v3385, 2
  %v3387 = vmax.f32 %v3385, %v3386
  %v3388 = vrot.slane %v3387, 1
  %v3389 = vmax.f32 %v3387, %v3388
  %v3390 = vrot.slane %v2667, 4
  %v3391 = vmax.f32 %v2667, %v3390
  %v3392 = vrot.slane %v3391, 2
  %v3393 = vmax.f32 %v3391, %v3392
  %v3394 = vrot.slane %v3393, 1
  %v3395 = vmax.f32 %v3393, %v3394
  %v3396 = vrot.slane %v2668, 4
  %v3397 = vmax.f32 %v2668, %v3396
  %v3398 = vrot.slane %v3397, 2
  %v3399 = vmax.f32 %v3397, %v3398
  %v3400 = vrot.slane %v3399, 1
  %v3401 = vmax.f32 %v3399, %v3400
  %v3402 = vrot.slane %v2669, 4
  %v3403 = vmax.f32 %v2669, %v3402
  %v3404 = vrot.slane %v3403, 2
  %v3405 = vmax.f32 %v3403, %v3404
  %v3406 = vrot.slane %v3405, 1
  %v3407 = vmax.f32 %v3405, %v3406
  %v3408 = vrot.slane %v2670, 4
  %v3409 = vmax.f32 %v2670, %v3408
  %v3410 = vrot.slane %v3409, 2
  %v3411 = vmax.f32 %v3409, %v3410
  %v3412 = vrot.slane %v3411, 1
  %v3413 = vmax.f32 %v3411, %v3412
  %v3414 = vrot.slane %v2671, 4
  %v3415 = vmax.f32 %v2671, %v3414
  %v3416 = vrot.slane %v3415, 2
  %v3417 = vmax.f32 %v3415, %v3416
  %v3418 = vrot.slane %v3417, 1
  %v3419 = vmax.f32 %v3417, %v3418
  %v3420 = vrot.slane %v2672, 4
  %v3421 = vmax.f32 %v2672, %v3420
  %v3422 = vrot.slane %v3421, 2
  %v3423 = vmax.f32 %v3421, %v3422
  %v3424 = vrot.slane %v3423, 1
  %v3425 = vmax.f32 %v3423, %v3424
  %v3426 = vrot.slane %v2673, 4
  %v3427 = vmax.f32 %v2673, %v3426
  %v3428 = vrot.slane %v3427, 2
  %v3429 = vmax.f32 %v3427, %v3428
  %v3430 = vrot.slane %v3429, 1
  %v3431 = vmax.f32 %v3429, %v3430
  %v3432 = vrot.slane %v2674, 4
  %v3433 = vmax.f32 %v2674, %v3432
  %v3434 = vrot.slane %v3433, 2
  %v3435 = vmax.f32 %v3433, %v3434
  %v3436 = vrot.slane %v3435, 1
  %v3437 = vmax.f32 %v3435, %v3436
  %v3438 = vrot.slane %v2675, 4
  %v3439 = vmax.f32 %v2675, %v3438
  %v3440 = vrot.slane %v3439, 2
  %v3441 = vmax.f32 %v3439, %v3440
  %v3442 = vrot.slane %v3441, 1
  %v3443 = vmax.f32 %v3441, %v3442
  %vm3572 = vcmask 1041409
  %v3573 = vsel %vm3572, %v2729, %v2681
  %vm3574 = vcmask 1042434
  %v3575 = vsel %vm3574, %v2777, %v3573
  %vm3576 = vcmask 1043459
  %v3577 = vsel %vm3576, %v2825, %v3575
  %vm3578 = vcmask 1044484
  %v3579 = vsel %vm3578, %v2873, %v3577
  %vm3580 = vcmask 1045509
  %v3581 = vsel %vm3580, %v2921, %v3579
  %vm3582 = vcmask 1046534
  %v3583 = vsel %vm3582, %v2969, %v3581
  %vm3584 = vcmask 1047559
  %v3585 = vsel %vm3584, %v3017, %v3583
  %v3586 = vsel %vm3572, %v2735, %v2687
  %v3587 = vsel %vm3574, %v2783, %v3586
  %v3588 = vsel %vm3576, %v2831, %v3587
  %v3589 = vsel %vm3578, %v2879, %v3588
  %v3590 = vsel %vm3580, %v2927, %v3589
  %v3591 = vsel %vm3582, %v2975, %v3590
  %v3592 = vsel %vm3584, %v3023, %v3591
  %v3593 = vsel %vm3572, %v2741, %v2693
  %v3594 = vsel %vm3574, %v2789, %v3593
  %v3595 = vsel %vm3576, %v2837, %v3594
  %v3596 = vsel %vm3578, %v2885, %v3595
  %v3597 = vsel %vm3580, %v2933, %v3596
  %v3598 = vsel %vm3582, %v2981, %v3597
  %v3599 = vsel %vm3584, %v3029, %v3598
  %v3600 = vsel %vm3572, %v2747, %v2699
  %v3601 = vsel %vm3574, %v2795, %v3600
  %v3602 = vsel %vm3576, %v2843, %v3601
  %v3603 = vsel %vm3578, %v2891, %v3602
  %v3604 = vsel %vm3580, %v2939, %v3603
  %v3605 = vsel %vm3582, %v2987, %v3604
  %v3606 = vsel %vm3584, %v3035, %v3605
  %v3607 = vsel %vm3572, %v2753, %v2705
  %v3608 = vsel %vm3574, %v2801, %v3607
  %v3609 = vsel %vm3576, %v2849, %v3608
  %v3610 = vsel %vm3578, %v2897, %v3609
  %v3611 = vsel %vm3580, %v2945, %v3610
  %v3612 = vsel %vm3582, %v2993, %v3611
  %v3613 = vsel %vm3584, %v3041, %v3612
  %v3614 = vsel %vm3572, %v2759, %v2711
  %v3615 = vsel %vm3574, %v2807, %v3614
  %v3616 = vsel %vm3576, %v2855, %v3615
  %v3617 = vsel %vm3578, %v2903, %v3616
  %v3618 = vsel %vm3580, %v2951, %v3617
  %v3619 = vsel %vm3582, %v2999, %v3618
  %v3620 = vsel %vm3584, %v3047, %v3619
  %v3621 = vsel %vm3572, %v2765, %v2717
  %v3622 = vsel %vm3574, %v2813, %v3621
  %v3623 = vsel %vm3576, %v2861, %v3622
  %v3624 = vsel %vm3578, %v2909, %v3623
  %v3625 = vsel %vm3580, %v2957, %v3624
  %v3626 = vsel %vm3582, %v3005, %v3625
  %v3627 = vsel %vm3584, %v3053, %v3626
  %v3628 = vsel %vm3572, %v2771, %v2723
  %v3629 = vsel %vm3574, %v2819, %v3628
  %v3630 = vsel %vm3576, %v2867, %v3629
  %v3631 = vsel %vm3578, %v2915, %v3630
  %v3632 = vsel %vm3580, %v2963, %v3631
  %v3633 = vsel %vm3582, %v3011, %v3632
  %v3634 = vsel %vm3584, %v3059, %v3633
  %v3635 = vsel %vm3572, %v3113, %v3065
  %v3636 = vsel %vm3574, %v3161, %v3635
  %v3637 = vsel %vm3576, %v3209, %v3636
  %v3638 = vsel %vm3578, %v3257, %v3637
  %v3639 = vsel %vm3580, %v3305, %v3638
  %v3640 = vsel %vm3582, %v3353, %v3639
  %v3641 = vsel %vm3584, %v3401, %v3640
  %v3642 = vsel %vm3572, %v3119, %v3071
  %v3643 = vsel %vm3574, %v3167, %v3642
  %v3644 = vsel %vm3576, %v3215, %v3643
  %v3645 = vsel %vm3578, %v3263, %v3644
  %v3646 = vsel %vm3580, %v3311, %v3645
  %v3647 = vsel %vm3582, %v3359, %v3646
  %v3648 = vsel %vm3584, %v3407, %v3647
  %v3649 = vsel %vm3572, %v3125, %v3077
  %v3650 = vsel %vm3574, %v3173, %v3649
  %v3651 = vsel %vm3576, %v3221, %v3650
  %v3652 = vsel %vm3578, %v3269, %v3651
  %v3653 = vsel %vm3580, %v3317, %v3652
  %v3654 = vsel %vm3582, %v3365, %v3653
  %v3655 = vsel %vm3584, %v3413, %v3654
  %v3656 = vsel %vm3572, %v3131, %v3083
  %v3657 = vsel %vm3574, %v3179, %v3656
  %v3658 = vsel %vm3576, %v3227, %v3657
  %v3659 = vsel %vm3578, %v3275, %v3658
  %v3660 = vsel %vm3580, %v3323, %v3659
  %v3661 = vsel %vm3582, %v3371, %v3660
  %v3662 = vsel %vm3584, %v3419, %v3661
  %v3663 = vsel %vm3572, %v3137, %v3089
  %v3664 = vsel %vm3574, %v3185, %v3663
  %v3665 = vsel %vm3576, %v3233, %v3664
  %v3666 = vsel %vm3578, %v3281, %v3665
  %v3667 = vsel %vm3580, %v3329, %v3666
  %v3668 = vsel %vm3582, %v3377, %v3667
  %v3669 = vsel %vm3584, %v3425, %v3668
  %v3670 = vsel %vm3572, %v3143, %v3095
  %v3671 = vsel %vm3574, %v3191, %v3670
  %v3672 = vsel %vm3576, %v3239, %v3671
  %v3673 = vsel %vm3578, %v3287, %v3672
  %v3674 = vsel %vm3580, %v3335, %v3673
  %v3675 = vsel %vm3582, %v3383, %v3674
  %v3676 = vsel %vm3584, %v3431, %v3675
  %v3677 = vsel %vm3572, %v3149, %v3101
  %v3678 = vsel %vm3574, %v3197, %v3677
  %v3679 = vsel %vm3576, %v3245, %v3678
  %v3680 = vsel %vm3578, %v3293, %v3679
  %v3681 = vsel %vm3580, %v3341, %v3680
  %v3682 = vsel %vm3582, %v3389, %v3681
  %v3683 = vsel %vm3584, %v3437, %v3682
  %v3684 = vsel %vm3572, %v3155, %v3107
  %v3685 = vsel %vm3574, %v3203, %v3684
  %v3686 = vsel %vm3576, %v3251, %v3685
  %v3687 = vsel %vm3578, %v3299, %v3686
  %v3688 = vsel %vm3580, %v3347, %v3687
  %v3689 = vsel %vm3582, %v3395, %v3688
  %v3690 = vsel %vm3584, %v3443, %v3689
  %3707 = vst [vmem:[%s9] sm:$0xff] %v3585
  %3708 = vst [vmem:[%s9 + $0x8] sm:$0xff] %v3592
  %3709 = vst [vmem:[%s9 + $0x10] sm:$0xff] %v3599
  %3710 = vst [vmem:[%s9 + $0x18] sm:$0xff] %v3606
  %3711 = vst [vmem:[%s9 + $0x20] sm:$0xff] %v3613
  %3712 = vst [vmem:[%s9 + $0x28] sm:$0xff] %v3620
  %3713 = vst [vmem:[%s9 + $0x30] sm:$0xff] %v3627
  %3714 = vst [vmem:[%s9 + $0x38] sm:$0xff] %v3634
  %3715 = vst [vmem:[%s9 + $0x40] sm:$0xff] %v3641
  %3716 = vst [vmem:[%s9 + $0x48] sm:$0xff] %v3648
  %3717 = vst [vmem:[%s9 + $0x50] sm:$0xff] %v3655
  %3718 = vst [vmem:[%s9 + $0x58] sm:$0xff] %v3662
  %3719 = vst [vmem:[%s9 + $0x60] sm:$0xff] %v3669
  %3720 = vst [vmem:[%s9 + $0x68] sm:$0xff] %v3676
  %3721 = vst [vmem:[%s9 + $0x70] sm:$0xff] %v3683
  %3722 = vst [vmem:[%s9 + $0x78] sm:$0xff] %v3690
  // Predicated region
  $region38: #{pointnet2_cls_forward.4} parent=0 // pred_check
    _
  $region39: #{pointnet2_cls_forward.4} parent=0 // pred_check_branch
    %3724 = sbr.rel (0) target = $region41
  $region40: #{pointnet2_cls_forward.4} parent=0 // pred_region
    _
  $region41: #{pointnet2_cls_forward.4} parent=0 // pred_fallthru
    _
  // Predicated region
  $region42: #{pointnet2_cls_forward.4} parent=0 // pred_check
    _
  $region43: #{pointnet2_cls_forward.4} parent=0 // pred_check_branch
    %3726 = sbr.rel (0) target = $region45
  $region44: #{pointnet2_cls_forward.4} parent=0 // pred_region
    _
  $region45: #{pointnet2_cls_forward.4} parent=0 // pred_fallthru
    _

// kernel: pointnet2_cls_forward.5
$region0: #{pointnet2_cls_forward.5}
  #allocation0 [shape = 'u32[]', space=smem, size = 0x4, offset = 0x4, fixed_abs, tag = 'smem constant byte address 0x4 - core index']
  #allocation1 [shape = 'u32[72,128]{1,0:T(1,128)}', space=vmem, size = 0x9000, scoped, tag = 'internal scratch']
  %s0 = inlined_call_operand.vmem [shape: f32[2,1024], index: 0, kind: input, shape index: {}]
  %s1 = inlined_call_operand.vmem [shape: f32[1024,512], index: 1, kind: input, shape index: {}]
  %s2 = inlined_call_operand.vmem [shape: f32[1,512], index: 2, kind: input, shape index: {}]
  %s3 = inlined_call_operand.vmem [shape: f32[512,256], index: 3, kind: input, shape index: {}]
  %s4 = inlined_call_operand.vmem [shape: f32[1,256], index: 4, kind: input, shape index: {}]
  %s5 = inlined_call_operand.vmem [shape: f32[256,3], index: 5, kind: input, shape index: {}]
  %s6 = inlined_call_operand.vmem [shape: f32[1,3], index: 6, kind: input, shape index: {}]
  %s7 = inlined_call_operand.hbm [shape: f32[2,3], index: 7, kind: output, shape index: {}]
  %s8 = sld [smem:[#allocation0]]
  $region38: #{pointnet2_cls_forward.5} parent=0
    _
  %s10 = ssub.s32 1, %s8
  %s11 = scalar_select 0, %s10, %s8
  $region1: #{pointnet2_cls_forward.5} parent=0
    #allocation2 [shape = 'u8[1024]{0}', space=vmem, size = 0x400, scoped, tag = 'output window, operand 0, single buffered']
    #allocation3 [shape = 's32[1]{0}', space=sflag, size = 0x4, scoped, tag = 'scoped memory for pointnet2_cls_forward.5']
    %12 = vsyncpa [#allocation3], 0
    // Predicated region
    $region2: #{pointnet2_cls_forward.5} parent=1 // pred_check
      _
    $region3: #{pointnet2_cls_forward.5} parent=1 // pred_check_branch
      %14 = sbr.rel (0) target = $region5
    $region4: #{pointnet2_cls_forward.5} parent=1 // pred_region
      _
    $region5: #{pointnet2_cls_forward.5} parent=1 // pred_fallthru
      _
    // Predicated region
    $region6: #{pointnet2_cls_forward.5} parent=1 // pred_check
      _
    $region7: #{pointnet2_cls_forward.5} parent=1 // pred_check_branch
      %16 = sbr.rel (0) target = $region9
    $region8: #{pointnet2_cls_forward.5} parent=1 // pred_region
      _
    $region9: #{pointnet2_cls_forward.5} parent=1 // pred_fallthru
      _
    // Predicated region
    $region10: #{pointnet2_cls_forward.5} parent=1 // pred_check
      _
    $region11: #{pointnet2_cls_forward.5} parent=1 // pred_check_branch
      %18 = sbr.rel (0) target = $region13
    $region12: #{pointnet2_cls_forward.5} parent=1 // pred_region
      _
    $region13: #{pointnet2_cls_forward.5} parent=1 // pred_fallthru
      _
    // Predicated region
    $region14: #{pointnet2_cls_forward.5} parent=1 // pred_check
      _
    $region15: #{pointnet2_cls_forward.5} parent=1 // pred_check_branch
      %20 = sbr.rel (0) target = $region17
    $region16: #{pointnet2_cls_forward.5} parent=1 // pred_region
      _
    $region17: #{pointnet2_cls_forward.5} parent=1 // pred_fallthru
      _
    // Predicated region
    $region18: #{pointnet2_cls_forward.5} parent=1 // pred_check
      _
    $region19: #{pointnet2_cls_forward.5} parent=1 // pred_check_branch
      %22 = sbr.rel (0) target = $region21
    $region20: #{pointnet2_cls_forward.5} parent=1 // pred_region
      _
    $region21: #{pointnet2_cls_forward.5} parent=1 // pred_fallthru
      _
    // Predicated region
    $region22: #{pointnet2_cls_forward.5} parent=1 // pred_check
      _
    $region23: #{pointnet2_cls_forward.5} parent=1 // pred_check_branch
      %24 = sbr.rel (0) target = $region25
    $region24: #{pointnet2_cls_forward.5} parent=1 // pred_region
      _
    $region25: #{pointnet2_cls_forward.5} parent=1 // pred_fallthru
      _
    // Predicated region
    $region26: #{pointnet2_cls_forward.5} parent=1 // pred_check
      _
    $region27: #{pointnet2_cls_forward.5} parent=1 // pred_check_branch
      %26 = sbr.rel (0) target = $region29
    $region28: #{pointnet2_cls_forward.5} parent=1 // pred_region
      _
    $region29: #{pointnet2_cls_forward.5} parent=1 // pred_fallthru
      _
    %v27 = vld [vmem:[%s0] sm:$0xff]
    %v28 = vld [vmem:[%s0 + $0x8] sm:$0xff]
    %v29 = vld [vmem:[%s1] sm:$0xff]
    %v30 = vld [vmem:[%s1 + $0x8] sm:$0xff]
    %v31 = vld [vmem:[%s1 + $0x10] sm:$0xff]
    %v32 = vld [vmem:[%s1 + $0x18] sm:$0xff]
    %v33 = vld [vmem:[%s1 + $0x20] sm:$0xff]
    %v34 = vld [vmem:[%s1 + $0x28] sm:$0xff]
    %v35 = vld [vmem:[%s1 + $0x30] sm:$0xff]
    %v36 = vld [vmem:[%s1 + $0x38] sm:$0xff]
    %v37 = vld [vmem:[%s1 + $0x40] sm:$0xff]
    %v38 = vld [vmem:[%s1 + $0x48] sm:$0xff]
    %v39 = vld [vmem:[%s1 + $0x50] sm:$0xff]
    %v40 = vld [vmem:[%s1 + $0x58] sm:$0xff]
    %v41 = vld [vmem:[%s1 + $0x60] sm:$0xff]
    %v42 = vld [vmem:[%s1 + $0x68] sm:$0xff]
    %v43 = vld [vmem:[%s1 + $0x70] sm:$0xff]
    %v44 = vld [vmem:[%s1 + $0x78] sm:$0xff]
    %v45 = vld [vmem:[%s1 + $0x80] sm:$0xff]
    %v46 = vld [vmem:[%s1 + $0x88] sm:$0xff]
    %v47 = vld [vmem:[%s1 + $0x90] sm:$0xff]
    %v48 = vld [vmem:[%s1 + $0x98] sm:$0xff]
    %v49 = vld [vmem:[%s1 + $0xa0] sm:$0xff]
    %v50 = vld [vmem:[%s1 + $0xa8] sm:$0xff]
    %v51 = vld [vmem:[%s1 + $0xb0] sm:$0xff]
    %v52 = vld [vmem:[%s1 + $0xb8] sm:$0xff]
    %v53 = vld [vmem:[%s1 + $0xc0] sm:$0xff]
    %v54 = vld [vmem:[%s1 + $0xc8] sm:$0xff]
    %v55 = vld [vmem:[%s1 + $0xd0] sm:$0xff]
    %v56 = vld [vmem:[%s1 + $0xd8] sm:$0xff]
    %v57 = vld [vmem:[%s1 + $0xe0] sm:$0xff]
    %v58 = vld [vmem:[%s1 + $0xe8] sm:$0xff]
    %v59 = vld [vmem:[%s1 + $0xf0] sm:$0xff]
    %v60 = vld [vmem:[%s1 + $0xf8] sm:$0xff]
    %v61 = vld [vmem:[%s1 + $0x100] sm:$0xff]
    %v62 = vld [vmem:[%s1 + $0x108] sm:$0xff]
    %v63 = vld [vmem:[%s1 + $0x110] sm:$0xff]
    %v64 = vld [vmem:[%s1 + $0x118] sm:$0xff]
    %v65 = vld [vmem:[%s1 + $0x120] sm:$0xff]
    %v66 = vld [vmem:[%s1 + $0x128] sm:$0xff]
    %v67 = vld [vmem:[%s1 + $0x130] sm:$0xff]
    %v68 = vld [vmem:[%s1 + $0x138] sm:$0xff]
    %v69 = vld [vmem:[%s1 + $0x140] sm:$0xff]
    %v70 = vld [vmem:[%s1 + $0x148] sm:$0xff]
    %v71 = vld [vmem:[%s1 + $0x150] sm:$0xff]
    %v72 = vld [vmem:[%s1 + $0x158] sm:$0xff]
    %v73 = vld [vmem:[%s1 + $0x160] sm:$0xff]
    %v74 = vld [vmem:[%s1 + $0x168] sm:$0xff]
    %v75 = vld [vmem:[%s1 + $0x170] sm:$0xff]
    %v76 = vld [vmem:[%s1 + $0x178] sm:$0xff]
    %v77 = vld [vmem:[%s1 + $0x180] sm:$0xff]
    %v78 = vld [vmem:[%s1 + $0x188] sm:$0xff]
    %v79 = vld [vmem:[%s1 + $0x190] sm:$0xff]
    %v80 = vld [vmem:[%s1 + $0x198] sm:$0xff]
    %v81 = vld [vmem:[%s1 + $0x1a0] sm:$0xff]
    %v82 = vld [vmem:[%s1 + $0x1a8] sm:$0xff]
    %v83 = vld [vmem:[%s1 + $0x1b0] sm:$0xff]
    %v84 = vld [vmem:[%s1 + $0x1b8] sm:$0xff]
    %v85 = vld [vmem:[%s1 + $0x1c0] sm:$0xff]
    %v86 = vld [vmem:[%s1 + $0x1c8] sm:$0xff]
    %v87 = vld [vmem:[%s1 + $0x1d0] sm:$0xff]
    %v88 = vld [vmem:[%s1 + $0x1d8] sm:$0xff]
    %v89 = vld [vmem:[%s1 + $0x1e0] sm:$0xff]
    %v90 = vld [vmem:[%s1 + $0x1e8] sm:$0xff]
    %v91 = vld [vmem:[%s1 + $0x1f0] sm:$0xff]
    %v92 = vld [vmem:[%s1 + $0x1f8] sm:$0xff]
    %v93 = vld [vmem:[%s1 + $0x200] sm:$0xff]
    %v94 = vld [vmem:[%s1 + $0x208] sm:$0xff]
    %v95 = vld [vmem:[%s1 + $0x210] sm:$0xff]
    %v96 = vld [vmem:[%s1 + $0x218] sm:$0xff]
    %v97 = vld [vmem:[%s1 + $0x220] sm:$0xff]
    %v98 = vld [vmem:[%s1 + $0x228] sm:$0xff]
    %v99 = vld [vmem:[%s1 + $0x230] sm:$0xff]
    %v100 = vld [vmem:[%s1 + $0x238] sm:$0xff]
    %v101 = vld [vmem:[%s1 + $0x240] sm:$0xff]
    %v102 = vld [vmem:[%s1 + $0x248] sm:$0xff]
    %v103 = vld [vmem:[%s1 + $0x250] sm:$0xff]
    %v104 = vld [vmem:[%s1 + $0x258] sm:$0xff]
    %v105 = vld [vmem:[%s1 + $0x260] sm:$0xff]
    %v106 = vld [vmem:[%s1 + $0x268] sm:$0xff]
    %v107 = vld [vmem:[%s1 + $0x270] sm:$0xff]
    %v108 = vld [vmem:[%s1 + $0x278] sm:$0xff]
    %v109 = vld [vmem:[%s1 + $0x280] sm:$0xff]
    %v110 = vld [vmem:[%s1 + $0x288] sm:$0xff]
    %v111 = vld [vmem:[%s1 + $0x290] sm:$0xff]
    %v112 = vld [vmem:[%s1 + $0x298] sm:$0xff]
    %v113 = vld [vmem:[%s1 + $0x2a0] sm:$0xff]
    %v114 = vld [vmem:[%s1 + $0x2a8] sm:$0xff]
    %v115 = vld [vmem:[%s1 + $0x2b0] sm:$0xff]
    %v116 = vld [vmem:[%s1 + $0x2b8] sm:$0xff]
    %v117 = vld [vmem:[%s1 + $0x2c0] sm:$0xff]
    %v118 = vld [vmem:[%s1 + $0x2c8] sm:$0xff]
    %v119 = vld [vmem:[%s1 + $0x2d0] sm:$0xff]
    %v120 = vld [vmem:[%s1 + $0x2d8] sm:$0xff]
    %v121 = vld [vmem:[%s1 + $0x2e0] sm:$0xff]
    %v122 = vld [vmem:[%s1 + $0x2e8] sm:$0xff]
    %v123 = vld [vmem:[%s1 + $0x2f0] sm:$0xff]
    %v124 = vld [vmem:[%s1 + $0x2f8] sm:$0xff]
    %v125 = vld [vmem:[%s1 + $0x300] sm:$0xff]
    %v126 = vld [vmem:[%s1 + $0x308] sm:$0xff]
    %v127 = vld [vmem:[%s1 + $0x310] sm:$0xff]
    %v128 = vld [vmem:[%s1 + $0x318] sm:$0xff]
    %v129 = vld [vmem:[%s1 + $0x320] sm:$0xff]
    %v130 = vld [vmem:[%s1 + $0x328] sm:$0xff]
    %v131 = vld [vmem:[%s1 + $0x330] sm:$0xff]
    %v132 = vld [vmem:[%s1 + $0x338] sm:$0xff]
    %v133 = vld [vmem:[%s1 + $0x340] sm:$0xff]
    %v134 = vld [vmem:[%s1 + $0x348] sm:$0xff]
    %v135 = vld [vmem:[%s1 + $0x350] sm:$0xff]
    %v136 = vld [vmem:[%s1 + $0x358] sm:$0xff]
    %v137 = vld [vmem:[%s1 + $0x360] sm:$0xff]
    %v138 = vld [vmem:[%s1 + $0x368] sm:$0xff]
    %v139 = vld [vmem:[%s1 + $0x370] sm:$0xff]
    %v140 = vld [vmem:[%s1 + $0x378] sm:$0xff]
    %v141 = vld [vmem:[%s1 + $0x380] sm:$0xff]
    %v142 = vld [vmem:[%s1 + $0x388] sm:$0xff]
    %v143 = vld [vmem:[%s1 + $0x390] sm:$0xff]
    %v144 = vld [vmem:[%s1 + $0x398] sm:$0xff]
    %v145 = vld [vmem:[%s1 + $0x3a0] sm:$0xff]
    %v146 = vld [vmem:[%s1 + $0x3a8] sm:$0xff]
    %v147 = vld [vmem:[%s1 + $0x3b0] sm:$0xff]
    %v148 = vld [vmem:[%s1 + $0x3b8] sm:$0xff]
    %v149 = vld [vmem:[%s1 + $0x3c0] sm:$0xff]
    %v150 = vld [vmem:[%s1 + $0x3c8] sm:$0xff]
    %v151 = vld [vmem:[%s1 + $0x3d0] sm:$0xff]
    %v152 = vld [vmem:[%s1 + $0x3d8] sm:$0xff]
    %v153 = vld [vmem:[%s1 + $0x3e0] sm:$0xff]
    %v154 = vld [vmem:[%s1 + $0x3e8] sm:$0xff]
    %v155 = vld [vmem:[%s1 + $0x3f0] sm:$0xff]
    %v156 = vld [vmem:[%s1 + $0x3f8] sm:$0xff]
    %v157 = vld [vmem:[%s1 + $0x400] sm:$0xff]
    %v158 = vld [vmem:[%s1 + $0x408] sm:$0xff]
    %v159 = vld [vmem:[%s1 + $0x410] sm:$0xff]
    %v160 = vld [vmem:[%s1 + $0x418] sm:$0xff]
    %v161 = vld [vmem:[%s1 + $0x420] sm:$0xff]
    %v162 = vld [vmem:[%s1 + $0x428] sm:$0xff]
    %v163 = vld [vmem:[%s1 + $0x430] sm:$0xff]
    %v164 = vld [vmem:[%s1 + $0x438] sm:$0xff]
    %v165 = vld [vmem:[%s1 + $0x440] sm:$0xff]
    %v166 = vld [vmem:[%s1 + $0x448] sm:$0xff]
    %v167 = vld [vmem:[%s1 + $0x450] sm:$0xff]
    %v168 = vld [vmem:[%s1 + $0x458] sm:$0xff]
    %v169 = vld [vmem:[%s1 + $0x460] sm:$0xff]
    %v170 = vld [vmem:[%s1 + $0x468] sm:$0xff]
    %v171 = vld [vmem:[%s1 + $0x470] sm:$0xff]
    %v172 = vld [vmem:[%s1 + $0x478] sm:$0xff]
    %v173 = vld [vmem:[%s1 + $0x480] sm:$0xff]
    %v174 = vld [vmem:[%s1 + $0x488] sm:$0xff]
    %v175 = vld [vmem:[%s1 + $0x490] sm:$0xff]
    %v176 = vld [vmem:[%s1 + $0x498] sm:$0xff]
    %v177 = vld [vmem:[%s1 + $0x4a0] sm:$0xff]
    %v178 = vld [vmem:[%s1 + $0x4a8] sm:$0xff]
    %v179 = vld [vmem:[%s1 + $0x4b0] sm:$0xff]
    %v180 = vld [vmem:[%s1 + $0x4b8] sm:$0xff]
    %v181 = vld [vmem:[%s1 + $0x4c0] sm:$0xff]
    %v182 = vld [vmem:[%s1 + $0x4c8] sm:$0xff]
    %v183 = vld [vmem:[%s1 + $0x4d0] sm:$0xff]
    %v184 = vld [vmem:[%s1 + $0x4d8] sm:$0xff]
    %v185 = vld [vmem:[%s1 + $0x4e0] sm:$0xff]
    %v186 = vld [vmem:[%s1 + $0x4e8] sm:$0xff]
    %v187 = vld [vmem:[%s1 + $0x4f0] sm:$0xff]
    %v188 = vld [vmem:[%s1 + $0x4f8] sm:$0xff]
    %v189 = vld [vmem:[%s1 + $0x500] sm:$0xff]
    %v190 = vld [vmem:[%s1 + $0x508] sm:$0xff]
    %v191 = vld [vmem:[%s1 + $0x510] sm:$0xff]
    %v192 = vld [vmem:[%s1 + $0x518] sm:$0xff]
    %v193 = vld [vmem:[%s1 + $0x520] sm:$0xff]
    %v194 = vld [vmem:[%s1 + $0x528] sm:$0xff]
    %v195 = vld [vmem:[%s1 + $0x530] sm:$0xff]
    %v196 = vld [vmem:[%s1 + $0x538] sm:$0xff]
    %v197 = vld [vmem:[%s1 + $0x540] sm:$0xff]
    %v198 = vld [vmem:[%s1 + $0x548] sm:$0xff]
    %v199 = vld [vmem:[%s1 + $0x550] sm:$0xff]
    %v200 = vld [vmem:[%s1 + $0x558] sm:$0xff]
    %v201 = vld [vmem:[%s1 + $0x560] sm:$0xff]
    %v202 = vld [vmem:[%s1 + $0x568] sm:$0xff]
    %v203 = vld [vmem:[%s1 + $0x570] sm:$0xff]
    %v204 = vld [vmem:[%s1 + $0x578] sm:$0xff]
    %v205 = vld [vmem:[%s1 + $0x580] sm:$0xff]
    %v206 = vld [vmem:[%s1 + $0x588] sm:$0xff]
    %v207 = vld [vmem:[%s1 + $0x590] sm:$0xff]
    %v208 = vld [vmem:[%s1 + $0x598] sm:$0xff]
    %v209 = vld [vmem:[%s1 + $0x5a0] sm:$0xff]
    %v210 = vld [vmem:[%s1 + $0x5a8] sm:$0xff]
    %v211 = vld [vmem:[%s1 + $0x5b0] sm:$0xff]
    %v212 = vld [vmem:[%s1 + $0x5b8] sm:$0xff]
    %v213 = vld [vmem:[%s1 + $0x5c0] sm:$0xff]
    %v214 = vld [vmem:[%s1 + $0x5c8] sm:$0xff]
    %v215 = vld [vmem:[%s1 + $0x5d0] sm:$0xff]
    %v216 = vld [vmem:[%s1 + $0x5d8] sm:$0xff]
    %v217 = vld [vmem:[%s1 + $0x5e0] sm:$0xff]
    %v218 = vld [vmem:[%s1 + $0x5e8] sm:$0xff]
    %v219 = vld [vmem:[%s1 + $0x5f0] sm:$0xff]
    %v220 = vld [vmem:[%s1 + $0x5f8] sm:$0xff]
    %v221 = vld [vmem:[%s1 + $0x600] sm:$0xff]
    %v222 = vld [vmem:[%s1 + $0x608] sm:$0xff]
    %v223 = vld [vmem:[%s1 + $0x610] sm:$0xff]
    %v224 = vld [vmem:[%s1 + $0x618] sm:$0xff]
    %v225 = vld [vmem:[%s1 + $0x620] sm:$0xff]
    %v226 = vld [vmem:[%s1 + $0x628] sm:$0xff]
    %v227 = vld [vmem:[%s1 + $0x630] sm:$0xff]
    %v228 = vld [vmem:[%s1 + $0x638] sm:$0xff]
    %v229 = vld [vmem:[%s1 + $0x640] sm:$0xff]
    %v230 = vld [vmem:[%s1 + $0x648] sm:$0xff]
    %v231 = vld [vmem:[%s1 + $0x650] sm:$0xff]
    %v232 = vld [vmem:[%s1 + $0x658] sm:$0xff]
    %v233 = vld [vmem:[%s1 + $0x660] sm:$0xff]
    %v234 = vld [vmem:[%s1 + $0x668] sm:$0xff]
    %v235 = vld [vmem:[%s1 + $0x670] sm:$0xff]
    %v236 = vld [vmem:[%s1 + $0x678] sm:$0xff]
    %v237 = vld [vmem:[%s1 + $0x680] sm:$0xff]
    %v238 = vld [vmem:[%s1 + $0x688] sm:$0xff]
    %v239 = vld [vmem:[%s1 + $0x690] sm:$0xff]
    %v240 = vld [vmem:[%s1 + $0x698] sm:$0xff]
    %v241 = vld [vmem:[%s1 + $0x6a0] sm:$0xff]
    %v242 = vld [vmem:[%s1 + $0x6a8] sm:$0xff]
    %v243 = vld [vmem:[%s1 + $0x6b0] sm:$0xff]
    %v244 = vld [vmem:[%s1 + $0x6b8] sm:$0xff]
    %v245 = vld [vmem:[%s1 + $0x6c0] sm:$0xff]
    %v246 = vld [vmem:[%s1 + $0x6c8] sm:$0xff]
    %v247 = vld [vmem:[%s1 + $0x6d0] sm:$0xff]
    %v248 = vld [vmem:[%s1 + $0x6d8] sm:$0xff]
    %v249 = vld [vmem:[%s1 + $0x6e0] sm:$0xff]
    %v250 = vld [vmem:[%s1 + $0x6e8] sm:$0xff]
    %v251 = vld [vmem:[%s1 + $0x6f0] sm:$0xff]
    %v252 = vld [vmem:[%s1 + $0x6f8] sm:$0xff]
    %v253 = vld [vmem:[%s1 + $0x700] sm:$0xff]
    %v254 = vld [vmem:[%s1 + $0x708] sm:$0xff]
    %v255 = vld [vmem:[%s1 + $0x710] sm:$0xff]
    %v256 = vld [vmem:[%s1 + $0x718] sm:$0xff]
    %v257 = vld [vmem:[%s1 + $0x720] sm:$0xff]
    %v258 = vld [vmem:[%s1 + $0x728] sm:$0xff]
    %v259 = vld [vmem:[%s1 + $0x730] sm:$0xff]
    %v260 = vld [vmem:[%s1 + $0x738] sm:$0xff]
    %v261 = vld [vmem:[%s1 + $0x740] sm:$0xff]
    %v262 = vld [vmem:[%s1 + $0x748] sm:$0xff]
    %v263 = vld [vmem:[%s1 + $0x750] sm:$0xff]
    %v264 = vld [vmem:[%s1 + $0x758] sm:$0xff]
    %v265 = vld [vmem:[%s1 + $0x760] sm:$0xff]
    %v266 = vld [vmem:[%s1 + $0x768] sm:$0xff]
    %v267 = vld [vmem:[%s1 + $0x770] sm:$0xff]
    %v268 = vld [vmem:[%s1 + $0x778] sm:$0xff]
    %v269 = vld [vmem:[%s1 + $0x780] sm:$0xff]
    %v270 = vld [vmem:[%s1 + $0x788] sm:$0xff]
    %v271 = vld [vmem:[%s1 + $0x790] sm:$0xff]
    %v272 = vld [vmem:[%s1 + $0x798] sm:$0xff]
    %v273 = vld [vmem:[%s1 + $0x7a0] sm:$0xff]
    %v274 = vld [vmem:[%s1 + $0x7a8] sm:$0xff]
    %v275 = vld [vmem:[%s1 + $0x7b0] sm:$0xff]
    %v276 = vld [vmem:[%s1 + $0x7b8] sm:$0xff]
    %v277 = vld [vmem:[%s1 + $0x7c0] sm:$0xff]
    %v278 = vld [vmem:[%s1 + $0x7c8] sm:$0xff]
    %v279 = vld [vmem:[%s1 + $0x7d0] sm:$0xff]
    %v280 = vld [vmem:[%s1 + $0x7d8] sm:$0xff]
    %v281 = vld [vmem:[%s1 + $0x7e0] sm:$0xff]
    %v282 = vld [vmem:[%s1 + $0x7e8] sm:$0xff]
    %v283 = vld [vmem:[%s1 + $0x7f0] sm:$0xff]
    %v284 = vld [vmem:[%s1 + $0x7f8] sm:$0xff]
    %v285 = vld [vmem:[%s1 + $0x800] sm:$0xff]
    %v286 = vld [vmem:[%s1 + $0x808] sm:$0xff]
    %v287 = vld [vmem:[%s1 + $0x810] sm:$0xff]
    %v288 = vld [vmem:[%s1 + $0x818] sm:$0xff]
    %v289 = vld [vmem:[%s1 + $0x820] sm:$0xff]
    %v290 = vld [vmem:[%s1 + $0x828] sm:$0xff]
    %v291 = vld [vmem:[%s1 + $0x830] sm:$0xff]
    %v292 = vld [vmem:[%s1 + $0x838] sm:$0xff]
    %v293 = vld [vmem:[%s1 + $0x840] sm:$0xff]
    %v294 = vld [vmem:[%s1 + $0x848] sm:$0xff]
    %v295 = vld [vmem:[%s1 + $0x850] sm:$0xff]
    %v296 = vld [vmem:[%s1 + $0x858] sm:$0xff]
    %v297 = vld [vmem:[%s1 + $0x860] sm:$0xff]
    %v298 = vld [vmem:[%s1 + $0x868] sm:$0xff]
    %v299 = vld [vmem:[%s1 + $0x870] sm:$0xff]
    %v300 = vld [vmem:[%s1 + $0x878] sm:$0xff]
    %v301 = vld [vmem:[%s1 + $0x880] sm:$0xff]
    %v302 = vld [vmem:[%s1 + $0x888] sm:$0xff]
    %v303 = vld [vmem:[%s1 + $0x890] sm:$0xff]
    %v304 = vld [vmem:[%s1 + $0x898] sm:$0xff]
    %v305 = vld [vmem:[%s1 + $0x8a0] sm:$0xff]
    %v306 = vld [vmem:[%s1 + $0x8a8] sm:$0xff]
    %v307 = vld [vmem:[%s1 + $0x8b0] sm:$0xff]
    %v308 = vld [vmem:[%s1 + $0x8b8] sm:$0xff]
    %v309 = vld [vmem:[%s1 + $0x8c0] sm:$0xff]
    %v310 = vld [vmem:[%s1 + $0x8c8] sm:$0xff]
    %v311 = vld [vmem:[%s1 + $0x8d0] sm:$0xff]
    %v312 = vld [vmem:[%s1 + $0x8d8] sm:$0xff]
    %v313 = vld [vmem:[%s1 + $0x8e0] sm:$0xff]
    %v314 = vld [vmem:[%s1 + $0x8e8] sm:$0xff]
    %v315 = vld [vmem:[%s1 + $0x8f0] sm:$0xff]
    %v316 = vld [vmem:[%s1 + $0x8f8] sm:$0xff]
    %v317 = vld [vmem:[%s1 + $0x900] sm:$0xff]
    %v318 = vld [vmem:[%s1 + $0x908] sm:$0xff]
    %v319 = vld [vmem:[%s1 + $0x910] sm:$0xff]
    %v320 = vld [vmem:[%s1 + $0x918] sm:$0xff]
    %v321 = vld [vmem:[%s1 + $0x920] sm:$0xff]
    %v322 = vld [vmem:[%s1 + $0x928] sm:$0xff]
    %v323 = vld [vmem:[%s1 + $0x930] sm:$0xff]
    %v324 = vld [vmem:[%s1 + $0x938] sm:$0xff]
    %v325 = vld [vmem:[%s1 + $0x940] sm:$0xff]
    %v326 = vld [vmem:[%s1 + $0x948] sm:$0xff]
    %v327 = vld [vmem:[%s1 + $0x950] sm:$0xff]
    %v328 = vld [vmem:[%s1 + $0x958] sm:$0xff]
    %v329 = vld [vmem:[%s1 + $0x960] sm:$0xff]
    %v330 = vld [vmem:[%s1 + $0x968] sm:$0xff]
    %v331 = vld [vmem:[%s1 + $0x970] sm:$0xff]
    %v332 = vld [vmem:[%s1 + $0x978] sm:$0xff]
    %v333 = vld [vmem:[%s1 + $0x980] sm:$0xff]
    %v334 = vld [vmem:[%s1 + $0x988] sm:$0xff]
    %v335 = vld [vmem:[%s1 + $0x990] sm:$0xff]
    %v336 = vld [vmem:[%s1 + $0x998] sm:$0xff]
    %v337 = vld [vmem:[%s1 + $0x9a0] sm:$0xff]
    %v338 = vld [vmem:[%s1 + $0x9a8] sm:$0xff]
    %v339 = vld [vmem:[%s1 + $0x9b0] sm:$0xff]
    %v340 = vld [vmem:[%s1 + $0x9b8] sm:$0xff]
    %v341 = vld [vmem:[%s1 + $0x9c0] sm:$0xff]
    %v342 = vld [vmem:[%s1 + $0x9c8] sm:$0xff]
    %v343 = vld [vmem:[%s1 + $0x9d0] sm:$0xff]
    %v344 = vld [vmem:[%s1 + $0x9d8] sm:$0xff]
    %v345 = vld [vmem:[%s1 + $0x9e0] sm:$0xff]
    %v346 = vld [vmem:[%s1 + $0x9e8] sm:$0xff]
    %v347 = vld [vmem:[%s1 + $0x9f0] sm:$0xff]
    %v348 = vld [vmem:[%s1 + $0x9f8] sm:$0xff]
    %v349 = vld [vmem:[%s1 + $0xa00] sm:$0xff]
    %v350 = vld [vmem:[%s1 + $0xa08] sm:$0xff]
    %v351 = vld [vmem:[%s1 + $0xa10] sm:$0xff]
    %v352 = vld [vmem:[%s1 + $0xa18] sm:$0xff]
    %v353 = vld [vmem:[%s1 + $0xa20] sm:$0xff]
    %v354 = vld [vmem:[%s1 + $0xa28] sm:$0xff]
    %v355 = vld [vmem:[%s1 + $0xa30] sm:$0xff]
    %v356 = vld [vmem:[%s1 + $0xa38] sm:$0xff]
    %v357 = vld [vmem:[%s1 + $0xa40] sm:$0xff]
    %v358 = vld [vmem:[%s1 + $0xa48] sm:$0xff]
    %v359 = vld [vmem:[%s1 + $0xa50] sm:$0xff]
    %v360 = vld [vmem:[%s1 + $0xa58] sm:$0xff]
    %v361 = vld [vmem:[%s1 + $0xa60] sm:$0xff]
    %v362 = vld [vmem:[%s1 + $0xa68] sm:$0xff]
    %v363 = vld [vmem:[%s1 + $0xa70] sm:$0xff]
    %v364 = vld [vmem:[%s1 + $0xa78] sm:$0xff]
    %v365 = vld [vmem:[%s1 + $0xa80] sm:$0xff]
    %v366 = vld [vmem:[%s1 + $0xa88] sm:$0xff]
    %v367 = vld [vmem:[%s1 + $0xa90] sm:$0xff]
    %v368 = vld [vmem:[%s1 + $0xa98] sm:$0xff]
    %v369 = vld [vmem:[%s1 + $0xaa0] sm:$0xff]
    %v370 = vld [vmem:[%s1 + $0xaa8] sm:$0xff]
    %v371 = vld [vmem:[%s1 + $0xab0] sm:$0xff]
    %v372 = vld [vmem:[%s1 + $0xab8] sm:$0xff]
    %v373 = vld [vmem:[%s1 + $0xac0] sm:$0xff]
    %v374 = vld [vmem:[%s1 + $0xac8] sm:$0xff]
    %v375 = vld [vmem:[%s1 + $0xad0] sm:$0xff]
    %v376 = vld [vmem:[%s1 + $0xad8] sm:$0xff]
    %v377 = vld [vmem:[%s1 + $0xae0] sm:$0xff]
    %v378 = vld [vmem:[%s1 + $0xae8] sm:$0xff]
    %v379 = vld [vmem:[%s1 + $0xaf0] sm:$0xff]
    %v380 = vld [vmem:[%s1 + $0xaf8] sm:$0xff]
    %v381 = vld [vmem:[%s1 + $0xb00] sm:$0xff]
    %v382 = vld [vmem:[%s1 + $0xb08] sm:$0xff]
    %v383 = vld [vmem:[%s1 + $0xb10] sm:$0xff]
    %v384 = vld [vmem:[%s1 + $0xb18] sm:$0xff]
    %v385 = vld [vmem:[%s1 + $0xb20] sm:$0xff]
    %v386 = vld [vmem:[%s1 + $0xb28] sm:$0xff]
    %v387 = vld [vmem:[%s1 + $0xb30] sm:$0xff]
    %v388 = vld [vmem:[%s1 + $0xb38] sm:$0xff]
    %v389 = vld [vmem:[%s1 + $0xb40] sm:$0xff]
    %v390 = vld [vmem:[%s1 + $0xb48] sm:$0xff]
    %v391 = vld [vmem:[%s1 + $0xb50] sm:$0xff]
    %v392 = vld [vmem:[%s1 + $0xb58] sm:$0xff]
    %v393 = vld [vmem:[%s1 + $0xb60] sm:$0xff]
    %v394 = vld [vmem:[%s1 + $0xb68] sm:$0xff]
    %v395 = vld [vmem:[%s1 + $0xb70] sm:$0xff]
    %v396 = vld [vmem:[%s1 + $0xb78] sm:$0xff]
    %v397 = vld [vmem:[%s1 + $0xb80] sm:$0xff]
    %v398 = vld [vmem:[%s1 + $0xb88] sm:$0xff]
    %v399 = vld [vmem:[%s1 + $0xb90] sm:$0xff]
    %v400 = vld [vmem:[%s1 + $0xb98] sm:$0xff]
    %v401 = vld [vmem:[%s1 + $0xba0] sm:$0xff]
    %v402 = vld [vmem:[%s1 + $0xba8] sm:$0xff]
    %v403 = vld [vmem:[%s1 + $0xbb0] sm:$0xff]
    %v404 = vld [vmem:[%s1 + $0xbb8] sm:$0xff]
    %v405 = vld [vmem:[%s1 + $0xbc0] sm:$0xff]
    %v406 = vld [vmem:[%s1 + $0xbc8] sm:$0xff]
    %v407 = vld [vmem:[%s1 + $0xbd0] sm:$0xff]
    %v408 = vld [vmem:[%s1 + $0xbd8] sm:$0xff]
    %v409 = vld [vmem:[%s1 + $0xbe0] sm:$0xff]
    %v410 = vld [vmem:[%s1 + $0xbe8] sm:$0xff]
    %v411 = vld [vmem:[%s1 + $0xbf0] sm:$0xff]
    %v412 = vld [vmem:[%s1 + $0xbf8] sm:$0xff]
    %v413 = vld [vmem:[%s1 + $0xc00] sm:$0xff]
    %v414 = vld [vmem:[%s1 + $0xc08] sm:$0xff]
    %v415 = vld [vmem:[%s1 + $0xc10] sm:$0xff]
    %v416 = vld [vmem:[%s1 + $0xc18] sm:$0xff]
    %v417 = vld [vmem:[%s1 + $0xc20] sm:$0xff]
    %v418 = vld [vmem:[%s1 + $0xc28] sm:$0xff]
    %v419 = vld [vmem:[%s1 + $0xc30] sm:$0xff]
    %v420 = vld [vmem:[%s1 + $0xc38] sm:$0xff]
    %v421 = vld [vmem:[%s1 + $0xc40] sm:$0xff]
    %v422 = vld [vmem:[%s1 + $0xc48] sm:$0xff]
    %v423 = vld [vmem:[%s1 + $0xc50] sm:$0xff]
    %v424 = vld [vmem:[%s1 + $0xc58] sm:$0xff]
    %v425 = vld [vmem:[%s1 + $0xc60] sm:$0xff]
    %v426 = vld [vmem:[%s1 + $0xc68] sm:$0xff]
    %v427 = vld [vmem:[%s1 + $0xc70] sm:$0xff]
    %v428 = vld [vmem:[%s1 + $0xc78] sm:$0xff]
    %v429 = vld [vmem:[%s1 + $0xc80] sm:$0xff]
    %v430 = vld [vmem:[%s1 + $0xc88] sm:$0xff]
    %v431 = vld [vmem:[%s1 + $0xc90] sm:$0xff]
    %v432 = vld [vmem:[%s1 + $0xc98] sm:$0xff]
    %v433 = vld [vmem:[%s1 + $0xca0] sm:$0xff]
    %v434 = vld [vmem:[%s1 + $0xca8] sm:$0xff]
    %v435 = vld [vmem:[%s1 + $0xcb0] sm:$0xff]
    %v436 = vld [vmem:[%s1 + $0xcb8] sm:$0xff]
    %v437 = vld [vmem:[%s1 + $0xcc0] sm:$0xff]
    %v438 = vld [vmem:[%s1 + $0xcc8] sm:$0xff]
    %v439 = vld [vmem:[%s1 + $0xcd0] sm:$0xff]
    %v440 = vld [vmem:[%s1 + $0xcd8] sm:$0xff]
    %v441 = vld [vmem:[%s1 + $0xce0] sm:$0xff]
    %v442 = vld [vmem:[%s1 + $0xce8] sm:$0xff]
    %v443 = vld [vmem:[%s1 + $0xcf0] sm:$0xff]
    %v444 = vld [vmem:[%s1 + $0xcf8] sm:$0xff]
    %v445 = vld [vmem:[%s1 + $0xd00] sm:$0xff]
    %v446 = vld [vmem:[%s1 + $0xd08] sm:$0xff]
    %v447 = vld [vmem:[%s1 + $0xd10] sm:$0xff]
    %v448 = vld [vmem:[%s1 + $0xd18] sm:$0xff]
    %v449 = vld [vmem:[%s1 + $0xd20] sm:$0xff]
    %v450 = vld [vmem:[%s1 + $0xd28] sm:$0xff]
    %v451 = vld [vmem:[%s1 + $0xd30] sm:$0xff]
    %v452 = vld [vmem:[%s1 + $0xd38] sm:$0xff]
    %v453 = vld [vmem:[%s1 + $0xd40] sm:$0xff]
    %v454 = vld [vmem:[%s1 + $0xd48] sm:$0xff]
    %v455 = vld [vmem:[%s1 + $0xd50] sm:$0xff]
    %v456 = vld [vmem:[%s1 + $0xd58] sm:$0xff]
    %v457 = vld [vmem:[%s1 + $0xd60] sm:$0xff]
    %v458 = vld [vmem:[%s1 + $0xd68] sm:$0xff]
    %v459 = vld [vmem:[%s1 + $0xd70] sm:$0xff]
    %v460 = vld [vmem:[%s1 + $0xd78] sm:$0xff]
    %v461 = vld [vmem:[%s1 + $0xd80] sm:$0xff]
    %v462 = vld [vmem:[%s1 + $0xd88] sm:$0xff]
    %v463 = vld [vmem:[%s1 + $0xd90] sm:$0xff]
    %v464 = vld [vmem:[%s1 + $0xd98] sm:$0xff]
    %v465 = vld [vmem:[%s1 + $0xda0] sm:$0xff]
    %v466 = vld [vmem:[%s1 + $0xda8] sm:$0xff]
    %v467 = vld [vmem:[%s1 + $0xdb0] sm:$0xff]
    %v468 = vld [vmem:[%s1 + $0xdb8] sm:$0xff]
    %v469 = vld [vmem:[%s1 + $0xdc0] sm:$0xff]
    %v470 = vld [vmem:[%s1 + $0xdc8] sm:$0xff]
    %v471 = vld [vmem:[%s1 + $0xdd0] sm:$0xff]
    %v472 = vld [vmem:[%s1 + $0xdd8] sm:$0xff]
    %v473 = vld [vmem:[%s1 + $0xde0] sm:$0xff]
    %v474 = vld [vmem:[%s1 + $0xde8] sm:$0xff]
    %v475 = vld [vmem:[%s1 + $0xdf0] sm:$0xff]
    %v476 = vld [vmem:[%s1 + $0xdf8] sm:$0xff]
    %v477 = vld [vmem:[%s1 + $0xe00] sm:$0xff]
    %v478 = vld [vmem:[%s1 + $0xe08] sm:$0xff]
    %v479 = vld [vmem:[%s1 + $0xe10] sm:$0xff]
    %v480 = vld [vmem:[%s1 + $0xe18] sm:$0xff]
    %v481 = vld [vmem:[%s1 + $0xe20] sm:$0xff]
    %v482 = vld [vmem:[%s1 + $0xe28] sm:$0xff]
    %v483 = vld [vmem:[%s1 + $0xe30] sm:$0xff]
    %v484 = vld [vmem:[%s1 + $0xe38] sm:$0xff]
    %v485 = vld [vmem:[%s1 + $0xe40] sm:$0xff]
    %v486 = vld [vmem:[%s1 + $0xe48] sm:$0xff]
    %v487 = vld [vmem:[%s1 + $0xe50] sm:$0xff]
    %v488 = vld [vmem:[%s1 + $0xe58] sm:$0xff]
    %v489 = vld [vmem:[%s1 + $0xe60] sm:$0xff]
    %v490 = vld [vmem:[%s1 + $0xe68] sm:$0xff]
    %v491 = vld [vmem:[%s1 + $0xe70] sm:$0xff]
    %v492 = vld [vmem:[%s1 + $0xe78] sm:$0xff]
    %v493 = vld [vmem:[%s1 + $0xe80] sm:$0xff]
    %v494 = vld [vmem:[%s1 + $0xe88] sm:$0xff]
    %v495 = vld [vmem:[%s1 + $0xe90] sm:$0xff]
    %v496 = vld [vmem:[%s1 + $0xe98] sm:$0xff]
    %v497 = vld [vmem:[%s1 + $0xea0] sm:$0xff]
    %v498 = vld [vmem:[%s1 + $0xea8] sm:$0xff]
    %v499 = vld [vmem:[%s1 + $0xeb0] sm:$0xff]
    %v500 = vld [vmem:[%s1 + $0xeb8] sm:$0xff]
    %v501 = vld [vmem:[%s1 + $0xec0] sm:$0xff]
    %v502 = vld [vmem:[%s1 + $0xec8] sm:$0xff]
    %v503 = vld [vmem:[%s1 + $0xed0] sm:$0xff]
    %v504 = vld [vmem:[%s1 + $0xed8] sm:$0xff]
    %v505 = vld [vmem:[%s1 + $0xee0] sm:$0xff]
    %v506 = vld [vmem:[%s1 + $0xee8] sm:$0xff]
    %v507 = vld [vmem:[%s1 + $0xef0] sm:$0xff]
    %v508 = vld [vmem:[%s1 + $0xef8] sm:$0xff]
    %v509 = vld [vmem:[%s1 + $0xf00] sm:$0xff]
    %v510 = vld [vmem:[%s1 + $0xf08] sm:$0xff]
    %v511 = vld [vmem:[%s1 + $0xf10] sm:$0xff]
    %v512 = vld [vmem:[%s1 + $0xf18] sm:$0xff]
    %v513 = vld [vmem:[%s1 + $0xf20] sm:$0xff]
    %v514 = vld [vmem:[%s1 + $0xf28] sm:$0xff]
    %v515 = vld [vmem:[%s1 + $0xf30] sm:$0xff]
    %v516 = vld [vmem:[%s1 + $0xf38] sm:$0xff]
    %v517 = vld [vmem:[%s1 + $0xf40] sm:$0xff]
    %v518 = vld [vmem:[%s1 + $0xf48] sm:$0xff]
    %v519 = vld [vmem:[%s1 + $0xf50] sm:$0xff]
    %v520 = vld [vmem:[%s1 + $0xf58] sm:$0xff]
    %v521 = vld [vmem:[%s1 + $0xf60] sm:$0xff]
    %v522 = vld [vmem:[%s1 + $0xf68] sm:$0xff]
    %v523 = vld [vmem:[%s1 + $0xf70] sm:$0xff]
    %v524 = vld [vmem:[%s1 + $0xf78] sm:$0xff]
    %v525 = vld [vmem:[%s1 + $0xf80] sm:$0xff]
    %v526 = vld [vmem:[%s1 + $0xf88] sm:$0xff]
    %v527 = vld [vmem:[%s1 + $0xf90] sm:$0xff]
    %v528 = vld [vmem:[%s1 + $0xf98] sm:$0xff]
    %v529 = vld [vmem:[%s1 + $0xfa0] sm:$0xff]
    %v530 = vld [vmem:[%s1 + $0xfa8] sm:$0xff]
    %v531 = vld [vmem:[%s1 + $0xfb0] sm:$0xff]
    %v532 = vld [vmem:[%s1 + $0xfb8] sm:$0xff]
    %v533 = vld [vmem:[%s1 + $0xfc0] sm:$0xff]
    %v534 = vld [vmem:[%s1 + $0xfc8] sm:$0xff]
    %v535 = vld [vmem:[%s1 + $0xfd0] sm:$0xff]
    %v536 = vld [vmem:[%s1 + $0xfd8] sm:$0xff]
    %v537 = vld [vmem:[%s1 + $0xfe0] sm:$0xff]
    %v538 = vld [vmem:[%s1 + $0xfe8] sm:$0xff]
    %v539 = vld [vmem:[%s1 + $0xff0] sm:$0xff]
    %v540 = vld [vmem:[%s1 + $0xff8] sm:$0xff]
    %v541 = vld [vmem:[%s2] sm:$0xf]
    %v543 = vperm.slane %v541, 0
    %v544 = vperm.slane %v541, 1
    %v545 = vperm.slane %v541, 2
    %v546 = vperm.slane %v541, 3
    %553 = vst [vmem:[#allocation1] ss:$4 sm:$0xff] %v27
    %s554 = scalar_lea.vmem [#allocation1], 32
    %555 = vst [vmem:[%s554] ss:$4 sm:$0xff] %v28
    %v556 = vld.sshfl [vmem:[#allocation1] sm:$0xff pattern:$0x73625140]
    %v557 = vld.sshfl [vmem:[#allocation1 + $0x8] sm:$0xff pattern:$0x73625140]
    %v558 = vld.sshfl [vmem:[#allocation1 + $0x10] sm:$0xff pattern:$0x73625140]
    %v559 = vld.sshfl [vmem:[#allocation1 + $0x18] sm:$0xff pattern:$0x73625140]
    %v560 = vld.sshfl [vmem:[#allocation1 + $0x20] sm:$0xff pattern:$0x73625140]
    %v561 = vld.sshfl [vmem:[#allocation1 + $0x28] sm:$0xff pattern:$0x73625140]
    %v562 = vld.sshfl [vmem:[#allocation1 + $0x30] sm:$0xff pattern:$0x73625140]
    %v563 = vld.sshfl [vmem:[#allocation1 + $0x38] sm:$0xff pattern:$0x73625140]
    %572 = vmatpush.msra.mxu0 %v89
    %573 = vmatpush.msra.mxu0 %v85
    %574 = vmatpush.msra.mxu0 %v81
    %575 = vmatpush.msra.mxu0 %v77
    %576 = vmatpush.msra.mxu0 %v73
    %577 = vmatpush.msra.mxu0 %v69
    %578 = vmatpush.msra.mxu0 %v65
    %579 = vmatpush.msra.mxu0 %v61
    %580 = vmatpush.msra.mxu0 %v57
    %581 = vmatpush.msra.mxu0 %v53
    %582 = vmatpush.msra.mxu0 %v49
    %583 = vmatpush.msra.mxu0 %v45
    %584 = vmatpush.msra.mxu0 %v41
    %585 = vmatpush.msra.mxu0 %v37
    %586 = vmatpush.msra.mxu0 %v33
    %587 = vmatpush.msra.mxu0 %v29
    %588 = vmatmul.f32.gmra.mxu0 %v556
    %v589 = vpop.f32.mrf.mxu0
    %v590 = vadd.f32 %v543, %v589
    %591 = vdwg.mxu0
    %592 = vmatpush.msra.mxu0 %v153
    %593 = vmatpush.msra.mxu0 %v149
    %594 = vmatpush.msra.mxu0 %v145
    %595 = vmatpush.msra.mxu0 %v141
    %596 = vmatpush.msra.mxu0 %v137
    %597 = vmatpush.msra.mxu0 %v133
    %598 = vmatpush.msra.mxu0 %v129
    %599 = vmatpush.msra.mxu0 %v125
    %600 = vmatpush.msra.mxu0 %v121
    %601 = vmatpush.msra.mxu0 %v117
    %602 = vmatpush.msra.mxu0 %v113
    %603 = vmatpush.msra.mxu0 %v109
    %604 = vmatpush.msra.mxu0 %v105
    %605 = vmatpush.msra.mxu0 %v101
    %606 = vmatpush.msra.mxu0 %v97
    %607 = vmatpush.msra.mxu0 %v93
    %608 = vmatmul.f32.gmra.mxu0 %v557
    %v609 = vpop.f32.mrf.mxu0
    %v610 = vadd.f32 %v590, %v609
    %611 = vdwg.mxu0
    %612 = vmatpush.msra.mxu0 %v217
    %613 = vmatpush.msra.mxu0 %v213
    %614 = vmatpush.msra.mxu0 %v209
    %615 = vmatpush.msra.mxu0 %v205
    %616 = vmatpush.msra.mxu0 %v201
    %617 = vmatpush.msra.mxu0 %v197
    %618 = vmatpush.msra.mxu0 %v193
    %619 = vmatpush.msra.mxu0 %v189
    %620 = vmatpush.msra.mxu0 %v185
    %621 = vmatpush.msra.mxu0 %v181
    %622 = vmatpush.msra.mxu0 %v177
    %623 = vmatpush.msra.mxu0 %v173
    %624 = vmatpush.msra.mxu0 %v169
    %625 = vmatpush.msra.mxu0 %v165
    %626 = vmatpush.msra.mxu0 %v161
    %627 = vmatpush.msra.mxu0 %v157
    %628 = vmatmul.f32.gmra.mxu0 %v558
    %v629 = vpop.f32.mrf.mxu0
    %v630 = vadd.f32 %v610, %v629
    %631 = vdwg.mxu0
    %632 = vmatpush.msra.mxu0 %v281
    %633 = vmatpush.msra.mxu0 %v277
    %634 = vmatpush.msra.mxu0 %v273
    %635 = vmatpush.msra.mxu0 %v269
    %636 = vmatpush.msra.mxu0 %v265
    %637 = vmatpush.msra.mxu0 %v261
    %638 = vmatpush.msra.mxu0 %v257
    %639 = vmatpush.msra.mxu0 %v253
    %640 = vmatpush.msra.mxu0 %v249
    %641 = vmatpush.msra.mxu0 %v245
    %642 = vmatpush.msra.mxu0 %v241
    %643 = vmatpush.msra.mxu0 %v237
    %644 = vmatpush.msra.mxu0 %v233
    %645 = vmatpush.msra.mxu0 %v229
    %646 = vmatpush.msra.mxu0 %v225
    %647 = vmatpush.msra.mxu0 %v221
    %648 = vmatmul.f32.gmra.mxu0 %v559
    %v649 = vpop.f32.mrf.mxu0
    %v650 = vadd.f32 %v630, %v649
    %651 = vdwg.mxu0
    %652 = vmatpush.msra.mxu0 %v345
    %653 = vmatpush.msra.mxu0 %v341
    %654 = vmatpush.msra.mxu0 %v337
    %655 = vmatpush.msra.mxu0 %v333
    %656 = vmatpush.msra.mxu0 %v329
    %657 = vmatpush.msra.mxu0 %v325
    %658 = vmatpush.msra.mxu0 %v321
    %659 = vmatpush.msra.mxu0 %v317
    %660 = vmatpush.msra.mxu0 %v313
    %661 = vmatpush.msra.mxu0 %v309
    %662 = vmatpush.msra.mxu0 %v305
    %663 = vmatpush.msra.mxu0 %v301
    %664 = vmatpush.msra.mxu0 %v297
    %665 = vmatpush.msra.mxu0 %v293
    %666 = vmatpush.msra.mxu0 %v289
    %667 = vmatpush.msra.mxu0 %v285
    %668 = vmatmul.f32.gmra.mxu0 %v560
    %v669 = vpop.f32.mrf.mxu0
    %v670 = vadd.f32 %v650, %v669
    %671 = vdwg.mxu0
    %672 = vmatpush.msra.mxu0 %v409
    %673 = vmatpush.msra.mxu0 %v405
    %674 = vmatpush.msra.mxu0 %v401
    %675 = vmatpush.msra.mxu0 %v397
    %676 = vmatpush.msra.mxu0 %v393
    %677 = vmatpush.msra.mxu0 %v389
    %678 = vmatpush.msra.mxu0 %v385
    %679 = vmatpush.msra.mxu0 %v381
    %680 = vmatpush.msra.mxu0 %v377
    %681 = vmatpush.msra.mxu0 %v373
    %682 = vmatpush.msra.mxu0 %v369
    %683 = vmatpush.msra.mxu0 %v365
    %684 = vmatpush.msra.mxu0 %v361
    %685 = vmatpush.msra.mxu0 %v357
    %686 = vmatpush.msra.mxu0 %v353
    %687 = vmatpush.msra.mxu0 %v349
    %688 = vmatmul.f32.gmra.mxu0 %v561
    %v689 = vpop.f32.mrf.mxu0
    %v690 = vadd.f32 %v670, %v689
    %691 = vdwg.mxu0
    %692 = vmatpush.msra.mxu0 %v473
    %693 = vmatpush.msra.mxu0 %v469
    %694 = vmatpush.msra.mxu0 %v465
    %695 = vmatpush.msra.mxu0 %v461
    %696 = vmatpush.msra.mxu0 %v457
    %697 = vmatpush.msra.mxu0 %v453
    %698 = vmatpush.msra.mxu0 %v449
    %699 = vmatpush.msra.mxu0 %v445
    %700 = vmatpush.msra.mxu0 %v441
    %701 = vmatpush.msra.mxu0 %v437
    %702 = vmatpush.msra.mxu0 %v433
    %703 = vmatpush.msra.mxu0 %v429
    %704 = vmatpush.msra.mxu0 %v425
    %705 = vmatpush.msra.mxu0 %v421
    %706 = vmatpush.msra.mxu0 %v417
    %707 = vmatpush.msra.mxu0 %v413
    %708 = vmatmul.f32.gmra.mxu0 %v562
    %v709 = vpop.f32.mrf.mxu0
    %v710 = vadd.f32 %v690, %v709
    %711 = vdwg.mxu0
    %712 = vmatpush.msra.mxu0 %v537
    %713 = vmatpush.msra.mxu0 %v533
    %714 = vmatpush.msra.mxu0 %v529
    %715 = vmatpush.msra.mxu0 %v525
    %716 = vmatpush.msra.mxu0 %v521
    %717 = vmatpush.msra.mxu0 %v517
    %718 = vmatpush.msra.mxu0 %v513
    %719 = vmatpush.msra.mxu0 %v509
    %720 = vmatpush.msra.mxu0 %v505
    %721 = vmatpush.msra.mxu0 %v501
    %722 = vmatpush.msra.mxu0 %v497
    %723 = vmatpush.msra.mxu0 %v493
    %724 = vmatpush.msra.mxu0 %v489
    %725 = vmatpush.msra.mxu0 %v485
    %726 = vmatpush.msra.mxu0 %v481
    %727 = vmatpush.msra.mxu0 %v477
    %728 = vmatmul.f32.gmra.mxu0 %v563
    %v729 = vpop.f32.mrf.mxu0
    %v730 = vadd.f32 %v710, %v729
    %731 = vdwg.mxu0
    %732 = vmatpush.msra.mxu0 %v90
    %733 = vmatpush.msra.mxu0 %v86
    %734 = vmatpush.msra.mxu0 %v82
    %735 = vmatpush.msra.mxu0 %v78
    %736 = vmatpush.msra.mxu0 %v74
    %737 = vmatpush.msra.mxu0 %v70
    %738 = vmatpush.msra.mxu0 %v66
    %739 = vmatpush.msra.mxu0 %v62
    %740 = vmatpush.msra.mxu0 %v58
    %741 = vmatpush.msra.mxu0 %v54
    %742 = vmatpush.msra.mxu0 %v50
    %743 = vmatpush.msra.mxu0 %v46
    %744 = vmatpush.msra.mxu0 %v42
    %745 = vmatpush.msra.mxu0 %v38
    %746 = vmatpush.msra.mxu0 %v34
    %747 = vmatpush.msra.mxu0 %v30
    %748 = vmatmul.f32.gmra.mxu0 %v556
    %v749 = vpop.f32.mrf.mxu0
    %v750 = vadd.f32 %v544, %v749
    %751 = vdwg.mxu0
    %752 = vmatpush.msra.mxu0 %v154
    %753 = vmatpush.msra.mxu0 %v150
    %754 = vmatpush.msra.mxu0 %v146
    %755 = vmatpush.msra.mxu0 %v142
    %756 = vmatpush.msra.mxu0 %v138
    %757 = vmatpush.msra.mxu0 %v134
    %758 = vmatpush.msra.mxu0 %v130
    %759 = vmatpush.msra.mxu0 %v126
    %760 = vmatpush.msra.mxu0 %v122
    %761 = vmatpush.msra.mxu0 %v118
    %762 = vmatpush.msra.mxu0 %v114
    %763 = vmatpush.msra.mxu0 %v110
    %764 = vmatpush.msra.mxu0 %v106
    %765 = vmatpush.msra.mxu0 %v102
    %766 = vmatpush.msra.mxu0 %v98
    %767 = vmatpush.msra.mxu0 %v94
    %768 = vmatmul.f32.gmra.mxu0 %v557
    %v769 = vpop.f32.mrf.mxu0
    %v770 = vadd.f32 %v750, %v769
    %771 = vdwg.mxu0
    %772 = vmatpush.msra.mxu0 %v218
    %773 = vmatpush.msra.mxu0 %v214
    %774 = vmatpush.msra.mxu0 %v210
    %775 = vmatpush.msra.mxu0 %v206
    %776 = vmatpush.msra.mxu0 %v202
    %777 = vmatpush.msra.mxu0 %v198
    %778 = vmatpush.msra.mxu0 %v194
    %779 = vmatpush.msra.mxu0 %v190
    %780 = vmatpush.msra.mxu0 %v186
    %781 = vmatpush.msra.mxu0 %v182
    %782 = vmatpush.msra.mxu0 %v178
    %783 = vmatpush.msra.mxu0 %v174
    %784 = vmatpush.msra.mxu0 %v170
    %785 = vmatpush.msra.mxu0 %v166
    %786 = vmatpush.msra.mxu0 %v162
    %787 = vmatpush.msra.mxu0 %v158
    %788 = vmatmul.f32.gmra.mxu0 %v558
    %v789 = vpop.f32.mrf.mxu0
    %v790 = vadd.f32 %v770, %v789
    %791 = vdwg.mxu0
    %792 = vmatpush.msra.mxu0 %v282
    %793 = vmatpush.msra.mxu0 %v278
    %794 = vmatpush.msra.mxu0 %v274
    %795 = vmatpush.msra.mxu0 %v270
    %796 = vmatpush.msra.mxu0 %v266
    %797 = vmatpush.msra.mxu0 %v262
    %798 = vmatpush.msra.mxu0 %v258
    %799 = vmatpush.msra.mxu0 %v254
    %800 = vmatpush.msra.mxu0 %v250
    %801 = vmatpush.msra.mxu0 %v246
    %802 = vmatpush.msra.mxu0 %v242
    %803 = vmatpush.msra.mxu0 %v238
    %804 = vmatpush.msra.mxu0 %v234
    %805 = vmatpush.msra.mxu0 %v230
    %806 = vmatpush.msra.mxu0 %v226
    %807 = vmatpush.msra.mxu0 %v222
    %808 = vmatmul.f32.gmra.mxu0 %v559
    %v809 = vpop.f32.mrf.mxu0
    %v810 = vadd.f32 %v790, %v809
    %811 = vdwg.mxu0
    %812 = vmatpush.msra.mxu0 %v346
    %813 = vmatpush.msra.mxu0 %v342
    %814 = vmatpush.msra.mxu0 %v338
    %815 = vmatpush.msra.mxu0 %v334
    %816 = vmatpush.msra.mxu0 %v330
    %817 = vmatpush.msra.mxu0 %v326
    %818 = vmatpush.msra.mxu0 %v322
    %819 = vmatpush.msra.mxu0 %v318
    %820 = vmatpush.msra.mxu0 %v314
    %821 = vmatpush.msra.mxu0 %v310
    %822 = vmatpush.msra.mxu0 %v306
    %823 = vmatpush.msra.mxu0 %v302
    %824 = vmatpush.msra.mxu0 %v298
    %825 = vmatpush.msra.mxu0 %v294
    %826 = vmatpush.msra.mxu0 %v290
    %827 = vmatpush.msra.mxu0 %v286
    %828 = vmatmul.f32.gmra.mxu0 %v560
    %v829 = vpop.f32.mrf.mxu0
    %v830 = vadd.f32 %v810, %v829
    %831 = vdwg.mxu0
    %832 = vmatpush.msra.mxu0 %v410
    %833 = vmatpush.msra.mxu0 %v406
    %834 = vmatpush.msra.mxu0 %v402
    %835 = vmatpush.msra.mxu0 %v398
    %836 = vmatpush.msra.mxu0 %v394
    %837 = vmatpush.msra.mxu0 %v390
    %838 = vmatpush.msra.mxu0 %v386
    %839 = vmatpush.msra.mxu0 %v382
    %840 = vmatpush.msra.mxu0 %v378
    %841 = vmatpush.msra.mxu0 %v374
    %842 = vmatpush.msra.mxu0 %v370
    %843 = vmatpush.msra.mxu0 %v366
    %844 = vmatpush.msra.mxu0 %v362
    %845 = vmatpush.msra.mxu0 %v358
    %846 = vmatpush.msra.mxu0 %v354
    %847 = vmatpush.msra.mxu0 %v350
    %848 = vmatmul.f32.gmra.mxu0 %v561
    %v849 = vpop.f32.mrf.mxu0
    %v850 = vadd.f32 %v830, %v849
    %851 = vdwg.mxu0
    %852 = vmatpush.msra.mxu0 %v474
    %853 = vmatpush.msra.mxu0 %v470
    %854 = vmatpush.msra.mxu0 %v466
    %855 = vmatpush.msra.mxu0 %v462
    %856 = vmatpush.msra.mxu0 %v458
    %857 = vmatpush.msra.mxu0 %v454
    %858 = vmatpush.msra.mxu0 %v450
    %859 = vmatpush.msra.mxu0 %v446
    %860 = vmatpush.msra.mxu0 %v442
    %861 = vmatpush.msra.mxu0 %v438
    %862 = vmatpush.msra.mxu0 %v434
    %863 = vmatpush.msra.mxu0 %v430
    %864 = vmatpush.msra.mxu0 %v426
    %865 = vmatpush.msra.mxu0 %v422
    %866 = vmatpush.msra.mxu0 %v418
    %867 = vmatpush.msra.mxu0 %v414
    %868 = vmatmul.f32.gmra.mxu0 %v562
    %v869 = vpop.f32.mrf.mxu0
    %v870 = vadd.f32 %v850, %v869
    %871 = vdwg.mxu0
    %872 = vmatpush.msra.mxu0 %v538
    %873 = vmatpush.msra.mxu0 %v534
    %874 = vmatpush.msra.mxu0 %v530
    %875 = vmatpush.msra.mxu0 %v526
    %876 = vmatpush.msra.mxu0 %v522
    %877 = vmatpush.msra.mxu0 %v518
    %878 = vmatpush.msra.mxu0 %v514
    %879 = vmatpush.msra.mxu0 %v510
    %880 = vmatpush.msra.mxu0 %v506
    %881 = vmatpush.msra.mxu0 %v502
    %882 = vmatpush.msra.mxu0 %v498
    %883 = vmatpush.msra.mxu0 %v494
    %884 = vmatpush.msra.mxu0 %v490
    %885 = vmatpush.msra.mxu0 %v486
    %886 = vmatpush.msra.mxu0 %v482
    %887 = vmatpush.msra.mxu0 %v478
    %888 = vmatmul.f32.gmra.mxu0 %v563
    %v889 = vpop.f32.mrf.mxu0
    %v890 = vadd.f32 %v870, %v889
    %891 = vdwg.mxu0
    %892 = vmatpush.msra.mxu0 %v91
    %893 = vmatpush.msra.mxu0 %v87
    %894 = vmatpush.msra.mxu0 %v83
    %895 = vmatpush.msra.mxu0 %v79
    %896 = vmatpush.msra.mxu0 %v75
    %897 = vmatpush.msra.mxu0 %v71
    %898 = vmatpush.msra.mxu0 %v67
    %899 = vmatpush.msra.mxu0 %v63
    %900 = vmatpush.msra.mxu0 %v59
    %901 = vmatpush.msra.mxu0 %v55
    %902 = vmatpush.msra.mxu0 %v51
    %903 = vmatpush.msra.mxu0 %v47
    %904 = vmatpush.msra.mxu0 %v43
    %905 = vmatpush.msra.mxu0 %v39
    %906 = vmatpush.msra.mxu0 %v35
    %907 = vmatpush.msra.mxu0 %v31
    %908 = vmatmul.f32.gmra.mxu0 %v556
    %v909 = vpop.f32.mrf.mxu0
    %v910 = vadd.f32 %v545, %v909
    %911 = vdwg.mxu0
    %912 = vmatpush.msra.mxu0 %v155
    %913 = vmatpush.msra.mxu0 %v151
    %914 = vmatpush.msra.mxu0 %v147
    %915 = vmatpush.msra.mxu0 %v143
    %916 = vmatpush.msra.mxu0 %v139
    %917 = vmatpush.msra.mxu0 %v135
    %918 = vmatpush.msra.mxu0 %v131
    %919 = vmatpush.msra.mxu0 %v127
    %920 = vmatpush.msra.mxu0 %v123
    %921 = vmatpush.msra.mxu0 %v119
    %922 = vmatpush.msra.mxu0 %v115
    %923 = vmatpush.msra.mxu0 %v111
    %924 = vmatpush.msra.mxu0 %v107
    %925 = vmatpush.msra.mxu0 %v103
    %926 = vmatpush.msra.mxu0 %v99
    %927 = vmatpush.msra.mxu0 %v95
    %928 = vmatmul.f32.gmra.mxu0 %v557
    %v929 = vpop.f32.mrf.mxu0
    %v930 = vadd.f32 %v910, %v929
    %931 = vdwg.mxu0
    %932 = vmatpush.msra.mxu0 %v219
    %933 = vmatpush.msra.mxu0 %v215
    %934 = vmatpush.msra.mxu0 %v211
    %935 = vmatpush.msra.mxu0 %v207
    %936 = vmatpush.msra.mxu0 %v203
    %937 = vmatpush.msra.mxu0 %v199
    %938 = vmatpush.msra.mxu0 %v195
    %939 = vmatpush.msra.mxu0 %v191
    %940 = vmatpush.msra.mxu0 %v187
    %941 = vmatpush.msra.mxu0 %v183
    %942 = vmatpush.msra.mxu0 %v179
    %943 = vmatpush.msra.mxu0 %v175
    %944 = vmatpush.msra.mxu0 %v171
    %945 = vmatpush.msra.mxu0 %v167
    %946 = vmatpush.msra.mxu0 %v163
    %947 = vmatpush.msra.mxu0 %v159
    %948 = vmatmul.f32.gmra.mxu0 %v558
    %v949 = vpop.f32.mrf.mxu0
    %v950 = vadd.f32 %v930, %v949
    %951 = vdwg.mxu0
    %952 = vmatpush.msra.mxu0 %v283
    %953 = vmatpush.msra.mxu0 %v279
    %954 = vmatpush.msra.mxu0 %v275
    %955 = vmatpush.msra.mxu0 %v271
    %956 = vmatpush.msra.mxu0 %v267
    %957 = vmatpush.msra.mxu0 %v263
    %958 = vmatpush.msra.mxu0 %v259
    %959 = vmatpush.msra.mxu0 %v255
    %960 = vmatpush.msra.mxu0 %v251
    %961 = vmatpush.msra.mxu0 %v247
    %962 = vmatpush.msra.mxu0 %v243
    %963 = vmatpush.msra.mxu0 %v239
    %964 = vmatpush.msra.mxu0 %v235
    %965 = vmatpush.msra.mxu0 %v231
    %966 = vmatpush.msra.mxu0 %v227
    %967 = vmatpush.msra.mxu0 %v223
    %968 = vmatmul.f32.gmra.mxu0 %v559
    %v969 = vpop.f32.mrf.mxu0
    %v970 = vadd.f32 %v950, %v969
    %971 = vdwg.mxu0
    %972 = vmatpush.msra.mxu0 %v347
    %973 = vmatpush.msra.mxu0 %v343
    %974 = vmatpush.msra.mxu0 %v339
    %975 = vmatpush.msra.mxu0 %v335
    %976 = vmatpush.msra.mxu0 %v331
    %977 = vmatpush.msra.mxu0 %v327
    %978 = vmatpush.msra.mxu0 %v323
    %979 = vmatpush.msra.mxu0 %v319
    %980 = vmatpush.msra.mxu0 %v315
    %981 = vmatpush.msra.mxu0 %v311
    %982 = vmatpush.msra.mxu0 %v307
    %983 = vmatpush.msra.mxu0 %v303
    %984 = vmatpush.msra.mxu0 %v299
    %985 = vmatpush.msra.mxu0 %v295
    %986 = vmatpush.msra.mxu0 %v291
    %987 = vmatpush.msra.mxu0 %v287
    %988 = vmatmul.f32.gmra.mxu0 %v560
    %v989 = vpop.f32.mrf.mxu0
    %v990 = vadd.f32 %v970, %v989
    %991 = vdwg.mxu0
    %992 = vmatpush.msra.mxu0 %v411
    %993 = vmatpush.msra.mxu0 %v407
    %994 = vmatpush.msra.mxu0 %v403
    %995 = vmatpush.msra.mxu0 %v399
    %996 = vmatpush.msra.mxu0 %v395
    %997 = vmatpush.msra.mxu0 %v391
    %998 = vmatpush.msra.mxu0 %v387
    %999 = vmatpush.msra.mxu0 %v383
    %1000 = vmatpush.msra.mxu0 %v379
    %1001 = vmatpush.msra.mxu0 %v375
    %1002 = vmatpush.msra.mxu0 %v371
    %1003 = vmatpush.msra.mxu0 %v367
    %1004 = vmatpush.msra.mxu0 %v363
    %1005 = vmatpush.msra.mxu0 %v359
    %1006 = vmatpush.msra.mxu0 %v355
    %1007 = vmatpush.msra.mxu0 %v351
    %1008 = vmatmul.f32.gmra.mxu0 %v561
    %v1009 = vpop.f32.mrf.mxu0
    %v1010 = vadd.f32 %v990, %v1009
    %1011 = vdwg.mxu0
    %1012 = vmatpush.msra.mxu0 %v475
    %1013 = vmatpush.msra.mxu0 %v471
    %1014 = vmatpush.msra.mxu0 %v467
    %1015 = vmatpush.msra.mxu0 %v463
    %1016 = vmatpush.msra.mxu0 %v459
    %1017 = vmatpush.msra.mxu0 %v455
    %1018 = vmatpush.msra.mxu0 %v451
    %1019 = vmatpush.msra.mxu0 %v447
    %1020 = vmatpush.msra.mxu0 %v443
    %1021 = vmatpush.msra.mxu0 %v439
    %1022 = vmatpush.msra.mxu0 %v435
    %1023 = vmatpush.msra.mxu0 %v431
    %1024 = vmatpush.msra.mxu0 %v427
    %1025 = vmatpush.msra.mxu0 %v423
    %1026 = vmatpush.msra.mxu0 %v419
    %1027 = vmatpush.msra.mxu0 %v415
    %1028 = vmatmul.f32.gmra.mxu0 %v562
    %v1029 = vpop.f32.mrf.mxu0
    %v1030 = vadd.f32 %v1010, %v1029
    %1031 = vdwg.mxu0
    %1032 = vmatpush.msra.mxu0 %v539
    %1033 = vmatpush.msra.mxu0 %v535
    %1034 = vmatpush.msra.mxu0 %v531
    %1035 = vmatpush.msra.mxu0 %v527
    %1036 = vmatpush.msra.mxu0 %v523
    %1037 = vmatpush.msra.mxu0 %v519
    %1038 = vmatpush.msra.mxu0 %v515
    %1039 = vmatpush.msra.mxu0 %v511
    %1040 = vmatpush.msra.mxu0 %v507
    %1041 = vmatpush.msra.mxu0 %v503
    %1042 = vmatpush.msra.mxu0 %v499
    %1043 = vmatpush.msra.mxu0 %v495
    %1044 = vmatpush.msra.mxu0 %v491
    %1045 = vmatpush.msra.mxu0 %v487
    %1046 = vmatpush.msra.mxu0 %v483
    %1047 = vmatpush.msra.mxu0 %v479
    %1048 = vmatmul.f32.gmra.mxu0 %v563
    %v1049 = vpop.f32.mrf.mxu0
    %v1050 = vadd.f32 %v1030, %v1049
    %1051 = vdwg.mxu0
    %1052 = vmatpush.msra.mxu0 %v92
    %1053 = vmatpush.msra.mxu0 %v88
    %1054 = vmatpush.msra.mxu0 %v84
    %1055 = vmatpush.msra.mxu0 %v80
    %1056 = vmatpush.msra.mxu0 %v76
    %1057 = vmatpush.msra.mxu0 %v72
    %1058 = vmatpush.msra.mxu0 %v68
    %1059 = vmatpush.msra.mxu0 %v64
    %1060 = vmatpush.msra.mxu0 %v60
    %1061 = vmatpush.msra.mxu0 %v56
    %1062 = vmatpush.msra.mxu0 %v52
    %1063 = vmatpush.msra.mxu0 %v48
    %1064 = vmatpush.msra.mxu0 %v44
    %1065 = vmatpush.msra.mxu0 %v40
    %1066 = vmatpush.msra.mxu0 %v36
    %1067 = vmatpush.msra.mxu0 %v32
    %1068 = vmatmul.f32.gmra.mxu0 %v556
    %v1069 = vpop.f32.mrf.mxu0
    %v1070 = vadd.f32 %v546, %v1069
    %1071 = vdwg.mxu0
    %1072 = vmatpush.msra.mxu0 %v156
    %1073 = vmatpush.msra.mxu0 %v152
    %1074 = vmatpush.msra.mxu0 %v148
    %1075 = vmatpush.msra.mxu0 %v144
    %1076 = vmatpush.msra.mxu0 %v140
    %1077 = vmatpush.msra.mxu0 %v136
    %1078 = vmatpush.msra.mxu0 %v132
    %1079 = vmatpush.msra.mxu0 %v128
    %1080 = vmatpush.msra.mxu0 %v124
    %1081 = vmatpush.msra.mxu0 %v120
    %1082 = vmatpush.msra.mxu0 %v116
    %1083 = vmatpush.msra.mxu0 %v112
    %1084 = vmatpush.msra.mxu0 %v108
    %1085 = vmatpush.msra.mxu0 %v104
    %1086 = vmatpush.msra.mxu0 %v100
    %1087 = vmatpush.msra.mxu0 %v96
    %1088 = vmatmul.f32.gmra.mxu0 %v557
    %v1089 = vpop.f32.mrf.mxu0
    %v1090 = vadd.f32 %v1070, %v1089
    %1091 = vdwg.mxu0
    %1092 = vmatpush.msra.mxu0 %v220
    %1093 = vmatpush.msra.mxu0 %v216
    %1094 = vmatpush.msra.mxu0 %v212
    %1095 = vmatpush.msra.mxu0 %v208
    %1096 = vmatpush.msra.mxu0 %v204
    %1097 = vmatpush.msra.mxu0 %v200
    %1098 = vmatpush.msra.mxu0 %v196
    %1099 = vmatpush.msra.mxu0 %v192
    %1100 = vmatpush.msra.mxu0 %v188
    %1101 = vmatpush.msra.mxu0 %v184
    %1102 = vmatpush.msra.mxu0 %v180
    %1103 = vmatpush.msra.mxu0 %v176
    %1104 = vmatpush.msra.mxu0 %v172
    %1105 = vmatpush.msra.mxu0 %v168
    %1106 = vmatpush.msra.mxu0 %v164
    %1107 = vmatpush.msra.mxu0 %v160
    %1108 = vmatmul.f32.gmra.mxu0 %v558
    %v1109 = vpop.f32.mrf.mxu0
    %v1110 = vadd.f32 %v1090, %v1109
    %1111 = vdwg.mxu0
    %1112 = vmatpush.msra.mxu0 %v284
    %1113 = vmatpush.msra.mxu0 %v280
    %1114 = vmatpush.msra.mxu0 %v276
    %1115 = vmatpush.msra.mxu0 %v272
    %1116 = vmatpush.msra.mxu0 %v268
    %1117 = vmatpush.msra.mxu0 %v264
    %1118 = vmatpush.msra.mxu0 %v260
    %1119 = vmatpush.msra.mxu0 %v256
    %1120 = vmatpush.msra.mxu0 %v252
    %1121 = vmatpush.msra.mxu0 %v248
    %1122 = vmatpush.msra.mxu0 %v244
    %1123 = vmatpush.msra.mxu0 %v240
    %1124 = vmatpush.msra.mxu0 %v236
    %1125 = vmatpush.msra.mxu0 %v232
    %1126 = vmatpush.msra.mxu0 %v228
    %1127 = vmatpush.msra.mxu0 %v224
    %1128 = vmatmul.f32.gmra.mxu0 %v559
    %v1129 = vpop.f32.mrf.mxu0
    %v1130 = vadd.f32 %v1110, %v1129
    %1131 = vdwg.mxu0
    %1132 = vmatpush.msra.mxu0 %v348
    %1133 = vmatpush.msra.mxu0 %v344
    %1134 = vmatpush.msra.mxu0 %v340
    %1135 = vmatpush.msra.mxu0 %v336
    %1136 = vmatpush.msra.mxu0 %v332
    %1137 = vmatpush.msra.mxu0 %v328
    %1138 = vmatpush.msra.mxu0 %v324
    %1139 = vmatpush.msra.mxu0 %v320
    %1140 = vmatpush.msra.mxu0 %v316
    %1141 = vmatpush.msra.mxu0 %v312
    %1142 = vmatpush.msra.mxu0 %v308
    %1143 = vmatpush.msra.mxu0 %v304
    %1144 = vmatpush.msra.mxu0 %v300
    %1145 = vmatpush.msra.mxu0 %v296
    %1146 = vmatpush.msra.mxu0 %v292
    %1147 = vmatpush.msra.mxu0 %v288
    %1148 = vmatmul.f32.gmra.mxu0 %v560
    %v1149 = vpop.f32.mrf.mxu0
    %v1150 = vadd.f32 %v1130, %v1149
    %1151 = vdwg.mxu0
    %1152 = vmatpush.msra.mxu0 %v412
    %1153 = vmatpush.msra.mxu0 %v408
    %1154 = vmatpush.msra.mxu0 %v404
    %1155 = vmatpush.msra.mxu0 %v400
    %1156 = vmatpush.msra.mxu0 %v396
    %1157 = vmatpush.msra.mxu0 %v392
    %1158 = vmatpush.msra.mxu0 %v388
    %1159 = vmatpush.msra.mxu0 %v384
    %1160 = vmatpush.msra.mxu0 %v380
    %1161 = vmatpush.msra.mxu0 %v376
    %1162 = vmatpush.msra.mxu0 %v372
    %1163 = vmatpush.msra.mxu0 %v368
    %1164 = vmatpush.msra.mxu0 %v364
    %1165 = vmatpush.msra.mxu0 %v360
    %1166 = vmatpush.msra.mxu0 %v356
    %1167 = vmatpush.msra.mxu0 %v352
    %1168 = vmatmul.f32.gmra.mxu0 %v561
    %v1169 = vpop.f32.mrf.mxu0
    %v1170 = vadd.f32 %v1150, %v1169
    %1171 = vdwg.mxu0
    %1172 = vmatpush.msra.mxu0 %v476
    %1173 = vmatpush.msra.mxu0 %v472
    %1174 = vmatpush.msra.mxu0 %v468
    %1175 = vmatpush.msra.mxu0 %v464
    %1176 = vmatpush.msra.mxu0 %v460
    %1177 = vmatpush.msra.mxu0 %v456
    %1178 = vmatpush.msra.mxu0 %v452
    %1179 = vmatpush.msra.mxu0 %v448
    %1180 = vmatpush.msra.mxu0 %v444
    %1181 = vmatpush.msra.mxu0 %v440
    %1182 = vmatpush.msra.mxu0 %v436
    %1183 = vmatpush.msra.mxu0 %v432
    %1184 = vmatpush.msra.mxu0 %v428
    %1185 = vmatpush.msra.mxu0 %v424
    %1186 = vmatpush.msra.mxu0 %v420
    %1187 = vmatpush.msra.mxu0 %v416
    %1188 = vmatmul.f32.gmra.mxu0 %v562
    %v1189 = vpop.f32.mrf.mxu0
    %v1190 = vadd.f32 %v1170, %v1189
    %1191 = vdwg.mxu0
    %1192 = vmatpush.msra.mxu0 %v540
    %1193 = vmatpush.msra.mxu0 %v536
    %1194 = vmatpush.msra.mxu0 %v532
    %1195 = vmatpush.msra.mxu0 %v528
    %1196 = vmatpush.msra.mxu0 %v524
    %1197 = vmatpush.msra.mxu0 %v520
    %1198 = vmatpush.msra.mxu0 %v516
    %1199 = vmatpush.msra.mxu0 %v512
    %1200 = vmatpush.msra.mxu0 %v508
    %1201 = vmatpush.msra.mxu0 %v504
    %1202 = vmatpush.msra.mxu0 %v500
    %1203 = vmatpush.msra.mxu0 %v496
    %1204 = vmatpush.msra.mxu0 %v492
    %1205 = vmatpush.msra.mxu0 %v488
    %1206 = vmatpush.msra.mxu0 %v484
    %1207 = vmatpush.msra.mxu0 %v480
    %1208 = vmatmul.f32.gmra.mxu0 %v563
    %v1209 = vpop.f32.mrf.mxu0
    %v1210 = vadd.f32 %v1190, %v1209
    %1211 = vdwg.mxu0
    %v1212 = vmax.f32 %v730, 0.0
    %v1213 = vmax.f32 %v890, 0.0
    %v1214 = vmax.f32 %v1050, 0.0
    %v1215 = vmax.f32 %v1210, 0.0
    %v1216 = vld [vmem:[%s3] sm:$0xff]
    %v1217 = vld [vmem:[%s3 + $0x8] sm:$0xff]
    %v1218 = vld [vmem:[%s3 + $0x10] sm:$0xff]
    %v1219 = vld [vmem:[%s3 + $0x18] sm:$0xff]
    %v1220 = vld [vmem:[%s3 + $0x20] sm:$0xff]
    %v1221 = vld [vmem:[%s3 + $0x28] sm:$0xff]
    %v1222 = vld [vmem:[%s3 + $0x30] sm:$0xff]
    %v1223 = vld [vmem:[%s3 + $0x38] sm:$0xff]
    %v1224 = vld [vmem:[%s3 + $0x40] sm:$0xff]
    %v1225 = vld [vmem:[%s3 + $0x48] sm:$0xff]
    %v1226 = vld [vmem:[%s3 + $0x50] sm:$0xff]
    %v1227 = vld [vmem:[%s3 + $0x58] sm:$0xff]
    %v1228 = vld [vmem:[%s3 + $0x60] sm:$0xff]
    %v1229 = vld [vmem:[%s3 + $0x68] sm:$0xff]
    %v1230 = vld [vmem:[%s3 + $0x70] sm:$0xff]
    %v1231 = vld [vmem:[%s3 + $0x78] sm:$0xff]
    %v1232 = vld [vmem:[%s3 + $0x80] sm:$0xff]
    %v1233 = vld [vmem:[%s3 + $0x88] sm:$0xff]
    %v1234 = vld [vmem:[%s3 + $0x90] sm:$0xff]
    %v1235 = vld [vmem:[%s3 + $0x98] sm:$0xff]
    %v1236 = vld [vmem:[%s3 + $0xa0] sm:$0xff]
    %v1237 = vld [vmem:[%s3 + $0xa8] sm:$0xff]
    %v1238 = vld [vmem:[%s3 + $0xb0] sm:$0xff]
    %v1239 = vld [vmem:[%s3 + $0xb8] sm:$0xff]
    %v1240 = vld [vmem:[%s3 + $0xc0] sm:$0xff]
    %v1241 = vld [vmem:[%s3 + $0xc8] sm:$0xff]
    %v1242 = vld [vmem:[%s3 + $0xd0] sm:$0xff]
    %v1243 = vld [vmem:[%s3 + $0xd8] sm:$0xff]
    %v1244 = vld [vmem:[%s3 + $0xe0] sm:$0xff]
    %v1245 = vld [vmem:[%s3 + $0xe8] sm:$0xff]
    %v1246 = vld [vmem:[%s3 + $0xf0] sm:$0xff]
    %v1247 = vld [vmem:[%s3 + $0xf8] sm:$0xff]
    %v1248 = vld [vmem:[%s3 + $0x100] sm:$0xff]
    %v1249 = vld [vmem:[%s3 + $0x108] sm:$0xff]
    %v1250 = vld [vmem:[%s3 + $0x110] sm:$0xff]
    %v1251 = vld [vmem:[%s3 + $0x118] sm:$0xff]
    %v1252 = vld [vmem:[%s3 + $0x120] sm:$0xff]
    %v1253 = vld [vmem:[%s3 + $0x128] sm:$0xff]
    %v1254 = vld [vmem:[%s3 + $0x130] sm:$0xff]
    %v1255 = vld [vmem:[%s3 + $0x138] sm:$0xff]
    %v1256 = vld [vmem:[%s3 + $0x140] sm:$0xff]
    %v1257 = vld [vmem:[%s3 + $0x148] sm:$0xff]
    %v1258 = vld [vmem:[%s3 + $0x150] sm:$0xff]
    %v1259 = vld [vmem:[%s3 + $0x158] sm:$0xff]
    %v1260 = vld [vmem:[%s3 + $0x160] sm:$0xff]
    %v1261 = vld [vmem:[%s3 + $0x168] sm:$0xff]
    %v1262 = vld [vmem:[%s3 + $0x170] sm:$0xff]
    %v1263 = vld [vmem:[%s3 + $0x178] sm:$0xff]
    %v1264 = vld [vmem:[%s3 + $0x180] sm:$0xff]
    %v1265 = vld [vmem:[%s3 + $0x188] sm:$0xff]
    %v1266 = vld [vmem:[%s3 + $0x190] sm:$0xff]
    %v1267 = vld [vmem:[%s3 + $0x198] sm:$0xff]
    %v1268 = vld [vmem:[%s3 + $0x1a0] sm:$0xff]
    %v1269 = vld [vmem:[%s3 + $0x1a8] sm:$0xff]
    %v1270 = vld [vmem:[%s3 + $0x1b0] sm:$0xff]
    %v1271 = vld [vmem:[%s3 + $0x1b8] sm:$0xff]
    %v1272 = vld [vmem:[%s3 + $0x1c0] sm:$0xff]
    %v1273 = vld [vmem:[%s3 + $0x1c8] sm:$0xff]
    %v1274 = vld [vmem:[%s3 + $0x1d0] sm:$0xff]
    %v1275 = vld [vmem:[%s3 + $0x1d8] sm:$0xff]
    %v1276 = vld [vmem:[%s3 + $0x1e0] sm:$0xff]
    %v1277 = vld [vmem:[%s3 + $0x1e8] sm:$0xff]
    %v1278 = vld [vmem:[%s3 + $0x1f0] sm:$0xff]
    %v1279 = vld [vmem:[%s3 + $0x1f8] sm:$0xff]
    %v1280 = vld [vmem:[%s3 + $0x200] sm:$0xff]
    %v1281 = vld [vmem:[%s3 + $0x208] sm:$0xff]
    %v1282 = vld [vmem:[%s3 + $0x210] sm:$0xff]
    %v1283 = vld [vmem:[%s3 + $0x218] sm:$0xff]
    %v1284 = vld [vmem:[%s3 + $0x220] sm:$0xff]
    %v1285 = vld [vmem:[%s3 + $0x228] sm:$0xff]
    %v1286 = vld [vmem:[%s3 + $0x230] sm:$0xff]
    %v1287 = vld [vmem:[%s3 + $0x238] sm:$0xff]
    %v1288 = vld [vmem:[%s3 + $0x240] sm:$0xff]
    %v1289 = vld [vmem:[%s3 + $0x248] sm:$0xff]
    %v1290 = vld [vmem:[%s3 + $0x250] sm:$0xff]
    %v1291 = vld [vmem:[%s3 + $0x258] sm:$0xff]
    %v1292 = vld [vmem:[%s3 + $0x260] sm:$0xff]
    %v1293 = vld [vmem:[%s3 + $0x268] sm:$0xff]
    %v1294 = vld [vmem:[%s3 + $0x270] sm:$0xff]
    %v1295 = vld [vmem:[%s3 + $0x278] sm:$0xff]
    %v1296 = vld [vmem:[%s3 + $0x280] sm:$0xff]
    %v1297 = vld [vmem:[%s3 + $0x288] sm:$0xff]
    %v1298 = vld [vmem:[%s3 + $0x290] sm:$0xff]
    %v1299 = vld [vmem:[%s3 + $0x298] sm:$0xff]
    %v1300 = vld [vmem:[%s3 + $0x2a0] sm:$0xff]
    %v1301 = vld [vmem:[%s3 + $0x2a8] sm:$0xff]
    %v1302 = vld [vmem:[%s3 + $0x2b0] sm:$0xff]
    %v1303 = vld [vmem:[%s3 + $0x2b8] sm:$0xff]
    %v1304 = vld [vmem:[%s3 + $0x2c0] sm:$0xff]
    %v1305 = vld [vmem:[%s3 + $0x2c8] sm:$0xff]
    %v1306 = vld [vmem:[%s3 + $0x2d0] sm:$0xff]
    %v1307 = vld [vmem:[%s3 + $0x2d8] sm:$0xff]
    %v1308 = vld [vmem:[%s3 + $0x2e0] sm:$0xff]
    %v1309 = vld [vmem:[%s3 + $0x2e8] sm:$0xff]
    %v1310 = vld [vmem:[%s3 + $0x2f0] sm:$0xff]
    %v1311 = vld [vmem:[%s3 + $0x2f8] sm:$0xff]
    %v1312 = vld [vmem:[%s3 + $0x300] sm:$0xff]
    %v1313 = vld [vmem:[%s3 + $0x308] sm:$0xff]
    %v1314 = vld [vmem:[%s3 + $0x310] sm:$0xff]
    %v1315 = vld [vmem:[%s3 + $0x318] sm:$0xff]
    %v1316 = vld [vmem:[%s3 + $0x320] sm:$0xff]
    %v1317 = vld [vmem:[%s3 + $0x328] sm:$0xff]
    %v1318 = vld [vmem:[%s3 + $0x330] sm:$0xff]
    %v1319 = vld [vmem:[%s3 + $0x338] sm:$0xff]
    %v1320 = vld [vmem:[%s3 + $0x340] sm:$0xff]
    %v1321 = vld [vmem:[%s3 + $0x348] sm:$0xff]
    %v1322 = vld [vmem:[%s3 + $0x350] sm:$0xff]
    %v1323 = vld [vmem:[%s3 + $0x358] sm:$0xff]
    %v1324 = vld [vmem:[%s3 + $0x360] sm:$0xff]
    %v1325 = vld [vmem:[%s3 + $0x368] sm:$0xff]
    %v1326 = vld [vmem:[%s3 + $0x370] sm:$0xff]
    %v1327 = vld [vmem:[%s3 + $0x378] sm:$0xff]
    %v1328 = vld [vmem:[%s3 + $0x380] sm:$0xff]
    %v1329 = vld [vmem:[%s3 + $0x388] sm:$0xff]
    %v1330 = vld [vmem:[%s3 + $0x390] sm:$0xff]
    %v1331 = vld [vmem:[%s3 + $0x398] sm:$0xff]
    %v1332 = vld [vmem:[%s3 + $0x3a0] sm:$0xff]
    %v1333 = vld [vmem:[%s3 + $0x3a8] sm:$0xff]
    %v1334 = vld [vmem:[%s3 + $0x3b0] sm:$0xff]
    %v1335 = vld [vmem:[%s3 + $0x3b8] sm:$0xff]
    %v1336 = vld [vmem:[%s3 + $0x3c0] sm:$0xff]
    %v1337 = vld [vmem:[%s3 + $0x3c8] sm:$0xff]
    %v1338 = vld [vmem:[%s3 + $0x3d0] sm:$0xff]
    %v1339 = vld [vmem:[%s3 + $0x3d8] sm:$0xff]
    %v1340 = vld [vmem:[%s3 + $0x3e0] sm:$0xff]
    %v1341 = vld [vmem:[%s3 + $0x3e8] sm:$0xff]
    %v1342 = vld [vmem:[%s3 + $0x3f0] sm:$0xff]
    %v1343 = vld [vmem:[%s3 + $0x3f8] sm:$0xff]
    %v1344 = vld [vmem:[%s4] sm:$0x3]
    %v1346 = vperm.slane %v1344, 0
    %v1347 = vperm.slane %v1344, 1
    %1350 = vmatpush.msra.mxu0 %v1246
    %1351 = vmatpush.msra.mxu0 %v1244
    %1352 = vmatpush.msra.mxu0 %v1242
    %1353 = vmatpush.msra.mxu0 %v1240
    %1354 = vmatpush.msra.mxu0 %v1238
    %1355 = vmatpush.msra.mxu0 %v1236
    %1356 = vmatpush.msra.mxu0 %v1234
    %1357 = vmatpush.msra.mxu0 %v1232
    %1358 = vmatpush.msra.mxu0 %v1230
    %1359 = vmatpush.msra.mxu0 %v1228
    %1360 = vmatpush.msra.mxu0 %v1226
    %1361 = vmatpush.msra.mxu0 %v1224
    %1362 = vmatpush.msra.mxu0 %v1222
    %1363 = vmatpush.msra.mxu0 %v1220
    %1364 = vmatpush.msra.mxu0 %v1218
    %1365 = vmatpush.msra.mxu0 %v1216
    %1366 = vmatmul.f32.gmra.mxu0 %v1212
    %v1367 = vpop.f32.mrf.mxu0
    %v1368 = vadd.f32 %v1346, %v1367
    %1369 = vdwg.mxu0
    %1370 = vmatpush.msra.mxu0 %v1278
    %1371 = vmatpush.msra.mxu0 %v1276
    %1372 = vmatpush.msra.mxu0 %v1274
    %1373 = vmatpush.msra.mxu0 %v1272
    %1374 = vmatpush.msra.mxu0 %v1270
    %1375 = vmatpush.msra.mxu0 %v1268
    %1376 = vmatpush.msra.mxu0 %v1266
    %1377 = vmatpush.msra.mxu0 %v1264
    %1378 = vmatpush.msra.mxu0 %v1262
    %1379 = vmatpush.msra.mxu0 %v1260
    %1380 = vmatpush.msra.mxu0 %v1258
    %1381 = vmatpush.msra.mxu0 %v1256
    %1382 = vmatpush.msra.mxu0 %v1254
    %1383 = vmatpush.msra.mxu0 %v1252
    %1384 = vmatpush.msra.mxu0 %v1250
    %1385 = vmatpush.msra.mxu0 %v1248
    %1386 = vmatmul.f32.gmra.mxu0 %v1213
    %v1387 = vpop.f32.mrf.mxu0
    %v1388 = vadd.f32 %v1368, %v1387
    %1389 = vdwg.mxu0
    %1390 = vmatpush.msra.mxu0 %v1310
    %1391 = vmatpush.msra.mxu0 %v1308
    %1392 = vmatpush.msra.mxu0 %v1306
    %1393 = vmatpush.msra.mxu0 %v1304
    %1394 = vmatpush.msra.mxu0 %v1302
    %1395 = vmatpush.msra.mxu0 %v1300
    %1396 = vmatpush.msra.mxu0 %v1298
    %1397 = vmatpush.msra.mxu0 %v1296
    %1398 = vmatpush.msra.mxu0 %v1294
    %1399 = vmatpush.msra.mxu0 %v1292
    %1400 = vmatpush.msra.mxu0 %v1290
    %1401 = vmatpush.msra.mxu0 %v1288
    %1402 = vmatpush.msra.mxu0 %v1286
    %1403 = vmatpush.msra.mxu0 %v1284
    %1404 = vmatpush.msra.mxu0 %v1282
    %1405 = vmatpush.msra.mxu0 %v1280
    %1406 = vmatmul.f32.gmra.mxu0 %v1214
    %v1407 = vpop.f32.mrf.mxu0
    %v1408 = vadd.f32 %v1388, %v1407
    %1409 = vdwg.mxu0
    %1410 = vmatpush.msra.mxu0 %v1342
    %1411 = vmatpush.msra.mxu0 %v1340
    %1412 = vmatpush.msra.mxu0 %v1338
    %1413 = vmatpush.msra.mxu0 %v1336
    %1414 = vmatpush.msra.mxu0 %v1334
    %1415 = vmatpush.msra.mxu0 %v1332
    %1416 = vmatpush.msra.mxu0 %v1330
    %1417 = vmatpush.msra.mxu0 %v1328
    %1418 = vmatpush.msra.mxu0 %v1326
    %1419 = vmatpush.msra.mxu0 %v1324
    %1420 = vmatpush.msra.mxu0 %v1322
    %1421 = vmatpush.msra.mxu0 %v1320
    %1422 = vmatpush.msra.mxu0 %v1318
    %1423 = vmatpush.msra.mxu0 %v1316
    %1424 = vmatpush.msra.mxu0 %v1314
    %1425 = vmatpush.msra.mxu0 %v1312
    %1426 = vmatmul.f32.gmra.mxu0 %v1215
    %v1427 = vpop.f32.mrf.mxu0
    %v1428 = vadd.f32 %v1408, %v1427
    %1429 = vdwg.mxu0
    %1430 = vmatpush.msra.mxu0 %v1247
    %1431 = vmatpush.msra.mxu0 %v1245
    %1432 = vmatpush.msra.mxu0 %v1243
    %1433 = vmatpush.msra.mxu0 %v1241
    %1434 = vmatpush.msra.mxu0 %v1239
    %1435 = vmatpush.msra.mxu0 %v1237
    %1436 = vmatpush.msra.mxu0 %v1235
    %1437 = vmatpush.msra.mxu0 %v1233
    %1438 = vmatpush.msra.mxu0 %v1231
    %1439 = vmatpush.msra.mxu0 %v1229
    %1440 = vmatpush.msra.mxu0 %v1227
    %1441 = vmatpush.msra.mxu0 %v1225
    %1442 = vmatpush.msra.mxu0 %v1223
    %1443 = vmatpush.msra.mxu0 %v1221
    %1444 = vmatpush.msra.mxu0 %v1219
    %1445 = vmatpush.msra.mxu0 %v1217
    %1446 = vmatmul.f32.gmra.mxu0 %v1212
    %v1447 = vpop.f32.mrf.mxu0
    %v1448 = vadd.f32 %v1347, %v1447
    %1449 = vdwg.mxu0
    %1450 = vmatpush.msra.mxu0 %v1279
    %1451 = vmatpush.msra.mxu0 %v1277
    %1452 = vmatpush.msra.mxu0 %v1275
    %1453 = vmatpush.msra.mxu0 %v1273
    %1454 = vmatpush.msra.mxu0 %v1271
    %1455 = vmatpush.msra.mxu0 %v1269
    %1456 = vmatpush.msra.mxu0 %v1267
    %1457 = vmatpush.msra.mxu0 %v1265
    %1458 = vmatpush.msra.mxu0 %v1263
    %1459 = vmatpush.msra.mxu0 %v1261
    %1460 = vmatpush.msra.mxu0 %v1259
    %1461 = vmatpush.msra.mxu0 %v1257
    %1462 = vmatpush.msra.mxu0 %v1255
    %1463 = vmatpush.msra.mxu0 %v1253
    %1464 = vmatpush.msra.mxu0 %v1251
    %1465 = vmatpush.msra.mxu0 %v1249
    %1466 = vmatmul.f32.gmra.mxu0 %v1213
    %v1467 = vpop.f32.mrf.mxu0
    %v1468 = vadd.f32 %v1448, %v1467
    %1469 = vdwg.mxu0
    %1470 = vmatpush.msra.mxu0 %v1311
    %1471 = vmatpush.msra.mxu0 %v1309
    %1472 = vmatpush.msra.mxu0 %v1307
    %1473 = vmatpush.msra.mxu0 %v1305
    %1474 = vmatpush.msra.mxu0 %v1303
    %1475 = vmatpush.msra.mxu0 %v1301
    %1476 = vmatpush.msra.mxu0 %v1299
    %1477 = vmatpush.msra.mxu0 %v1297
    %1478 = vmatpush.msra.mxu0 %v1295
    %1479 = vmatpush.msra.mxu0 %v1293
    %1480 = vmatpush.msra.mxu0 %v1291
    %1481 = vmatpush.msra.mxu0 %v1289
    %1482 = vmatpush.msra.mxu0 %v1287
    %1483 = vmatpush.msra.mxu0 %v1285
    %1484 = vmatpush.msra.mxu0 %v1283
    %1485 = vmatpush.msra.mxu0 %v1281
    %1486 = vmatmul.f32.gmra.mxu0 %v1214
    %v1487 = vpop.f32.mrf.mxu0
    %v1488 = vadd.f32 %v1468, %v1487
    %1489 = vdwg.mxu0
    %1490 = vmatpush.msra.mxu0 %v1343
    %1491 = vmatpush.msra.mxu0 %v1341
    %1492 = vmatpush.msra.mxu0 %v1339
    %1493 = vmatpush.msra.mxu0 %v1337
    %1494 = vmatpush.msra.mxu0 %v1335
    %1495 = vmatpush.msra.mxu0 %v1333
    %1496 = vmatpush.msra.mxu0 %v1331
    %1497 = vmatpush.msra.mxu0 %v1329
    %1498 = vmatpush.msra.mxu0 %v1327
    %1499 = vmatpush.msra.mxu0 %v1325
    %1500 = vmatpush.msra.mxu0 %v1323
    %1501 = vmatpush.msra.mxu0 %v1321
    %1502 = vmatpush.msra.mxu0 %v1319
    %1503 = vmatpush.msra.mxu0 %v1317
    %1504 = vmatpush.msra.mxu0 %v1315
    %1505 = vmatpush.msra.mxu0 %v1313
    %1506 = vmatmul.f32.gmra.mxu0 %v1215
    %v1507 = vpop.f32.mrf.mxu0
    %v1508 = vadd.f32 %v1488, %v1507
    %1509 = vdwg.mxu0
    %v1510 = vmax.f32 %v1428, 0.0
    %v1511 = vmax.f32 %v1508, 0.0
    %v1512 = vld [vmem:[%s5] sm:$0xff]
    %v1513 = vld [vmem:[%s5 + $0x8] sm:$0xff]
    %v1514 = vld [vmem:[%s5 + $0x10] sm:$0xff]
    %v1515 = vld [vmem:[%s5 + $0x18] sm:$0xff]
    %v1516 = vld [vmem:[%s5 + $0x20] sm:$0xff]
    %v1517 = vld [vmem:[%s5 + $0x28] sm:$0xff]
    %v1518 = vld [vmem:[%s5 + $0x30] sm:$0xff]
    %v1519 = vld [vmem:[%s5 + $0x38] sm:$0xff]
    %v1520 = vld [vmem:[%s5 + $0x40] sm:$0xff]
    %v1521 = vld [vmem:[%s5 + $0x48] sm:$0xff]
    %v1522 = vld [vmem:[%s5 + $0x50] sm:$0xff]
    %v1523 = vld [vmem:[%s5 + $0x58] sm:$0xff]
    %v1524 = vld [vmem:[%s5 + $0x60] sm:$0xff]
    %v1525 = vld [vmem:[%s5 + $0x68] sm:$0xff]
    %v1526 = vld [vmem:[%s5 + $0x70] sm:$0xff]
    %v1527 = vld [vmem:[%s5 + $0x78] sm:$0xff]
    %v1528 = vld [vmem:[%s5 + $0x80] sm:$0xff]
    %v1529 = vld [vmem:[%s5 + $0x88] sm:$0xff]
    %v1530 = vld [vmem:[%s5 + $0x90] sm:$0xff]
    %v1531 = vld [vmem:[%s5 + $0x98] sm:$0xff]
    %v1532 = vld [vmem:[%s5 + $0xa0] sm:$0xff]
    %v1533 = vld [vmem:[%s5 + $0xa8] sm:$0xff]
    %v1534 = vld [vmem:[%s5 + $0xb0] sm:$0xff]
    %v1535 = vld [vmem:[%s5 + $0xb8] sm:$0xff]
    %v1536 = vld [vmem:[%s5 + $0xc0] sm:$0xff]
    %v1537 = vld [vmem:[%s5 + $0xc8] sm:$0xff]
    %v1538 = vld [vmem:[%s5 + $0xd0] sm:$0xff]
    %v1539 = vld [vmem:[%s5 + $0xd8] sm:$0xff]
    %v1540 = vld [vmem:[%s5 + $0xe0] sm:$0xff]
    %v1541 = vld [vmem:[%s5 + $0xe8] sm:$0xff]
    %v1542 = vld [vmem:[%s5 + $0xf0] sm:$0xff]
    %v1543 = vld [vmem:[%s5 + $0xf8] sm:$0xff]
    %v1544 = vld [vmem:[%s6] sm:$0x1]
    %v1546 = vperm.slane %v1544, 0
    %1548 = vmatpush.msra.mxu0 %v1527
    %1549 = vmatpush.msra.mxu0 %v1526
    %1550 = vmatpush.msra.mxu0 %v1525
    %1551 = vmatpush.msra.mxu0 %v1524
    %1552 = vmatpush.msra.mxu0 %v1523
    %1553 = vmatpush.msra.mxu0 %v1522
    %1554 = vmatpush.msra.mxu0 %v1521
    %1555 = vmatpush.msra.mxu0 %v1520
    %1556 = vmatpush.msra.mxu0 %v1519
    %1557 = vmatpush.msra.mxu0 %v1518
    %1558 = vmatpush.msra.mxu0 %v1517
    %1559 = vmatpush.msra.mxu0 %v1516
    %1560 = vmatpush.msra.mxu0 %v1515
    %1561 = vmatpush.msra.mxu0 %v1514
    %1562 = vmatpush.msra.mxu0 %v1513
    %1563 = vmatpush.msra.mxu0 %v1512
    %1564 = vmatmul.f32.gmra.mxu0 %v1510
    %v1565 = vpop.f32.mrf.mxu0
    %v1566 = vadd.f32 %v1546, %v1565
    %1567 = vdwg.mxu0
    %1568 = vmatpush.msra.mxu0 %v1543
    %1569 = vmatpush.msra.mxu0 %v1542
    %1570 = vmatpush.msra.mxu0 %v1541
    %1571 = vmatpush.msra.mxu0 %v1540
    %1572 = vmatpush.msra.mxu0 %v1539
    %1573 = vmatpush.msra.mxu0 %v1538
    %1574 = vmatpush.msra.mxu0 %v1537
    %1575 = vmatpush.msra.mxu0 %v1536
    %1576 = vmatpush.msra.mxu0 %v1535
    %1577 = vmatpush.msra.mxu0 %v1534
    %1578 = vmatpush.msra.mxu0 %v1533
    %1579 = vmatpush.msra.mxu0 %v1532
    %1580 = vmatpush.msra.mxu0 %v1531
    %1581 = vmatpush.msra.mxu0 %v1530
    %1582 = vmatpush.msra.mxu0 %v1529
    %1583 = vmatpush.msra.mxu0 %v1528
    %1584 = vmatmul.f32.gmra.mxu0 %v1511
    %v1585 = vpop.f32.mrf.mxu0
    %v1586 = vadd.f32 %v1566, %v1585
    %1587 = vdwg.mxu0
    %vm1588 = vcmask 17408
    %1589 = vst.msk [vmem:[#allocation2] sm:$0x3] %vm1588, %v1586
    // Predicated region
    $region30: #{pointnet2_cls_forward.5} parent=1 // pred_check
      _
    $region31: #{pointnet2_cls_forward.5} parent=1 // pred_check_branch
      %1591 = sbr.rel (0) target = $region33
    $region32: #{pointnet2_cls_forward.5} parent=1 // pred_region
      %1593 = vsyncadd [#allocation3], 0
      %s1595 = sshll.u32 [#allocation2], 4
      %s1596 = int_to_ptr.vmem [resolvable:$true] %s1595
      %s1597 = sshll.u32 %s7, 4
      %s1598 = int_to_ptr.hbm [resolvable:$true] %s1597
      %1600 = dma.vmem_to_hbm [thread:$0]  %s1596, 32, %s1598, [#allocation3]
    $region33: #{pointnet2_cls_forward.5} parent=1 // pred_fallthru
      _
    // Predicated region
    $region34: #{pointnet2_cls_forward.5} parent=1 // pred_check
      _
    $region35: #{pointnet2_cls_forward.5} parent=1 // pred_check_branch
      %1602 = sbr.rel (0) target = $region37
    $region36: #{pointnet2_cls_forward.5} parent=1 // pred_region
      %1604 = dma.done [#allocation3], 32
    $region37: #{pointnet2_cls_forward.5} parent=1 // pred_fallthru
      _
    %1605 = vsyncpa [#allocation3], 1

</llo_original>
